<compile_context>
chip_gen: v6e
topology: v6e:2x2x1
jax: 0.10.0
libtpu: 0.0.40
codegen_flags: <defaults>
</compile_context>

<pallas_src>
import functools

import jax
import jax.numpy as jnp
from jax.experimental import pallas as pl
from jax.experimental.pallas import tpu as pltpu

_LANE = 128
_VMEM_LIMIT = 48 * 1024 * 1024   # <= v7x guidance, > v5e 16 MiB scoped default


# ---------------------------------------------------------------------------
# Pallas kernels
# ---------------------------------------------------------------------------

def _conv3x3_kernel(x_ref, w_ref, b_ref, *out_refs, th, relu, want_stats):
    """3x3 / stride 1 / pad 1 conv over one (1, th, W, Cout_p) output row block.

    x_ref : (1, H+2, W+2, Cin_p) full spatially padded image (bf16); its block
            index is constant across the row-block grid axis, so it is DMA'd
            once per image and kept resident.
    w_ref : (9, Cin_p, Cout_p)   per-tap weights (bf16), resident.
    b_ref : (1, Cout_p)          bias (f32).
    out 0 : (1, th, W, Cout_p)   bf16 conv output row block.
    out 1 : (1, 8, Cout_p)       optional f32 partial BN stats
                                 (row 0 = sum, row 1 = sum of squares).
    """
    o_ref = out_refs[0]
    w_out = o_ref.shape[2]
    cin_p = x_ref.shape[3]
    r0 = pl.multiple_of(pl.program_id(1) * th, th)

    # one VMEM load of the (th+2, W+2, Cin_p) halo window for this row block
    win = x_ref[0, pl.ds(r0, th + 2), :, :]

    acc = None
    for kh in range(3):
        for kw in range(3):
            slab = win[kh:kh + th, kw:kw + w_out, :].reshape(th * w_out, cin_p)
            part = jnp.dot(slab, w_ref[3 * kh + kw],
                           preferred_element_type=jnp.float32)
            acc = part if acc is None else acc + part
    acc = acc + b_ref[...]
    if relu:
        acc = jnp.maximum(acc, 0.0)
    o_ref[0] = acc.reshape(th, w_out, -1).astype(o_ref.dtype)

    if want_stats:
        st_ref = out_refs[1]
        st_ref[0, 0:1, :] = jnp.sum(acc, axis=0, keepdims=True)
        st_ref[0, 1:2, :] = jnp.sum(acc * acc, axis=0, keepdims=True)
        st_ref[0, 2:, :] = jnp.zeros((6, acc.shape[-1]), jnp.float32)


def _bn_relu_fc_kernel(f_ref, scale_ref, shift_ref, w_ref, b_ref, o_ref):
    """out = relu(f * scale + shift) @ w + b; bf16 MXU, f32 accumulate."""
    h = jnp.maximum(
        f_ref[...].astype(jnp.float32) * scale_ref[...] + shift_ref[...], 0.0)
    o_ref[...] = (jnp.dot(h.astype(jnp.bfloat16), w_ref[...],
                          preferred_element_type=jnp.float32)
                  + b_ref[...]).astype(o_ref.dtype)


# ---------------------------------------------------------------------------
# Tiling helpers
# ---------------------------------------------------------------------------

def _ceil_to(v, m):
    return ((v + m - 1) // m) * m


def _pad_axis(a, axis, target):
    pad = target - a.shape[axis]
    if pad == 0:
        return a
    widths = [(0, 0)] * a.ndim
    widths[axis] = (0, pad)
    return jnp.pad(a, widths)


def _pad_w9(w_hwio, cin_p, cout_p):
    """(3,3,Cin,Cout) -> (9, Cin_p, Cout_p) bf16, zero padded."""
    kh, kw, cin, cout = w_hwio.shape
    w = w_hwio.reshape(kh * kw, cin, cout)
    w = _pad_axis(w, 1, cin_p)
    w = _pad_axis(w, 2, cout_p)
    return w.astype(jnp.bfloat16)


def _pick_th(h_out, w_out, n_batch, target_rows=2048, min_steps=8):
    """Row-block height: divisor of h_out, grid >= min_steps, rows <= target."""
    divs = [d for d in range(1, h_out + 1) if h_out % d == 0]
    best = 1
    for d in divs:
        if d * w_out <= target_rows and n_batch * (h_out // d) >= min_steps:
            best = d
    if best == 1:
        for d in divs:
            if d * w_out <= target_rows:
                best = d
    return best


def _pick_tm(m, target=1024, min_steps=8):
    """Row tile: multiple-of-8 divisor of m, prefer a grid of >= min_steps."""
    best = None
    for d in range(8, min(m, target) + 1, 8):
        if m % d == 0 and m // d >= min_steps:
            best = d
    if best is None:
        for d in range(8, min(m, target) + 1, 8):
            if m % d == 0:
                best = d
    return best if best is not None else m


# ---------------------------------------------------------------------------
# Pallas wrappers
# ---------------------------------------------------------------------------

def conv3x3_pallas(x_nhwc, w9, b, *, relu, want_stats):
    """Fused 3x3 conv (stride 1, pad 1). x channels / w / b already 128-padded.

    Returns bf16 (N, H, W, Cout_p) [and (8, Cout_p) f32 stats: sum / sumsq].
    """
    N, H, W, Cin_p = x_nhwc.shape
    Cout_p = w9.shape[-1]
    xp = jnp.pad(x_nhwc.astype(jnp.bfloat16), ((0, 0), (1, 1), (1, 1), (0, 0)))
    Hp, Wp = H + 2, W + 2
    th = _pick_th(H, W, N)
    nrb = H // th

    kernel = functools.partial(_conv3x3_kernel, th=th, relu=relu,
                               want_stats=want_stats)
    out_shape = jax.ShapeDtypeStruct((N, H, W, Cout_p), jnp.bfloat16)
    out_specs = pl.BlockSpec((1, th, W, Cout_p), lambda n, rb: (n, rb, 0, 0))
    if want_stats:
        out_shape = (out_shape,
                     jax.ShapeDtypeStruct((N * nrb, 8, Cout_p), jnp.float32))
        out_specs = (out_specs,
                     pl.BlockSpec((1, 8, Cout_p),
                                  lambda n, rb: (n * nrb + rb, 0, 0)))

    res = pl.pallas_call(
        kernel,
        out_shape=out_shape,
        grid_spec=pltpu.PrefetchScalarGridSpec(
            num_scalar_prefetch=0,
            grid=(N, nrb),
            in_specs=[
                # full padded image; block index constant in rb -> one DMA/image
                pl.BlockSpec((1, Hp, Wp, Cin_p), lambda n, rb: (n, 0, 0, 0)),
                pl.BlockSpec((9, Cin_p, Cout_p), lambda n, rb: (0, 0, 0)),
                pl.BlockSpec((1, Cout_p), lambda n, rb: (0, 0)),
            ],
            out_specs=out_specs,
        ),
        compiler_params=pltpu.CompilerParams(
            dimension_semantics=("parallel", "arbitrary"),
            vmem_limit_bytes=_VMEM_LIMIT,
        ),
    )(xp, w9.astype(jnp.bfloat16), b.astype(jnp.float32))

    if want_stats:
        out, partial = res
        # tiny (N*nrb, 8, Cout_p) reduction in JAX keeps the grid stats-free
        return out, partial.sum(axis=0)
    return res


def bn_relu_fc_pallas(f2d, scale, shift, w, b):
    """relu(f*scale+shift) @ w + b, row tiled; f / w in bf16, f32 accumulate."""
    M, C = f2d.shape
    Kp = w.shape[1]
    tm = _pick_tm(M)
    return pl.pallas_call(
        _bn_relu_fc_kernel,
        out_shape=jax.ShapeDtypeStruct((M, Kp), jnp.float32),
        grid_spec=pltpu.PrefetchScalarGridSpec(
            num_scalar_prefetch=0,
            grid=(M // tm,),
            in_specs=[
                pl.BlockSpec((tm, C), lambda i: (i, 0)),
                pl.BlockSpec((1, C), lambda i: (0, 0)),
                pl.BlockSpec((1, C), lambda i: (0, 0)),
                pl.BlockSpec((C, Kp), lambda i: (0, 0)),
                pl.BlockSpec((1, Kp), lambda i: (0, 0)),
            ],
            out_specs=pl.BlockSpec((tm, Kp), lambda i: (i, 0)),
        ),
        compiler_params=pltpu.CompilerParams(
            dimension_semantics=("parallel",),
            vmem_limit_bytes=_VMEM_LIMIT,
        ),
    )(f2d.astype(jnp.bfloat16), scale.astype(jnp.float32),
      shift.astype(jnp.float32), w.astype(jnp.bfloat16), b.astype(jnp.float32))


# ---------------------------------------------------------------------------
# Parameters (mirrors the PyTorch init) and forward passes
# ---------------------------------------------------------------------------

def init_params(key, in_channels, feature_dim, num_keypoints):
    ks = jax.random.split(key, 6)
    p = {}
    # backbone / upsampling stand-ins (injected modules in the original code)
    p["backbone_w"] = (jax.random.normal(ks[0], (3, 3, in_channels, feature_dim),
                                         jnp.float32) * 0.1)
    p["backbone_b"] = jnp.zeros((1, feature_dim), jnp.float32)
    p["up_w"] = (jax.random.normal(ks[1], (3, 3, feature_dim, feature_dim),
                                   jnp.float32) * 0.05)
    p["up_b"] = jnp.zeros((1, feature_dim), jnp.float32)
    # two regression heads: Conv2d weight ~ N(0, 0.001), bias = 0; BN gamma=1, beta=0
    for prefix, k3, k1 in (("head", ks[2], ks[3]), ("head_adv", ks[4], ks[5])):
        p[prefix + "_conv_w"] = (jax.random.normal(
            k3, (3, 3, feature_dim, feature_dim), jnp.float32) * 0.001)
        p[prefix + "_conv_b"] = jnp.zeros((1, feature_dim), jnp.float32)
        p[prefix + "_gamma"] = jnp.ones((1, feature_dim), jnp.float32)
        p[prefix + "_beta"] = jnp.zeros((1, feature_dim), jnp.float32)
        p[prefix + "_fc_w"] = (jax.random.normal(
            k1, (feature_dim, num_keypoints), jnp.float32) * 0.001)
        p[prefix + "_fc_b"] = jnp.zeros((1, num_keypoints), jnp.float32)
    return p


def pose_forward_pallas(x_nchw, p, training=True):
    x = jnp.transpose(x_nchw, (0, 2, 3, 1)).astype(jnp.bfloat16)   # NHWC bf16
    N, H, W, Cin = x.shape
    C = p["backbone_w"].shape[-1]
    K = p["head_fc_w"].shape[-1]
    Cin_p = _ceil_to(Cin, _LANE)
    Cp = _ceil_to(C, _LANE)
    C2p = _ceil_to(2 * C, _LANE)
    assert 2 * K <= _LANE, "fused fc assumes <=64 keypoints (one 128-lane vreg)"

    x = _pad_axis(x, 3, Cin_p)

    # backbone stand-in: conv3x3(Cin->C) + ReLU
    fb = conv3x3_pallas(x, _pad_w9(p["backbone_w"], Cin_p, Cp),
                        _pad_axis(p["backbone_b"], 1, Cp),
                        relu=True, want_stats=False)                # (N,H,W,Cp)

    # upsampling stand-in: nearest-2x + conv3x3(C->C) + ReLU
    # TODO(synk): the nearest-2x repeat is still a JAX-side 4x HBM expansion;
    # fold it into the conv kernel (row//2 / col//2 indexing) for another cut.
    fu = jnp.repeat(jnp.repeat(fb, 2, axis=1), 2, axis=2)           # (N,2H,2W,Cp)
    f = conv3x3_pallas(fu, _pad_w9(p["up_w"], Cp, Cp),
                       _pad_axis(p["up_b"], 1, Cp),
                       relu=True, want_stats=False)                 # (N,2H,2W,Cp)

    # WarmStartGradientLayer is identity in the forward pass -> f_adv == f:
    # fuse both heads (conv Cout concatenated, block-diagonal fc).
    w3 = jnp.concatenate([p["head_conv_w"], p["head_adv_conv_w"]], axis=-1)
    b3 = jnp.concatenate([p["head_conv_b"], p["head_adv_conv_b"]], axis=-1)
    f1, stats = conv3x3_pallas(f, _pad_w9(w3, Cp, C2p), _pad_axis(b3, 1, C2p),
                               relu=False, want_stats=True)         # bf16, f32

    M = f1.shape[0] * f1.shape[1] * f1.shape[2]
    # BatchNorm2d training mode: biased batch statistics over (N, H, W).
    mean = stats[0:1] / M
    # TODO(synk): E[x^2]-E[x]^2 is fragile for large-mean activations; clamped.
    var = jnp.maximum(stats[1:2] / M - mean * mean, 0.0)
    gamma = _pad_axis(jnp.concatenate([p["head_gamma"], p["head_adv_gamma"]],
                                      axis=-1), 1, C2p)
    beta = _pad_axis(jnp.concatenate([p["head_beta"], p["head_adv_beta"]],
                                     axis=-1), 1, C2p)
    scale = gamma / jnp.sqrt(var + 1e-5)
    shift = beta - mean * scale
    # TODO(synk): BN running-stat (momentum) updates are a training side effect
    # and are not materialized here.

    zero = jnp.zeros((C, K), jnp.float32)
    wfc = jnp.concatenate(
        [jnp.concatenate([p["head_fc_w"], zero], axis=1),
         jnp.concatenate([zero, p["head_adv_fc_w"]], axis=1)], axis=0)  # (2C,2K)
    wfc = jnp.pad(wfc, ((0, C2p - 2 * C), (0, _LANE - 2 * K)))
    bfc = jnp.pad(jnp.concatenate([p["head_fc_b"], p["head_adv_fc_b"]], axis=1),
                  ((0, 0), (0, _LANE - 2 * K)))

    y = bn_relu_fc_pallas(f1.reshape(M, C2p), scale, shift, wfc, bfc)
    y = y[:, :2 * K].reshape(N, 2 * H, 2 * W, 2 * K)
    y_main = jnp.transpose(y[..., :K], (0, 3, 1, 2))                # NCHW
    y_adv = jnp.transpose(y[..., K:], (0, 3, 1, 2))
    if training:
        return y_main, y_adv
    return y_main


# ---------------------------------------------------------------------------
# Pure-JAX reference (mirrors the kernel dtypes; used only for validation)
# ---------------------------------------------------------------------------

def conv3x3_ref(x, w, b, *, relu, want_stats=False):
    N, H, W, _ = x.shape
    Cout = w.shape[-1]
    xp = jnp.pad(x.astype(jnp.bfloat16), ((0, 0), (1, 1), (1, 1), (0, 0)))
    wb = w.astype(jnp.bfloat16)
    acc = jnp.zeros((N, H, W, Cout), jnp.float32)
    for kh in range(3):
        for kw in range(3):
            acc = acc + jnp.einsum("nhwc,co->nhwo",
                                   xp[:, kh:kh + H, kw:kw + W, :], wb[kh, kw],
                                   preferred_element_type=jnp.float32)
    acc = acc + b.reshape(1, 1, 1, -1).astype(jnp.float32)
    if relu:
        acc = jnp.maximum(acc, 0.0)
    out = acc.astype(jnp.bfloat16)
    if want_stats:
        flat = acc.reshape(-1, Cout)
        return out, jnp.stack([flat.sum(0), (flat * flat).sum(0)], axis=0)
    return out


def pose_forward_ref(x_nchw, p, training=True):
    x = jnp.transpose(x_nchw, (0, 2, 3, 1)).astype(jnp.bfloat16)
    N, H, W, _ = x.shape
    C = p["backbone_w"].shape[-1]
    K = p["head_fc_w"].shape[-1]
    fb = conv3x3_ref(x, p["backbone_w"], p["backbone_b"], relu=True)
    fu = jnp.repeat(jnp.repeat(fb, 2, axis=1), 2, axis=2)
    f = conv3x3_ref(fu, p["up_w"], p["up_b"], relu=True)

    def head(prefix, feat):
        h1, st = conv3x3_ref(feat, p[prefix + "_conv_w"], p[prefix + "_conv_b"],
                             relu=False, want_stats=True)
        M = N * (2 * H) * (2 * W)
        mean = st[0] / M
        var = jnp.maximum(st[1] / M - mean * mean, 0.0)
        scale = p[prefix + "_gamma"][0] / jnp.sqrt(var + 1e-5)
        shift = p[prefix + "_beta"][0] - mean * scale
        h = jnp.maximum(h1.astype(jnp.float32) * scale + shift, 0.0)
        y = (jnp.dot(h.reshape(M, C).astype(jnp.bfloat16),
                     p[prefix + "_fc_w"].astype(jnp.bfloat16),
                     preferred_element_type=jnp.float32)
             + p[prefix + "_fc_b"])
        return y.reshape(N, 2 * H, 2 * W, K)

    y_main = jnp.transpose(head("head", f), (0, 3, 1, 2))
    y_adv = jnp.transpose(head("head_adv", f), (0, 3, 1, 2))
    if training:
        return y_main, y_adv
    return y_main


# ---------------------------------------------------------------------------
# Main
# ---------------------------------------------------------------------------

if __name__ == "__main__":
    key = jax.random.PRNGKey(0)
    k_x, k_p = jax.random.split(key)

    batch, in_channels, spatial = 2, 4, 16
    feature_dim, num_keypoints = 32, 16

    x = jax.random.normal(k_x, (batch, in_channels, spatial, spatial), jnp.float32)
    params = init_params(k_p, in_channels, feature_dim, num_keypoints)

    run_pallas = jax.jit(functools.partial(pose_forward_pallas, training=True))
    run_ref = jax.jit(functools.partial(pose_forward_ref, training=True))

    y, y_adv = run_pallas(x, params)
    jax.block_until_ready((y, y_adv))

    y_ref, y_adv_ref = run_ref(x, params)
    jax.block_until_ready((y_ref, y_adv_ref))

    expected_shape = (batch, num_keypoints, 2 * spatial, 2 * spatial)
    assert y.shape == expected_shape and y_adv.shape == expected_shape
    assert jnp.all(jnp.isfinite(y)) and jnp.all(jnp.isfinite(y_adv))
    # both paths use bf16 tap matmuls with f32 accumulation in the same order,
    # so only reduction-order / stats-order differences remain.
    assert jnp.allclose(y, y_ref, rtol=2e-2, atol=5e-4), \
        float(jnp.max(jnp.abs(y - y_ref)))
    assert jnp.allclose(y_adv, y_adv_ref, rtol=2e-2, atol=5e-4), \
        float(jnp.max(jnp.abs(y_adv - y_adv_ref)))

    print("KERNEL_OK")
</pallas_src>

<mosaic_0001>
module attributes {stable_mosaic.version = 11 : i64} {
  func.func @_conv3x3_kernel(%arg0: i32, %arg1: i32, %arg2: memref<1x18x18x128xbf16, #tpu.memory_space<vmem>>, %arg3: memref<9x128x128xbf16, #tpu.memory_space<vmem>>, %arg4: memref<1x128xf32, #tpu.memory_space<vmem>>, %arg5: memref<1x4x16x128xbf16, #tpu.memory_space<vmem>>) attributes {dimension_semantics = [#tpu.dimension_semantics<parallel>, #tpu.dimension_semantics<arbitrary>], iteration_bounds = array<i64: 2, 4>, scalar_prefetch = 0 : i64, scratch_operands = 0 : i64, tpu.core_type = #tpu.core_type<tc>, window_params = [{transform_indices = @transform_0, window_bounds = array<i64: 1, 18, 18, 128>}, {pipeline_mode = #tpu.pipeline_mode<synchronous>, transform_indices = @transform_1, window_bounds = array<i64: 9, 128, 128>}, {pipeline_mode = #tpu.pipeline_mode<synchronous>, transform_indices = @transform_2, window_bounds = array<i64: 1, 128>}, {transform_indices = @transform_3, window_bounds = array<i64: 1, 4, 16, 128>}]} {
    %c4_i32 = arith.constant 4 : i32
    %0 = arith.muli %arg1, %c4_i32 : i32
    %1 = tpu.assume_multiple %0, 4 : i32
    %c0 = arith.constant 0 : index
    %2 = arith.index_cast %1 : i32 to index
    %c0_0 = arith.constant 0 : index
    %c0_1 = arith.constant 0 : index
    %3 = vector.load %arg2[%c0, %2, %c0_0, %c0_1] : memref<1x18x18x128xbf16, #tpu.memory_space<vmem>>, vector<1x6x18x128xbf16>
    %4 = vector.shape_cast %3 : vector<1x6x18x128xbf16> to vector<6x18x128xbf16>
    %5 = vector.extract_strided_slice %4 {offsets = [0, 0, 0], sizes = [4, 16, 128], strides = [1, 1, 1]} : vector<6x18x128xbf16> to vector<4x16x128xbf16>
    %6 = vector.shape_cast %5 : vector<4x16x128xbf16> to vector<64x128xbf16>
    %c0_2 = arith.constant 0 : index
    %c0_3 = arith.constant 0 : index
    %c0_4 = arith.constant 0 : index
    %7 = vector.load %arg3[%c0_2, %c0_3, %c0_4] : memref<9x128x128xbf16, #tpu.memory_space<vmem>>, vector<1x128x128xbf16>
    %8 = vector.shape_cast %7 : vector<1x128x128xbf16> to vector<128x128xbf16>
    %cst = arith.constant dense<0.000000e+00> : vector<64x128xf32>
    %9 = tpu.matmul %6, %8, %cst {dimension_numbers = #tpu.dot_dimension_numbers<[1], [0], [0], [1], [0, 0, 1, 1], [], []>} : vector<64x128xbf16>, vector<128x128xbf16>, vector<64x128xf32> -> vector<64x128xf32>
    %10 = vector.extract_strided_slice %4 {offsets = [0, 1, 0], sizes = [4, 16, 128], strides = [1, 1, 1]} : vector<6x18x128xbf16> to vector<4x16x128xbf16>
    %11 = vector.shape_cast %10 : vector<4x16x128xbf16> to vector<64x128xbf16>
    %c1 = arith.constant 1 : index
    %c0_5 = arith.constant 0 : index
    %c0_6 = arith.constant 0 : index
    %12 = vector.load %arg3[%c1, %c0_5, %c0_6] : memref<9x128x128xbf16, #tpu.memory_space<vmem>>, vector<1x128x128xbf16>
    %13 = vector.shape_cast %12 : vector<1x128x128xbf16> to vector<128x128xbf16>
    %cst_7 = arith.constant dense<0.000000e+00> : vector<64x128xf32>
    %14 = tpu.matmul %11, %13, %cst_7 {dimension_numbers = #tpu.dot_dimension_numbers<[1], [0], [0], [1], [0, 0, 1, 1], [], []>} : vector<64x128xbf16>, vector<128x128xbf16>, vector<64x128xf32> -> vector<64x128xf32>
    %15 = arith.addf %9, %14 : vector<64x128xf32>
    %16 = vector.extract_strided_slice %4 {offsets = [0, 2, 0], sizes = [4, 16, 128], strides = [1, 1, 1]} : vector<6x18x128xbf16> to vector<4x16x128xbf16>
    %17 = vector.shape_cast %16 : vector<4x16x128xbf16> to vector<64x128xbf16>
    %c2 = arith.constant 2 : index
    %c0_8 = arith.constant 0 : index
    %c0_9 = arith.constant 0 : index
    %18 = vector.load %arg3[%c2, %c0_8, %c0_9] : memref<9x128x128xbf16, #tpu.memory_space<vmem>>, vector<1x128x128xbf16>
    %19 = vector.shape_cast %18 : vector<1x128x128xbf16> to vector<128x128xbf16>
    %cst_10 = arith.constant dense<0.000000e+00> : vector<64x128xf32>
    %20 = tpu.matmul %17, %19, %cst_10 {dimension_numbers = #tpu.dot_dimension_numbers<[1], [0], [0], [1], [0, 0, 1, 1], [], []>} : vector<64x128xbf16>, vector<128x128xbf16>, vector<64x128xf32> -> vector<64x128xf32>
    %21 = arith.addf %15, %20 : vector<64x128xf32>
    %22 = vector.extract_strided_slice %4 {offsets = [1, 0, 0], sizes = [4, 16, 128], strides = [1, 1, 1]} : vector<6x18x128xbf16> to vector<4x16x128xbf16>
    %23 = vector.shape_cast %22 : vector<4x16x128xbf16> to vector<64x128xbf16>
    %c3 = arith.constant 3 : index
    %c0_11 = arith.constant 0 : index
    %c0_12 = arith.constant 0 : index
    %24 = vector.load %arg3[%c3, %c0_11, %c0_12] : memref<9x128x128xbf16, #tpu.memory_space<vmem>>, vector<1x128x128xbf16>
    %25 = vector.shape_cast %24 : vector<1x128x128xbf16> to vector<128x128xbf16>
    %cst_13 = arith.constant dense<0.000000e+00> : vector<64x128xf32>
    %26 = tpu.matmul %23, %25, %cst_13 {dimension_numbers = #tpu.dot_dimension_numbers<[1], [0], [0], [1], [0, 0, 1, 1], [], []>} : vector<64x128xbf16>, vector<128x128xbf16>, vector<64x128xf32> -> vector<64x128xf32>
    %27 = arith.addf %21, %26 : vector<64x128xf32>
    %28 = vector.extract_strided_slice %4 {offsets = [1, 1, 0], sizes = [4, 16, 128], strides = [1, 1, 1]} : vector<6x18x128xbf16> to vector<4x16x128xbf16>
    %29 = vector.shape_cast %28 : vector<4x16x128xbf16> to vector<64x128xbf16>
    %c4 = arith.constant 4 : index
    %c0_14 = arith.constant 0 : index
    %c0_15 = arith.constant 0 : index
    %30 = vector.load %arg3[%c4, %c0_14, %c0_15] : memref<9x128x128xbf16, #tpu.memory_space<vmem>>, vector<1x128x128xbf16>
    %31 = vector.shape_cast %30 : vector<1x128x128xbf16> to vector<128x128xbf16>
    %cst_16 = arith.constant dense<0.000000e+00> : vector<64x128xf32>
    %32 = tpu.matmul %29, %31, %cst_16 {dimension_numbers = #tpu.dot_dimension_numbers<[1], [0], [0], [1], [0, 0, 1, 1], [], []>} : vector<64x128xbf16>, vector<128x128xbf16>, vector<64x128xf32> -> vector<64x128xf32>
    %33 = arith.addf %27, %32 : vector<64x128xf32>
    %34 = vector.extract_strided_slice %4 {offsets = [1, 2, 0], sizes = [4, 16, 128], strides = [1, 1, 1]} : vector<6x18x128xbf16> to vector<4x16x128xbf16>
    %35 = vector.shape_cast %34 : vector<4x16x128xbf16> to vector<64x128xbf16>
    %c5 = arith.constant 5 : index
    %c0_17 = arith.constant 0 : index
    %c0_18 = arith.constant 0 : index
    %36 = vector.load %arg3[%c5, %c0_17, %c0_18] : memref<9x128x128xbf16, #tpu.memory_space<vmem>>, vector<1x128x128xbf16>
    %37 = vector.shape_cast %36 : vector<1x128x128xbf16> to vector<128x128xbf16>
    %cst_19 = arith.constant dense<0.000000e+00> : vector<64x128xf32>
    %38 = tpu.matmul %35, %37, %cst_19 {dimension_numbers = #tpu.dot_dimension_numbers<[1], [0], [0], [1], [0, 0, 1, 1], [], []>} : vector<64x128xbf16>, vector<128x128xbf16>, vector<64x128xf32> -> vector<64x128xf32>
    %39 = arith.addf %33, %38 : vector<64x128xf32>
    %40 = vector.extract_strided_slice %4 {offsets = [2, 0, 0], sizes = [4, 16, 128], strides = [1, 1, 1]} : vector<6x18x128xbf16> to vector<4x16x128xbf16>
    %41 = vector.shape_cast %40 : vector<4x16x128xbf16> to vector<64x128xbf16>
    %c6 = arith.constant 6 : index
    %c0_20 = arith.constant 0 : index
    %c0_21 = arith.constant 0 : index
    %42 = vector.load %arg3[%c6, %c0_20, %c0_21] : memref<9x128x128xbf16, #tpu.memory_space<vmem>>, vector<1x128x128xbf16>
    %43 = vector.shape_cast %42 : vector<1x128x128xbf16> to vector<128x128xbf16>
    %cst_22 = arith.constant dense<0.000000e+00> : vector<64x128xf32>
    %44 = tpu.matmul %41, %43, %cst_22 {dimension_numbers = #tpu.dot_dimension_numbers<[1], [0], [0], [1], [0, 0, 1, 1], [], []>} : vector<64x128xbf16>, vector<128x128xbf16>, vector<64x128xf32> -> vector<64x128xf32>
    %45 = arith.addf %39, %44 : vector<64x128xf32>
    %46 = vector.extract_strided_slice %4 {offsets = [2, 1, 0], sizes = [4, 16, 128], strides = [1, 1, 1]} : vector<6x18x128xbf16> to vector<4x16x128xbf16>
    %47 = vector.shape_cast %46 : vector<4x16x128xbf16> to vector<64x128xbf16>
    %c7 = arith.constant 7 : index
    %c0_23 = arith.constant 0 : index
    %c0_24 = arith.constant 0 : index
    %48 = vector.load %arg3[%c7, %c0_23, %c0_24] : memref<9x128x128xbf16, #tpu.memory_space<vmem>>, vector<1x128x128xbf16>
    %49 = vector.shape_cast %48 : vector<1x128x128xbf16> to vector<128x128xbf16>
    %cst_25 = arith.constant dense<0.000000e+00> : vector<64x128xf32>
    %50 = tpu.matmul %47, %49, %cst_25 {dimension_numbers = #tpu.dot_dimension_numbers<[1], [0], [0], [1], [0, 0, 1, 1], [], []>} : vector<64x128xbf16>, vector<128x128xbf16>, vector<64x128xf32> -> vector<64x128xf32>
    %51 = arith.addf %45, %50 : vector<64x128xf32>
    %52 = vector.extract_strided_slice %4 {offsets = [2, 2, 0], sizes = [4, 16, 128], strides = [1, 1, 1]} : vector<6x18x128xbf16> to vector<4x16x128xbf16>
    %53 = vector.shape_cast %52 : vector<4x16x128xbf16> to vector<64x128xbf16>
    %c8 = arith.constant 8 : index
    %c0_26 = arith.constant 0 : index
    %c0_27 = arith.constant 0 : index
    %54 = vector.load %arg3[%c8, %c0_26, %c0_27] : memref<9x128x128xbf16, #tpu.memory_space<vmem>>, vector<1x128x128xbf16>
    %55 = vector.shape_cast %54 : vector<1x128x128xbf16> to vector<128x128xbf16>
    %cst_28 = arith.constant dense<0.000000e+00> : vector<64x128xf32>
    %56 = tpu.matmul %53, %55, %cst_28 {dimension_numbers = #tpu.dot_dimension_numbers<[1], [0], [0], [1], [0, 0, 1, 1], [], []>} : vector<64x128xbf16>, vector<128x128xbf16>, vector<64x128xf32> -> vector<64x128xf32>
    %57 = arith.addf %51, %56 : vector<64x128xf32>
    %c0_29 = arith.constant 0 : index
    %c0_30 = arith.constant 0 : index
    %58 = vector.load %arg4[%c0_29, %c0_30] : memref<1x128xf32, #tpu.memory_space<vmem>>, vector<1x128xf32>
    %59 = vector.broadcast %58 : vector<1x128xf32> to vector<64x128xf32>
    %60 = arith.addf %57, %59 : vector<64x128xf32>
    %cst_31 = arith.constant 0.000000e+00 : f32
    %61 = vector.broadcast %cst_31 : f32 to vector<64x128xf32>
    %62 = arith.maximumf %60, %61 : vector<64x128xf32>
    %63 = vector.shape_cast %62 : vector<64x128xf32> to vector<4x16x128xf32>
    %64 = arith.truncf %63 : vector<4x16x128xf32> to vector<4x16x128xbf16>
    %c0_32 = arith.constant 0 : index
    %c0_33 = arith.constant 0 : index
    %c0_34 = arith.constant 0 : index
    %c0_35 = arith.constant 0 : index
    %65 = vector.load %arg5[%c0_32, %c0_33, %c0_34, %c0_35] : memref<1x4x16x128xbf16, #tpu.memory_space<vmem>>, vector<1x4x16x128xbf16>
    %66 = vector.shape_cast %65 : vector<1x4x16x128xbf16> to vector<4x16x128xbf16>
    %67 = vector.shape_cast %64 : vector<4x16x128xbf16> to vector<1x4x16x128xbf16>
    tpu.vector_store %arg5[%c0_32, %c0_33, %c0_34, %c0_35], %67 {strides = array<i32>} : memref<1x4x16x128xbf16, #tpu.memory_space<vmem>>, vector<1x4x16x128xbf16>,
    return
  }
  func.func @transform_0(%arg0: i32, %arg1: i32) -> (i32, i32, i32, i32) {
    %c0_i32 = arith.constant 0 : i32
    %c0_i32_0 = arith.constant 0 : i32
    %c0_i32_1 = arith.constant 0 : i32
    %c0_i32_2 = arith.constant 0 : i32
    return %arg0, %c0_i32, %c0_i32_0, %c0_i32_1 : i32, i32, i32, i32
  }
  func.func @transform_1(%arg0: i32, %arg1: i32) -> (i32, i32, i32) {
    %c0_i32 = arith.constant 0 : i32
    %c0_i32_0 = arith.constant 0 : i32
    %c0_i32_1 = arith.constant 0 : i32
    %c0_i32_2 = arith.constant 0 : i32
    return %c0_i32, %c0_i32_0, %c0_i32_1 : i32, i32, i32
  }
  func.func @transform_2(%arg0: i32, %arg1: i32) -> (i32, i32) {
    %c0_i32 = arith.constant 0 : i32
    %c0_i32_0 = arith.constant 0 : i32
    %c0_i32_1 = arith.constant 0 : i32
    return %c0_i32, %c0_i32_0 : i32, i32
  }
  func.func @transform_3(%arg0: i32, %arg1: i32) -> (i32, i32, i32, i32) {
    %c0_i32 = arith.constant 0 : i32
    %c0_i32_0 = arith.constant 0 : i32
    %c0_i32_1 = arith.constant 0 : i32
    return %arg0, %arg1, %c0_i32, %c0_i32_0 : i32, i32, i32, i32
  }
}

module attributes {stable_mosaic.version = 11 : i64} {
  func.func @_conv3x3_kernel(%arg0: i32, %arg1: i32, %arg2: memref<1x34x34x128xbf16, #tpu.memory_space<vmem>>, %arg3: memref<9x128x128xbf16, #tpu.memory_space<vmem>>, %arg4: memref<1x128xf32, #tpu.memory_space<vmem>>, %arg5: memref<1x8x32x128xbf16, #tpu.memory_space<vmem>>) attributes {dimension_semantics = [#tpu.dimension_semantics<parallel>, #tpu.dimension_semantics<arbitrary>], iteration_bounds = array<i64: 2, 4>, scalar_prefetch = 0 : i64, scratch_operands = 0 : i64, tpu.core_type = #tpu.core_type<tc>, window_params = [{transform_indices = @transform_0, window_bounds = array<i64: 1, 34, 34, 128>}, {pipeline_mode = #tpu.pipeline_mode<synchronous>, transform_indices = @transform_1, window_bounds = array<i64: 9, 128, 128>}, {pipeline_mode = #tpu.pipeline_mode<synchronous>, transform_indices = @transform_2, window_bounds = array<i64: 1, 128>}, {transform_indices = @transform_3, window_bounds = array<i64: 1, 8, 32, 128>}]} {
    %c8_i32 = arith.constant 8 : i32
    %0 = arith.muli %arg1, %c8_i32 : i32
    %1 = tpu.assume_multiple %0, 8 : i32
    %c0 = arith.constant 0 : index
    %2 = arith.index_cast %1 : i32 to index
    %c0_0 = arith.constant 0 : index
    %c0_1 = arith.constant 0 : index
    %3 = vector.load %arg2[%c0, %2, %c0_0, %c0_1] : memref<1x34x34x128xbf16, #tpu.memory_space<vmem>>, vector<1x10x34x128xbf16>
    %4 = vector.shape_cast %3 : vector<1x10x34x128xbf16> to vector<10x34x128xbf16>
    %5 = vector.extract_strided_slice %4 {offsets = [0, 0, 0], sizes = [8, 32, 128], strides = [1, 1, 1]} : vector<10x34x128xbf16> to vector<8x32x128xbf16>
    %6 = vector.shape_cast %5 : vector<8x32x128xbf16> to vector<256x128xbf16>
    %c0_2 = arith.constant 0 : index
    %c0_3 = arith.constant 0 : index
    %c0_4 = arith.constant 0 : index
    %7 = vector.load %arg3[%c0_2, %c0_3, %c0_4] : memref<9x128x128xbf16, #tpu.memory_space<vmem>>, vector<1x128x128xbf16>
    %8 = vector.shape_cast %7 : vector<1x128x128xbf16> to vector<128x128xbf16>
    %cst = arith.constant dense<0.000000e+00> : vector<256x128xf32>
    %9 = tpu.matmul %6, %8, %cst {dimension_numbers = #tpu.dot_dimension_numbers<[1], [0], [0], [1], [0, 0, 1, 1], [], []>} : vector<256x128xbf16>, vector<128x128xbf16>, vector<256x128xf32> -> vector<256x128xf32>
    %10 = vector.extract_strided_slice %4 {offsets = [0, 1, 0], sizes = [8, 32, 128], strides = [1, 1, 1]} : vector<10x34x128xbf16> to vector<8x32x128xbf16>
    %11 = vector.shape_cast %10 : vector<8x32x128xbf16> to vector<256x128xbf16>
    %c1 = arith.constant 1 : index
    %c0_5 = arith.constant 0 : index
    %c0_6 = arith.constant 0 : index
    %12 = vector.load %arg3[%c1, %c0_5, %c0_6] : memref<9x128x128xbf16, #tpu.memory_space<vmem>>, vector<1x128x128xbf16>
    %13 = vector.shape_cast %12 : vector<1x128x128xbf16> to vector<128x128xbf16>
    %cst_7 = arith.constant dense<0.000000e+00> : vector<256x128xf32>
    %14 = tpu.matmul %11, %13, %cst_7 {dimension_numbers = #tpu.dot_dimension_numbers<[1], [0], [0], [1], [0, 0, 1, 1], [], []>} : vector<256x128xbf16>, vector<128x128xbf16>, vector<256x128xf32> -> vector<256x128xf32>
    %15 = arith.addf %9, %14 : vector<256x128xf32>
    %16 = vector.extract_strided_slice %4 {offsets = [0, 2, 0], sizes = [8, 32, 128], strides = [1, 1, 1]} : vector<10x34x128xbf16> to vector<8x32x128xbf16>
    %17 = vector.shape_cast %16 : vector<8x32x128xbf16> to vector<256x128xbf16>
    %c2 = arith.constant 2 : index
    %c0_8 = arith.constant 0 : index
    %c0_9 = arith.constant 0 : index
    %18 = vector.load %arg3[%c2, %c0_8, %c0_9] : memref<9x128x128xbf16, #tpu.memory_space<vmem>>, vector<1x128x128xbf16>
    %19 = vector.shape_cast %18 : vector<1x128x128xbf16> to vector<128x128xbf16>
    %cst_10 = arith.constant dense<0.000000e+00> : vector<256x128xf32>
    %20 = tpu.matmul %17, %19, %cst_10 {dimension_numbers = #tpu.dot_dimension_numbers<[1], [0], [0], [1], [0, 0, 1, 1], [], []>} : vector<256x128xbf16>, vector<128x128xbf16>, vector<256x128xf32> -> vector<256x128xf32>
    %21 = arith.addf %15, %20 : vector<256x128xf32>
    %22 = vector.extract_strided_slice %4 {offsets = [1, 0, 0], sizes = [8, 32, 128], strides = [1, 1, 1]} : vector<10x34x128xbf16> to vector<8x32x128xbf16>
    %23 = vector.shape_cast %22 : vector<8x32x128xbf16> to vector<256x128xbf16>
    %c3 = arith.constant 3 : index
    %c0_11 = arith.constant 0 : index
    %c0_12 = arith.constant 0 : index
    %24 = vector.load %arg3[%c3, %c0_11, %c0_12] : memref<9x128x128xbf16, #tpu.memory_space<vmem>>, vector<1x128x128xbf16>
    %25 = vector.shape_cast %24 : vector<1x128x128xbf16> to vector<128x128xbf16>
    %cst_13 = arith.constant dense<0.000000e+00> : vector<256x128xf32>
    %26 = tpu.matmul %23, %25, %cst_13 {dimension_numbers = #tpu.dot_dimension_numbers<[1], [0], [0], [1], [0, 0, 1, 1], [], []>} : vector<256x128xbf16>, vector<128x128xbf16>, vector<256x128xf32> -> vector<256x128xf32>
    %27 = arith.addf %21, %26 : vector<256x128xf32>
    %28 = vector.extract_strided_slice %4 {offsets = [1, 1, 0], sizes = [8, 32, 128], strides = [1, 1, 1]} : vector<10x34x128xbf16> to vector<8x32x128xbf16>
    %29 = vector.shape_cast %28 : vector<8x32x128xbf16> to vector<256x128xbf16>
    %c4 = arith.constant 4 : index
    %c0_14 = arith.constant 0 : index
    %c0_15 = arith.constant 0 : index
    %30 = vector.load %arg3[%c4, %c0_14, %c0_15] : memref<9x128x128xbf16, #tpu.memory_space<vmem>>, vector<1x128x128xbf16>
    %31 = vector.shape_cast %30 : vector<1x128x128xbf16> to vector<128x128xbf16>
    %cst_16 = arith.constant dense<0.000000e+00> : vector<256x128xf32>
    %32 = tpu.matmul %29, %31, %cst_16 {dimension_numbers = #tpu.dot_dimension_numbers<[1], [0], [0], [1], [0, 0, 1, 1], [], []>} : vector<256x128xbf16>, vector<128x128xbf16>, vector<256x128xf32> -> vector<256x128xf32>
    %33 = arith.addf %27, %32 : vector<256x128xf32>
    %34 = vector.extract_strided_slice %4 {offsets = [1, 2, 0], sizes = [8, 32, 128], strides = [1, 1, 1]} : vector<10x34x128xbf16> to vector<8x32x128xbf16>
    %35 = vector.shape_cast %34 : vector<8x32x128xbf16> to vector<256x128xbf16>
    %c5 = arith.constant 5 : index
    %c0_17 = arith.constant 0 : index
    %c0_18 = arith.constant 0 : index
    %36 = vector.load %arg3[%c5, %c0_17, %c0_18] : memref<9x128x128xbf16, #tpu.memory_space<vmem>>, vector<1x128x128xbf16>
    %37 = vector.shape_cast %36 : vector<1x128x128xbf16> to vector<128x128xbf16>
    %cst_19 = arith.constant dense<0.000000e+00> : vector<256x128xf32>
    %38 = tpu.matmul %35, %37, %cst_19 {dimension_numbers = #tpu.dot_dimension_numbers<[1], [0], [0], [1], [0, 0, 1, 1], [], []>} : vector<256x128xbf16>, vector<128x128xbf16>, vector<256x128xf32> -> vector<256x128xf32>
    %39 = arith.addf %33, %38 : vector<256x128xf32>
    %40 = vector.extract_strided_slice %4 {offsets = [2, 0, 0], sizes = [8, 32, 128], strides = [1, 1, 1]} : vector<10x34x128xbf16> to vector<8x32x128xbf16>
    %41 = vector.shape_cast %40 : vector<8x32x128xbf16> to vector<256x128xbf16>
    %c6 = arith.constant 6 : index
    %c0_20 = arith.constant 0 : index
    %c0_21 = arith.constant 0 : index
    %42 = vector.load %arg3[%c6, %c0_20, %c0_21] : memref<9x128x128xbf16, #tpu.memory_space<vmem>>, vector<1x128x128xbf16>
    %43 = vector.shape_cast %42 : vector<1x128x128xbf16> to vector<128x128xbf16>
    %cst_22 = arith.constant dense<0.000000e+00> : vector<256x128xf32>
    %44 = tpu.matmul %41, %43, %cst_22 {dimension_numbers = #tpu.dot_dimension_numbers<[1], [0], [0], [1], [0, 0, 1, 1], [], []>} : vector<256x128xbf16>, vector<128x128xbf16>, vector<256x128xf32> -> vector<256x128xf32>
    %45 = arith.addf %39, %44 : vector<256x128xf32>
    %46 = vector.extract_strided_slice %4 {offsets = [2, 1, 0], sizes = [8, 32, 128], strides = [1, 1, 1]} : vector<10x34x128xbf16> to vector<8x32x128xbf16>
    %47 = vector.shape_cast %46 : vector<8x32x128xbf16> to vector<256x128xbf16>
    %c7 = arith.constant 7 : index
    %c0_23 = arith.constant 0 : index
    %c0_24 = arith.constant 0 : index
    %48 = vector.load %arg3[%c7, %c0_23, %c0_24] : memref<9x128x128xbf16, #tpu.memory_space<vmem>>, vector<1x128x128xbf16>
    %49 = vector.shape_cast %48 : vector<1x128x128xbf16> to vector<128x128xbf16>
    %cst_25 = arith.constant dense<0.000000e+00> : vector<256x128xf32>
    %50 = tpu.matmul %47, %49, %cst_25 {dimension_numbers = #tpu.dot_dimension_numbers<[1], [0], [0], [1], [0, 0, 1, 1], [], []>} : vector<256x128xbf16>, vector<128x128xbf16>, vector<256x128xf32> -> vector<256x128xf32>
    %51 = arith.addf %45, %50 : vector<256x128xf32>
    %52 = vector.extract_strided_slice %4 {offsets = [2, 2, 0], sizes = [8, 32, 128], strides = [1, 1, 1]} : vector<10x34x128xbf16> to vector<8x32x128xbf16>
    %53 = vector.shape_cast %52 : vector<8x32x128xbf16> to vector<256x128xbf16>
    %c8 = arith.constant 8 : index
    %c0_26 = arith.constant 0 : index
    %c0_27 = arith.constant 0 : index
    %54 = vector.load %arg3[%c8, %c0_26, %c0_27] : memref<9x128x128xbf16, #tpu.memory_space<vmem>>, vector<1x128x128xbf16>
    %55 = vector.shape_cast %54 : vector<1x128x128xbf16> to vector<128x128xbf16>
    %cst_28 = arith.constant dense<0.000000e+00> : vector<256x128xf32>
    %56 = tpu.matmul %53, %55, %cst_28 {dimension_numbers = #tpu.dot_dimension_numbers<[1], [0], [0], [1], [0, 0, 1, 1], [], []>} : vector<256x128xbf16>, vector<128x128xbf16>, vector<256x128xf32> -> vector<256x128xf32>
    %57 = arith.addf %51, %56 : vector<256x128xf32>
    %c0_29 = arith.constant 0 : index
    %c0_30 = arith.constant 0 : index
    %58 = vector.load %arg4[%c0_29, %c0_30] : memref<1x128xf32, #tpu.memory_space<vmem>>, vector<1x128xf32>
    %59 = vector.broadcast %58 : vector<1x128xf32> to vector<256x128xf32>
    %60 = arith.addf %57, %59 : vector<256x128xf32>
    %cst_31 = arith.constant 0.000000e+00 : f32
    %61 = vector.broadcast %cst_31 : f32 to vector<256x128xf32>
    %62 = arith.maximumf %60, %61 : vector<256x128xf32>
    %63 = vector.shape_cast %62 : vector<256x128xf32> to vector<8x32x128xf32>
    %64 = arith.truncf %63 : vector<8x32x128xf32> to vector<8x32x128xbf16>
    %c0_32 = arith.constant 0 : index
    %c0_33 = arith.constant 0 : index
    %c0_34 = arith.constant 0 : index
    %c0_35 = arith.constant 0 : index
    %65 = vector.load %arg5[%c0_32, %c0_33, %c0_34, %c0_35] : memref<1x8x32x128xbf16, #tpu.memory_space<vmem>>, vector<1x8x32x128xbf16>
    %66 = vector.shape_cast %65 : vector<1x8x32x128xbf16> to vector<8x32x128xbf16>
    %67 = vector.shape_cast %64 : vector<8x32x128xbf16> to vector<1x8x32x128xbf16>
    tpu.vector_store %arg5[%c0_32, %c0_33, %c0_34, %c0_35], %67 {strides = array<i32>} : memref<1x8x32x128xbf16, #tpu.memory_space<vmem>>, vector<1x8x32x128xbf16>,
    return
  }
  func.func @transform_0(%arg0: i32, %arg1: i32) -> (i32, i32, i32, i32) {
    %c0_i32 = arith.constant 0 : i32
    %c0_i32_0 = arith.constant 0 : i32
    %c0_i32_1 = arith.constant 0 : i32
    %c0_i32_2 = arith.constant 0 : i32
    return %arg0, %c0_i32, %c0_i32_0, %c0_i32_1 : i32, i32, i32, i32
  }
  func.func @transform_1(%arg0: i32, %arg1: i32) -> (i32, i32, i32) {
    %c0_i32 = arith.constant 0 : i32
    %c0_i32_0 = arith.constant 0 : i32
    %c0_i32_1 = arith.constant 0 : i32
    %c0_i32_2 = arith.constant 0 : i32
    return %c0_i32, %c0_i32_0, %c0_i32_1 : i32, i32, i32
  }
  func.func @transform_2(%arg0: i32, %arg1: i32) -> (i32, i32) {
    %c0_i32 = arith.constant 0 : i32
    %c0_i32_0 = arith.constant 0 : i32
    %c0_i32_1 = arith.constant 0 : i32
    return %c0_i32, %c0_i32_0 : i32, i32
  }
  func.func @transform_3(%arg0: i32, %arg1: i32) -> (i32, i32, i32, i32) {
    %c0_i32 = arith.constant 0 : i32
    %c0_i32_0 = arith.constant 0 : i32
    %c0_i32_1 = arith.constant 0 : i32
    return %arg0, %arg1, %c0_i32, %c0_i32_0 : i32, i32, i32, i32
  }
}

module attributes {stable_mosaic.version = 11 : i64} {
  func.func @_conv3x3_kernel(%arg0: i32, %arg1: i32, %arg2: memref<1x34x34x128xbf16, #tpu.memory_space<vmem>>, %arg3: memref<9x128x128xbf16, #tpu.memory_space<vmem>>, %arg4: memref<1x128xf32, #tpu.memory_space<vmem>>, %arg5: memref<1x8x32x128xbf16, #tpu.memory_space<vmem>>, %arg6: memref<1x8x128xf32, #tpu.memory_space<vmem>>) attributes {dimension_semantics = [#tpu.dimension_semantics<parallel>, #tpu.dimension_semantics<arbitrary>], iteration_bounds = array<i64: 2, 4>, scalar_prefetch = 0 : i64, scratch_operands = 0 : i64, tpu.core_type = #tpu.core_type<tc>, window_params = [{transform_indices = @transform_0, window_bounds = array<i64: 1, 34, 34, 128>}, {pipeline_mode = #tpu.pipeline_mode<synchronous>, transform_indices = @transform_1, window_bounds = array<i64: 9, 128, 128>}, {pipeline_mode = #tpu.pipeline_mode<synchronous>, transform_indices = @transform_2, window_bounds = array<i64: 1, 128>}, {transform_indices = @transform_3, window_bounds = array<i64: 1, 8, 32, 128>}, {transform_indices = @transform_4, window_bounds = array<i64: 1, 8, 128>}]} {
    %c8_i32 = arith.constant 8 : i32
    %0 = arith.muli %arg1, %c8_i32 : i32
    %1 = tpu.assume_multiple %0, 8 : i32
    %c0 = arith.constant 0 : index
    %2 = arith.index_cast %1 : i32 to index
    %c0_0 = arith.constant 0 : index
    %c0_1 = arith.constant 0 : index
    %3 = vector.load %arg2[%c0, %2, %c0_0, %c0_1] : memref<1x34x34x128xbf16, #tpu.memory_space<vmem>>, vector<1x10x34x128xbf16>
    %4 = vector.shape_cast %3 : vector<1x10x34x128xbf16> to vector<10x34x128xbf16>
    %5 = vector.extract_strided_slice %4 {offsets = [0, 0, 0], sizes = [8, 32, 128], strides = [1, 1, 1]} : vector<10x34x128xbf16> to vector<8x32x128xbf16>
    %6 = vector.shape_cast %5 : vector<8x32x128xbf16> to vector<256x128xbf16>
    %c0_2 = arith.constant 0 : index
    %c0_3 = arith.constant 0 : index
    %c0_4 = arith.constant 0 : index
    %7 = vector.load %arg3[%c0_2, %c0_3, %c0_4] : memref<9x128x128xbf16, #tpu.memory_space<vmem>>, vector<1x128x128xbf16>
    %8 = vector.shape_cast %7 : vector<1x128x128xbf16> to vector<128x128xbf16>
    %cst = arith.constant dense<0.000000e+00> : vector<256x128xf32>
    %9 = tpu.matmul %6, %8, %cst {dimension_numbers = #tpu.dot_dimension_numbers<[1], [0], [0], [1], [0, 0, 1, 1], [], []>} : vector<256x128xbf16>, vector<128x128xbf16>, vector<256x128xf32> -> vector<256x128xf32>
    %10 = vector.extract_strided_slice %4 {offsets = [0, 1, 0], sizes = [8, 32, 128], strides = [1, 1, 1]} : vector<10x34x128xbf16> to vector<8x32x128xbf16>
    %11 = vector.shape_cast %10 : vector<8x32x128xbf16> to vector<256x128xbf16>
    %c1 = arith.constant 1 : index
    %c0_5 = arith.constant 0 : index
    %c0_6 = arith.constant 0 : index
    %12 = vector.load %arg3[%c1, %c0_5, %c0_6] : memref<9x128x128xbf16, #tpu.memory_space<vmem>>, vector<1x128x128xbf16>
    %13 = vector.shape_cast %12 : vector<1x128x128xbf16> to vector<128x128xbf16>
    %cst_7 = arith.constant dense<0.000000e+00> : vector<256x128xf32>
    %14 = tpu.matmul %11, %13, %cst_7 {dimension_numbers = #tpu.dot_dimension_numbers<[1], [0], [0], [1], [0, 0, 1, 1], [], []>} : vector<256x128xbf16>, vector<128x128xbf16>, vector<256x128xf32> -> vector<256x128xf32>
    %15 = arith.addf %9, %14 : vector<256x128xf32>
    %16 = vector.extract_strided_slice %4 {offsets = [0, 2, 0], sizes = [8, 32, 128], strides = [1, 1, 1]} : vector<10x34x128xbf16> to vector<8x32x128xbf16>
    %17 = vector.shape_cast %16 : vector<8x32x128xbf16> to vector<256x128xbf16>
    %c2 = arith.constant 2 : index
    %c0_8 = arith.constant 0 : index
    %c0_9 = arith.constant 0 : index
    %18 = vector.load %arg3[%c2, %c0_8, %c0_9] : memref<9x128x128xbf16, #tpu.memory_space<vmem>>, vector<1x128x128xbf16>
    %19 = vector.shape_cast %18 : vector<1x128x128xbf16> to vector<128x128xbf16>
    %cst_10 = arith.constant dense<0.000000e+00> : vector<256x128xf32>
    %20 = tpu.matmul %17, %19, %cst_10 {dimension_numbers = #tpu.dot_dimension_numbers<[1], [0], [0], [1], [0, 0, 1, 1], [], []>} : vector<256x128xbf16>, vector<128x128xbf16>, vector<256x128xf32> -> vector<256x128xf32>
    %21 = arith.addf %15, %20 : vector<256x128xf32>
    %22 = vector.extract_strided_slice %4 {offsets = [1, 0, 0], sizes = [8, 32, 128], strides = [1, 1, 1]} : vector<10x34x128xbf16> to vector<8x32x128xbf16>
    %23 = vector.shape_cast %22 : vector<8x32x128xbf16> to vector<256x128xbf16>
    %c3 = arith.constant 3 : index
    %c0_11 = arith.constant 0 : index
    %c0_12 = arith.constant 0 : index
    %24 = vector.load %arg3[%c3, %c0_11, %c0_12] : memref<9x128x128xbf16, #tpu.memory_space<vmem>>, vector<1x128x128xbf16>
    %25 = vector.shape_cast %24 : vector<1x128x128xbf16> to vector<128x128xbf16>
    %cst_13 = arith.constant dense<0.000000e+00> : vector<256x128xf32>
    %26 = tpu.matmul %23, %25, %cst_13 {dimension_numbers = #tpu.dot_dimension_numbers<[1], [0], [0], [1], [0, 0, 1, 1], [], []>} : vector<256x128xbf16>, vector<128x128xbf16>, vector<256x128xf32> -> vector<256x128xf32>
    %27 = arith.addf %21, %26 : vector<256x128xf32>
    %28 = vector.extract_strided_slice %4 {offsets = [1, 1, 0], sizes = [8, 32, 128], strides = [1, 1, 1]} : vector<10x34x128xbf16> to vector<8x32x128xbf16>
    %29 = vector.shape_cast %28 : vector<8x32x128xbf16> to vector<256x128xbf16>
    %c4 = arith.constant 4 : index
    %c0_14 = arith.constant 0 : index
    %c0_15 = arith.constant 0 : index
    %30 = vector.load %arg3[%c4, %c0_14, %c0_15] : memref<9x128x128xbf16, #tpu.memory_space<vmem>>, vector<1x128x128xbf16>
    %31 = vector.shape_cast %30 : vector<1x128x128xbf16> to vector<128x128xbf16>
    %cst_16 = arith.constant dense<0.000000e+00> : vector<256x128xf32>
    %32 = tpu.matmul %29, %31, %cst_16 {dimension_numbers = #tpu.dot_dimension_numbers<[1], [0], [0], [1], [0, 0, 1, 1], [], []>} : vector<256x128xbf16>, vector<128x128xbf16>, vector<256x128xf32> -> vector<256x128xf32>
    %33 = arith.addf %27, %32 : vector<256x128xf32>
    %34 = vector.extract_strided_slice %4 {offsets = [1, 2, 0], sizes = [8, 32, 128], strides = [1, 1, 1]} : vector<10x34x128xbf16> to vector<8x32x128xbf16>
    %35 = vector.shape_cast %34 : vector<8x32x128xbf16> to vector<256x128xbf16>
    %c5 = arith.constant 5 : index
    %c0_17 = arith.constant 0 : index
    %c0_18 = arith.constant 0 : index
    %36 = vector.load %arg3[%c5, %c0_17, %c0_18] : memref<9x128x128xbf16, #tpu.memory_space<vmem>>, vector<1x128x128xbf16>
    %37 = vector.shape_cast %36 : vector<1x128x128xbf16> to vector<128x128xbf16>
    %cst_19 = arith.constant dense<0.000000e+00> : vector<256x128xf32>
    %38 = tpu.matmul %35, %37, %cst_19 {dimension_numbers = #tpu.dot_dimension_numbers<[1], [0], [0], [1], [0, 0, 1, 1], [], []>} : vector<256x128xbf16>, vector<128x128xbf16>, vector<256x128xf32> -> vector<256x128xf32>
    %39 = arith.addf %33, %38 : vector<256x128xf32>
    %40 = vector.extract_strided_slice %4 {offsets = [2, 0, 0], sizes = [8, 32, 128], strides = [1, 1, 1]} : vector<10x34x128xbf16> to vector<8x32x128xbf16>
    %41 = vector.shape_cast %40 : vector<8x32x128xbf16> to vector<256x128xbf16>
    %c6 = arith.constant 6 : index
    %c0_20 = arith.constant 0 : index
    %c0_21 = arith.constant 0 : index
    %42 = vector.load %arg3[%c6, %c0_20, %c0_21] : memref<9x128x128xbf16, #tpu.memory_space<vmem>>, vector<1x128x128xbf16>
    %43 = vector.shape_cast %42 : vector<1x128x128xbf16> to vector<128x128xbf16>
    %cst_22 = arith.constant dense<0.000000e+00> : vector<256x128xf32>
    %44 = tpu.matmul %41, %43, %cst_22 {dimension_numbers = #tpu.dot_dimension_numbers<[1], [0], [0], [1], [0, 0, 1, 1], [], []>} : vector<256x128xbf16>, vector<128x128xbf16>, vector<256x128xf32> -> vector<256x128xf32>
    %45 = arith.addf %39, %44 : vector<256x128xf32>
    %46 = vector.extract_strided_slice %4 {offsets = [2, 1, 0], sizes = [8, 32, 128], strides = [1, 1, 1]} : vector<10x34x128xbf16> to vector<8x32x128xbf16>
    %47 = vector.shape_cast %46 : vector<8x32x128xbf16> to vector<256x128xbf16>
    %c7 = arith.constant 7 : index
    %c0_23 = arith.constant 0 : index
    %c0_24 = arith.constant 0 : index
    %48 = vector.load %arg3[%c7, %c0_23, %c0_24] : memref<9x128x128xbf16, #tpu.memory_space<vmem>>, vector<1x128x128xbf16>
    %49 = vector.shape_cast %48 : vector<1x128x128xbf16> to vector<128x128xbf16>
    %cst_25 = arith.constant dense<0.000000e+00> : vector<256x128xf32>
    %50 = tpu.matmul %47, %49, %cst_25 {dimension_numbers = #tpu.dot_dimension_numbers<[1], [0], [0], [1], [0, 0, 1, 1], [], []>} : vector<256x128xbf16>, vector<128x128xbf16>, vector<256x128xf32> -> vector<256x128xf32>
    %51 = arith.addf %45, %50 : vector<256x128xf32>
    %52 = vector.extract_strided_slice %4 {offsets = [2, 2, 0], sizes = [8, 32, 128], strides = [1, 1, 1]} : vector<10x34x128xbf16> to vector<8x32x128xbf16>
    %53 = vector.shape_cast %52 : vector<8x32x128xbf16> to vector<256x128xbf16>
    %c8 = arith.constant 8 : index
    %c0_26 = arith.constant 0 : index
    %c0_27 = arith.constant 0 : index
    %54 = vector.load %arg3[%c8, %c0_26, %c0_27] : memref<9x128x128xbf16, #tpu.memory_space<vmem>>, vector<1x128x128xbf16>
    %55 = vector.shape_cast %54 : vector<1x128x128xbf16> to vector<128x128xbf16>
    %cst_28 = arith.constant dense<0.000000e+00> : vector<256x128xf32>
    %56 = tpu.matmul %53, %55, %cst_28 {dimension_numbers = #tpu.dot_dimension_numbers<[1], [0], [0], [1], [0, 0, 1, 1], [], []>} : vector<256x128xbf16>, vector<128x128xbf16>, vector<256x128xf32> -> vector<256x128xf32>
    %57 = arith.addf %51, %56 : vector<256x128xf32>
    %c0_29 = arith.constant 0 : index
    %c0_30 = arith.constant 0 : index
    %58 = vector.load %arg4[%c0_29, %c0_30] : memref<1x128xf32, #tpu.memory_space<vmem>>, vector<1x128xf32>
    %59 = vector.broadcast %58 : vector<1x128xf32> to vector<256x128xf32>
    %60 = arith.addf %57, %59 : vector<256x128xf32>
    %61 = vector.shape_cast %60 : vector<256x128xf32> to vector<8x32x128xf32>
    %62 = arith.truncf %61 : vector<8x32x128xf32> to vector<8x32x128xbf16>
    %c0_31 = arith.constant 0 : index
    %c0_32 = arith.constant 0 : index
    %c0_33 = arith.constant 0 : index
    %c0_34 = arith.constant 0 : index
    %63 = vector.load %arg5[%c0_31, %c0_32, %c0_33, %c0_34] : memref<1x8x32x128xbf16, #tpu.memory_space<vmem>>, vector<1x8x32x128xbf16>
    %64 = vector.shape_cast %63 : vector<1x8x32x128xbf16> to vector<8x32x128xbf16>
    %65 = vector.shape_cast %62 : vector<8x32x128xbf16> to vector<1x8x32x128xbf16>
    tpu.vector_store %arg5[%c0_31, %c0_32, %c0_33, %c0_34], %65 {strides = array<i32>} : memref<1x8x32x128xbf16, #tpu.memory_space<vmem>>, vector<1x8x32x128xbf16>,
    %cst_35 = arith.constant dense<0.000000e+00> : vector<128xf32>
    %66 = vector.multi_reduction <add>, %60, %cst_35 [0] : vector<256x128xf32> to vector<128xf32>
    %67 = vector.shape_cast %66 : vector<128xf32> to vector<1x128xf32>
    %c0_36 = arith.constant 0 : index
    %c0_37 = arith.constant 0 : index
    %c0_38 = arith.constant 0 : index
    %68 = vector.load %arg6[%c0_36, %c0_37, %c0_38] : memref<1x8x128xf32, #tpu.memory_space<vmem>>, vector<1x1x128xf32>
    %69 = vector.shape_cast %68 : vector<1x1x128xf32> to vector<1x128xf32>
    %70 = vector.shape_cast %67 : vector<1x128xf32> to vector<1x1x128xf32>
    tpu.vector_store %arg6[%c0_36, %c0_37, %c0_38], %70 {strides = array<i32>} : memref<1x8x128xf32, #tpu.memory_space<vmem>>, vector<1x1x128xf32>,
    %71 = arith.mulf %60, %60 : vector<256x128xf32>
    %cst_39 = arith.constant dense<0.000000e+00> : vector<128xf32>
    %72 = vector.multi_reduction <add>, %71, %cst_39 [0] : vector<256x128xf32> to vector<128xf32>
    %73 = vector.shape_cast %72 : vector<128xf32> to vector<1x128xf32>
    %c0_40 = arith.constant 0 : index
    %c1_41 = arith.constant 1 : index
    %c0_42 = arith.constant 0 : index
    %74 = vector.load %arg6[%c0_40, %c1_41, %c0_42] : memref<1x8x128xf32, #tpu.memory_space<vmem>>, vector<1x1x128xf32>
    %75 = vector.shape_cast %74 : vector<1x1x128xf32> to vector<1x128xf32>
    %76 = vector.shape_cast %73 : vector<1x128xf32> to vector<1x1x128xf32>
    tpu.vector_store %arg6[%c0_40, %c1_41, %c0_42], %76 {strides = array<i32>} : memref<1x8x128xf32, #tpu.memory_space<vmem>>, vector<1x1x128xf32>,
    %cst_43 = arith.constant 0.000000e+00 : f32
    %77 = vector.broadcast %cst_43 : f32 to vector<6x128xf32>
    %c0_44 = arith.constant 0 : index
    %c2_45 = arith.constant 2 : index
    %c0_46 = arith.constant 0 : index
    %78 = vector.load %arg6[%c0_44, %c2_45, %c0_46] : memref<1x8x128xf32, #tpu.memory_space<vmem>>, vector<1x6x128xf32>
    %79 = vector.shape_cast %78 : vector<1x6x128xf32> to vector<6x128xf32>
    %80 = vector.shape_cast %77 : vector<6x128xf32> to vector<1x6x128xf32>
    tpu.vector_store %arg6[%c0_44, %c2_45, %c0_46], %80 {strides = array<i32>} : memref<1x8x128xf32, #tpu.memory_space<vmem>>, vector<1x6x128xf32>,
    return
  }
  func.func @transform_0(%arg0: i32, %arg1: i32) -> (i32, i32, i32, i32) {
    %c0_i32 = arith.constant 0 : i32
    %c0_i32_0 = arith.constant 0 : i32
    %c0_i32_1 = arith.constant 0 : i32
    %c0_i32_2 = arith.constant 0 : i32
    return %arg0, %c0_i32, %c0_i32_0, %c0_i32_1 : i32, i32, i32, i32
  }
  func.func @transform_1(%arg0: i32, %arg1: i32) -> (i32, i32, i32) {
    %c0_i32 = arith.constant 0 : i32
    %c0_i32_0 = arith.constant 0 : i32
    %c0_i32_1 = arith.constant 0 : i32
    %c0_i32_2 = arith.constant 0 : i32
    return %c0_i32, %c0_i32_0, %c0_i32_1 : i32, i32, i32
  }
  func.func @transform_2(%arg0: i32, %arg1: i32) -> (i32, i32) {
    %c0_i32 = arith.constant 0 : i32
    %c0_i32_0 = arith.constant 0 : i32
    %c0_i32_1 = arith.constant 0 : i32
    return %c0_i32, %c0_i32_0 : i32, i32
  }
  func.func @transform_3(%arg0: i32, %arg1: i32) -> (i32, i32, i32, i32) {
    %c0_i32 = arith.constant 0 : i32
    %c0_i32_0 = arith.constant 0 : i32
    %c0_i32_1 = arith.constant 0 : i32
    return %arg0, %arg1, %c0_i32, %c0_i32_0 : i32, i32, i32, i32
  }
  func.func @transform_4(%arg0: i32, %arg1: i32) -> (i32, i32, i32) {
    %c4_i32 = arith.constant 4 : i32
    %0 = arith.muli %arg0, %c4_i32 : i32
    %1 = arith.addi %0, %arg1 : i32
    %c0_i32 = arith.constant 0 : i32
    %c0_i32_0 = arith.constant 0 : i32
    %c0_i32_1 = arith.constant 0 : i32
    return %1, %c0_i32, %c0_i32_0 : i32, i32, i32
  }
}

module attributes {stable_mosaic.version = 11 : i64} {
  func.func @_bn_relu_fc_kernel(%arg0: i32, %arg1: memref<256x128xbf16, #tpu.memory_space<vmem>>, %arg2: memref<1x128xf32, #tpu.memory_space<vmem>>, %arg3: memref<1x128xf32, #tpu.memory_space<vmem>>, %arg4: memref<128x128xbf16, #tpu.memory_space<vmem>>, %arg5: memref<1x128xf32, #tpu.memory_space<vmem>>, %arg6: memref<256x128xf32, #tpu.memory_space<vmem>>) attributes {dimension_semantics = [#tpu.dimension_semantics<parallel>], iteration_bounds = array<i64: 8>, scalar_prefetch = 0 : i64, scratch_operands = 0 : i64, tpu.core_type = #tpu.core_type<tc>, window_params = [{transform_indices = @transform_0, window_bounds = array<i64: 256, 128>}, {pipeline_mode = #tpu.pipeline_mode<synchronous>, transform_indices = @transform_1, window_bounds = array<i64: 1, 128>}, {pipeline_mode = #tpu.pipeline_mode<synchronous>, transform_indices = @transform_2, window_bounds = array<i64: 1, 128>}, {pipeline_mode = #tpu.pipeline_mode<synchronous>, transform_indices = @transform_3, window_bounds = array<i64: 128, 128>}, {pipeline_mode = #tpu.pipeline_mode<synchronous>, transform_indices = @transform_4, window_bounds = array<i64: 1, 128>}, {transform_indices = @transform_5, window_bounds = array<i64: 256, 128>}]} {
    %c0 = arith.constant 0 : index
    %c0_0 = arith.constant 0 : index
    %0 = vector.load %arg1[%c0, %c0_0] : memref<256x128xbf16, #tpu.memory_space<vmem>>, vector<256x128xbf16>
    %1 = arith.extf %0 : vector<256x128xbf16> to vector<256x128xf32>
    %c0_1 = arith.constant 0 : index
    %c0_2 = arith.constant 0 : index
    %2 = vector.load %arg2[%c0_1, %c0_2] : memref<1x128xf32, #tpu.memory_space<vmem>>, vector<1x128xf32>
    %3 = vector.broadcast %2 : vector<1x128xf32> to vector<256x128xf32>
    %4 = arith.mulf %1, %3 : vector<256x128xf32>
    %c0_3 = arith.constant 0 : index
    %c0_4 = arith.constant 0 : index
    %5 = vector.load %arg3[%c0_3, %c0_4] : memref<1x128xf32, #tpu.memory_space<vmem>>, vector<1x128xf32>
    %6 = vector.broadcast %5 : vector<1x128xf32> to vector<256x128xf32>
    %7 = arith.addf %4, %6 : vector<256x128xf32>
    %cst = arith.constant 0.000000e+00 : f32
    %8 = vector.broadcast %cst : f32 to vector<256x128xf32>
    %9 = arith.maximumf %7, %8 : vector<256x128xf32>
    %10 = arith.truncf %9 : vector<256x128xf32> to vector<256x128xbf16>
    %c0_5 = arith.constant 0 : index
    %c0_6 = arith.constant 0 : index
    %11 = vector.load %arg4[%c0_5, %c0_6] : memref<128x128xbf16, #tpu.memory_space<vmem>>, vector<128x128xbf16>
    %cst_7 = arith.constant dense<0.000000e+00> : vector<256x128xf32>
    %12 = tpu.matmul %10, %11, %cst_7 {dimension_numbers = #tpu.dot_dimension_numbers<[1], [0], [0], [1], [0, 0, 1, 1], [], []>} : vector<256x128xbf16>, vector<128x128xbf16>, vector<256x128xf32> -> vector<256x128xf32>
    %c0_8 = arith.constant 0 : index
    %c0_9 = arith.constant 0 : index
    %13 = vector.load %arg5[%c0_8, %c0_9] : memref<1x128xf32, #tpu.memory_space<vmem>>, vector<1x128xf32>
    %14 = vector.broadcast %13 : vector<1x128xf32> to vector<256x128xf32>
    %15 = arith.addf %12, %14 : vector<256x128xf32>
    %c0_10 = arith.constant 0 : index
    %c0_11 = arith.constant 0 : index
    %16 = vector.load %arg6[%c0_10, %c0_11] : memref<256x128xf32, #tpu.memory_space<vmem>>, vector<256x128xf32>
    tpu.vector_store %arg6[%c0_10, %c0_11], %15 {strides = array<i32>} : memref<256x128xf32, #tpu.memory_space<vmem>>, vector<256x128xf32>,
    return
  }
  func.func @transform_0(%arg0: i32) -> (i32, i32) {
    %c0_i32 = arith.constant 0 : i32
    %c0_i32_0 = arith.constant 0 : i32
    return %arg0, %c0_i32 : i32, i32
  }
  func.func @transform_1(%arg0: i32) -> (i32, i32) {
    %c0_i32 = arith.constant 0 : i32
    %c0_i32_0 = arith.constant 0 : i32
    %c0_i32_1 = arith.constant 0 : i32
    return %c0_i32, %c0_i32_0 : i32, i32
  }
  func.func @transform_2(%arg0: i32) -> (i32, i32) {
    %c0_i32 = arith.constant 0 : i32
    %c0_i32_0 = arith.constant 0 : i32
    %c0_i32_1 = arith.constant 0 : i32
    return %c0_i32, %c0_i32_0 : i32, i32
  }
  func.func @transform_3(%arg0: i32) -> (i32, i32) {
    %c0_i32 = arith.constant 0 : i32
    %c0_i32_0 = arith.constant 0 : i32
    %c0_i32_1 = arith.constant 0 : i32
    return %c0_i32, %c0_i32_0 : i32, i32
  }
  func.func @transform_4(%arg0: i32) -> (i32, i32) {
    %c0_i32 = arith.constant 0 : i32
    %c0_i32_0 = arith.constant 0 : i32
    %c0_i32_1 = arith.constant 0 : i32
    return %c0_i32, %c0_i32_0 : i32, i32
  }
  func.func @transform_5(%arg0: i32) -> (i32, i32) {
    %c0_i32 = arith.constant 0 : i32
    %c0_i32_0 = arith.constant 0 : i32
    return %arg0, %c0_i32 : i32, i32
  }
}

</mosaic_0001>

<llo_original>
// kernel: pose_forward_pallas.4
$region0: #{pose_forward_pallas.4}
  #allocation0 [shape = 'u32[]', space=smem, size = 0x4, offset = 0x4, fixed_abs, tag = 'smem constant byte address 0x4 - core index']
  #allocation1 [shape = 'u32[144,128]{1,0:T(1,128)}', space=vmem, size = 0x12000, scoped, tag = 'internal scratch']
  %s0 = inlined_call_operand.vmem [shape: bf16[2,18,18,128], index: 0, kind: input, shape index: {}]
  %s1 = inlined_call_operand.vmem [shape: bf16[9,128,128], index: 1, kind: input, shape index: {}]
  %s2 = inlined_call_operand.vmem [shape: f32[1,128], index: 2, kind: input, shape index: {}]
  %s3 = inlined_call_operand.vmem [shape: bf16[2,16,16,128], index: 3, kind: output, shape index: {}]
  %s4 = sld [smem:[#allocation0]]
  $region45: #{pose_forward_pallas.4} parent=0
    _
  %s6 = ssub.s32 1, %s4
  %s7 = scalar_select 0, %s6, %s4
  loop: start=0, step=1, limit=10
  $region2: #{pose_forward_pallas.4} parent=0 // loop_pre_header
    _
  $region3: #{pose_forward_pallas.4} parent=0 // loop_header
    %s9 = sphi 0, %s13
    %p10 = scmp.ge.s32.totalorder %s9, 10
    %s16 = sphi 0, %s28
    %s17 = sphi 0, %s24
    %s18 = sphi 0, %s16
    %s19 = sphi 0, %s17
    %s20 = sphi 0, %s18
    %s21 = sphi 0, %s19
    %s31 = sphi 0, %s33
    %s34 = sphi 0, %s31
    %s35 = sphi 0, %s34
    %s51 = sphi 0, %s35
    %s55 = sphi 0, %s55
    %s57 = sphi 0, %s55
    %s58 = sphi 0, %s57
    %s72 = sphi 0, %s58
    %s76 = sphi 0, %s76
    %s78 = sphi 0, %s76
    %s79 = sphi 0, %s78
    %s93 = sphi 0, %s79
    %s101 = sphi 0, %s103
    %s104 = sphi 0, %s101
    %s105 = sphi 0, %s104
    %s121 = sphi 0, %s105
  $region4: #{pose_forward_pallas.4} parent=0 // loop_header_branch
    %12 = sbr.rel (%p10) target = $region8
  $region5: #{pose_forward_pallas.4} parent=0 // loop_body
    %s14 = ssub.s32 %s9, 1
    %s15 = ssub.s32 %s9, 2
    %s22 = sadd.s32 1, %s17
    %p23 = scmp.ge.s32.totalorder %s22, 4
    %s24 = scalar_select %p23, 0, %s22
    %s25 = sadd.s32 1, %s16
    %s26 = scalar_select %p23, %s25, %s16
    %p27 = scmp.ge.s32.totalorder %s26, 2
    %s28 = scalar_select %p27, 0, %s26
    %s29 = ssub.s32 %s16, %s28
    %p30 = scmp.eq.s32.totalorder %s29, 0
    %s32 = sadd.s32 %s31, 1
    %s33 = scalar_select %p30, %s31, %s32
    %p36 = pneg %p30
    %p37 = scmp.eq.s32.totalorder %s9, 7
    %p38 = por %p36, %p37
    %p39 = scmp.ne.s32.totalorder %s31, %s34
    %p40 = scmp.eq.s32.totalorder %s9, 0
    %p41 = por %p39, %p40
    %p42 = scmp.ne.s32.totalorder %s31, %s34
    %p43 = scmp.eq.s32.totalorder %s14, 7
    %p44 = por %p42, %p43
    %p45 = scmp.ne.s32.totalorder %s34, %s35
    %p46 = scmp.eq.s32.totalorder %s14, 0
    %p47 = por %p45, %p46
    %p48 = scmp.ne.s32.totalorder %s34, %s35
    %p49 = scmp.eq.s32.totalorder %s15, 7
    %p50 = por %p48, %p49
    %p52 = scmp.ne.s32.totalorder %s35, %s51
    %p53 = scmp.eq.s32.totalorder %s15, 0
    %p54 = por %p52, %p53
    %s56 = sadd.s32 %s55, 1
    %p59 = scmp.eq.s32.totalorder %s9, 7
    %p60 = scmp.ne.s32.totalorder %s55, %s57
    %p61 = scmp.eq.s32.totalorder %s9, 0
    %p62 = por %p60, %p61
    %p63 = scmp.ne.s32.totalorder %s55, %s57
    %p64 = scmp.eq.s32.totalorder %s14, 7
    %p65 = por %p63, %p64
    %p66 = scmp.ne.s32.totalorder %s57, %s58
    %p67 = scmp.eq.s32.totalorder %s14, 0
    %p68 = por %p66, %p67
    %p69 = scmp.ne.s32.totalorder %s57, %s58
    %p70 = scmp.eq.s32.totalorder %s15, 7
    %p71 = por %p69, %p70
    %p73 = scmp.ne.s32.totalorder %s58, %s72
    %p74 = scmp.eq.s32.totalorder %s15, 0
    %p75 = por %p73, %p74
    %s77 = sadd.s32 %s76, 1
    %p80 = scmp.eq.s32.totalorder %s9, 7
    %p81 = scmp.ne.s32.totalorder %s76, %s78
    %p82 = scmp.eq.s32.totalorder %s9, 0
    %p83 = por %p81, %p82
    %p84 = scmp.ne.s32.totalorder %s76, %s78
    %p85 = scmp.eq.s32.totalorder %s14, 7
    %p86 = por %p84, %p85
    %p87 = scmp.ne.s32.totalorder %s78, %s79
    %p88 = scmp.eq.s32.totalorder %s14, 0
    %p89 = por %p87, %p88
    %p90 = scmp.ne.s32.totalorder %s78, %s79
    %p91 = scmp.eq.s32.totalorder %s15, 7
    %p92 = por %p90, %p91
    %p94 = scmp.ne.s32.totalorder %s79, %s93
    %p95 = scmp.eq.s32.totalorder %s15, 0
    %p96 = por %p94, %p95
    %s97 = ssub.s32 %s16, %s28
    %s98 = ssub.s32 %s17, %s24
    %s99 = sor.u32 %s97, %s98
    %p100 = scmp.eq.s32.totalorder %s99, 0
    %s102 = sadd.s32 %s101, 1
    %s103 = scalar_select %p100, %s101, %s102
    %p106 = pneg %p100
    %p107 = scmp.eq.s32.totalorder %s9, 7
    %p108 = por %p106, %p107
    %p109 = scmp.ne.s32.totalorder %s101, %s104
    %p110 = scmp.eq.s32.totalorder %s9, 0
    %p111 = por %p109, %p110
    %p112 = scmp.ne.s32.totalorder %s101, %s104
    %p113 = scmp.eq.s32.totalorder %s14, 7
    %p114 = por %p112, %p113
    %p115 = scmp.ne.s32.totalorder %s104, %s105
    %p116 = scmp.eq.s32.totalorder %s14, 0
    %p117 = por %p115, %p116
    %p118 = scmp.ne.s32.totalorder %s104, %s105
    %p119 = scmp.eq.s32.totalorder %s15, 7
    %p120 = por %p118, %p119
    %p122 = scmp.ne.s32.totalorder %s105, %s121
    %p123 = scmp.eq.s32.totalorder %s15, 0
    %p124 = por %p122, %p123
    %p125 = scmp.le.s32.totalorder 1, %s9
    %p126 = scmp.lt.s32.totalorder %s9, 9
    %p127 = pnand %p125, %p126
    %p128 = pneg %p127
    // Predicated region
    $region9: #{pose_forward_pallas.4} parent=5 // pred_check
      _
    $region10: #{pose_forward_pallas.4} parent=5 // pred_check_branch
      %130 = sbr.rel (%p127) target = $region12
    $region11: #{pose_forward_pallas.4} parent=5 // pred_region
      %s131 = ssub.s32 %s9, 1
      // Predicated region
      $region13: #{pose_forward_pallas.4} parent=11 // pred_check
        %p132 = pneg %p68
      $region14: #{pose_forward_pallas.4} parent=11 // pred_check_branch
        %134 = sbr.rel (%p132) target = $region16
      $region15: #{pose_forward_pallas.4} parent=11 // pred_region
        _
      $region16: #{pose_forward_pallas.4} parent=11 // pred_fallthru
        _
      // Predicated region
      $region17: #{pose_forward_pallas.4} parent=11 // pred_check
        %p135 = pneg %p89
      $region18: #{pose_forward_pallas.4} parent=11 // pred_check_branch
        %137 = sbr.rel (%p135) target = $region20
      $region19: #{pose_forward_pallas.4} parent=11 // pred_region
        _
      $region20: #{pose_forward_pallas.4} parent=11 // pred_fallthru
        _
    $region12: #{pose_forward_pallas.4} parent=5 // pred_fallthru
      _
    %p138 = scmp.lt.s32.totalorder %s9, 8
    // Predicated region
    $region21: #{pose_forward_pallas.4} parent=5 // pred_check
      %p139 = pneg %p138
    $region22: #{pose_forward_pallas.4} parent=5 // pred_check_branch
      %141 = sbr.rel (%p139) target = $region24
    $region23: #{pose_forward_pallas.4} parent=5 // pred_region
      // Predicated region
      $region25: #{pose_forward_pallas.4} parent=23 // pred_check
        %p142 = pneg %p41
      $region26: #{pose_forward_pallas.4} parent=23 // pred_check_branch
        %144 = sbr.rel (%p142) target = $region28
      $region27: #{pose_forward_pallas.4} parent=23 // pred_region
        %p145 = scmp.lt.s32.totalorder %s16, 1
        %s146 = scalar_select %p145, %s16, 1
        %s147 = smul.addr %s146, 54
        %s148 = smul.addr %s147, 4
        %s149 = scalar_lea.vmem %s0, %s148
      $region28: #{pose_forward_pallas.4} parent=23 // pred_fallthru
        _
    $region24: #{pose_forward_pallas.4} parent=5 // pred_fallthru
      _
    %p150 = scmp.le.s32.totalorder 1, %s9
    %p151 = scmp.lt.s32.totalorder %s9, 9
    %p152 = pnand %p150, %p151
    %p153 = pneg %p152
    // Predicated region
    $region29: #{pose_forward_pallas.4} parent=5 // pred_check
      _
    $region30: #{pose_forward_pallas.4} parent=5 // pred_check_branch
      %155 = sbr.rel (%p152) target = $region32
    $region31: #{pose_forward_pallas.4} parent=5 // pred_region
      %s156 = ssub.s32 %s9, 1
      %p157 = scmp.lt.s32.totalorder %s18, 1
      %s158 = scalar_select %p157, %s18, 1
      %s159 = smul.addr %s158, 54
      %s160 = smul.addr %s159, 4
      %s161 = scalar_lea.vmem %s0, %s160
      %p162 = pneg %p47
      %p163 = pneg %p44
      %p164 = pneg %p68
      %p165 = pneg %p65
      %p166 = pneg %p89
      %p167 = pneg %p86
      %p168 = pneg %p117
      %p169 = pneg %p114
      %s170 = smul.u32 4, %s19
      %p171 = scmp.lt.s32.totalorder %s18, 1
      %s172 = scalar_select %p171, %s18, 1
      %p173 = scmp.lt.s32.totalorder %s170, 15
      %s174 = scalar_select %p173, %s170, 15
      %s175 = smul.addr %s174, 2
      %s176 = smul.addr %s172, 32
      %s177 = sadd.s32 %s175, %s176
      %s178 = smul.addr %s177, 4
      %s179 = scalar_lea.vmem %s3, %s178
      %p180 = scmp.lt.s32.totalorder %s18, 1
      %s181 = scalar_select %p180, %s18, 1
      %s182 = smul.addr %s181, 54
      %s183 = smul.addr %s182, 4
      %s184 = scalar_lea.vmem %s0, %s183
      %s185 = smul.u32 4, %s19
      %p186 = scmp.lt.s32.totalorder %s18, 1
      %s187 = scalar_select %p186, %s18, 1
      %p188 = scmp.lt.s32.totalorder %s185, 15
      %s189 = scalar_select %p188, %s185, 15
      %s190 = smul.addr %s189, 2
      %s191 = smul.addr %s187, 32
      %s192 = sadd.s32 %s190, %s191
      %s193 = smul.addr %s192, 4
      %s194 = scalar_lea.vmem %s3, %s193
      %s195 = smul.u32 4, %s19
      %s197 = smul.u32 %s19, 4
      %s198 = smul.u32 %s197, 3
      %s199 = smul.addr %s198, 4
      %s200 = scalar_lea.vmem %s184, %s199
      %v201 = vld [vmem:[%s200] sm:$0xf]
      %v202 = vld [vmem:[%s200 + $0x4] sm:$0xf]
      %v203 = vld [vmem:[%s200 + $0x8] sm:$0x1]
      %v204 = vld [vmem:[%s200 + $0xc] sm:$0xf]
      %v205 = vld [vmem:[%s200 + $0x10] sm:$0xf]
      %v206 = vld [vmem:[%s200 + $0x14] sm:$0x1]
      %v207 = vld [vmem:[%s200 + $0x18] sm:$0xf]
      %v208 = vld [vmem:[%s200 + $0x1c] sm:$0xf]
      %v209 = vld [vmem:[%s200 + $0x20] sm:$0x1]
      %v210 = vld [vmem:[%s200 + $0x24] sm:$0xf]
      %v211 = vld [vmem:[%s200 + $0x28] sm:$0xf]
      %v212 = vld [vmem:[%s200 + $0x2c] sm:$0x1]
      %v213 = vld [vmem:[%s200 + $0x30] sm:$0xf]
      %v214 = vld [vmem:[%s200 + $0x34] sm:$0xf]
      %v215 = vld [vmem:[%s200 + $0x38] sm:$0x1]
      %v216 = vld [vmem:[%s200 + $0x3c] sm:$0xf]
      %v217 = vld [vmem:[%s200 + $0x40] sm:$0xf]
      %v218 = vld [vmem:[%s200 + $0x44] sm:$0x1]
      %v219 = vld [vmem:[%s1] sm:$0xf]
      %v220 = vld [vmem:[%s1 + $0x4] sm:$0xf]
      %v221 = vld [vmem:[%s1 + $0x8] sm:$0xf]
      %v222 = vld [vmem:[%s1 + $0xc] sm:$0xf]
      %v223 = vld [vmem:[%s1 + $0x10] sm:$0xf]
      %v224 = vld [vmem:[%s1 + $0x14] sm:$0xf]
      %v225 = vld [vmem:[%s1 + $0x18] sm:$0xf]
      %v226 = vld [vmem:[%s1 + $0x1c] sm:$0xf]
      %v227 = vld [vmem:[%s1 + $0x20] sm:$0xf]
      %v228 = vld [vmem:[%s1 + $0x24] sm:$0xf]
      %v229 = vld [vmem:[%s1 + $0x28] sm:$0xf]
      %v230 = vld [vmem:[%s1 + $0x2c] sm:$0xf]
      %v231 = vld [vmem:[%s1 + $0x30] sm:$0xf]
      %v232 = vld [vmem:[%s1 + $0x34] sm:$0xf]
      %v233 = vld [vmem:[%s1 + $0x38] sm:$0xf]
      %v234 = vld [vmem:[%s1 + $0x3c] sm:$0xf]
      %vm235 = vsmask.f32 3328
      %vm236 = vsmask.f32 7440
      %vm237 = vmor %vm235, %vm236
      %v239 = vshrl.u32 %v201, 16
      %v241 = vrot.slane %v239, 4
      %v242 = vshll.u32 %v201, 16
      %v244 = vrot.slane %v242, 5
      %v245 = vor.u32 %v241, %v244
      %v246 = vrot.slane %v245, 4
      %v248 = vshll.u32 %v202, 16
      %v250 = vrot.slane %v248, 5
      %v251 = vsel %vm237, %v246, %v250
      %v252 = vshrl.u32 %v202, 16
      %v254 = vrot.slane %v252, 4
      %v255 = vor.u32 %v254, %v250
      %v256 = vrot.slane %v255, 4
      %v258 = vshll.u32 %v203, 16
      %v260 = vrot.slane %v258, 5
      %v261 = vsel %vm237, %v256, %v260
      %v263 = vshrl.u32 %v204, 16
      %v265 = vrot.slane %v263, 4
      %v266 = vshll.u32 %v204, 16
      %v268 = vrot.slane %v266, 5
      %v269 = vor.u32 %v265, %v268
      %v270 = vrot.slane %v269, 4
      %v272 = vshll.u32 %v205, 16
      %v274 = vrot.slane %v272, 5
      %v275 = vsel %vm237, %v270, %v274
      %v276 = vshrl.u32 %v205, 16
      %v278 = vrot.slane %v276, 4
      %v279 = vor.u32 %v278, %v274
      %v280 = vrot.slane %v279, 4
      %v282 = vshll.u32 %v206, 16
      %v284 = vrot.slane %v282, 5
      %v285 = vsel %vm237, %v280, %v284
      %v287 = vshrl.u32 %v207, 16
      %v289 = vrot.slane %v287, 4
      %v290 = vshll.u32 %v207, 16
      %v292 = vrot.slane %v290, 5
      %v293 = vor.u32 %v289, %v292
      %v294 = vrot.slane %v293, 4
      %v296 = vshll.u32 %v208, 16
      %v298 = vrot.slane %v296, 5
      %v299 = vsel %vm237, %v294, %v298
      %v300 = vshrl.u32 %v208, 16
      %v302 = vrot.slane %v300, 4
      %v303 = vor.u32 %v302, %v298
      %v304 = vrot.slane %v303, 4
      %v306 = vshll.u32 %v209, 16
      %v308 = vrot.slane %v306, 5
      %v309 = vsel %vm237, %v304, %v308
      %v311 = vshrl.u32 %v210, 16
      %v313 = vrot.slane %v311, 4
      %v314 = vshll.u32 %v210, 16
      %v316 = vrot.slane %v314, 5
      %v317 = vor.u32 %v313, %v316
      %v318 = vrot.slane %v317, 4
      %v320 = vshll.u32 %v211, 16
      %v322 = vrot.slane %v320, 5
      %v323 = vsel %vm237, %v318, %v322
      %v324 = vshrl.u32 %v211, 16
      %v326 = vrot.slane %v324, 4
      %v327 = vor.u32 %v326, %v322
      %v328 = vrot.slane %v327, 4
      %v330 = vshll.u32 %v212, 16
      %v332 = vrot.slane %v330, 5
      %v333 = vsel %vm237, %v328, %v332
      %s334 = scalar_lea.vmem %s1, 64
      %v335 = vld [vmem:[%s334] sm:$0xf]
      %v336 = vld [vmem:[%s334 + $0x4] sm:$0xf]
      %v337 = vld [vmem:[%s334 + $0x8] sm:$0xf]
      %v338 = vld [vmem:[%s334 + $0xc] sm:$0xf]
      %v339 = vld [vmem:[%s334 + $0x10] sm:$0xf]
      %v340 = vld [vmem:[%s334 + $0x14] sm:$0xf]
      %v341 = vld [vmem:[%s334 + $0x18] sm:$0xf]
      %v342 = vld [vmem:[%s334 + $0x1c] sm:$0xf]
      %v343 = vld [vmem:[%s334 + $0x20] sm:$0xf]
      %v344 = vld [vmem:[%s334 + $0x24] sm:$0xf]
      %v345 = vld [vmem:[%s334 + $0x28] sm:$0xf]
      %v346 = vld [vmem:[%s334 + $0x2c] sm:$0xf]
      %v347 = vld [vmem:[%s334 + $0x30] sm:$0xf]
      %v348 = vld [vmem:[%s334 + $0x34] sm:$0xf]
      %v349 = vld [vmem:[%s334 + $0x38] sm:$0xf]
      %v350 = vld [vmem:[%s334 + $0x3c] sm:$0xf]
      %v351 = vunpack.c.l.b16 %v251
      %v352 = vunpack.c.l.b16 %v261
      %v353 = vunpack.c.l.b16 %v275
      %v354 = vunpack.c.l.b16 %v285
      %v355 = vunpack.c.l.b16 %v299
      %v356 = vunpack.c.l.b16 %v309
      %v357 = vunpack.c.l.b16 %v323
      %v358 = vunpack.c.l.b16 %v333
      %v359 = vpack.c.b16 %v352, %v351
      %v360 = vpack.c.b16 %v354, %v353
      %v361 = vpack.c.b16 %v356, %v355
      %v362 = vpack.c.b16 %v358, %v357
      %v383 = vunpack.c.l.b16 %v335
      %v384 = vunpack.c.l.b16 %v336
      %v385 = vunpack.c.l.b16 %v337
      %v386 = vunpack.c.l.b16 %v338
      %v387 = vunpack.c.l.b16 %v339
      %v388 = vunpack.c.l.b16 %v340
      %v389 = vunpack.c.l.b16 %v341
      %v390 = vunpack.c.l.b16 %v342
      %v391 = vunpack.c.l.b16 %v343
      %v392 = vunpack.c.l.b16 %v344
      %v393 = vunpack.c.l.b16 %v345
      %v394 = vunpack.c.l.b16 %v346
      %v395 = vunpack.c.l.b16 %v347
      %v396 = vunpack.c.l.b16 %v348
      %v397 = vunpack.c.l.b16 %v349
      %v398 = vunpack.c.l.b16 %v350
      %v399 = vpack.c.b16 %v384, %v383
      %v400 = vpack.c.b16 %v386, %v385
      %v401 = vpack.c.b16 %v388, %v387
      %v402 = vpack.c.b16 %v390, %v389
      %v403 = vpack.c.b16 %v392, %v391
      %v404 = vpack.c.b16 %v394, %v393
      %v405 = vpack.c.b16 %v396, %v395
      %v406 = vpack.c.b16 %v398, %v397
      %415 = vmatprep.subr.bf16.mxu0 0
      %416 = vmatpush1.bf16.msra.mxu0 %v406
      %417 = vmatprep.subr.bf16.mxu0 0
      %418 = vmatpush1.bf16.msra.mxu0 %v405
      %419 = vmatprep.subr.bf16.mxu0 0
      %420 = vmatpush1.bf16.msra.mxu0 %v404
      %421 = vmatprep.subr.bf16.mxu0 0
      %422 = vmatpush1.bf16.msra.mxu0 %v403
      %423 = vmatprep.subr.bf16.mxu0 0
      %424 = vmatpush1.bf16.msra.mxu0 %v402
      %425 = vmatprep.subr.bf16.mxu0 0
      %426 = vmatpush1.bf16.msra.mxu0 %v401
      %427 = vmatprep.subr.bf16.mxu0 0
      %428 = vmatpush1.bf16.msra.mxu0 %v400
      %429 = vmatprep.subr.bf16.mxu0 0
      %430 = vmatpush1.bf16.msra.mxu0 %v399
      %431 = vmatprep.subr.bf16.mxu0 0
      %432 = vmatpush2.bf16.msra.mxu0 0
      %433 = vmatprep.subr.bf16.mxu0 0
      %434 = vmatpush2.bf16.msra.mxu0 0
      %435 = vmatprep.subr.bf16.mxu0 0
      %436 = vmatpush2.bf16.msra.mxu0 0
      %437 = vmatprep.subr.bf16.mxu0 0
      %438 = vmatpush2.bf16.msra.mxu0 0
      %439 = vmatprep.subr.bf16.mxu0 0
      %440 = vmatpush2.bf16.msra.mxu0 0
      %441 = vmatprep.subr.bf16.mxu0 0
      %442 = vmatpush2.bf16.msra.mxu0 0
      %443 = vmatprep.subr.bf16.mxu0 0
      %444 = vmatpush2.bf16.msra.mxu0 0
      %445 = vmatprep.subr.bf16.mxu0 0
      %446 = vmatpush2.bf16.msra.mxu0 0
      %447 = vmatprep.mubr.bf16.mxu0 0
      %448 = vmatmul.mubr.bf16.gmra.mxu0 %v359
      %v449 = vpop.f32.mrf.mxu0
      %v450 = vadd.f32 0.0, %v449
      %v451 = vpop.f32.mrf.mxu0
      %v452 = vpop.f32.mrf.mxu0
      %v453 = vadd.f32 0.0, %v452
      %v454 = vpop.f32.mrf.mxu0
      %455 = vmatprep.mubr.bf16.mxu0 0
      %456 = vmatmul.mubr.bf16.gmra.mxu0 %v360
      %v457 = vpop.f32.mrf.mxu0
      %v458 = vadd.f32 0.0, %v457
      %v459 = vpop.f32.mrf.mxu0
      %v460 = vpop.f32.mrf.mxu0
      %v461 = vadd.f32 0.0, %v460
      %v462 = vpop.f32.mrf.mxu0
      %463 = vmatprep.mubr.bf16.mxu0 0
      %464 = vmatmul.mubr.bf16.gmra.mxu0 %v361
      %v465 = vpop.f32.mrf.mxu0
      %v466 = vadd.f32 0.0, %v465
      %v467 = vpop.f32.mrf.mxu0
      %v468 = vpop.f32.mrf.mxu0
      %v469 = vadd.f32 0.0, %v468
      %v470 = vpop.f32.mrf.mxu0
      %471 = vmatprep.mubr.bf16.mxu0 0
      %472 = vmatmul.mubr.bf16.gmra.mxu0 %v362
      %v473 = vpop.f32.mrf.mxu0
      %v474 = vadd.f32 0.0, %v473
      %v475 = vpop.f32.mrf.mxu0
      %v476 = vpop.f32.mrf.mxu0
      %v477 = vadd.f32 0.0, %v476
      %v478 = vpop.f32.mrf.mxu0
      %479 = vdwg.mxu0
      %v488 = vunpack.c.l.b16 %v201
      %v489 = vunpack.c.l.b16 %v202
      %v490 = vunpack.c.l.b16 %v204
      %v491 = vunpack.c.l.b16 %v205
      %v492 = vunpack.c.l.b16 %v207
      %v493 = vunpack.c.l.b16 %v208
      %v494 = vunpack.c.l.b16 %v210
      %v495 = vunpack.c.l.b16 %v211
      %v496 = vpack.c.b16 %v489, %v488
      %v497 = vpack.c.b16 %v491, %v490
      %v498 = vpack.c.b16 %v493, %v492
      %v499 = vpack.c.b16 %v495, %v494
      %v520 = vunpack.c.l.b16 %v219
      %v521 = vunpack.c.l.b16 %v220
      %v522 = vunpack.c.l.b16 %v221
      %v523 = vunpack.c.l.b16 %v222
      %v524 = vunpack.c.l.b16 %v223
      %v525 = vunpack.c.l.b16 %v224
      %v526 = vunpack.c.l.b16 %v225
      %v527 = vunpack.c.l.b16 %v226
      %v528 = vunpack.c.l.b16 %v227
      %v529 = vunpack.c.l.b16 %v228
      %v530 = vunpack.c.l.b16 %v229
      %v531 = vunpack.c.l.b16 %v230
      %v532 = vunpack.c.l.b16 %v231
      %v533 = vunpack.c.l.b16 %v232
      %v534 = vunpack.c.l.b16 %v233
      %v535 = vunpack.c.l.b16 %v234
      %v536 = vpack.c.b16 %v521, %v520
      %v537 = vpack.c.b16 %v523, %v522
      %v538 = vpack.c.b16 %v525, %v524
      %v539 = vpack.c.b16 %v527, %v526
      %v540 = vpack.c.b16 %v529, %v528
      %v541 = vpack.c.b16 %v531, %v530
      %v542 = vpack.c.b16 %v533, %v532
      %v543 = vpack.c.b16 %v535, %v534
      %552 = vmatprep.subr.bf16.mxu0 0
      %553 = vmatpush1.bf16.msra.mxu0 %v543
      %554 = vmatprep.subr.bf16.mxu0 0
      %555 = vmatpush1.bf16.msra.mxu0 %v542
      %556 = vmatprep.subr.bf16.mxu0 0
      %557 = vmatpush1.bf16.msra.mxu0 %v541
      %558 = vmatprep.subr.bf16.mxu0 0
      %559 = vmatpush1.bf16.msra.mxu0 %v540
      %560 = vmatprep.subr.bf16.mxu0 0
      %561 = vmatpush1.bf16.msra.mxu0 %v539
      %562 = vmatprep.subr.bf16.mxu0 0
      %563 = vmatpush1.bf16.msra.mxu0 %v538
      %564 = vmatprep.subr.bf16.mxu0 0
      %565 = vmatpush1.bf16.msra.mxu0 %v537
      %566 = vmatprep.subr.bf16.mxu0 0
      %567 = vmatpush1.bf16.msra.mxu0 %v536
      %568 = vmatprep.subr.bf16.mxu0 0
      %569 = vmatpush2.bf16.msra.mxu0 0
      %570 = vmatprep.subr.bf16.mxu0 0
      %571 = vmatpush2.bf16.msra.mxu0 0
      %572 = vmatprep.subr.bf16.mxu0 0
      %573 = vmatpush2.bf16.msra.mxu0 0
      %574 = vmatprep.subr.bf16.mxu0 0
      %575 = vmatpush2.bf16.msra.mxu0 0
      %576 = vmatprep.subr.bf16.mxu0 0
      %577 = vmatpush2.bf16.msra.mxu0 0
      %578 = vmatprep.subr.bf16.mxu0 0
      %579 = vmatpush2.bf16.msra.mxu0 0
      %580 = vmatprep.subr.bf16.mxu0 0
      %581 = vmatpush2.bf16.msra.mxu0 0
      %582 = vmatprep.subr.bf16.mxu0 0
      %583 = vmatpush2.bf16.msra.mxu0 0
      %584 = vmatprep.mubr.bf16.mxu0 0
      %585 = vmatmul.mubr.bf16.gmra.mxu0 %v496
      %v586 = vpop.f32.mrf.mxu0
      %v587 = vadd.f32 %v450, %v586
      %v588 = vpop.f32.mrf.mxu0
      %v589 = vpop.f32.mrf.mxu0
      %v590 = vadd.f32 %v453, %v589
      %v591 = vpop.f32.mrf.mxu0
      %592 = vmatprep.mubr.bf16.mxu0 0
      %593 = vmatmul.mubr.bf16.gmra.mxu0 %v497
      %v594 = vpop.f32.mrf.mxu0
      %v595 = vadd.f32 %v458, %v594
      %v596 = vpop.f32.mrf.mxu0
      %v597 = vpop.f32.mrf.mxu0
      %v598 = vadd.f32 %v461, %v597
      %v599 = vpop.f32.mrf.mxu0
      %600 = vmatprep.mubr.bf16.mxu0 0
      %601 = vmatmul.mubr.bf16.gmra.mxu0 %v498
      %v602 = vpop.f32.mrf.mxu0
      %v603 = vadd.f32 %v466, %v602
      %v604 = vpop.f32.mrf.mxu0
      %v605 = vpop.f32.mrf.mxu0
      %v606 = vadd.f32 %v469, %v605
      %v607 = vpop.f32.mrf.mxu0
      %608 = vmatprep.mubr.bf16.mxu0 0
      %609 = vmatmul.mubr.bf16.gmra.mxu0 %v499
      %v610 = vpop.f32.mrf.mxu0
      %v611 = vadd.f32 %v474, %v610
      %v612 = vpop.f32.mrf.mxu0
      %v613 = vpop.f32.mrf.mxu0
      %v614 = vadd.f32 %v477, %v613
      %v615 = vpop.f32.mrf.mxu0
      %616 = vdwg.mxu0
      %vm621 = vcmask 1042432
      %vm622 = vcmask 1046532
      %vm623 = vmor %vm621, %vm622
      %v624 = vrot.slane %v201, 5
      %v625 = vrot.slane %v624, 4
      %v626 = vrot.slane %v202, 5
      %v627 = vsel %vm623, %v625, %v626
      %v628 = vrot.slane %v626, 4
      %v629 = vrot.slane %v203, 5
      %v630 = vsel %vm623, %v628, %v629
      %v631 = vrot.slane %v204, 5
      %v632 = vrot.slane %v631, 4
      %v633 = vrot.slane %v205, 5
      %v634 = vsel %vm623, %v632, %v633
      %v635 = vrot.slane %v633, 4
      %v636 = vrot.slane %v206, 5
      %v637 = vsel %vm623, %v635, %v636
      %v638 = vrot.slane %v207, 5
      %v639 = vrot.slane %v638, 4
      %v640 = vrot.slane %v208, 5
      %v641 = vsel %vm623, %v639, %v640
      %v642 = vrot.slane %v640, 4
      %v643 = vrot.slane %v209, 5
      %v644 = vsel %vm623, %v642, %v643
      %v645 = vrot.slane %v210, 5
      %v646 = vrot.slane %v645, 4
      %v647 = vrot.slane %v211, 5
      %v648 = vsel %vm623, %v646, %v647
      %v649 = vrot.slane %v647, 4
      %v650 = vrot.slane %v212, 5
      %v651 = vsel %vm623, %v649, %v650
      %s652 = scalar_lea.vmem %s1, 128
      %v653 = vld [vmem:[%s652] sm:$0xf]
      %v654 = vld [vmem:[%s652 + $0x4] sm:$0xf]
      %v655 = vld [vmem:[%s652 + $0x8] sm:$0xf]
      %v656 = vld [vmem:[%s652 + $0xc] sm:$0xf]
      %v657 = vld [vmem:[%s652 + $0x10] sm:$0xf]
      %v658 = vld [vmem:[%s652 + $0x14] sm:$0xf]
      %v659 = vld [vmem:[%s652 + $0x18] sm:$0xf]
      %v660 = vld [vmem:[%s652 + $0x1c] sm:$0xf]
      %v661 = vld [vmem:[%s652 + $0x20] sm:$0xf]
      %v662 = vld [vmem:[%s652 + $0x24] sm:$0xf]
      %v663 = vld [vmem:[%s652 + $0x28] sm:$0xf]
      %v664 = vld [vmem:[%s652 + $0x2c] sm:$0xf]
      %v665 = vld [vmem:[%s652 + $0x30] sm:$0xf]
      %v666 = vld [vmem:[%s652 + $0x34] sm:$0xf]
      %v667 = vld [vmem:[%s652 + $0x38] sm:$0xf]
      %v668 = vld [vmem:[%s652 + $0x3c] sm:$0xf]
      %v669 = vunpack.c.l.b16 %v627
      %v670 = vunpack.c.l.b16 %v630
      %v671 = vunpack.c.l.b16 %v634
      %v672 = vunpack.c.l.b16 %v637
      %v673 = vunpack.c.l.b16 %v641
      %v674 = vunpack.c.l.b16 %v644
      %v675 = vunpack.c.l.b16 %v648
      %v676 = vunpack.c.l.b16 %v651
      %v677 = vpack.c.b16 %v670, %v669
      %v678 = vpack.c.b16 %v672, %v671
      %v679 = vpack.c.b16 %v674, %v673
      %v680 = vpack.c.b16 %v676, %v675
      %v701 = vunpack.c.l.b16 %v653
      %v702 = vunpack.c.l.b16 %v654
      %v703 = vunpack.c.l.b16 %v655
      %v704 = vunpack.c.l.b16 %v656
      %v705 = vunpack.c.l.b16 %v657
      %v706 = vunpack.c.l.b16 %v658
      %v707 = vunpack.c.l.b16 %v659
      %v708 = vunpack.c.l.b16 %v660
      %v709 = vunpack.c.l.b16 %v661
      %v710 = vunpack.c.l.b16 %v662
      %v711 = vunpack.c.l.b16 %v663
      %v712 = vunpack.c.l.b16 %v664
      %v713 = vunpack.c.l.b16 %v665
      %v714 = vunpack.c.l.b16 %v666
      %v715 = vunpack.c.l.b16 %v667
      %v716 = vunpack.c.l.b16 %v668
      %v717 = vpack.c.b16 %v702, %v701
      %v718 = vpack.c.b16 %v704, %v703
      %v719 = vpack.c.b16 %v706, %v705
      %v720 = vpack.c.b16 %v708, %v707
      %v721 = vpack.c.b16 %v710, %v709
      %v722 = vpack.c.b16 %v712, %v711
      %v723 = vpack.c.b16 %v714, %v713
      %v724 = vpack.c.b16 %v716, %v715
      %733 = vmatprep.subr.bf16.mxu0 0
      %734 = vmatpush1.bf16.msra.mxu0 %v724
      %735 = vmatprep.subr.bf16.mxu0 0
      %736 = vmatpush1.bf16.msra.mxu0 %v723
      %737 = vmatprep.subr.bf16.mxu0 0
      %738 = vmatpush1.bf16.msra.mxu0 %v722
      %739 = vmatprep.subr.bf16.mxu0 0
      %740 = vmatpush1.bf16.msra.mxu0 %v721
      %741 = vmatprep.subr.bf16.mxu0 0
      %742 = vmatpush1.bf16.msra.mxu0 %v720
      %743 = vmatprep.subr.bf16.mxu0 0
      %744 = vmatpush1.bf16.msra.mxu0 %v719
      %745 = vmatprep.subr.bf16.mxu0 0
      %746 = vmatpush1.bf16.msra.mxu0 %v718
      %747 = vmatprep.subr.bf16.mxu0 0
      %748 = vmatpush1.bf16.msra.mxu0 %v717
      %749 = vmatprep.subr.bf16.mxu0 0
      %750 = vmatpush2.bf16.msra.mxu0 0
      %751 = vmatprep.subr.bf16.mxu0 0
      %752 = vmatpush2.bf16.msra.mxu0 0
      %753 = vmatprep.subr.bf16.mxu0 0
      %754 = vmatpush2.bf16.msra.mxu0 0
      %755 = vmatprep.subr.bf16.mxu0 0
      %756 = vmatpush2.bf16.msra.mxu0 0
      %757 = vmatprep.subr.bf16.mxu0 0
      %758 = vmatpush2.bf16.msra.mxu0 0
      %759 = vmatprep.subr.bf16.mxu0 0
      %760 = vmatpush2.bf16.msra.mxu0 0
      %761 = vmatprep.subr.bf16.mxu0 0
      %762 = vmatpush2.bf16.msra.mxu0 0
      %763 = vmatprep.subr.bf16.mxu0 0
      %764 = vmatpush2.bf16.msra.mxu0 0
      %765 = vmatprep.mubr.bf16.mxu0 0
      %766 = vmatmul.mubr.bf16.gmra.mxu0 %v677
      %v767 = vpop.f32.mrf.mxu0
      %v768 = vadd.f32 0.0, %v767
      %v769 = vpop.f32.mrf.mxu0
      %v770 = vpop.f32.mrf.mxu0
      %v771 = vadd.f32 0.0, %v770
      %v772 = vpop.f32.mrf.mxu0
      %773 = vmatprep.mubr.bf16.mxu0 0
      %774 = vmatmul.mubr.bf16.gmra.mxu0 %v678
      %v775 = vpop.f32.mrf.mxu0
      %v776 = vadd.f32 0.0, %v775
      %v777 = vpop.f32.mrf.mxu0
      %v778 = vpop.f32.mrf.mxu0
      %v779 = vadd.f32 0.0, %v778
      %v780 = vpop.f32.mrf.mxu0
      %781 = vmatprep.mubr.bf16.mxu0 0
      %782 = vmatmul.mubr.bf16.gmra.mxu0 %v679
      %v783 = vpop.f32.mrf.mxu0
      %v784 = vadd.f32 0.0, %v783
      %v785 = vpop.f32.mrf.mxu0
      %v786 = vpop.f32.mrf.mxu0
      %v787 = vadd.f32 0.0, %v786
      %v788 = vpop.f32.mrf.mxu0
      %789 = vmatprep.mubr.bf16.mxu0 0
      %790 = vmatmul.mubr.bf16.gmra.mxu0 %v680
      %v791 = vpop.f32.mrf.mxu0
      %v792 = vadd.f32 0.0, %v791
      %v793 = vpop.f32.mrf.mxu0
      %v794 = vpop.f32.mrf.mxu0
      %v795 = vadd.f32 0.0, %v794
      %v796 = vpop.f32.mrf.mxu0
      %797 = vdwg.mxu0
      %v798 = vadd.f32 %v587, %v768
      %v799 = vadd.f32 %v590, %v771
      %v800 = vadd.f32 %v595, %v776
      %v801 = vadd.f32 %v598, %v779
      %v802 = vadd.f32 %v603, %v784
      %v803 = vadd.f32 %v606, %v787
      %v804 = vadd.f32 %v611, %v792
      %v805 = vadd.f32 %v614, %v795
      %s806 = scalar_lea.vmem %s1, 192
      %v807 = vld [vmem:[%s806] sm:$0xf]
      %v808 = vld [vmem:[%s806 + $0x4] sm:$0xf]
      %v809 = vld [vmem:[%s806 + $0x8] sm:$0xf]
      %v810 = vld [vmem:[%s806 + $0xc] sm:$0xf]
      %v811 = vld [vmem:[%s806 + $0x10] sm:$0xf]
      %v812 = vld [vmem:[%s806 + $0x14] sm:$0xf]
      %v813 = vld [vmem:[%s806 + $0x18] sm:$0xf]
      %v814 = vld [vmem:[%s806 + $0x1c] sm:$0xf]
      %v815 = vld [vmem:[%s806 + $0x20] sm:$0xf]
      %v816 = vld [vmem:[%s806 + $0x24] sm:$0xf]
      %v817 = vld [vmem:[%s806 + $0x28] sm:$0xf]
      %v818 = vld [vmem:[%s806 + $0x2c] sm:$0xf]
      %v819 = vld [vmem:[%s806 + $0x30] sm:$0xf]
      %v820 = vld [vmem:[%s806 + $0x34] sm:$0xf]
      %v821 = vld [vmem:[%s806 + $0x38] sm:$0xf]
      %v822 = vld [vmem:[%s806 + $0x3c] sm:$0xf]
      %v825 = vunpack.c.l.b16 %v213
      %v826 = vunpack.c.l.b16 %v214
      %v827 = vpack.c.b16 %v826, %v825
      %v845 = vunpack.c.l.b16 %v807
      %v846 = vunpack.c.l.b16 %v808
      %v847 = vunpack.c.l.b16 %v809
      %v848 = vunpack.c.l.b16 %v810
      %v849 = vunpack.c.l.b16 %v811
      %v850 = vunpack.c.l.b16 %v812
      %v851 = vunpack.c.l.b16 %v813
      %v852 = vunpack.c.l.b16 %v814
      %v853 = vunpack.c.l.b16 %v815
      %v854 = vunpack.c.l.b16 %v816
      %v855 = vunpack.c.l.b16 %v817
      %v856 = vunpack.c.l.b16 %v818
      %v857 = vunpack.c.l.b16 %v819
      %v858 = vunpack.c.l.b16 %v820
      %v859 = vunpack.c.l.b16 %v821
      %v860 = vunpack.c.l.b16 %v822
      %v861 = vpack.c.b16 %v846, %v845
      %v862 = vpack.c.b16 %v848, %v847
      %v863 = vpack.c.b16 %v850, %v849
      %v864 = vpack.c.b16 %v852, %v851
      %v865 = vpack.c.b16 %v854, %v853
      %v866 = vpack.c.b16 %v856, %v855
      %v867 = vpack.c.b16 %v858, %v857
      %v868 = vpack.c.b16 %v860, %v859
      %877 = vmatprep.subr.bf16.mxu0 0
      %878 = vmatpush1.bf16.msra.mxu0 %v868
      %879 = vmatprep.subr.bf16.mxu0 0
      %880 = vmatpush1.bf16.msra.mxu0 %v867
      %881 = vmatprep.subr.bf16.mxu0 0
      %882 = vmatpush1.bf16.msra.mxu0 %v866
      %883 = vmatprep.subr.bf16.mxu0 0
      %884 = vmatpush1.bf16.msra.mxu0 %v865
      %885 = vmatprep.subr.bf16.mxu0 0
      %886 = vmatpush1.bf16.msra.mxu0 %v864
      %887 = vmatprep.subr.bf16.mxu0 0
      %888 = vmatpush1.bf16.msra.mxu0 %v863
      %889 = vmatprep.subr.bf16.mxu0 0
      %890 = vmatpush1.bf16.msra.mxu0 %v862
      %891 = vmatprep.subr.bf16.mxu0 0
      %892 = vmatpush1.bf16.msra.mxu0 %v861
      %893 = vmatprep.subr.bf16.mxu0 0
      %894 = vmatpush2.bf16.msra.mxu0 0
      %895 = vmatprep.subr.bf16.mxu0 0
      %896 = vmatpush2.bf16.msra.mxu0 0
      %897 = vmatprep.subr.bf16.mxu0 0
      %898 = vmatpush2.bf16.msra.mxu0 0
      %899 = vmatprep.subr.bf16.mxu0 0
      %900 = vmatpush2.bf16.msra.mxu0 0
      %901 = vmatprep.subr.bf16.mxu0 0
      %902 = vmatpush2.bf16.msra.mxu0 0
      %903 = vmatprep.subr.bf16.mxu0 0
      %904 = vmatpush2.bf16.msra.mxu0 0
      %905 = vmatprep.subr.bf16.mxu0 0
      %906 = vmatpush2.bf16.msra.mxu0 0
      %907 = vmatprep.subr.bf16.mxu0 0
      %908 = vmatpush2.bf16.msra.mxu0 0
      %909 = vmatprep.mubr.bf16.mxu0 0
      %910 = vmatmul.mubr.bf16.gmra.mxu0 %v497
      %v911 = vpop.f32.mrf.mxu0
      %v912 = vadd.f32 0.0, %v911
      %v913 = vpop.f32.mrf.mxu0
      %v914 = vpop.f32.mrf.mxu0
      %v915 = vadd.f32 0.0, %v914
      %v916 = vpop.f32.mrf.mxu0
      %917 = vmatprep.mubr.bf16.mxu0 0
      %918 = vmatmul.mubr.bf16.gmra.mxu0 %v498
      %v919 = vpop.f32.mrf.mxu0
      %v920 = vadd.f32 0.0, %v919
      %v921 = vpop.f32.mrf.mxu0
      %v922 = vpop.f32.mrf.mxu0
      %v923 = vadd.f32 0.0, %v922
      %v924 = vpop.f32.mrf.mxu0
      %925 = vmatprep.mubr.bf16.mxu0 0
      %926 = vmatmul.mubr.bf16.gmra.mxu0 %v499
      %v927 = vpop.f32.mrf.mxu0
      %v928 = vadd.f32 0.0, %v927
      %v929 = vpop.f32.mrf.mxu0
      %v930 = vpop.f32.mrf.mxu0
      %v931 = vadd.f32 0.0, %v930
      %v932 = vpop.f32.mrf.mxu0
      %933 = vmatprep.mubr.bf16.mxu0 0
      %934 = vmatmul.mubr.bf16.gmra.mxu0 %v827
      %v935 = vpop.f32.mrf.mxu0
      %v936 = vadd.f32 0.0, %v935
      %v937 = vpop.f32.mrf.mxu0
      %v938 = vpop.f32.mrf.mxu0
      %v939 = vadd.f32 0.0, %v938
      %v940 = vpop.f32.mrf.mxu0
      %941 = vdwg.mxu0
      %v942 = vadd.f32 %v798, %v912
      %v943 = vadd.f32 %v799, %v915
      %v944 = vadd.f32 %v800, %v920
      %v945 = vadd.f32 %v801, %v923
      %v946 = vadd.f32 %v802, %v928
      %v947 = vadd.f32 %v803, %v931
      %v948 = vadd.f32 %v804, %v936
      %v949 = vadd.f32 %v805, %v939
      %v951 = vshrl.u32 %v213, 16
      %v953 = vrot.slane %v951, 4
      %v954 = vshll.u32 %v213, 16
      %v956 = vrot.slane %v954, 5
      %v957 = vor.u32 %v953, %v956
      %v958 = vrot.slane %v957, 4
      %v960 = vshll.u32 %v214, 16
      %v962 = vrot.slane %v960, 5
      %v963 = vsel %vm237, %v958, %v962
      %v964 = vshrl.u32 %v214, 16
      %v966 = vrot.slane %v964, 4
      %v967 = vor.u32 %v966, %v962
      %v968 = vrot.slane %v967, 4
      %v970 = vshll.u32 %v215, 16
      %v972 = vrot.slane %v970, 5
      %v973 = vsel %vm237, %v968, %v972
      %s974 = scalar_lea.vmem %s1, 256
      %v975 = vld [vmem:[%s974] sm:$0xf]
      %v976 = vld [vmem:[%s974 + $0x4] sm:$0xf]
      %v977 = vld [vmem:[%s974 + $0x8] sm:$0xf]
      %v978 = vld [vmem:[%s974 + $0xc] sm:$0xf]
      %v979 = vld [vmem:[%s974 + $0x10] sm:$0xf]
      %v980 = vld [vmem:[%s974 + $0x14] sm:$0xf]
      %v981 = vld [vmem:[%s974 + $0x18] sm:$0xf]
      %v982 = vld [vmem:[%s974 + $0x1c] sm:$0xf]
      %v983 = vld [vmem:[%s974 + $0x20] sm:$0xf]
      %v984 = vld [vmem:[%s974 + $0x24] sm:$0xf]
      %v985 = vld [vmem:[%s974 + $0x28] sm:$0xf]
      %v986 = vld [vmem:[%s974 + $0x2c] sm:$0xf]
      %v987 = vld [vmem:[%s974 + $0x30] sm:$0xf]
      %v988 = vld [vmem:[%s974 + $0x34] sm:$0xf]
      %v989 = vld [vmem:[%s974 + $0x38] sm:$0xf]
      %v990 = vld [vmem:[%s974 + $0x3c] sm:$0xf]
      %v991 = vunpack.c.l.b16 %v963
      %v992 = vunpack.c.l.b16 %v973
      %v993 = vpack.c.b16 %v992, %v991
      %v1011 = vunpack.c.l.b16 %v975
      %v1012 = vunpack.c.l.b16 %v976
      %v1013 = vunpack.c.l.b16 %v977
      %v1014 = vunpack.c.l.b16 %v978
      %v1015 = vunpack.c.l.b16 %v979
      %v1016 = vunpack.c.l.b16 %v980
      %v1017 = vunpack.c.l.b16 %v981
      %v1018 = vunpack.c.l.b16 %v982
      %v1019 = vunpack.c.l.b16 %v983
      %v1020 = vunpack.c.l.b16 %v984
      %v1021 = vunpack.c.l.b16 %v985
      %v1022 = vunpack.c.l.b16 %v986
      %v1023 = vunpack.c.l.b16 %v987
      %v1024 = vunpack.c.l.b16 %v988
      %v1025 = vunpack.c.l.b16 %v989
      %v1026 = vunpack.c.l.b16 %v990
      %v1027 = vpack.c.b16 %v1012, %v1011
      %v1028 = vpack.c.b16 %v1014, %v1013
      %v1029 = vpack.c.b16 %v1016, %v1015
      %v1030 = vpack.c.b16 %v1018, %v1017
      %v1031 = vpack.c.b16 %v1020, %v1019
      %v1032 = vpack.c.b16 %v1022, %v1021
      %v1033 = vpack.c.b16 %v1024, %v1023
      %v1034 = vpack.c.b16 %v1026, %v1025
      %1043 = vmatprep.subr.bf16.mxu0 0
      %1044 = vmatpush1.bf16.msra.mxu0 %v1034
      %1045 = vmatprep.subr.bf16.mxu0 0
      %1046 = vmatpush1.bf16.msra.mxu0 %v1033
      %1047 = vmatprep.subr.bf16.mxu0 0
      %1048 = vmatpush1.bf16.msra.mxu0 %v1032
      %1049 = vmatprep.subr.bf16.mxu0 0
      %1050 = vmatpush1.bf16.msra.mxu0 %v1031
      %1051 = vmatprep.subr.bf16.mxu0 0
      %1052 = vmatpush1.bf16.msra.mxu0 %v1030
      %1053 = vmatprep.subr.bf16.mxu0 0
      %1054 = vmatpush1.bf16.msra.mxu0 %v1029
      %1055 = vmatprep.subr.bf16.mxu0 0
      %1056 = vmatpush1.bf16.msra.mxu0 %v1028
      %1057 = vmatprep.subr.bf16.mxu0 0
      %1058 = vmatpush1.bf16.msra.mxu0 %v1027
      %1059 = vmatprep.subr.bf16.mxu0 0
      %1060 = vmatpush2.bf16.msra.mxu0 0
      %1061 = vmatprep.subr.bf16.mxu0 0
      %1062 = vmatpush2.bf16.msra.mxu0 0
      %1063 = vmatprep.subr.bf16.mxu0 0
      %1064 = vmatpush2.bf16.msra.mxu0 0
      %1065 = vmatprep.subr.bf16.mxu0 0
      %1066 = vmatpush2.bf16.msra.mxu0 0
      %1067 = vmatprep.subr.bf16.mxu0 0
      %1068 = vmatpush2.bf16.msra.mxu0 0
      %1069 = vmatprep.subr.bf16.mxu0 0
      %1070 = vmatpush2.bf16.msra.mxu0 0
      %1071 = vmatprep.subr.bf16.mxu0 0
      %1072 = vmatpush2.bf16.msra.mxu0 0
      %1073 = vmatprep.subr.bf16.mxu0 0
      %1074 = vmatpush2.bf16.msra.mxu0 0
      %1075 = vmatprep.mubr.bf16.mxu0 0
      %1076 = vmatmul.mubr.bf16.gmra.mxu0 %v360
      %v1077 = vpop.f32.mrf.mxu0
      %v1078 = vadd.f32 0.0, %v1077
      %v1079 = vpop.f32.mrf.mxu0
      %v1080 = vpop.f32.mrf.mxu0
      %v1081 = vadd.f32 0.0, %v1080
      %v1082 = vpop.f32.mrf.mxu0
      %1083 = vmatprep.mubr.bf16.mxu0 0
      %1084 = vmatmul.mubr.bf16.gmra.mxu0 %v361
      %v1085 = vpop.f32.mrf.mxu0
      %v1086 = vadd.f32 0.0, %v1085
      %v1087 = vpop.f32.mrf.mxu0
      %v1088 = vpop.f32.mrf.mxu0
      %v1089 = vadd.f32 0.0, %v1088
      %v1090 = vpop.f32.mrf.mxu0
      %1091 = vmatprep.mubr.bf16.mxu0 0
      %1092 = vmatmul.mubr.bf16.gmra.mxu0 %v362
      %v1093 = vpop.f32.mrf.mxu0
      %v1094 = vadd.f32 0.0, %v1093
      %v1095 = vpop.f32.mrf.mxu0
      %v1096 = vpop.f32.mrf.mxu0
      %v1097 = vadd.f32 0.0, %v1096
      %v1098 = vpop.f32.mrf.mxu0
      %1099 = vmatprep.mubr.bf16.mxu0 0
      %1100 = vmatmul.mubr.bf16.gmra.mxu0 %v993
      %v1101 = vpop.f32.mrf.mxu0
      %v1102 = vadd.f32 0.0, %v1101
      %v1103 = vpop.f32.mrf.mxu0
      %v1104 = vpop.f32.mrf.mxu0
      %v1105 = vadd.f32 0.0, %v1104
      %v1106 = vpop.f32.mrf.mxu0
      %1107 = vdwg.mxu0
      %v1108 = vadd.f32 %v942, %v1078
      %v1109 = vadd.f32 %v943, %v1081
      %v1110 = vadd.f32 %v944, %v1086
      %v1111 = vadd.f32 %v945, %v1089
      %v1112 = vadd.f32 %v946, %v1094
      %v1113 = vadd.f32 %v947, %v1097
      %v1114 = vadd.f32 %v948, %v1102
      %v1115 = vadd.f32 %v949, %v1105
      %v1117 = vrot.slane %v213, 5
      %v1118 = vrot.slane %v1117, 4
      %v1119 = vrot.slane %v214, 5
      %v1120 = vsel %vm623, %v1118, %v1119
      %v1121 = vrot.slane %v1119, 4
      %v1122 = vrot.slane %v215, 5
      %v1123 = vsel %vm623, %v1121, %v1122
      %s1124 = scalar_lea.vmem %s1, 320
      %v1125 = vld [vmem:[%s1124] sm:$0xf]
      %v1126 = vld [vmem:[%s1124 + $0x4] sm:$0xf]
      %v1127 = vld [vmem:[%s1124 + $0x8] sm:$0xf]
      %v1128 = vld [vmem:[%s1124 + $0xc] sm:$0xf]
      %v1129 = vld [vmem:[%s1124 + $0x10] sm:$0xf]
      %v1130 = vld [vmem:[%s1124 + $0x14] sm:$0xf]
      %v1131 = vld [vmem:[%s1124 + $0x18] sm:$0xf]
      %v1132 = vld [vmem:[%s1124 + $0x1c] sm:$0xf]
      %v1133 = vld [vmem:[%s1124 + $0x20] sm:$0xf]
      %v1134 = vld [vmem:[%s1124 + $0x24] sm:$0xf]
      %v1135 = vld [vmem:[%s1124 + $0x28] sm:$0xf]
      %v1136 = vld [vmem:[%s1124 + $0x2c] sm:$0xf]
      %v1137 = vld [vmem:[%s1124 + $0x30] sm:$0xf]
      %v1138 = vld [vmem:[%s1124 + $0x34] sm:$0xf]
      %v1139 = vld [vmem:[%s1124 + $0x38] sm:$0xf]
      %v1140 = vld [vmem:[%s1124 + $0x3c] sm:$0xf]
      %v1141 = vunpack.c.l.b16 %v1120
      %v1142 = vunpack.c.l.b16 %v1123
      %v1143 = vpack.c.b16 %v1142, %v1141
      %v1161 = vunpack.c.l.b16 %v1125
      %v1162 = vunpack.c.l.b16 %v1126
      %v1163 = vunpack.c.l.b16 %v1127
      %v1164 = vunpack.c.l.b16 %v1128
      %v1165 = vunpack.c.l.b16 %v1129
      %v1166 = vunpack.c.l.b16 %v1130
      %v1167 = vunpack.c.l.b16 %v1131
      %v1168 = vunpack.c.l.b16 %v1132
      %v1169 = vunpack.c.l.b16 %v1133
      %v1170 = vunpack.c.l.b16 %v1134
      %v1171 = vunpack.c.l.b16 %v1135
      %v1172 = vunpack.c.l.b16 %v1136
      %v1173 = vunpack.c.l.b16 %v1137
      %v1174 = vunpack.c.l.b16 %v1138
      %v1175 = vunpack.c.l.b16 %v1139
      %v1176 = vunpack.c.l.b16 %v1140
      %v1177 = vpack.c.b16 %v1162, %v1161
      %v1178 = vpack.c.b16 %v1164, %v1163
      %v1179 = vpack.c.b16 %v1166, %v1165
      %v1180 = vpack.c.b16 %v1168, %v1167
      %v1181 = vpack.c.b16 %v1170, %v1169
      %v1182 = vpack.c.b16 %v1172, %v1171
      %v1183 = vpack.c.b16 %v1174, %v1173
      %v1184 = vpack.c.b16 %v1176, %v1175
      %1193 = vmatprep.subr.bf16.mxu0 0
      %1194 = vmatpush1.bf16.msra.mxu0 %v1184
      %1195 = vmatprep.subr.bf16.mxu0 0
      %1196 = vmatpush1.bf16.msra.mxu0 %v1183
      %1197 = vmatprep.subr.bf16.mxu0 0
      %1198 = vmatpush1.bf16.msra.mxu0 %v1182
      %1199 = vmatprep.subr.bf16.mxu0 0
      %1200 = vmatpush1.bf16.msra.mxu0 %v1181
      %1201 = vmatprep.subr.bf16.mxu0 0
      %1202 = vmatpush1.bf16.msra.mxu0 %v1180
      %1203 = vmatprep.subr.bf16.mxu0 0
      %1204 = vmatpush1.bf16.msra.mxu0 %v1179
      %1205 = vmatprep.subr.bf16.mxu0 0
      %1206 = vmatpush1.bf16.msra.mxu0 %v1178
      %1207 = vmatprep.subr.bf16.mxu0 0
      %1208 = vmatpush1.bf16.msra.mxu0 %v1177
      %1209 = vmatprep.subr.bf16.mxu0 0
      %1210 = vmatpush2.bf16.msra.mxu0 0
      %1211 = vmatprep.subr.bf16.mxu0 0
      %1212 = vmatpush2.bf16.msra.mxu0 0
      %1213 = vmatprep.subr.bf16.mxu0 0
      %1214 = vmatpush2.bf16.msra.mxu0 0
      %1215 = vmatprep.subr.bf16.mxu0 0
      %1216 = vmatpush2.bf16.msra.mxu0 0
      %1217 = vmatprep.subr.bf16.mxu0 0
      %1218 = vmatpush2.bf16.msra.mxu0 0
      %1219 = vmatprep.subr.bf16.mxu0 0
      %1220 = vmatpush2.bf16.msra.mxu0 0
      %1221 = vmatprep.subr.bf16.mxu0 0
      %1222 = vmatpush2.bf16.msra.mxu0 0
      %1223 = vmatprep.subr.bf16.mxu0 0
      %1224 = vmatpush2.bf16.msra.mxu0 0
      %1225 = vmatprep.mubr.bf16.mxu0 0
      %1226 = vmatmul.mubr.bf16.gmra.mxu0 %v678
      %v1227 = vpop.f32.mrf.mxu0
      %v1228 = vadd.f32 0.0, %v1227
      %v1229 = vpop.f32.mrf.mxu0
      %v1230 = vpop.f32.mrf.mxu0
      %v1231 = vadd.f32 0.0, %v1230
      %v1232 = vpop.f32.mrf.mxu0
      %1233 = vmatprep.mubr.bf16.mxu0 0
      %1234 = vmatmul.mubr.bf16.gmra.mxu0 %v679
      %v1235 = vpop.f32.mrf.mxu0
      %v1236 = vadd.f32 0.0, %v1235
      %v1237 = vpop.f32.mrf.mxu0
      %v1238 = vpop.f32.mrf.mxu0
      %v1239 = vadd.f32 0.0, %v1238
      %v1240 = vpop.f32.mrf.mxu0
      %1241 = vmatprep.mubr.bf16.mxu0 0
      %1242 = vmatmul.mubr.bf16.gmra.mxu0 %v680
      %v1243 = vpop.f32.mrf.mxu0
      %v1244 = vadd.f32 0.0, %v1243
      %v1245 = vpop.f32.mrf.mxu0
      %v1246 = vpop.f32.mrf.mxu0
      %v1247 = vadd.f32 0.0, %v1246
      %v1248 = vpop.f32.mrf.mxu0
      %1249 = vmatprep.mubr.bf16.mxu0 0
      %1250 = vmatmul.mubr.bf16.gmra.mxu0 %v1143
      %v1251 = vpop.f32.mrf.mxu0
      %v1252 = vadd.f32 0.0, %v1251
      %v1253 = vpop.f32.mrf.mxu0
      %v1254 = vpop.f32.mrf.mxu0
      %v1255 = vadd.f32 0.0, %v1254
      %v1256 = vpop.f32.mrf.mxu0
      %1257 = vdwg.mxu0
      %v1258 = vadd.f32 %v1108, %v1228
      %v1259 = vadd.f32 %v1109, %v1231
      %v1260 = vadd.f32 %v1110, %v1236
      %v1261 = vadd.f32 %v1111, %v1239
      %v1262 = vadd.f32 %v1112, %v1244
      %v1263 = vadd.f32 %v1113, %v1247
      %v1264 = vadd.f32 %v1114, %v1252
      %v1265 = vadd.f32 %v1115, %v1255
      %s1266 = scalar_lea.vmem %s1, 384
      %v1267 = vld [vmem:[%s1266] sm:$0xf]
      %v1268 = vld [vmem:[%s1266 + $0x4] sm:$0xf]
      %v1269 = vld [vmem:[%s1266 + $0x8] sm:$0xf]
      %v1270 = vld [vmem:[%s1266 + $0xc] sm:$0xf]
      %v1271 = vld [vmem:[%s1266 + $0x10] sm:$0xf]
      %v1272 = vld [vmem:[%s1266 + $0x14] sm:$0xf]
      %v1273 = vld [vmem:[%s1266 + $0x18] sm:$0xf]
      %v1274 = vld [vmem:[%s1266 + $0x1c] sm:$0xf]
      %v1275 = vld [vmem:[%s1266 + $0x20] sm:$0xf]
      %v1276 = vld [vmem:[%s1266 + $0x24] sm:$0xf]
      %v1277 = vld [vmem:[%s1266 + $0x28] sm:$0xf]
      %v1278 = vld [vmem:[%s1266 + $0x2c] sm:$0xf]
      %v1279 = vld [vmem:[%s1266 + $0x30] sm:$0xf]
      %v1280 = vld [vmem:[%s1266 + $0x34] sm:$0xf]
      %v1281 = vld [vmem:[%s1266 + $0x38] sm:$0xf]
      %v1282 = vld [vmem:[%s1266 + $0x3c] sm:$0xf]
      %v1285 = vunpack.c.l.b16 %v216
      %v1286 = vunpack.c.l.b16 %v217
      %v1287 = vpack.c.b16 %v1286, %v1285
      %v1305 = vunpack.c.l.b16 %v1267
      %v1306 = vunpack.c.l.b16 %v1268
      %v1307 = vunpack.c.l.b16 %v1269
      %v1308 = vunpack.c.l.b16 %v1270
      %v1309 = vunpack.c.l.b16 %v1271
      %v1310 = vunpack.c.l.b16 %v1272
      %v1311 = vunpack.c.l.b16 %v1273
      %v1312 = vunpack.c.l.b16 %v1274
      %v1313 = vunpack.c.l.b16 %v1275
      %v1314 = vunpack.c.l.b16 %v1276
      %v1315 = vunpack.c.l.b16 %v1277
      %v1316 = vunpack.c.l.b16 %v1278
      %v1317 = vunpack.c.l.b16 %v1279
      %v1318 = vunpack.c.l.b16 %v1280
      %v1319 = vunpack.c.l.b16 %v1281
      %v1320 = vunpack.c.l.b16 %v1282
      %v1321 = vpack.c.b16 %v1306, %v1305
      %v1322 = vpack.c.b16 %v1308, %v1307
      %v1323 = vpack.c.b16 %v1310, %v1309
      %v1324 = vpack.c.b16 %v1312, %v1311
      %v1325 = vpack.c.b16 %v1314, %v1313
      %v1326 = vpack.c.b16 %v1316, %v1315
      %v1327 = vpack.c.b16 %v1318, %v1317
      %v1328 = vpack.c.b16 %v1320, %v1319
      %1337 = vmatprep.subr.bf16.mxu0 0
      %1338 = vmatpush1.bf16.msra.mxu0 %v1328
      %1339 = vmatprep.subr.bf16.mxu0 0
      %1340 = vmatpush1.bf16.msra.mxu0 %v1327
      %1341 = vmatprep.subr.bf16.mxu0 0
      %1342 = vmatpush1.bf16.msra.mxu0 %v1326
      %1343 = vmatprep.subr.bf16.mxu0 0
      %1344 = vmatpush1.bf16.msra.mxu0 %v1325
      %1345 = vmatprep.subr.bf16.mxu0 0
      %1346 = vmatpush1.bf16.msra.mxu0 %v1324
      %1347 = vmatprep.subr.bf16.mxu0 0
      %1348 = vmatpush1.bf16.msra.mxu0 %v1323
      %1349 = vmatprep.subr.bf16.mxu0 0
      %1350 = vmatpush1.bf16.msra.mxu0 %v1322
      %1351 = vmatprep.subr.bf16.mxu0 0
      %1352 = vmatpush1.bf16.msra.mxu0 %v1321
      %1353 = vmatprep.subr.bf16.mxu0 0
      %1354 = vmatpush2.bf16.msra.mxu0 0
      %1355 = vmatprep.subr.bf16.mxu0 0
      %1356 = vmatpush2.bf16.msra.mxu0 0
      %1357 = vmatprep.subr.bf16.mxu0 0
      %1358 = vmatpush2.bf16.msra.mxu0 0
      %1359 = vmatprep.subr.bf16.mxu0 0
      %1360 = vmatpush2.bf16.msra.mxu0 0
      %1361 = vmatprep.subr.bf16.mxu0 0
      %1362 = vmatpush2.bf16.msra.mxu0 0
      %1363 = vmatprep.subr.bf16.mxu0 0
      %1364 = vmatpush2.bf16.msra.mxu0 0
      %1365 = vmatprep.subr.bf16.mxu0 0
      %1366 = vmatpush2.bf16.msra.mxu0 0
      %1367 = vmatprep.subr.bf16.mxu0 0
      %1368 = vmatpush2.bf16.msra.mxu0 0
      %1369 = vmatprep.mubr.bf16.mxu0 0
      %1370 = vmatmul.mubr.bf16.gmra.mxu0 %v498
      %v1371 = vpop.f32.mrf.mxu0
      %v1372 = vadd.f32 0.0, %v1371
      %v1373 = vpop.f32.mrf.mxu0
      %v1374 = vpop.f32.mrf.mxu0
      %v1375 = vadd.f32 0.0, %v1374
      %v1376 = vpop.f32.mrf.mxu0
      %1377 = vmatprep.mubr.bf16.mxu0 0
      %1378 = vmatmul.mubr.bf16.gmra.mxu0 %v499
      %v1379 = vpop.f32.mrf.mxu0
      %v1380 = vadd.f32 0.0, %v1379
      %v1381 = vpop.f32.mrf.mxu0
      %v1382 = vpop.f32.mrf.mxu0
      %v1383 = vadd.f32 0.0, %v1382
      %v1384 = vpop.f32.mrf.mxu0
      %1385 = vmatprep.mubr.bf16.mxu0 0
      %1386 = vmatmul.mubr.bf16.gmra.mxu0 %v827
      %v1387 = vpop.f32.mrf.mxu0
      %v1388 = vadd.f32 0.0, %v1387
      %v1389 = vpop.f32.mrf.mxu0
      %v1390 = vpop.f32.mrf.mxu0
      %v1391 = vadd.f32 0.0, %v1390
      %v1392 = vpop.f32.mrf.mxu0
      %1393 = vmatprep.mubr.bf16.mxu0 0
      %1394 = vmatmul.mubr.bf16.gmra.mxu0 %v1287
      %v1395 = vpop.f32.mrf.mxu0
      %v1396 = vadd.f32 0.0, %v1395
      %v1397 = vpop.f32.mrf.mxu0
      %v1398 = vpop.f32.mrf.mxu0
      %v1399 = vadd.f32 0.0, %v1398
      %v1400 = vpop.f32.mrf.mxu0
      %1401 = vdwg.mxu0
      %v1402 = vadd.f32 %v1258, %v1372
      %v1403 = vadd.f32 %v1259, %v1375
      %v1404 = vadd.f32 %v1260, %v1380
      %v1405 = vadd.f32 %v1261, %v1383
      %v1406 = vadd.f32 %v1262, %v1388
      %v1407 = vadd.f32 %v1263, %v1391
      %v1408 = vadd.f32 %v1264, %v1396
      %v1409 = vadd.f32 %v1265, %v1399
      %v1411 = vshrl.u32 %v216, 16
      %v1413 = vrot.slane %v1411, 4
      %v1414 = vshll.u32 %v216, 16
      %v1416 = vrot.slane %v1414, 5
      %v1417 = vor.u32 %v1413, %v1416
      %v1418 = vrot.slane %v1417, 4
      %v1420 = vshll.u32 %v217, 16
      %v1422 = vrot.slane %v1420, 5
      %v1423 = vsel %vm237, %v1418, %v1422
      %v1424 = vshrl.u32 %v217, 16
      %v1426 = vrot.slane %v1424, 4
      %v1427 = vor.u32 %v1426, %v1422
      %v1428 = vrot.slane %v1427, 4
      %v1430 = vshll.u32 %v218, 16
      %v1432 = vrot.slane %v1430, 5
      %v1433 = vsel %vm237, %v1428, %v1432
      %s1434 = scalar_lea.vmem %s1, 448
      %v1435 = vld [vmem:[%s1434] sm:$0xf]
      %v1436 = vld [vmem:[%s1434 + $0x4] sm:$0xf]
      %v1437 = vld [vmem:[%s1434 + $0x8] sm:$0xf]
      %v1438 = vld [vmem:[%s1434 + $0xc] sm:$0xf]
      %v1439 = vld [vmem:[%s1434 + $0x10] sm:$0xf]
      %v1440 = vld [vmem:[%s1434 + $0x14] sm:$0xf]
      %v1441 = vld [vmem:[%s1434 + $0x18] sm:$0xf]
      %v1442 = vld [vmem:[%s1434 + $0x1c] sm:$0xf]
      %v1443 = vld [vmem:[%s1434 + $0x20] sm:$0xf]
      %v1444 = vld [vmem:[%s1434 + $0x24] sm:$0xf]
      %v1445 = vld [vmem:[%s1434 + $0x28] sm:$0xf]
      %v1446 = vld [vmem:[%s1434 + $0x2c] sm:$0xf]
      %v1447 = vld [vmem:[%s1434 + $0x30] sm:$0xf]
      %v1448 = vld [vmem:[%s1434 + $0x34] sm:$0xf]
      %v1449 = vld [vmem:[%s1434 + $0x38] sm:$0xf]
      %v1450 = vld [vmem:[%s1434 + $0x3c] sm:$0xf]
      %v1451 = vunpack.c.l.b16 %v1423
      %v1452 = vunpack.c.l.b16 %v1433
      %v1453 = vpack.c.b16 %v1452, %v1451
      %v1471 = vunpack.c.l.b16 %v1435
      %v1472 = vunpack.c.l.b16 %v1436
      %v1473 = vunpack.c.l.b16 %v1437
      %v1474 = vunpack.c.l.b16 %v1438
      %v1475 = vunpack.c.l.b16 %v1439
      %v1476 = vunpack.c.l.b16 %v1440
      %v1477 = vunpack.c.l.b16 %v1441
      %v1478 = vunpack.c.l.b16 %v1442
      %v1479 = vunpack.c.l.b16 %v1443
      %v1480 = vunpack.c.l.b16 %v1444
      %v1481 = vunpack.c.l.b16 %v1445
      %v1482 = vunpack.c.l.b16 %v1446
      %v1483 = vunpack.c.l.b16 %v1447
      %v1484 = vunpack.c.l.b16 %v1448
      %v1485 = vunpack.c.l.b16 %v1449
      %v1486 = vunpack.c.l.b16 %v1450
      %v1487 = vpack.c.b16 %v1472, %v1471
      %v1488 = vpack.c.b16 %v1474, %v1473
      %v1489 = vpack.c.b16 %v1476, %v1475
      %v1490 = vpack.c.b16 %v1478, %v1477
      %v1491 = vpack.c.b16 %v1480, %v1479
      %v1492 = vpack.c.b16 %v1482, %v1481
      %v1493 = vpack.c.b16 %v1484, %v1483
      %v1494 = vpack.c.b16 %v1486, %v1485
      %1503 = vmatprep.subr.bf16.mxu0 0
      %1504 = vmatpush1.bf16.msra.mxu0 %v1494
      %1505 = vmatprep.subr.bf16.mxu0 0
      %1506 = vmatpush1.bf16.msra.mxu0 %v1493
      %1507 = vmatprep.subr.bf16.mxu0 0
      %1508 = vmatpush1.bf16.msra.mxu0 %v1492
      %1509 = vmatprep.subr.bf16.mxu0 0
      %1510 = vmatpush1.bf16.msra.mxu0 %v1491
      %1511 = vmatprep.subr.bf16.mxu0 0
      %1512 = vmatpush1.bf16.msra.mxu0 %v1490
      %1513 = vmatprep.subr.bf16.mxu0 0
      %1514 = vmatpush1.bf16.msra.mxu0 %v1489
      %1515 = vmatprep.subr.bf16.mxu0 0
      %1516 = vmatpush1.bf16.msra.mxu0 %v1488
      %1517 = vmatprep.subr.bf16.mxu0 0
      %1518 = vmatpush1.bf16.msra.mxu0 %v1487
      %1519 = vmatprep.subr.bf16.mxu0 0
      %1520 = vmatpush2.bf16.msra.mxu0 0
      %1521 = vmatprep.subr.bf16.mxu0 0
      %1522 = vmatpush2.bf16.msra.mxu0 0
      %1523 = vmatprep.subr.bf16.mxu0 0
      %1524 = vmatpush2.bf16.msra.mxu0 0
      %1525 = vmatprep.subr.bf16.mxu0 0
      %1526 = vmatpush2.bf16.msra.mxu0 0
      %1527 = vmatprep.subr.bf16.mxu0 0
      %1528 = vmatpush2.bf16.msra.mxu0 0
      %1529 = vmatprep.subr.bf16.mxu0 0
      %1530 = vmatpush2.bf16.msra.mxu0 0
      %1531 = vmatprep.subr.bf16.mxu0 0
      %1532 = vmatpush2.bf16.msra.mxu0 0
      %1533 = vmatprep.subr.bf16.mxu0 0
      %1534 = vmatpush2.bf16.msra.mxu0 0
      %1535 = vmatprep.mubr.bf16.mxu0 0
      %1536 = vmatmul.mubr.bf16.gmra.mxu0 %v361
      %v1537 = vpop.f32.mrf.mxu0
      %v1538 = vadd.f32 0.0, %v1537
      %v1539 = vpop.f32.mrf.mxu0
      %v1540 = vpop.f32.mrf.mxu0
      %v1541 = vadd.f32 0.0, %v1540
      %v1542 = vpop.f32.mrf.mxu0
      %1543 = vmatprep.mubr.bf16.mxu0 0
      %1544 = vmatmul.mubr.bf16.gmra.mxu0 %v362
      %v1545 = vpop.f32.mrf.mxu0
      %v1546 = vadd.f32 0.0, %v1545
      %v1547 = vpop.f32.mrf.mxu0
      %v1548 = vpop.f32.mrf.mxu0
      %v1549 = vadd.f32 0.0, %v1548
      %v1550 = vpop.f32.mrf.mxu0
      %1551 = vmatprep.mubr.bf16.mxu0 0
      %1552 = vmatmul.mubr.bf16.gmra.mxu0 %v993
      %v1553 = vpop.f32.mrf.mxu0
      %v1554 = vadd.f32 0.0, %v1553
      %v1555 = vpop.f32.mrf.mxu0
      %v1556 = vpop.f32.mrf.mxu0
      %v1557 = vadd.f32 0.0, %v1556
      %v1558 = vpop.f32.mrf.mxu0
      %1559 = vmatprep.mubr.bf16.mxu0 0
      %1560 = vmatmul.mubr.bf16.gmra.mxu0 %v1453
      %v1561 = vpop.f32.mrf.mxu0
      %v1562 = vadd.f32 0.0, %v1561
      %v1563 = vpop.f32.mrf.mxu0
      %v1564 = vpop.f32.mrf.mxu0
      %v1565 = vadd.f32 0.0, %v1564
      %v1566 = vpop.f32.mrf.mxu0
      %1567 = vdwg.mxu0
      %v1568 = vadd.f32 %v1402, %v1538
      %v1569 = vadd.f32 %v1403, %v1541
      %v1570 = vadd.f32 %v1404, %v1546
      %v1571 = vadd.f32 %v1405, %v1549
      %v1572 = vadd.f32 %v1406, %v1554
      %v1573 = vadd.f32 %v1407, %v1557
      %v1574 = vadd.f32 %v1408, %v1562
      %v1575 = vadd.f32 %v1409, %v1565
      %v1577 = vrot.slane %v216, 5
      %v1578 = vrot.slane %v1577, 4
      %v1579 = vrot.slane %v217, 5
      %v1580 = vsel %vm623, %v1578, %v1579
      %v1581 = vrot.slane %v1579, 4
      %v1582 = vrot.slane %v218, 5
      %v1583 = vsel %vm623, %v1581, %v1582
      %s1584 = scalar_lea.vmem %s1, 512
      %v1585 = vld [vmem:[%s1584] sm:$0xf]
      %v1586 = vld [vmem:[%s1584 + $0x4] sm:$0xf]
      %v1587 = vld [vmem:[%s1584 + $0x8] sm:$0xf]
      %v1588 = vld [vmem:[%s1584 + $0xc] sm:$0xf]
      %v1589 = vld [vmem:[%s1584 + $0x10] sm:$0xf]
      %v1590 = vld [vmem:[%s1584 + $0x14] sm:$0xf]
      %v1591 = vld [vmem:[%s1584 + $0x18] sm:$0xf]
      %v1592 = vld [vmem:[%s1584 + $0x1c] sm:$0xf]
      %v1593 = vld [vmem:[%s1584 + $0x20] sm:$0xf]
      %v1594 = vld [vmem:[%s1584 + $0x24] sm:$0xf]
      %v1595 = vld [vmem:[%s1584 + $0x28] sm:$0xf]
      %v1596 = vld [vmem:[%s1584 + $0x2c] sm:$0xf]
      %v1597 = vld [vmem:[%s1584 + $0x30] sm:$0xf]
      %v1598 = vld [vmem:[%s1584 + $0x34] sm:$0xf]
      %v1599 = vld [vmem:[%s1584 + $0x38] sm:$0xf]
      %v1600 = vld [vmem:[%s1584 + $0x3c] sm:$0xf]
      %v1601 = vunpack.c.l.b16 %v1580
      %v1602 = vunpack.c.l.b16 %v1583
      %v1603 = vpack.c.b16 %v1602, %v1601
      %v1621 = vunpack.c.l.b16 %v1585
      %v1622 = vunpack.c.l.b16 %v1586
      %v1623 = vunpack.c.l.b16 %v1587
      %v1624 = vunpack.c.l.b16 %v1588
      %v1625 = vunpack.c.l.b16 %v1589
      %v1626 = vunpack.c.l.b16 %v1590
      %v1627 = vunpack.c.l.b16 %v1591
      %v1628 = vunpack.c.l.b16 %v1592
      %v1629 = vunpack.c.l.b16 %v1593
      %v1630 = vunpack.c.l.b16 %v1594
      %v1631 = vunpack.c.l.b16 %v1595
      %v1632 = vunpack.c.l.b16 %v1596
      %v1633 = vunpack.c.l.b16 %v1597
      %v1634 = vunpack.c.l.b16 %v1598
      %v1635 = vunpack.c.l.b16 %v1599
      %v1636 = vunpack.c.l.b16 %v1600
      %v1637 = vpack.c.b16 %v1622, %v1621
      %v1638 = vpack.c.b16 %v1624, %v1623
      %v1639 = vpack.c.b16 %v1626, %v1625
      %v1640 = vpack.c.b16 %v1628, %v1627
      %v1641 = vpack.c.b16 %v1630, %v1629
      %v1642 = vpack.c.b16 %v1632, %v1631
      %v1643 = vpack.c.b16 %v1634, %v1633
      %v1644 = vpack.c.b16 %v1636, %v1635
      %1653 = vmatprep.subr.bf16.mxu0 0
      %1654 = vmatpush1.bf16.msra.mxu0 %v1644
      %1655 = vmatprep.subr.bf16.mxu0 0
      %1656 = vmatpush1.bf16.msra.mxu0 %v1643
      %1657 = vmatprep.subr.bf16.mxu0 0
      %1658 = vmatpush1.bf16.msra.mxu0 %v1642
      %1659 = vmatprep.subr.bf16.mxu0 0
      %1660 = vmatpush1.bf16.msra.mxu0 %v1641
      %1661 = vmatprep.subr.bf16.mxu0 0
      %1662 = vmatpush1.bf16.msra.mxu0 %v1640
      %1663 = vmatprep.subr.bf16.mxu0 0
      %1664 = vmatpush1.bf16.msra.mxu0 %v1639
      %1665 = vmatprep.subr.bf16.mxu0 0
      %1666 = vmatpush1.bf16.msra.mxu0 %v1638
      %1667 = vmatprep.subr.bf16.mxu0 0
      %1668 = vmatpush1.bf16.msra.mxu0 %v1637
      %1669 = vmatprep.subr.bf16.mxu0 0
      %1670 = vmatpush2.bf16.msra.mxu0 0
      %1671 = vmatprep.subr.bf16.mxu0 0
      %1672 = vmatpush2.bf16.msra.mxu0 0
      %1673 = vmatprep.subr.bf16.mxu0 0
      %1674 = vmatpush2.bf16.msra.mxu0 0
      %1675 = vmatprep.subr.bf16.mxu0 0
      %1676 = vmatpush2.bf16.msra.mxu0 0
      %1677 = vmatprep.subr.bf16.mxu0 0
      %1678 = vmatpush2.bf16.msra.mxu0 0
      %1679 = vmatprep.subr.bf16.mxu0 0
      %1680 = vmatpush2.bf16.msra.mxu0 0
      %1681 = vmatprep.subr.bf16.mxu0 0
      %1682 = vmatpush2.bf16.msra.mxu0 0
      %1683 = vmatprep.subr.bf16.mxu0 0
      %1684 = vmatpush2.bf16.msra.mxu0 0
      %1685 = vmatprep.mubr.bf16.mxu0 0
      %1686 = vmatmul.mubr.bf16.gmra.mxu0 %v679
      %v1687 = vpop.f32.mrf.mxu0
      %v1688 = vadd.f32 0.0, %v1687
      %v1689 = vpop.f32.mrf.mxu0
      %v1690 = vpop.f32.mrf.mxu0
      %v1691 = vadd.f32 0.0, %v1690
      %v1692 = vpop.f32.mrf.mxu0
      %1693 = vmatprep.mubr.bf16.mxu0 0
      %1694 = vmatmul.mubr.bf16.gmra.mxu0 %v680
      %v1695 = vpop.f32.mrf.mxu0
      %v1696 = vadd.f32 0.0, %v1695
      %v1697 = vpop.f32.mrf.mxu0
      %v1698 = vpop.f32.mrf.mxu0
      %v1699 = vadd.f32 0.0, %v1698
      %v1700 = vpop.f32.mrf.mxu0
      %1701 = vmatprep.mubr.bf16.mxu0 0
      %1702 = vmatmul.mubr.bf16.gmra.mxu0 %v1143
      %v1703 = vpop.f32.mrf.mxu0
      %v1704 = vadd.f32 0.0, %v1703
      %v1705 = vpop.f32.mrf.mxu0
      %v1706 = vpop.f32.mrf.mxu0
      %v1707 = vadd.f32 0.0, %v1706
      %v1708 = vpop.f32.mrf.mxu0
      %1709 = vmatprep.mubr.bf16.mxu0 0
      %1710 = vmatmul.mubr.bf16.gmra.mxu0 %v1603
      %v1711 = vpop.f32.mrf.mxu0
      %v1712 = vadd.f32 0.0, %v1711
      %v1713 = vpop.f32.mrf.mxu0
      %v1714 = vpop.f32.mrf.mxu0
      %v1715 = vadd.f32 0.0, %v1714
      %v1716 = vpop.f32.mrf.mxu0
      %1717 = vdwg.mxu0
      %v1718 = vadd.f32 %v1568, %v1688
      %v1719 = vadd.f32 %v1569, %v1691
      %v1720 = vadd.f32 %v1570, %v1696
      %v1721 = vadd.f32 %v1571, %v1699
      %v1722 = vadd.f32 %v1572, %v1704
      %v1723 = vadd.f32 %v1573, %v1707
      %v1724 = vadd.f32 %v1574, %v1712
      %v1725 = vadd.f32 %v1575, %v1715
      %v1726 = vld [vmem:[%s2] sm:$0x1]
      %v1728 = vlaneseq
      %v1729 = vshrl.u32 %v1728, 7
      %v1730 = vsub.s32 0, %v1729
      %v1731 = vrot.slane %v1726, %v1730
      %v1733 = vadd.f32 %v1718, %v1731
      %v1734 = vadd.f32 %v1719, %v1731
      %v1735 = vadd.f32 %v1720, %v1731
      %v1736 = vadd.f32 %v1721, %v1731
      %v1737 = vadd.f32 %v1722, %v1731
      %v1738 = vadd.f32 %v1723, %v1731
      %v1739 = vadd.f32 %v1724, %v1731
      %v1740 = vadd.f32 %v1725, %v1731
      %v1741 = vmax.f32 %v1733, 0.0
      %v1742 = vmax.f32 %v1734, 0.0
      %v1743 = vmax.f32 %v1735, 0.0
      %v1744 = vmax.f32 %v1736, 0.0
      %v1745 = vmax.f32 %v1737, 0.0
      %v1746 = vmax.f32 %v1738, 0.0
      %v1747 = vmax.f32 %v1739, 0.0
      %v1748 = vmax.f32 %v1740, 0.0
      %v1749 = vpack.c.bf16 %v1742, %v1741
      %v1750 = vpack.c.bf16 %v1744, %v1743
      %v1751 = vpack.c.bf16 %v1746, %v1745
      %v1752 = vpack.c.bf16 %v1748, %v1747
      %v1757 = vunpack.c.l.b16 %v1749
      %v1758 = vunpack.c.h.b16 %v1749
      %v1759 = vunpack.c.l.b16 %v1750
      %v1760 = vunpack.c.h.b16 %v1750
      %v1761 = vunpack.c.l.b16 %v1751
      %v1762 = vunpack.c.h.b16 %v1751
      %v1763 = vunpack.c.l.b16 %v1752
      %v1764 = vunpack.c.h.b16 %v1752
      %v1765 = vpack.c.b16 %v1757, %v1757
      %v1766 = vpack.c.b16 %v1758, %v1758
      %v1767 = vpack.c.b16 %v1759, %v1759
      %v1768 = vpack.c.b16 %v1760, %v1760
      %v1769 = vpack.c.b16 %v1761, %v1761
      %v1770 = vpack.c.b16 %v1762, %v1762
      %v1771 = vpack.c.b16 %v1763, %v1763
      %v1772 = vpack.c.b16 %v1764, %v1764
      %1781 = vst [vmem:[%s194] sm:$0xf] %v1765
      %1782 = vst [vmem:[%s194 + $0x4] sm:$0xf] %v1766
      %1783 = vst [vmem:[%s194 + $0x8] sm:$0xf] %v1767
      %1784 = vst [vmem:[%s194 + $0xc] sm:$0xf] %v1768
      %1785 = vst [vmem:[%s194 + $0x10] sm:$0xf] %v1769
      %1786 = vst [vmem:[%s194 + $0x14] sm:$0xf] %v1770
      %1787 = vst [vmem:[%s194 + $0x18] sm:$0xf] %v1771
      %1788 = vst [vmem:[%s194 + $0x1c] sm:$0xf] %v1772
      %s1789 = smul.u32 4, %s19
      %p1790 = scmp.lt.s32.totalorder %s18, 1
      %s1791 = scalar_select %p1790, %s18, 1
      %p1792 = scmp.lt.s32.totalorder %s1789, 15
      %s1793 = scalar_select %p1792, %s1789, 15
      %s1794 = smul.addr %s1793, 2
      %s1795 = smul.addr %s1791, 32
      %s1796 = sadd.s32 %s1794, %s1795
      %s1797 = smul.addr %s1796, 4
      %s1798 = scalar_lea.vmem %s3, %s1797
      // Predicated region
      $region33: #{pose_forward_pallas.4} parent=31 // pred_check
        %p1799 = pneg %p114
      $region34: #{pose_forward_pallas.4} parent=31 // pred_check_branch
        %1801 = sbr.rel (%p1799) target = $region36
      $region35: #{pose_forward_pallas.4} parent=31 // pred_region
        %s1802 = smul.u32 4, %s19
      $region36: #{pose_forward_pallas.4} parent=31 // pred_fallthru
        _
    $region32: #{pose_forward_pallas.4} parent=5 // pred_fallthru
      _
    %p1803 = scmp.le.s32.totalorder 2, %s9
    // Predicated region
    $region37: #{pose_forward_pallas.4} parent=5 // pred_check
      %p1804 = pneg %p1803
    $region38: #{pose_forward_pallas.4} parent=5 // pred_check_branch
      %1806 = sbr.rel (%p1804) target = $region40
    $region39: #{pose_forward_pallas.4} parent=5 // pred_region
      %s1807 = ssub.s32 %s9, 2
      // Predicated region
      $region41: #{pose_forward_pallas.4} parent=39 // pred_check
        %p1808 = pneg %p120
      $region42: #{pose_forward_pallas.4} parent=39 // pred_check_branch
        %1810 = sbr.rel (%p1808) target = $region44
      $region43: #{pose_forward_pallas.4} parent=39 // pred_region
        %s1811 = smul.u32 4, %s21
        %p1812 = scmp.lt.s32.totalorder %s20, 1
        %s1813 = scalar_select %p1812, %s20, 1
        %p1814 = scmp.lt.s32.totalorder %s1811, 15
        %s1815 = scalar_select %p1814, %s1811, 15
        %s1816 = smul.addr %s1815, 2
        %s1817 = smul.addr %s1813, 32
        %s1818 = sadd.s32 %s1816, %s1817
        %s1819 = smul.addr %s1818, 4
        %s1820 = scalar_lea.vmem %s3, %s1819
      $region44: #{pose_forward_pallas.4} parent=39 // pred_fallthru
        _
    $region40: #{pose_forward_pallas.4} parent=5 // pred_fallthru
      _
  $region6: #{pose_forward_pallas.4} parent=0 // loop_footer
    %s13 = sadd.s32 1, %s9
  $region7: #{pose_forward_pallas.4} parent=0 // loop_footer_branch
    %8 = sbr.rel target = $region3
  $region8: #{pose_forward_pallas.4} parent=0 // loop_exit
    _

// kernel: pose_forward_pallas.5
$region0: #{pose_forward_pallas.5}
  #allocation0 [shape = 'u32[]', space=smem, size = 0x4, offset = 0x4, fixed_abs, tag = 'smem constant byte address 0x4 - core index']
  #allocation1 [shape = 'u32[144,128]{1,0:T(1,128)}', space=vmem, size = 0x12000, scoped, tag = 'internal scratch']
  %s0 = inlined_call_operand.vmem [shape: bf16[2,34,34,128], index: 0, kind: input, shape index: {}]
  %s1 = inlined_call_operand.vmem [shape: bf16[9,128,128], index: 1, kind: input, shape index: {}]
  %s2 = inlined_call_operand.vmem [shape: f32[1,128], index: 2, kind: input, shape index: {}]
  %s3 = inlined_call_operand.vmem [shape: bf16[2,32,32,128], index: 3, kind: output, shape index: {}]
  %s4 = sld [smem:[#allocation0]]
  $region45: #{pose_forward_pallas.5} parent=0
    _
  %s6 = ssub.s32 1, %s4
  %s7 = scalar_select 0, %s6, %s4
  loop: start=0, step=1, limit=10
  $region2: #{pose_forward_pallas.5} parent=0 // loop_pre_header
    _
  $region3: #{pose_forward_pallas.5} parent=0 // loop_header
    %s9 = sphi 0, %s13
    %p10 = scmp.ge.s32.totalorder %s9, 10
    %s16 = sphi 0, %s28
    %s17 = sphi 0, %s24
    %s18 = sphi 0, %s16
    %s19 = sphi 0, %s17
    %s20 = sphi 0, %s18
    %s21 = sphi 0, %s19
    %s31 = sphi 0, %s33
    %s34 = sphi 0, %s31
    %s35 = sphi 0, %s34
    %s51 = sphi 0, %s35
    %s55 = sphi 0, %s55
    %s57 = sphi 0, %s55
    %s58 = sphi 0, %s57
    %s72 = sphi 0, %s58
    %s76 = sphi 0, %s76
    %s78 = sphi 0, %s76
    %s79 = sphi 0, %s78
    %s93 = sphi 0, %s79
    %s101 = sphi 0, %s103
    %s104 = sphi 0, %s101
    %s105 = sphi 0, %s104
    %s121 = sphi 0, %s105
  $region4: #{pose_forward_pallas.5} parent=0 // loop_header_branch
    %12 = sbr.rel (%p10) target = $region8
  $region5: #{pose_forward_pallas.5} parent=0 // loop_body
    %s14 = ssub.s32 %s9, 1
    %s15 = ssub.s32 %s9, 2
    %s22 = sadd.s32 1, %s17
    %p23 = scmp.ge.s32.totalorder %s22, 4
    %s24 = scalar_select %p23, 0, %s22
    %s25 = sadd.s32 1, %s16
    %s26 = scalar_select %p23, %s25, %s16
    %p27 = scmp.ge.s32.totalorder %s26, 2
    %s28 = scalar_select %p27, 0, %s26
    %s29 = ssub.s32 %s16, %s28
    %p30 = scmp.eq.s32.totalorder %s29, 0
    %s32 = sadd.s32 %s31, 1
    %s33 = scalar_select %p30, %s31, %s32
    %p36 = pneg %p30
    %p37 = scmp.eq.s32.totalorder %s9, 7
    %p38 = por %p36, %p37
    %p39 = scmp.ne.s32.totalorder %s31, %s34
    %p40 = scmp.eq.s32.totalorder %s9, 0
    %p41 = por %p39, %p40
    %p42 = scmp.ne.s32.totalorder %s31, %s34
    %p43 = scmp.eq.s32.totalorder %s14, 7
    %p44 = por %p42, %p43
    %p45 = scmp.ne.s32.totalorder %s34, %s35
    %p46 = scmp.eq.s32.totalorder %s14, 0
    %p47 = por %p45, %p46
    %p48 = scmp.ne.s32.totalorder %s34, %s35
    %p49 = scmp.eq.s32.totalorder %s15, 7
    %p50 = por %p48, %p49
    %p52 = scmp.ne.s32.totalorder %s35, %s51
    %p53 = scmp.eq.s32.totalorder %s15, 0
    %p54 = por %p52, %p53
    %s56 = sadd.s32 %s55, 1
    %p59 = scmp.eq.s32.totalorder %s9, 7
    %p60 = scmp.ne.s32.totalorder %s55, %s57
    %p61 = scmp.eq.s32.totalorder %s9, 0
    %p62 = por %p60, %p61
    %p63 = scmp.ne.s32.totalorder %s55, %s57
    %p64 = scmp.eq.s32.totalorder %s14, 7
    %p65 = por %p63, %p64
    %p66 = scmp.ne.s32.totalorder %s57, %s58
    %p67 = scmp.eq.s32.totalorder %s14, 0
    %p68 = por %p66, %p67
    %p69 = scmp.ne.s32.totalorder %s57, %s58
    %p70 = scmp.eq.s32.totalorder %s15, 7
    %p71 = por %p69, %p70
    %p73 = scmp.ne.s32.totalorder %s58, %s72
    %p74 = scmp.eq.s32.totalorder %s15, 0
    %p75 = por %p73, %p74
    %s77 = sadd.s32 %s76, 1
    %p80 = scmp.eq.s32.totalorder %s9, 7
    %p81 = scmp.ne.s32.totalorder %s76, %s78
    %p82 = scmp.eq.s32.totalorder %s9, 0
    %p83 = por %p81, %p82
    %p84 = scmp.ne.s32.totalorder %s76, %s78
    %p85 = scmp.eq.s32.totalorder %s14, 7
    %p86 = por %p84, %p85
    %p87 = scmp.ne.s32.totalorder %s78, %s79
    %p88 = scmp.eq.s32.totalorder %s14, 0
    %p89 = por %p87, %p88
    %p90 = scmp.ne.s32.totalorder %s78, %s79
    %p91 = scmp.eq.s32.totalorder %s15, 7
    %p92 = por %p90, %p91
    %p94 = scmp.ne.s32.totalorder %s79, %s93
    %p95 = scmp.eq.s32.totalorder %s15, 0
    %p96 = por %p94, %p95
    %s97 = ssub.s32 %s16, %s28
    %s98 = ssub.s32 %s17, %s24
    %s99 = sor.u32 %s97, %s98
    %p100 = scmp.eq.s32.totalorder %s99, 0
    %s102 = sadd.s32 %s101, 1
    %s103 = scalar_select %p100, %s101, %s102
    %p106 = pneg %p100
    %p107 = scmp.eq.s32.totalorder %s9, 7
    %p108 = por %p106, %p107
    %p109 = scmp.ne.s32.totalorder %s101, %s104
    %p110 = scmp.eq.s32.totalorder %s9, 0
    %p111 = por %p109, %p110
    %p112 = scmp.ne.s32.totalorder %s101, %s104
    %p113 = scmp.eq.s32.totalorder %s14, 7
    %p114 = por %p112, %p113
    %p115 = scmp.ne.s32.totalorder %s104, %s105
    %p116 = scmp.eq.s32.totalorder %s14, 0
    %p117 = por %p115, %p116
    %p118 = scmp.ne.s32.totalorder %s104, %s105
    %p119 = scmp.eq.s32.totalorder %s15, 7
    %p120 = por %p118, %p119
    %p122 = scmp.ne.s32.totalorder %s105, %s121
    %p123 = scmp.eq.s32.totalorder %s15, 0
    %p124 = por %p122, %p123
    %p125 = scmp.le.s32.totalorder 1, %s9
    %p126 = scmp.lt.s32.totalorder %s9, 9
    %p127 = pnand %p125, %p126
    %p128 = pneg %p127
    // Predicated region
    $region9: #{pose_forward_pallas.5} parent=5 // pred_check
      _
    $region10: #{pose_forward_pallas.5} parent=5 // pred_check_branch
      %130 = sbr.rel (%p127) target = $region12
    $region11: #{pose_forward_pallas.5} parent=5 // pred_region
      %s131 = ssub.s32 %s9, 1
      // Predicated region
      $region13: #{pose_forward_pallas.5} parent=11 // pred_check
        %p132 = pneg %p68
      $region14: #{pose_forward_pallas.5} parent=11 // pred_check_branch
        %134 = sbr.rel (%p132) target = $region16
      $region15: #{pose_forward_pallas.5} parent=11 // pred_region
        _
      $region16: #{pose_forward_pallas.5} parent=11 // pred_fallthru
        _
      // Predicated region
      $region17: #{pose_forward_pallas.5} parent=11 // pred_check
        %p135 = pneg %p89
      $region18: #{pose_forward_pallas.5} parent=11 // pred_check_branch
        %137 = sbr.rel (%p135) target = $region20
      $region19: #{pose_forward_pallas.5} parent=11 // pred_region
        _
      $region20: #{pose_forward_pallas.5} parent=11 // pred_fallthru
        _
    $region12: #{pose_forward_pallas.5} parent=5 // pred_fallthru
      _
    %p138 = scmp.lt.s32.totalorder %s9, 8
    // Predicated region
    $region21: #{pose_forward_pallas.5} parent=5 // pred_check
      %p139 = pneg %p138
    $region22: #{pose_forward_pallas.5} parent=5 // pred_check_branch
      %141 = sbr.rel (%p139) target = $region24
    $region23: #{pose_forward_pallas.5} parent=5 // pred_region
      // Predicated region
      $region25: #{pose_forward_pallas.5} parent=23 // pred_check
        %p142 = pneg %p41
      $region26: #{pose_forward_pallas.5} parent=23 // pred_check_branch
        %144 = sbr.rel (%p142) target = $region28
      $region27: #{pose_forward_pallas.5} parent=23 // pred_region
        %p145 = scmp.lt.s32.totalorder %s16, 1
        %s146 = scalar_select %p145, %s16, 1
        %s147 = smul.addr %s146, 170
        %s148 = smul.addr %s147, 4
        %s149 = scalar_lea.vmem %s0, %s148
      $region28: #{pose_forward_pallas.5} parent=23 // pred_fallthru
        _
    $region24: #{pose_forward_pallas.5} parent=5 // pred_fallthru
      _
    %p150 = scmp.le.s32.totalorder 1, %s9
    %p151 = scmp.lt.s32.totalorder %s9, 9
    %p152 = pnand %p150, %p151
    %p153 = pneg %p152
    // Predicated region
    $region29: #{pose_forward_pallas.5} parent=5 // pred_check
      _
    $region30: #{pose_forward_pallas.5} parent=5 // pred_check_branch
      %155 = sbr.rel (%p152) target = $region32
    $region31: #{pose_forward_pallas.5} parent=5 // pred_region
      %s156 = ssub.s32 %s9, 1
      %p157 = scmp.lt.s32.totalorder %s18, 1
      %s158 = scalar_select %p157, %s18, 1
      %s159 = smul.addr %s158, 170
      %s160 = smul.addr %s159, 4
      %s161 = scalar_lea.vmem %s0, %s160
      %p162 = pneg %p47
      %p163 = pneg %p44
      %p164 = pneg %p68
      %p165 = pneg %p65
      %p166 = pneg %p89
      %p167 = pneg %p86
      %p168 = pneg %p117
      %p169 = pneg %p114
      %s170 = smul.u32 8, %s19
      %p171 = scmp.lt.s32.totalorder %s18, 1
      %s172 = scalar_select %p171, %s18, 1
      %p173 = scmp.lt.s32.totalorder %s170, 31
      %s174 = scalar_select %p173, %s170, 31
      %s175 = smul.addr %s174, 4
      %s176 = smul.addr %s172, 128
      %s177 = sadd.s32 %s175, %s176
      %s178 = smul.addr %s177, 4
      %s179 = scalar_lea.vmem %s3, %s178
      %p180 = scmp.lt.s32.totalorder %s18, 1
      %s181 = scalar_select %p180, %s18, 1
      %s182 = smul.addr %s181, 170
      %s183 = smul.addr %s182, 4
      %s184 = scalar_lea.vmem %s0, %s183
      %s185 = smul.u32 8, %s19
      %p186 = scmp.lt.s32.totalorder %s18, 1
      %s187 = scalar_select %p186, %s18, 1
      %p188 = scmp.lt.s32.totalorder %s185, 31
      %s189 = scalar_select %p188, %s185, 31
      %s190 = smul.addr %s189, 4
      %s191 = smul.addr %s187, 128
      %s192 = sadd.s32 %s190, %s191
      %s193 = smul.addr %s192, 4
      %s194 = scalar_lea.vmem %s3, %s193
      %s195 = smul.u32 8, %s19
      %s197 = smul.u32 %s19, 8
      %s198 = smul.u32 %s197, 5
      %s199 = smul.addr %s198, 4
      %s200 = scalar_lea.vmem %s184, %s199
      %v201 = vld [vmem:[%s200] sm:$0xf]
      %v202 = vld [vmem:[%s200 + $0x4] sm:$0xf]
      %v203 = vld [vmem:[%s200 + $0x8] sm:$0xf]
      %v204 = vld [vmem:[%s200 + $0xc] sm:$0xf]
      %v205 = vld [vmem:[%s200 + $0x10] sm:$0x1]
      %v206 = vld [vmem:[%s200 + $0x14] sm:$0xf]
      %v207 = vld [vmem:[%s200 + $0x18] sm:$0xf]
      %v208 = vld [vmem:[%s200 + $0x1c] sm:$0xf]
      %v209 = vld [vmem:[%s200 + $0x20] sm:$0xf]
      %v210 = vld [vmem:[%s200 + $0x24] sm:$0x1]
      %v211 = vld [vmem:[%s200 + $0x28] sm:$0xf]
      %v212 = vld [vmem:[%s200 + $0x2c] sm:$0xf]
      %v213 = vld [vmem:[%s200 + $0x30] sm:$0xf]
      %v214 = vld [vmem:[%s200 + $0x34] sm:$0xf]
      %v215 = vld [vmem:[%s200 + $0x38] sm:$0x1]
      %v216 = vld [vmem:[%s200 + $0x3c] sm:$0xf]
      %v217 = vld [vmem:[%s200 + $0x40] sm:$0xf]
      %v218 = vld [vmem:[%s200 + $0x44] sm:$0xf]
      %v219 = vld [vmem:[%s200 + $0x48] sm:$0xf]
      %v220 = vld [vmem:[%s200 + $0x4c] sm:$0x1]
      %v221 = vld [vmem:[%s200 + $0x50] sm:$0xf]
      %v222 = vld [vmem:[%s200 + $0x54] sm:$0xf]
      %v223 = vld [vmem:[%s200 + $0x58] sm:$0xf]
      %v224 = vld [vmem:[%s200 + $0x5c] sm:$0xf]
      %v225 = vld [vmem:[%s200 + $0x60] sm:$0x1]
      %v226 = vld [vmem:[%s200 + $0x64] sm:$0xf]
      %v227 = vld [vmem:[%s200 + $0x68] sm:$0xf]
      %v228 = vld [vmem:[%s200 + $0x6c] sm:$0xf]
      %v229 = vld [vmem:[%s200 + $0x70] sm:$0xf]
      %v230 = vld [vmem:[%s200 + $0x74] sm:$0x1]
      %v231 = vld [vmem:[%s200 + $0x78] sm:$0xf]
      %v232 = vld [vmem:[%s200 + $0x7c] sm:$0xf]
      %v233 = vld [vmem:[%s200 + $0x80] sm:$0xf]
      %v234 = vld [vmem:[%s200 + $0x84] sm:$0xf]
      %v235 = vld [vmem:[%s200 + $0x88] sm:$0x1]
      %v236 = vld [vmem:[%s200 + $0x8c] sm:$0xf]
      %v237 = vld [vmem:[%s200 + $0x90] sm:$0xf]
      %v238 = vld [vmem:[%s200 + $0x94] sm:$0xf]
      %v239 = vld [vmem:[%s200 + $0x98] sm:$0xf]
      %v240 = vld [vmem:[%s200 + $0x9c] sm:$0x1]
      %v241 = vld [vmem:[%s200 + $0xa0] sm:$0xf]
      %v242 = vld [vmem:[%s200 + $0xa4] sm:$0xf]
      %v243 = vld [vmem:[%s200 + $0xa8] sm:$0xf]
      %v244 = vld [vmem:[%s200 + $0xac] sm:$0xf]
      %v245 = vld [vmem:[%s200 + $0xb0] sm:$0x1]
      %v246 = vld [vmem:[%s200 + $0xb4] sm:$0xf]
      %v247 = vld [vmem:[%s200 + $0xb8] sm:$0xf]
      %v248 = vld [vmem:[%s200 + $0xbc] sm:$0xf]
      %v249 = vld [vmem:[%s200 + $0xc0] sm:$0xf]
      %v250 = vld [vmem:[%s200 + $0xc4] sm:$0x1]
      %v251 = vld [vmem:[%s1] sm:$0xf]
      %v252 = vld [vmem:[%s1 + $0x4] sm:$0xf]
      %v253 = vld [vmem:[%s1 + $0x8] sm:$0xf]
      %v254 = vld [vmem:[%s1 + $0xc] sm:$0xf]
      %v255 = vld [vmem:[%s1 + $0x10] sm:$0xf]
      %v256 = vld [vmem:[%s1 + $0x14] sm:$0xf]
      %v257 = vld [vmem:[%s1 + $0x18] sm:$0xf]
      %v258 = vld [vmem:[%s1 + $0x1c] sm:$0xf]
      %v259 = vld [vmem:[%s1 + $0x20] sm:$0xf]
      %v260 = vld [vmem:[%s1 + $0x24] sm:$0xf]
      %v261 = vld [vmem:[%s1 + $0x28] sm:$0xf]
      %v262 = vld [vmem:[%s1 + $0x2c] sm:$0xf]
      %v263 = vld [vmem:[%s1 + $0x30] sm:$0xf]
      %v264 = vld [vmem:[%s1 + $0x34] sm:$0xf]
      %v265 = vld [vmem:[%s1 + $0x38] sm:$0xf]
      %v266 = vld [vmem:[%s1 + $0x3c] sm:$0xf]
      %vm267 = vsmask.f32 3328
      %vm268 = vsmask.f32 7440
      %vm269 = vmor %vm267, %vm268
      %v271 = vshrl.u32 %v201, 16
      %v273 = vrot.slane %v271, 4
      %v274 = vshll.u32 %v201, 16
      %v276 = vrot.slane %v274, 5
      %v277 = vor.u32 %v273, %v276
      %v278 = vrot.slane %v277, 4
      %v280 = vshll.u32 %v202, 16
      %v282 = vrot.slane %v280, 5
      %v283 = vsel %vm269, %v278, %v282
      %v284 = vshrl.u32 %v202, 16
      %v286 = vrot.slane %v284, 4
      %v287 = vor.u32 %v286, %v282
      %v288 = vrot.slane %v287, 4
      %v290 = vshll.u32 %v203, 16
      %v292 = vrot.slane %v290, 5
      %v293 = vsel %vm269, %v288, %v292
      %v294 = vshrl.u32 %v203, 16
      %v296 = vrot.slane %v294, 4
      %v297 = vor.u32 %v296, %v292
      %v298 = vrot.slane %v297, 4
      %v300 = vshll.u32 %v204, 16
      %v302 = vrot.slane %v300, 5
      %v303 = vsel %vm269, %v298, %v302
      %v304 = vshrl.u32 %v204, 16
      %v306 = vrot.slane %v304, 4
      %v307 = vor.u32 %v306, %v302
      %v308 = vrot.slane %v307, 4
      %v310 = vshll.u32 %v205, 16
      %v312 = vrot.slane %v310, 5
      %v313 = vsel %vm269, %v308, %v312
      %v315 = vshrl.u32 %v206, 16
      %v317 = vrot.slane %v315, 4
      %v318 = vshll.u32 %v206, 16
      %v320 = vrot.slane %v318, 5
      %v321 = vor.u32 %v317, %v320
      %v322 = vrot.slane %v321, 4
      %v324 = vshll.u32 %v207, 16
      %v326 = vrot.slane %v324, 5
      %v327 = vsel %vm269, %v322, %v326
      %v328 = vshrl.u32 %v207, 16
      %v330 = vrot.slane %v328, 4
      %v331 = vor.u32 %v330, %v326
      %v332 = vrot.slane %v331, 4
      %v334 = vshll.u32 %v208, 16
      %v336 = vrot.slane %v334, 5
      %v337 = vsel %vm269, %v332, %v336
      %v338 = vshrl.u32 %v208, 16
      %v340 = vrot.slane %v338, 4
      %v341 = vor.u32 %v340, %v336
      %v342 = vrot.slane %v341, 4
      %v344 = vshll.u32 %v209, 16
      %v346 = vrot.slane %v344, 5
      %v347 = vsel %vm269, %v342, %v346
      %v348 = vshrl.u32 %v209, 16
      %v350 = vrot.slane %v348, 4
      %v351 = vor.u32 %v350, %v346
      %v352 = vrot.slane %v351, 4
      %v354 = vshll.u32 %v210, 16
      %v356 = vrot.slane %v354, 5
      %v357 = vsel %vm269, %v352, %v356
      %v359 = vshrl.u32 %v211, 16
      %v361 = vrot.slane %v359, 4
      %v362 = vshll.u32 %v211, 16
      %v364 = vrot.slane %v362, 5
      %v365 = vor.u32 %v361, %v364
      %v366 = vrot.slane %v365, 4
      %v368 = vshll.u32 %v212, 16
      %v370 = vrot.slane %v368, 5
      %v371 = vsel %vm269, %v366, %v370
      %v372 = vshrl.u32 %v212, 16
      %v374 = vrot.slane %v372, 4
      %v375 = vor.u32 %v374, %v370
      %v376 = vrot.slane %v375, 4
      %v378 = vshll.u32 %v213, 16
      %v380 = vrot.slane %v378, 5
      %v381 = vsel %vm269, %v376, %v380
      %v382 = vshrl.u32 %v213, 16
      %v384 = vrot.slane %v382, 4
      %v385 = vor.u32 %v384, %v380
      %v386 = vrot.slane %v385, 4
      %v388 = vshll.u32 %v214, 16
      %v390 = vrot.slane %v388, 5
      %v391 = vsel %vm269, %v386, %v390
      %v392 = vshrl.u32 %v214, 16
      %v394 = vrot.slane %v392, 4
      %v395 = vor.u32 %v394, %v390
      %v396 = vrot.slane %v395, 4
      %v398 = vshll.u32 %v215, 16
      %v400 = vrot.slane %v398, 5
      %v401 = vsel %vm269, %v396, %v400
      %v403 = vshrl.u32 %v216, 16
      %v405 = vrot.slane %v403, 4
      %v406 = vshll.u32 %v216, 16
      %v408 = vrot.slane %v406, 5
      %v409 = vor.u32 %v405, %v408
      %v410 = vrot.slane %v409, 4
      %v412 = vshll.u32 %v217, 16
      %v414 = vrot.slane %v412, 5
      %v415 = vsel %vm269, %v410, %v414
      %v416 = vshrl.u32 %v217, 16
      %v418 = vrot.slane %v416, 4
      %v419 = vor.u32 %v418, %v414
      %v420 = vrot.slane %v419, 4
      %v422 = vshll.u32 %v218, 16
      %v424 = vrot.slane %v422, 5
      %v425 = vsel %vm269, %v420, %v424
      %v426 = vshrl.u32 %v218, 16
      %v428 = vrot.slane %v426, 4
      %v429 = vor.u32 %v428, %v424
      %v430 = vrot.slane %v429, 4
      %v432 = vshll.u32 %v219, 16
      %v434 = vrot.slane %v432, 5
      %v435 = vsel %vm269, %v430, %v434
      %v436 = vshrl.u32 %v219, 16
      %v438 = vrot.slane %v436, 4
      %v439 = vor.u32 %v438, %v434
      %v440 = vrot.slane %v439, 4
      %v442 = vshll.u32 %v220, 16
      %v444 = vrot.slane %v442, 5
      %v445 = vsel %vm269, %v440, %v444
      %v447 = vshrl.u32 %v221, 16
      %v449 = vrot.slane %v447, 4
      %v450 = vshll.u32 %v221, 16
      %v452 = vrot.slane %v450, 5
      %v453 = vor.u32 %v449, %v452
      %v454 = vrot.slane %v453, 4
      %v456 = vshll.u32 %v222, 16
      %v458 = vrot.slane %v456, 5
      %v459 = vsel %vm269, %v454, %v458
      %v460 = vshrl.u32 %v222, 16
      %v462 = vrot.slane %v460, 4
      %v463 = vor.u32 %v462, %v458
      %v464 = vrot.slane %v463, 4
      %v466 = vshll.u32 %v223, 16
      %v468 = vrot.slane %v466, 5
      %v469 = vsel %vm269, %v464, %v468
      %v470 = vshrl.u32 %v223, 16
      %v472 = vrot.slane %v470, 4
      %v473 = vor.u32 %v472, %v468
      %v474 = vrot.slane %v473, 4
      %v476 = vshll.u32 %v224, 16
      %v478 = vrot.slane %v476, 5
      %v479 = vsel %vm269, %v474, %v478
      %v480 = vshrl.u32 %v224, 16
      %v482 = vrot.slane %v480, 4
      %v483 = vor.u32 %v482, %v478
      %v484 = vrot.slane %v483, 4
      %v486 = vshll.u32 %v225, 16
      %v488 = vrot.slane %v486, 5
      %v489 = vsel %vm269, %v484, %v488
      %v491 = vshrl.u32 %v226, 16
      %v493 = vrot.slane %v491, 4
      %v494 = vshll.u32 %v226, 16
      %v496 = vrot.slane %v494, 5
      %v497 = vor.u32 %v493, %v496
      %v498 = vrot.slane %v497, 4
      %v500 = vshll.u32 %v227, 16
      %v502 = vrot.slane %v500, 5
      %v503 = vsel %vm269, %v498, %v502
      %v504 = vshrl.u32 %v227, 16
      %v506 = vrot.slane %v504, 4
      %v507 = vor.u32 %v506, %v502
      %v508 = vrot.slane %v507, 4
      %v510 = vshll.u32 %v228, 16
      %v512 = vrot.slane %v510, 5
      %v513 = vsel %vm269, %v508, %v512
      %v514 = vshrl.u32 %v228, 16
      %v516 = vrot.slane %v514, 4
      %v517 = vor.u32 %v516, %v512
      %v518 = vrot.slane %v517, 4
      %v520 = vshll.u32 %v229, 16
      %v522 = vrot.slane %v520, 5
      %v523 = vsel %vm269, %v518, %v522
      %v524 = vshrl.u32 %v229, 16
      %v526 = vrot.slane %v524, 4
      %v527 = vor.u32 %v526, %v522
      %v528 = vrot.slane %v527, 4
      %v530 = vshll.u32 %v230, 16
      %v532 = vrot.slane %v530, 5
      %v533 = vsel %vm269, %v528, %v532
      %v535 = vshrl.u32 %v231, 16
      %v537 = vrot.slane %v535, 4
      %v538 = vshll.u32 %v231, 16
      %v540 = vrot.slane %v538, 5
      %v541 = vor.u32 %v537, %v540
      %v542 = vrot.slane %v541, 4
      %v544 = vshll.u32 %v232, 16
      %v546 = vrot.slane %v544, 5
      %v547 = vsel %vm269, %v542, %v546
      %v548 = vshrl.u32 %v232, 16
      %v550 = vrot.slane %v548, 4
      %v551 = vor.u32 %v550, %v546
      %v552 = vrot.slane %v551, 4
      %v554 = vshll.u32 %v233, 16
      %v556 = vrot.slane %v554, 5
      %v557 = vsel %vm269, %v552, %v556
      %v558 = vshrl.u32 %v233, 16
      %v560 = vrot.slane %v558, 4
      %v561 = vor.u32 %v560, %v556
      %v562 = vrot.slane %v561, 4
      %v564 = vshll.u32 %v234, 16
      %v566 = vrot.slane %v564, 5
      %v567 = vsel %vm269, %v562, %v566
      %v568 = vshrl.u32 %v234, 16
      %v570 = vrot.slane %v568, 4
      %v571 = vor.u32 %v570, %v566
      %v572 = vrot.slane %v571, 4
      %v574 = vshll.u32 %v235, 16
      %v576 = vrot.slane %v574, 5
      %v577 = vsel %vm269, %v572, %v576
      %v579 = vshrl.u32 %v236, 16
      %v581 = vrot.slane %v579, 4
      %v582 = vshll.u32 %v236, 16
      %v584 = vrot.slane %v582, 5
      %v585 = vor.u32 %v581, %v584
      %v586 = vrot.slane %v585, 4
      %v588 = vshll.u32 %v237, 16
      %v590 = vrot.slane %v588, 5
      %v591 = vsel %vm269, %v586, %v590
      %v592 = vshrl.u32 %v237, 16
      %v594 = vrot.slane %v592, 4
      %v595 = vor.u32 %v594, %v590
      %v596 = vrot.slane %v595, 4
      %v598 = vshll.u32 %v238, 16
      %v600 = vrot.slane %v598, 5
      %v601 = vsel %vm269, %v596, %v600
      %v602 = vshrl.u32 %v238, 16
      %v604 = vrot.slane %v602, 4
      %v605 = vor.u32 %v604, %v600
      %v606 = vrot.slane %v605, 4
      %v608 = vshll.u32 %v239, 16
      %v610 = vrot.slane %v608, 5
      %v611 = vsel %vm269, %v606, %v610
      %v612 = vshrl.u32 %v239, 16
      %v614 = vrot.slane %v612, 4
      %v615 = vor.u32 %v614, %v610
      %v616 = vrot.slane %v615, 4
      %v618 = vshll.u32 %v240, 16
      %v620 = vrot.slane %v618, 5
      %v621 = vsel %vm269, %v616, %v620
      %s622 = scalar_lea.vmem %s1, 64
      %v623 = vld [vmem:[%s622] sm:$0xf]
      %v624 = vld [vmem:[%s622 + $0x4] sm:$0xf]
      %v625 = vld [vmem:[%s622 + $0x8] sm:$0xf]
      %v626 = vld [vmem:[%s622 + $0xc] sm:$0xf]
      %v627 = vld [vmem:[%s622 + $0x10] sm:$0xf]
      %v628 = vld [vmem:[%s622 + $0x14] sm:$0xf]
      %v629 = vld [vmem:[%s622 + $0x18] sm:$0xf]
      %v630 = vld [vmem:[%s622 + $0x1c] sm:$0xf]
      %v631 = vld [vmem:[%s622 + $0x20] sm:$0xf]
      %v632 = vld [vmem:[%s622 + $0x24] sm:$0xf]
      %v633 = vld [vmem:[%s622 + $0x28] sm:$0xf]
      %v634 = vld [vmem:[%s622 + $0x2c] sm:$0xf]
      %v635 = vld [vmem:[%s622 + $0x30] sm:$0xf]
      %v636 = vld [vmem:[%s622 + $0x34] sm:$0xf]
      %v637 = vld [vmem:[%s622 + $0x38] sm:$0xf]
      %v638 = vld [vmem:[%s622 + $0x3c] sm:$0xf]
      %v639 = vunpack.c.l.b16 %v283
      %v640 = vunpack.c.l.b16 %v293
      %v641 = vunpack.c.l.b16 %v303
      %v642 = vunpack.c.l.b16 %v313
      %v643 = vunpack.c.l.b16 %v327
      %v644 = vunpack.c.l.b16 %v337
      %v645 = vunpack.c.l.b16 %v347
      %v646 = vunpack.c.l.b16 %v357
      %v647 = vunpack.c.l.b16 %v371
      %v648 = vunpack.c.l.b16 %v381
      %v649 = vunpack.c.l.b16 %v391
      %v650 = vunpack.c.l.b16 %v401
      %v651 = vunpack.c.l.b16 %v415
      %v652 = vunpack.c.l.b16 %v425
      %v653 = vunpack.c.l.b16 %v435
      %v654 = vunpack.c.l.b16 %v445
      %v655 = vunpack.c.l.b16 %v459
      %v656 = vunpack.c.l.b16 %v469
      %v657 = vunpack.c.l.b16 %v479
      %v658 = vunpack.c.l.b16 %v489
      %v659 = vunpack.c.l.b16 %v503
      %v660 = vunpack.c.l.b16 %v513
      %v661 = vunpack.c.l.b16 %v523
      %v662 = vunpack.c.l.b16 %v533
      %v663 = vunpack.c.l.b16 %v547
      %v664 = vunpack.c.l.b16 %v557
      %v665 = vunpack.c.l.b16 %v567
      %v666 = vunpack.c.l.b16 %v577
      %v667 = vunpack.c.l.b16 %v591
      %v668 = vunpack.c.l.b16 %v601
      %v669 = vunpack.c.l.b16 %v611
      %v670 = vunpack.c.l.b16 %v621
      %v671 = vpack.c.b16 %v640, %v639
      %v672 = vpack.c.b16 %v642, %v641
      %v673 = vpack.c.b16 %v644, %v643
      %v674 = vpack.c.b16 %v646, %v645
      %v675 = vpack.c.b16 %v648, %v647
      %v676 = vpack.c.b16 %v650, %v649
      %v677 = vpack.c.b16 %v652, %v651
      %v678 = vpack.c.b16 %v654, %v653
      %v679 = vpack.c.b16 %v656, %v655
      %v680 = vpack.c.b16 %v658, %v657
      %v681 = vpack.c.b16 %v660, %v659
      %v682 = vpack.c.b16 %v662, %v661
      %v683 = vpack.c.b16 %v664, %v663
      %v684 = vpack.c.b16 %v666, %v665
      %v685 = vpack.c.b16 %v668, %v667
      %v686 = vpack.c.b16 %v670, %v669
      %v719 = vunpack.c.l.b16 %v623
      %v720 = vunpack.c.l.b16 %v624
      %v721 = vunpack.c.l.b16 %v625
      %v722 = vunpack.c.l.b16 %v626
      %v723 = vunpack.c.l.b16 %v627
      %v724 = vunpack.c.l.b16 %v628
      %v725 = vunpack.c.l.b16 %v629
      %v726 = vunpack.c.l.b16 %v630
      %v727 = vunpack.c.l.b16 %v631
      %v728 = vunpack.c.l.b16 %v632
      %v729 = vunpack.c.l.b16 %v633
      %v730 = vunpack.c.l.b16 %v634
      %v731 = vunpack.c.l.b16 %v635
      %v732 = vunpack.c.l.b16 %v636
      %v733 = vunpack.c.l.b16 %v637
      %v734 = vunpack.c.l.b16 %v638
      %v735 = vpack.c.b16 %v720, %v719
      %v736 = vpack.c.b16 %v722, %v721
      %v737 = vpack.c.b16 %v724, %v723
      %v738 = vpack.c.b16 %v726, %v725
      %v739 = vpack.c.b16 %v728, %v727
      %v740 = vpack.c.b16 %v730, %v729
      %v741 = vpack.c.b16 %v732, %v731
      %v742 = vpack.c.b16 %v734, %v733
      %751 = vmatprep.subr.bf16.mxu0 0
      %752 = vmatpush1.bf16.msra.mxu0 %v742
      %753 = vmatprep.subr.bf16.mxu0 0
      %754 = vmatpush1.bf16.msra.mxu0 %v741
      %755 = vmatprep.subr.bf16.mxu0 0
      %756 = vmatpush1.bf16.msra.mxu0 %v740
      %757 = vmatprep.subr.bf16.mxu0 0
      %758 = vmatpush1.bf16.msra.mxu0 %v739
      %759 = vmatprep.subr.bf16.mxu0 0
      %760 = vmatpush1.bf16.msra.mxu0 %v738
      %761 = vmatprep.subr.bf16.mxu0 0
      %762 = vmatpush1.bf16.msra.mxu0 %v737
      %763 = vmatprep.subr.bf16.mxu0 0
      %764 = vmatpush1.bf16.msra.mxu0 %v736
      %765 = vmatprep.subr.bf16.mxu0 0
      %766 = vmatpush1.bf16.msra.mxu0 %v735
      %767 = vmatprep.subr.bf16.mxu0 0
      %768 = vmatpush2.bf16.msra.mxu0 0
      %769 = vmatprep.subr.bf16.mxu0 0
      %770 = vmatpush2.bf16.msra.mxu0 0
      %771 = vmatprep.subr.bf16.mxu0 0
      %772 = vmatpush2.bf16.msra.mxu0 0
      %773 = vmatprep.subr.bf16.mxu0 0
      %774 = vmatpush2.bf16.msra.mxu0 0
      %775 = vmatprep.subr.bf16.mxu0 0
      %776 = vmatpush2.bf16.msra.mxu0 0
      %777 = vmatprep.subr.bf16.mxu0 0
      %778 = vmatpush2.bf16.msra.mxu0 0
      %779 = vmatprep.subr.bf16.mxu0 0
      %780 = vmatpush2.bf16.msra.mxu0 0
      %781 = vmatprep.subr.bf16.mxu0 0
      %782 = vmatpush2.bf16.msra.mxu0 0
      %783 = vmatprep.mubr.bf16.mxu0 0
      %784 = vmatmul.mubr.bf16.gmra.mxu0 %v671
      %v785 = vpop.f32.mrf.mxu0
      %v786 = vadd.f32 0.0, %v785
      %v787 = vpop.f32.mrf.mxu0
      %v788 = vpop.f32.mrf.mxu0
      %v789 = vadd.f32 0.0, %v788
      %v790 = vpop.f32.mrf.mxu0
      %791 = vmatprep.mubr.bf16.mxu0 0
      %792 = vmatmul.mubr.bf16.gmra.mxu0 %v672
      %v793 = vpop.f32.mrf.mxu0
      %v794 = vadd.f32 0.0, %v793
      %v795 = vpop.f32.mrf.mxu0
      %v796 = vpop.f32.mrf.mxu0
      %v797 = vadd.f32 0.0, %v796
      %v798 = vpop.f32.mrf.mxu0
      %799 = vmatprep.mubr.bf16.mxu0 0
      %800 = vmatmul.mubr.bf16.gmra.mxu0 %v673
      %v801 = vpop.f32.mrf.mxu0
      %v802 = vadd.f32 0.0, %v801
      %v803 = vpop.f32.mrf.mxu0
      %v804 = vpop.f32.mrf.mxu0
      %v805 = vadd.f32 0.0, %v804
      %v806 = vpop.f32.mrf.mxu0
      %807 = vmatprep.mubr.bf16.mxu0 0
      %808 = vmatmul.mubr.bf16.gmra.mxu0 %v674
      %v809 = vpop.f32.mrf.mxu0
      %v810 = vadd.f32 0.0, %v809
      %v811 = vpop.f32.mrf.mxu0
      %v812 = vpop.f32.mrf.mxu0
      %v813 = vadd.f32 0.0, %v812
      %v814 = vpop.f32.mrf.mxu0
      %815 = vmatprep.mubr.bf16.mxu0 0
      %816 = vmatmul.mubr.bf16.gmra.mxu0 %v675
      %v817 = vpop.f32.mrf.mxu0
      %v818 = vadd.f32 0.0, %v817
      %v819 = vpop.f32.mrf.mxu0
      %v820 = vpop.f32.mrf.mxu0
      %v821 = vadd.f32 0.0, %v820
      %v822 = vpop.f32.mrf.mxu0
      %823 = vmatprep.mubr.bf16.mxu0 0
      %824 = vmatmul.mubr.bf16.gmra.mxu0 %v676
      %v825 = vpop.f32.mrf.mxu0
      %v826 = vadd.f32 0.0, %v825
      %v827 = vpop.f32.mrf.mxu0
      %v828 = vpop.f32.mrf.mxu0
      %v829 = vadd.f32 0.0, %v828
      %v830 = vpop.f32.mrf.mxu0
      %831 = vmatprep.mubr.bf16.mxu0 0
      %832 = vmatmul.mubr.bf16.gmra.mxu0 %v677
      %v833 = vpop.f32.mrf.mxu0
      %v834 = vadd.f32 0.0, %v833
      %v835 = vpop.f32.mrf.mxu0
      %v836 = vpop.f32.mrf.mxu0
      %v837 = vadd.f32 0.0, %v836
      %v838 = vpop.f32.mrf.mxu0
      %839 = vmatprep.mubr.bf16.mxu0 0
      %840 = vmatmul.mubr.bf16.gmra.mxu0 %v678
      %v841 = vpop.f32.mrf.mxu0
      %v842 = vadd.f32 0.0, %v841
      %v843 = vpop.f32.mrf.mxu0
      %v844 = vpop.f32.mrf.mxu0
      %v845 = vadd.f32 0.0, %v844
      %v846 = vpop.f32.mrf.mxu0
      %847 = vmatprep.mubr.bf16.mxu0 0
      %848 = vmatmul.mubr.bf16.gmra.mxu0 %v679
      %v849 = vpop.f32.mrf.mxu0
      %v850 = vadd.f32 0.0, %v849
      %v851 = vpop.f32.mrf.mxu0
      %v852 = vpop.f32.mrf.mxu0
      %v853 = vadd.f32 0.0, %v852
      %v854 = vpop.f32.mrf.mxu0
      %855 = vmatprep.mubr.bf16.mxu0 0
      %856 = vmatmul.mubr.bf16.gmra.mxu0 %v680
      %v857 = vpop.f32.mrf.mxu0
      %v858 = vadd.f32 0.0, %v857
      %v859 = vpop.f32.mrf.mxu0
      %v860 = vpop.f32.mrf.mxu0
      %v861 = vadd.f32 0.0, %v860
      %v862 = vpop.f32.mrf.mxu0
      %863 = vmatprep.mubr.bf16.mxu0 0
      %864 = vmatmul.mubr.bf16.gmra.mxu0 %v681
      %v865 = vpop.f32.mrf.mxu0
      %v866 = vadd.f32 0.0, %v865
      %v867 = vpop.f32.mrf.mxu0
      %v868 = vpop.f32.mrf.mxu0
      %v869 = vadd.f32 0.0, %v868
      %v870 = vpop.f32.mrf.mxu0
      %871 = vmatprep.mubr.bf16.mxu0 0
      %872 = vmatmul.mubr.bf16.gmra.mxu0 %v682
      %v873 = vpop.f32.mrf.mxu0
      %v874 = vadd.f32 0.0, %v873
      %v875 = vpop.f32.mrf.mxu0
      %v876 = vpop.f32.mrf.mxu0
      %v877 = vadd.f32 0.0, %v876
      %v878 = vpop.f32.mrf.mxu0
      %879 = vmatprep.mubr.bf16.mxu0 0
      %880 = vmatmul.mubr.bf16.gmra.mxu0 %v683
      %v881 = vpop.f32.mrf.mxu0
      %v882 = vadd.f32 0.0, %v881
      %v883 = vpop.f32.mrf.mxu0
      %v884 = vpop.f32.mrf.mxu0
      %v885 = vadd.f32 0.0, %v884
      %v886 = vpop.f32.mrf.mxu0
      %887 = vmatprep.mubr.bf16.mxu0 0
      %888 = vmatmul.mubr.bf16.gmra.mxu0 %v684
      %v889 = vpop.f32.mrf.mxu0
      %v890 = vadd.f32 0.0, %v889
      %v891 = vpop.f32.mrf.mxu0
      %v892 = vpop.f32.mrf.mxu0
      %v893 = vadd.f32 0.0, %v892
      %v894 = vpop.f32.mrf.mxu0
      %895 = vmatprep.mubr.bf16.mxu0 0
      %896 = vmatmul.mubr.bf16.gmra.mxu0 %v685
      %v897 = vpop.f32.mrf.mxu0
      %v898 = vadd.f32 0.0, %v897
      %v899 = vpop.f32.mrf.mxu0
      %v900 = vpop.f32.mrf.mxu0
      %v901 = vadd.f32 0.0, %v900
      %v902 = vpop.f32.mrf.mxu0
      %903 = vmatprep.mubr.bf16.mxu0 0
      %904 = vmatmul.mubr.bf16.gmra.mxu0 %v686
      %v905 = vpop.f32.mrf.mxu0
      %v906 = vadd.f32 0.0, %v905
      %v907 = vpop.f32.mrf.mxu0
      %v908 = vpop.f32.mrf.mxu0
      %v909 = vadd.f32 0.0, %v908
      %v910 = vpop.f32.mrf.mxu0
      %911 = vdwg.mxu0
      %v944 = vunpack.c.l.b16 %v201
      %v945 = vunpack.c.l.b16 %v202
      %v946 = vunpack.c.l.b16 %v203
      %v947 = vunpack.c.l.b16 %v204
      %v948 = vunpack.c.l.b16 %v206
      %v949 = vunpack.c.l.b16 %v207
      %v950 = vunpack.c.l.b16 %v208
      %v951 = vunpack.c.l.b16 %v209
      %v952 = vunpack.c.l.b16 %v211
      %v953 = vunpack.c.l.b16 %v212
      %v954 = vunpack.c.l.b16 %v213
      %v955 = vunpack.c.l.b16 %v214
      %v956 = vunpack.c.l.b16 %v216
      %v957 = vunpack.c.l.b16 %v217
      %v958 = vunpack.c.l.b16 %v218
      %v959 = vunpack.c.l.b16 %v219
      %v960 = vunpack.c.l.b16 %v221
      %v961 = vunpack.c.l.b16 %v222
      %v962 = vunpack.c.l.b16 %v223
      %v963 = vunpack.c.l.b16 %v224
      %v964 = vunpack.c.l.b16 %v226
      %v965 = vunpack.c.l.b16 %v227
      %v966 = vunpack.c.l.b16 %v228
      %v967 = vunpack.c.l.b16 %v229
      %v968 = vunpack.c.l.b16 %v231
      %v969 = vunpack.c.l.b16 %v232
      %v970 = vunpack.c.l.b16 %v233
      %v971 = vunpack.c.l.b16 %v234
      %v972 = vunpack.c.l.b16 %v236
      %v973 = vunpack.c.l.b16 %v237
      %v974 = vunpack.c.l.b16 %v238
      %v975 = vunpack.c.l.b16 %v239
      %v976 = vpack.c.b16 %v945, %v944
      %v977 = vpack.c.b16 %v947, %v946
      %v978 = vpack.c.b16 %v949, %v948
      %v979 = vpack.c.b16 %v951, %v950
      %v980 = vpack.c.b16 %v953, %v952
      %v981 = vpack.c.b16 %v955, %v954
      %v982 = vpack.c.b16 %v957, %v956
      %v983 = vpack.c.b16 %v959, %v958
      %v984 = vpack.c.b16 %v961, %v960
      %v985 = vpack.c.b16 %v963, %v962
      %v986 = vpack.c.b16 %v965, %v964
      %v987 = vpack.c.b16 %v967, %v966
      %v988 = vpack.c.b16 %v969, %v968
      %v989 = vpack.c.b16 %v971, %v970
      %v990 = vpack.c.b16 %v973, %v972
      %v991 = vpack.c.b16 %v975, %v974
      %v1024 = vunpack.c.l.b16 %v251
      %v1025 = vunpack.c.l.b16 %v252
      %v1026 = vunpack.c.l.b16 %v253
      %v1027 = vunpack.c.l.b16 %v254
      %v1028 = vunpack.c.l.b16 %v255
      %v1029 = vunpack.c.l.b16 %v256
      %v1030 = vunpack.c.l.b16 %v257
      %v1031 = vunpack.c.l.b16 %v258
      %v1032 = vunpack.c.l.b16 %v259
      %v1033 = vunpack.c.l.b16 %v260
      %v1034 = vunpack.c.l.b16 %v261
      %v1035 = vunpack.c.l.b16 %v262
      %v1036 = vunpack.c.l.b16 %v263
      %v1037 = vunpack.c.l.b16 %v264
      %v1038 = vunpack.c.l.b16 %v265
      %v1039 = vunpack.c.l.b16 %v266
      %v1040 = vpack.c.b16 %v1025, %v1024
      %v1041 = vpack.c.b16 %v1027, %v1026
      %v1042 = vpack.c.b16 %v1029, %v1028
      %v1043 = vpack.c.b16 %v1031, %v1030
      %v1044 = vpack.c.b16 %v1033, %v1032
      %v1045 = vpack.c.b16 %v1035, %v1034
      %v1046 = vpack.c.b16 %v1037, %v1036
      %v1047 = vpack.c.b16 %v1039, %v1038
      %1056 = vmatprep.subr.bf16.mxu0 0
      %1057 = vmatpush1.bf16.msra.mxu0 %v1047
      %1058 = vmatprep.subr.bf16.mxu0 0
      %1059 = vmatpush1.bf16.msra.mxu0 %v1046
      %1060 = vmatprep.subr.bf16.mxu0 0
      %1061 = vmatpush1.bf16.msra.mxu0 %v1045
      %1062 = vmatprep.subr.bf16.mxu0 0
      %1063 = vmatpush1.bf16.msra.mxu0 %v1044
      %1064 = vmatprep.subr.bf16.mxu0 0
      %1065 = vmatpush1.bf16.msra.mxu0 %v1043
      %1066 = vmatprep.subr.bf16.mxu0 0
      %1067 = vmatpush1.bf16.msra.mxu0 %v1042
      %1068 = vmatprep.subr.bf16.mxu0 0
      %1069 = vmatpush1.bf16.msra.mxu0 %v1041
      %1070 = vmatprep.subr.bf16.mxu0 0
      %1071 = vmatpush1.bf16.msra.mxu0 %v1040
      %1072 = vmatprep.subr.bf16.mxu0 0
      %1073 = vmatpush2.bf16.msra.mxu0 0
      %1074 = vmatprep.subr.bf16.mxu0 0
      %1075 = vmatpush2.bf16.msra.mxu0 0
      %1076 = vmatprep.subr.bf16.mxu0 0
      %1077 = vmatpush2.bf16.msra.mxu0 0
      %1078 = vmatprep.subr.bf16.mxu0 0
      %1079 = vmatpush2.bf16.msra.mxu0 0
      %1080 = vmatprep.subr.bf16.mxu0 0
      %1081 = vmatpush2.bf16.msra.mxu0 0
      %1082 = vmatprep.subr.bf16.mxu0 0
      %1083 = vmatpush2.bf16.msra.mxu0 0
      %1084 = vmatprep.subr.bf16.mxu0 0
      %1085 = vmatpush2.bf16.msra.mxu0 0
      %1086 = vmatprep.subr.bf16.mxu0 0
      %1087 = vmatpush2.bf16.msra.mxu0 0
      %1088 = vmatprep.mubr.bf16.mxu0 0
      %1089 = vmatmul.mubr.bf16.gmra.mxu0 %v976
      %v1090 = vpop.f32.mrf.mxu0
      %v1091 = vadd.f32 %v786, %v1090
      %v1092 = vpop.f32.mrf.mxu0
      %v1093 = vpop.f32.mrf.mxu0
      %v1094 = vadd.f32 %v789, %v1093
      %v1095 = vpop.f32.mrf.mxu0
      %1096 = vmatprep.mubr.bf16.mxu0 0
      %1097 = vmatmul.mubr.bf16.gmra.mxu0 %v977
      %v1098 = vpop.f32.mrf.mxu0
      %v1099 = vadd.f32 %v794, %v1098
      %v1100 = vpop.f32.mrf.mxu0
      %v1101 = vpop.f32.mrf.mxu0
      %v1102 = vadd.f32 %v797, %v1101
      %v1103 = vpop.f32.mrf.mxu0
      %1104 = vmatprep.mubr.bf16.mxu0 0
      %1105 = vmatmul.mubr.bf16.gmra.mxu0 %v978
      %v1106 = vpop.f32.mrf.mxu0
      %v1107 = vadd.f32 %v802, %v1106
      %v1108 = vpop.f32.mrf.mxu0
      %v1109 = vpop.f32.mrf.mxu0
      %v1110 = vadd.f32 %v805, %v1109
      %v1111 = vpop.f32.mrf.mxu0
      %1112 = vmatprep.mubr.bf16.mxu0 0
      %1113 = vmatmul.mubr.bf16.gmra.mxu0 %v979
      %v1114 = vpop.f32.mrf.mxu0
      %v1115 = vadd.f32 %v810, %v1114
      %v1116 = vpop.f32.mrf.mxu0
      %v1117 = vpop.f32.mrf.mxu0
      %v1118 = vadd.f32 %v813, %v1117
      %v1119 = vpop.f32.mrf.mxu0
      %1120 = vmatprep.mubr.bf16.mxu0 0
      %1121 = vmatmul.mubr.bf16.gmra.mxu0 %v980
      %v1122 = vpop.f32.mrf.mxu0
      %v1123 = vadd.f32 %v818, %v1122
      %v1124 = vpop.f32.mrf.mxu0
      %v1125 = vpop.f32.mrf.mxu0
      %v1126 = vadd.f32 %v821, %v1125
      %v1127 = vpop.f32.mrf.mxu0
      %1128 = vmatprep.mubr.bf16.mxu0 0
      %1129 = vmatmul.mubr.bf16.gmra.mxu0 %v981
      %v1130 = vpop.f32.mrf.mxu0
      %v1131 = vadd.f32 %v826, %v1130
      %v1132 = vpop.f32.mrf.mxu0
      %v1133 = vpop.f32.mrf.mxu0
      %v1134 = vadd.f32 %v829, %v1133
      %v1135 = vpop.f32.mrf.mxu0
      %1136 = vmatprep.mubr.bf16.mxu0 0
      %1137 = vmatmul.mubr.bf16.gmra.mxu0 %v982
      %v1138 = vpop.f32.mrf.mxu0
      %v1139 = vadd.f32 %v834, %v1138
      %v1140 = vpop.f32.mrf.mxu0
      %v1141 = vpop.f32.mrf.mxu0
      %v1142 = vadd.f32 %v837, %v1141
      %v1143 = vpop.f32.mrf.mxu0
      %1144 = vmatprep.mubr.bf16.mxu0 0
      %1145 = vmatmul.mubr.bf16.gmra.mxu0 %v983
      %v1146 = vpop.f32.mrf.mxu0
      %v1147 = vadd.f32 %v842, %v1146
      %v1148 = vpop.f32.mrf.mxu0
      %v1149 = vpop.f32.mrf.mxu0
      %v1150 = vadd.f32 %v845, %v1149
      %v1151 = vpop.f32.mrf.mxu0
      %1152 = vmatprep.mubr.bf16.mxu0 0
      %1153 = vmatmul.mubr.bf16.gmra.mxu0 %v984
      %v1154 = vpop.f32.mrf.mxu0
      %v1155 = vadd.f32 %v850, %v1154
      %v1156 = vpop.f32.mrf.mxu0
      %v1157 = vpop.f32.mrf.mxu0
      %v1158 = vadd.f32 %v853, %v1157
      %v1159 = vpop.f32.mrf.mxu0
      %1160 = vmatprep.mubr.bf16.mxu0 0
      %1161 = vmatmul.mubr.bf16.gmra.mxu0 %v985
      %v1162 = vpop.f32.mrf.mxu0
      %v1163 = vadd.f32 %v858, %v1162
      %v1164 = vpop.f32.mrf.mxu0
      %v1165 = vpop.f32.mrf.mxu0
      %v1166 = vadd.f32 %v861, %v1165
      %v1167 = vpop.f32.mrf.mxu0
      %1168 = vmatprep.mubr.bf16.mxu0 0
      %1169 = vmatmul.mubr.bf16.gmra.mxu0 %v986
      %v1170 = vpop.f32.mrf.mxu0
      %v1171 = vadd.f32 %v866, %v1170
      %v1172 = vpop.f32.mrf.mxu0
      %v1173 = vpop.f32.mrf.mxu0
      %v1174 = vadd.f32 %v869, %v1173
      %v1175 = vpop.f32.mrf.mxu0
      %1176 = vmatprep.mubr.bf16.mxu0 0
      %1177 = vmatmul.mubr.bf16.gmra.mxu0 %v987
      %v1178 = vpop.f32.mrf.mxu0
      %v1179 = vadd.f32 %v874, %v1178
      %v1180 = vpop.f32.mrf.mxu0
      %v1181 = vpop.f32.mrf.mxu0
      %v1182 = vadd.f32 %v877, %v1181
      %v1183 = vpop.f32.mrf.mxu0
      %1184 = vmatprep.mubr.bf16.mxu0 0
      %1185 = vmatmul.mubr.bf16.gmra.mxu0 %v988
      %v1186 = vpop.f32.mrf.mxu0
      %v1187 = vadd.f32 %v882, %v1186
      %v1188 = vpop.f32.mrf.mxu0
      %v1189 = vpop.f32.mrf.mxu0
      %v1190 = vadd.f32 %v885, %v1189
      %v1191 = vpop.f32.mrf.mxu0
      %1192 = vmatprep.mubr.bf16.mxu0 0
      %1193 = vmatmul.mubr.bf16.gmra.mxu0 %v989
      %v1194 = vpop.f32.mrf.mxu0
      %v1195 = vadd.f32 %v890, %v1194
      %v1196 = vpop.f32.mrf.mxu0
      %v1197 = vpop.f32.mrf.mxu0
      %v1198 = vadd.f32 %v893, %v1197
      %v1199 = vpop.f32.mrf.mxu0
      %1200 = vmatprep.mubr.bf16.mxu0 0
      %1201 = vmatmul.mubr.bf16.gmra.mxu0 %v990
      %v1202 = vpop.f32.mrf.mxu0
      %v1203 = vadd.f32 %v898, %v1202
      %v1204 = vpop.f32.mrf.mxu0
      %v1205 = vpop.f32.mrf.mxu0
      %v1206 = vadd.f32 %v901, %v1205
      %v1207 = vpop.f32.mrf.mxu0
      %1208 = vmatprep.mubr.bf16.mxu0 0
      %1209 = vmatmul.mubr.bf16.gmra.mxu0 %v991
      %v1210 = vpop.f32.mrf.mxu0
      %v1211 = vadd.f32 %v906, %v1210
      %v1212 = vpop.f32.mrf.mxu0
      %v1213 = vpop.f32.mrf.mxu0
      %v1214 = vadd.f32 %v909, %v1213
      %v1215 = vpop.f32.mrf.mxu0
      %1216 = vdwg.mxu0
      %vm1225 = vcmask 1042432
      %vm1226 = vcmask 1046532
      %vm1227 = vmor %vm1225, %vm1226
      %v1228 = vrot.slane %v201, 5
      %v1229 = vrot.slane %v1228, 4
      %v1230 = vrot.slane %v202, 5
      %v1231 = vsel %vm1227, %v1229, %v1230
      %v1232 = vrot.slane %v1230, 4
      %v1233 = vrot.slane %v203, 5
      %v1234 = vsel %vm1227, %v1232, %v1233
      %v1235 = vrot.slane %v1233, 4
      %v1236 = vrot.slane %v204, 5
      %v1237 = vsel %vm1227, %v1235, %v1236
      %v1238 = vrot.slane %v1236, 4
      %v1239 = vrot.slane %v205, 5
      %v1240 = vsel %vm1227, %v1238, %v1239
      %v1241 = vrot.slane %v206, 5
      %v1242 = vrot.slane %v1241, 4
      %v1243 = vrot.slane %v207, 5
      %v1244 = vsel %vm1227, %v1242, %v1243
      %v1245 = vrot.slane %v1243, 4
      %v1246 = vrot.slane %v208, 5
      %v1247 = vsel %vm1227, %v1245, %v1246
      %v1248 = vrot.slane %v1246, 4
      %v1249 = vrot.slane %v209, 5
      %v1250 = vsel %vm1227, %v1248, %v1249
      %v1251 = vrot.slane %v1249, 4
      %v1252 = vrot.slane %v210, 5
      %v1253 = vsel %vm1227, %v1251, %v1252
      %v1254 = vrot.slane %v211, 5
      %v1255 = vrot.slane %v1254, 4
      %v1256 = vrot.slane %v212, 5
      %v1257 = vsel %vm1227, %v1255, %v1256
      %v1258 = vrot.slane %v1256, 4
      %v1259 = vrot.slane %v213, 5
      %v1260 = vsel %vm1227, %v1258, %v1259
      %v1261 = vrot.slane %v1259, 4
      %v1262 = vrot.slane %v214, 5
      %v1263 = vsel %vm1227, %v1261, %v1262
      %v1264 = vrot.slane %v1262, 4
      %v1265 = vrot.slane %v215, 5
      %v1266 = vsel %vm1227, %v1264, %v1265
      %v1267 = vrot.slane %v216, 5
      %v1268 = vrot.slane %v1267, 4
      %v1269 = vrot.slane %v217, 5
      %v1270 = vsel %vm1227, %v1268, %v1269
      %v1271 = vrot.slane %v1269, 4
      %v1272 = vrot.slane %v218, 5
      %v1273 = vsel %vm1227, %v1271, %v1272
      %v1274 = vrot.slane %v1272, 4
      %v1275 = vrot.slane %v219, 5
      %v1276 = vsel %vm1227, %v1274, %v1275
      %v1277 = vrot.slane %v1275, 4
      %v1278 = vrot.slane %v220, 5
      %v1279 = vsel %vm1227, %v1277, %v1278
      %v1280 = vrot.slane %v221, 5
      %v1281 = vrot.slane %v1280, 4
      %v1282 = vrot.slane %v222, 5
      %v1283 = vsel %vm1227, %v1281, %v1282
      %v1284 = vrot.slane %v1282, 4
      %v1285 = vrot.slane %v223, 5
      %v1286 = vsel %vm1227, %v1284, %v1285
      %v1287 = vrot.slane %v1285, 4
      %v1288 = vrot.slane %v224, 5
      %v1289 = vsel %vm1227, %v1287, %v1288
      %v1290 = vrot.slane %v1288, 4
      %v1291 = vrot.slane %v225, 5
      %v1292 = vsel %vm1227, %v1290, %v1291
      %v1293 = vrot.slane %v226, 5
      %v1294 = vrot.slane %v1293, 4
      %v1295 = vrot.slane %v227, 5
      %v1296 = vsel %vm1227, %v1294, %v1295
      %v1297 = vrot.slane %v1295, 4
      %v1298 = vrot.slane %v228, 5
      %v1299 = vsel %vm1227, %v1297, %v1298
      %v1300 = vrot.slane %v1298, 4
      %v1301 = vrot.slane %v229, 5
      %v1302 = vsel %vm1227, %v1300, %v1301
      %v1303 = vrot.slane %v1301, 4
      %v1304 = vrot.slane %v230, 5
      %v1305 = vsel %vm1227, %v1303, %v1304
      %v1306 = vrot.slane %v231, 5
      %v1307 = vrot.slane %v1306, 4
      %v1308 = vrot.slane %v232, 5
      %v1309 = vsel %vm1227, %v1307, %v1308
      %v1310 = vrot.slane %v1308, 4
      %v1311 = vrot.slane %v233, 5
      %v1312 = vsel %vm1227, %v1310, %v1311
      %v1313 = vrot.slane %v1311, 4
      %v1314 = vrot.slane %v234, 5
      %v1315 = vsel %vm1227, %v1313, %v1314
      %v1316 = vrot.slane %v1314, 4
      %v1317 = vrot.slane %v235, 5
      %v1318 = vsel %vm1227, %v1316, %v1317
      %v1319 = vrot.slane %v236, 5
      %v1320 = vrot.slane %v1319, 4
      %v1321 = vrot.slane %v237, 5
      %v1322 = vsel %vm1227, %v1320, %v1321
      %v1323 = vrot.slane %v1321, 4
      %v1324 = vrot.slane %v238, 5
      %v1325 = vsel %vm1227, %v1323, %v1324
      %v1326 = vrot.slane %v1324, 4
      %v1327 = vrot.slane %v239, 5
      %v1328 = vsel %vm1227, %v1326, %v1327
      %v1329 = vrot.slane %v1327, 4
      %v1330 = vrot.slane %v240, 5
      %v1331 = vsel %vm1227, %v1329, %v1330
      %s1332 = scalar_lea.vmem %s1, 128
      %v1333 = vld [vmem:[%s1332] sm:$0xf]
      %v1334 = vld [vmem:[%s1332 + $0x4] sm:$0xf]
      %v1335 = vld [vmem:[%s1332 + $0x8] sm:$0xf]
      %v1336 = vld [vmem:[%s1332 + $0xc] sm:$0xf]
      %v1337 = vld [vmem:[%s1332 + $0x10] sm:$0xf]
      %v1338 = vld [vmem:[%s1332 + $0x14] sm:$0xf]
      %v1339 = vld [vmem:[%s1332 + $0x18] sm:$0xf]
      %v1340 = vld [vmem:[%s1332 + $0x1c] sm:$0xf]
      %v1341 = vld [vmem:[%s1332 + $0x20] sm:$0xf]
      %v1342 = vld [vmem:[%s1332 + $0x24] sm:$0xf]
      %v1343 = vld [vmem:[%s1332 + $0x28] sm:$0xf]
      %v1344 = vld [vmem:[%s1332 + $0x2c] sm:$0xf]
      %v1345 = vld [vmem:[%s1332 + $0x30] sm:$0xf]
      %v1346 = vld [vmem:[%s1332 + $0x34] sm:$0xf]
      %v1347 = vld [vmem:[%s1332 + $0x38] sm:$0xf]
      %v1348 = vld [vmem:[%s1332 + $0x3c] sm:$0xf]
      %v1349 = vunpack.c.l.b16 %v1231
      %v1350 = vunpack.c.l.b16 %v1234
      %v1351 = vunpack.c.l.b16 %v1237
      %v1352 = vunpack.c.l.b16 %v1240
      %v1353 = vunpack.c.l.b16 %v1244
      %v1354 = vunpack.c.l.b16 %v1247
      %v1355 = vunpack.c.l.b16 %v1250
      %v1356 = vunpack.c.l.b16 %v1253
      %v1357 = vunpack.c.l.b16 %v1257
      %v1358 = vunpack.c.l.b16 %v1260
      %v1359 = vunpack.c.l.b16 %v1263
      %v1360 = vunpack.c.l.b16 %v1266
      %v1361 = vunpack.c.l.b16 %v1270
      %v1362 = vunpack.c.l.b16 %v1273
      %v1363 = vunpack.c.l.b16 %v1276
      %v1364 = vunpack.c.l.b16 %v1279
      %v1365 = vunpack.c.l.b16 %v1283
      %v1366 = vunpack.c.l.b16 %v1286
      %v1367 = vunpack.c.l.b16 %v1289
      %v1368 = vunpack.c.l.b16 %v1292
      %v1369 = vunpack.c.l.b16 %v1296
      %v1370 = vunpack.c.l.b16 %v1299
      %v1371 = vunpack.c.l.b16 %v1302
      %v1372 = vunpack.c.l.b16 %v1305
      %v1373 = vunpack.c.l.b16 %v1309
      %v1374 = vunpack.c.l.b16 %v1312
      %v1375 = vunpack.c.l.b16 %v1315
      %v1376 = vunpack.c.l.b16 %v1318
      %v1377 = vunpack.c.l.b16 %v1322
      %v1378 = vunpack.c.l.b16 %v1325
      %v1379 = vunpack.c.l.b16 %v1328
      %v1380 = vunpack.c.l.b16 %v1331
      %v1381 = vpack.c.b16 %v1350, %v1349
      %v1382 = vpack.c.b16 %v1352, %v1351
      %v1383 = vpack.c.b16 %v1354, %v1353
      %v1384 = vpack.c.b16 %v1356, %v1355
      %v1385 = vpack.c.b16 %v1358, %v1357
      %v1386 = vpack.c.b16 %v1360, %v1359
      %v1387 = vpack.c.b16 %v1362, %v1361
      %v1388 = vpack.c.b16 %v1364, %v1363
      %v1389 = vpack.c.b16 %v1366, %v1365
      %v1390 = vpack.c.b16 %v1368, %v1367
      %v1391 = vpack.c.b16 %v1370, %v1369
      %v1392 = vpack.c.b16 %v1372, %v1371
      %v1393 = vpack.c.b16 %v1374, %v1373
      %v1394 = vpack.c.b16 %v1376, %v1375
      %v1395 = vpack.c.b16 %v1378, %v1377
      %v1396 = vpack.c.b16 %v1380, %v1379
      %v1429 = vunpack.c.l.b16 %v1333
      %v1430 = vunpack.c.l.b16 %v1334
      %v1431 = vunpack.c.l.b16 %v1335
      %v1432 = vunpack.c.l.b16 %v1336
      %v1433 = vunpack.c.l.b16 %v1337
      %v1434 = vunpack.c.l.b16 %v1338
      %v1435 = vunpack.c.l.b16 %v1339
      %v1436 = vunpack.c.l.b16 %v1340
      %v1437 = vunpack.c.l.b16 %v1341
      %v1438 = vunpack.c.l.b16 %v1342
      %v1439 = vunpack.c.l.b16 %v1343
      %v1440 = vunpack.c.l.b16 %v1344
      %v1441 = vunpack.c.l.b16 %v1345
      %v1442 = vunpack.c.l.b16 %v1346
      %v1443 = vunpack.c.l.b16 %v1347
      %v1444 = vunpack.c.l.b16 %v1348
      %v1445 = vpack.c.b16 %v1430, %v1429
      %v1446 = vpack.c.b16 %v1432, %v1431
      %v1447 = vpack.c.b16 %v1434, %v1433
      %v1448 = vpack.c.b16 %v1436, %v1435
      %v1449 = vpack.c.b16 %v1438, %v1437
      %v1450 = vpack.c.b16 %v1440, %v1439
      %v1451 = vpack.c.b16 %v1442, %v1441
      %v1452 = vpack.c.b16 %v1444, %v1443
      %1461 = vmatprep.subr.bf16.mxu0 0
      %1462 = vmatpush1.bf16.msra.mxu0 %v1452
      %1463 = vmatprep.subr.bf16.mxu0 0
      %1464 = vmatpush1.bf16.msra.mxu0 %v1451
      %1465 = vmatprep.subr.bf16.mxu0 0
      %1466 = vmatpush1.bf16.msra.mxu0 %v1450
      %1467 = vmatprep.subr.bf16.mxu0 0
      %1468 = vmatpush1.bf16.msra.mxu0 %v1449
      %1469 = vmatprep.subr.bf16.mxu0 0
      %1470 = vmatpush1.bf16.msra.mxu0 %v1448
      %1471 = vmatprep.subr.bf16.mxu0 0
      %1472 = vmatpush1.bf16.msra.mxu0 %v1447
      %1473 = vmatprep.subr.bf16.mxu0 0
      %1474 = vmatpush1.bf16.msra.mxu0 %v1446
      %1475 = vmatprep.subr.bf16.mxu0 0
      %1476 = vmatpush1.bf16.msra.mxu0 %v1445
      %1477 = vmatprep.subr.bf16.mxu0 0
      %1478 = vmatpush2.bf16.msra.mxu0 0
      %1479 = vmatprep.subr.bf16.mxu0 0
      %1480 = vmatpush2.bf16.msra.mxu0 0
      %1481 = vmatprep.subr.bf16.mxu0 0
      %1482 = vmatpush2.bf16.msra.mxu0 0
      %1483 = vmatprep.subr.bf16.mxu0 0
      %1484 = vmatpush2.bf16.msra.mxu0 0
      %1485 = vmatprep.subr.bf16.mxu0 0
      %1486 = vmatpush2.bf16.msra.mxu0 0
      %1487 = vmatprep.subr.bf16.mxu0 0
      %1488 = vmatpush2.bf16.msra.mxu0 0
      %1489 = vmatprep.subr.bf16.mxu0 0
      %1490 = vmatpush2.bf16.msra.mxu0 0
      %1491 = vmatprep.subr.bf16.mxu0 0
      %1492 = vmatpush2.bf16.msra.mxu0 0
      %1493 = vmatprep.mubr.bf16.mxu0 0
      %1494 = vmatmul.mubr.bf16.gmra.mxu0 %v1381
      %v1495 = vpop.f32.mrf.mxu0
      %v1496 = vadd.f32 0.0, %v1495
      %v1497 = vpop.f32.mrf.mxu0
      %v1498 = vpop.f32.mrf.mxu0
      %v1499 = vadd.f32 0.0, %v1498
      %v1500 = vpop.f32.mrf.mxu0
      %1501 = vmatprep.mubr.bf16.mxu0 0
      %1502 = vmatmul.mubr.bf16.gmra.mxu0 %v1382
      %v1503 = vpop.f32.mrf.mxu0
      %v1504 = vadd.f32 0.0, %v1503
      %v1505 = vpop.f32.mrf.mxu0
      %v1506 = vpop.f32.mrf.mxu0
      %v1507 = vadd.f32 0.0, %v1506
      %v1508 = vpop.f32.mrf.mxu0
      %1509 = vmatprep.mubr.bf16.mxu0 0
      %1510 = vmatmul.mubr.bf16.gmra.mxu0 %v1383
      %v1511 = vpop.f32.mrf.mxu0
      %v1512 = vadd.f32 0.0, %v1511
      %v1513 = vpop.f32.mrf.mxu0
      %v1514 = vpop.f32.mrf.mxu0
      %v1515 = vadd.f32 0.0, %v1514
      %v1516 = vpop.f32.mrf.mxu0
      %1517 = vmatprep.mubr.bf16.mxu0 0
      %1518 = vmatmul.mubr.bf16.gmra.mxu0 %v1384
      %v1519 = vpop.f32.mrf.mxu0
      %v1520 = vadd.f32 0.0, %v1519
      %v1521 = vpop.f32.mrf.mxu0
      %v1522 = vpop.f32.mrf.mxu0
      %v1523 = vadd.f32 0.0, %v1522
      %v1524 = vpop.f32.mrf.mxu0
      %1525 = vmatprep.mubr.bf16.mxu0 0
      %1526 = vmatmul.mubr.bf16.gmra.mxu0 %v1385
      %v1527 = vpop.f32.mrf.mxu0
      %v1528 = vadd.f32 0.0, %v1527
      %v1529 = vpop.f32.mrf.mxu0
      %v1530 = vpop.f32.mrf.mxu0
      %v1531 = vadd.f32 0.0, %v1530
      %v1532 = vpop.f32.mrf.mxu0
      %1533 = vmatprep.mubr.bf16.mxu0 0
      %1534 = vmatmul.mubr.bf16.gmra.mxu0 %v1386
      %v1535 = vpop.f32.mrf.mxu0
      %v1536 = vadd.f32 0.0, %v1535
      %v1537 = vpop.f32.mrf.mxu0
      %v1538 = vpop.f32.mrf.mxu0
      %v1539 = vadd.f32 0.0, %v1538
      %v1540 = vpop.f32.mrf.mxu0
      %1541 = vmatprep.mubr.bf16.mxu0 0
      %1542 = vmatmul.mubr.bf16.gmra.mxu0 %v1387
      %v1543 = vpop.f32.mrf.mxu0
      %v1544 = vadd.f32 0.0, %v1543
      %v1545 = vpop.f32.mrf.mxu0
      %v1546 = vpop.f32.mrf.mxu0
      %v1547 = vadd.f32 0.0, %v1546
      %v1548 = vpop.f32.mrf.mxu0
      %1549 = vmatprep.mubr.bf16.mxu0 0
      %1550 = vmatmul.mubr.bf16.gmra.mxu0 %v1388
      %v1551 = vpop.f32.mrf.mxu0
      %v1552 = vadd.f32 0.0, %v1551
      %v1553 = vpop.f32.mrf.mxu0
      %v1554 = vpop.f32.mrf.mxu0
      %v1555 = vadd.f32 0.0, %v1554
      %v1556 = vpop.f32.mrf.mxu0
      %1557 = vmatprep.mubr.bf16.mxu0 0
      %1558 = vmatmul.mubr.bf16.gmra.mxu0 %v1389
      %v1559 = vpop.f32.mrf.mxu0
      %v1560 = vadd.f32 0.0, %v1559
      %v1561 = vpop.f32.mrf.mxu0
      %v1562 = vpop.f32.mrf.mxu0
      %v1563 = vadd.f32 0.0, %v1562
      %v1564 = vpop.f32.mrf.mxu0
      %1565 = vmatprep.mubr.bf16.mxu0 0
      %1566 = vmatmul.mubr.bf16.gmra.mxu0 %v1390
      %v1567 = vpop.f32.mrf.mxu0
      %v1568 = vadd.f32 0.0, %v1567
      %v1569 = vpop.f32.mrf.mxu0
      %v1570 = vpop.f32.mrf.mxu0
      %v1571 = vadd.f32 0.0, %v1570
      %v1572 = vpop.f32.mrf.mxu0
      %1573 = vmatprep.mubr.bf16.mxu0 0
      %1574 = vmatmul.mubr.bf16.gmra.mxu0 %v1391
      %v1575 = vpop.f32.mrf.mxu0
      %v1576 = vadd.f32 0.0, %v1575
      %v1577 = vpop.f32.mrf.mxu0
      %v1578 = vpop.f32.mrf.mxu0
      %v1579 = vadd.f32 0.0, %v1578
      %v1580 = vpop.f32.mrf.mxu0
      %1581 = vmatprep.mubr.bf16.mxu0 0
      %1582 = vmatmul.mubr.bf16.gmra.mxu0 %v1392
      %v1583 = vpop.f32.mrf.mxu0
      %v1584 = vadd.f32 0.0, %v1583
      %v1585 = vpop.f32.mrf.mxu0
      %v1586 = vpop.f32.mrf.mxu0
      %v1587 = vadd.f32 0.0, %v1586
      %v1588 = vpop.f32.mrf.mxu0
      %1589 = vmatprep.mubr.bf16.mxu0 0
      %1590 = vmatmul.mubr.bf16.gmra.mxu0 %v1393
      %v1591 = vpop.f32.mrf.mxu0
      %v1592 = vadd.f32 0.0, %v1591
      %v1593 = vpop.f32.mrf.mxu0
      %v1594 = vpop.f32.mrf.mxu0
      %v1595 = vadd.f32 0.0, %v1594
      %v1596 = vpop.f32.mrf.mxu0
      %1597 = vmatprep.mubr.bf16.mxu0 0
      %1598 = vmatmul.mubr.bf16.gmra.mxu0 %v1394
      %v1599 = vpop.f32.mrf.mxu0
      %v1600 = vadd.f32 0.0, %v1599
      %v1601 = vpop.f32.mrf.mxu0
      %v1602 = vpop.f32.mrf.mxu0
      %v1603 = vadd.f32 0.0, %v1602
      %v1604 = vpop.f32.mrf.mxu0
      %1605 = vmatprep.mubr.bf16.mxu0 0
      %1606 = vmatmul.mubr.bf16.gmra.mxu0 %v1395
      %v1607 = vpop.f32.mrf.mxu0
      %v1608 = vadd.f32 0.0, %v1607
      %v1609 = vpop.f32.mrf.mxu0
      %v1610 = vpop.f32.mrf.mxu0
      %v1611 = vadd.f32 0.0, %v1610
      %v1612 = vpop.f32.mrf.mxu0
      %1613 = vmatprep.mubr.bf16.mxu0 0
      %1614 = vmatmul.mubr.bf16.gmra.mxu0 %v1396
      %v1615 = vpop.f32.mrf.mxu0
      %v1616 = vadd.f32 0.0, %v1615
      %v1617 = vpop.f32.mrf.mxu0
      %v1618 = vpop.f32.mrf.mxu0
      %v1619 = vadd.f32 0.0, %v1618
      %v1620 = vpop.f32.mrf.mxu0
      %1621 = vdwg.mxu0
      %v1622 = vadd.f32 %v1091, %v1496
      %v1623 = vadd.f32 %v1094, %v1499
      %v1624 = vadd.f32 %v1099, %v1504
      %v1625 = vadd.f32 %v1102, %v1507
      %v1626 = vadd.f32 %v1107, %v1512
      %v1627 = vadd.f32 %v1110, %v1515
      %v1628 = vadd.f32 %v1115, %v1520
      %v1629 = vadd.f32 %v1118, %v1523
      %v1630 = vadd.f32 %v1123, %v1528
      %v1631 = vadd.f32 %v1126, %v1531
      %v1632 = vadd.f32 %v1131, %v1536
      %v1633 = vadd.f32 %v1134, %v1539
      %v1634 = vadd.f32 %v1139, %v1544
      %v1635 = vadd.f32 %v1142, %v1547
      %v1636 = vadd.f32 %v1147, %v1552
      %v1637 = vadd.f32 %v1150, %v1555
      %v1638 = vadd.f32 %v1155, %v1560
      %v1639 = vadd.f32 %v1158, %v1563
      %v1640 = vadd.f32 %v1163, %v1568
      %v1641 = vadd.f32 %v1166, %v1571
      %v1642 = vadd.f32 %v1171, %v1576
      %v1643 = vadd.f32 %v1174, %v1579
      %v1644 = vadd.f32 %v1179, %v1584
      %v1645 = vadd.f32 %v1182, %v1587
      %v1646 = vadd.f32 %v1187, %v1592
      %v1647 = vadd.f32 %v1190, %v1595
      %v1648 = vadd.f32 %v1195, %v1600
      %v1649 = vadd.f32 %v1198, %v1603
      %v1650 = vadd.f32 %v1203, %v1608
      %v1651 = vadd.f32 %v1206, %v1611
      %v1652 = vadd.f32 %v1211, %v1616
      %v1653 = vadd.f32 %v1214, %v1619
      %s1654 = scalar_lea.vmem %s1, 192
      %v1655 = vld [vmem:[%s1654] sm:$0xf]
      %v1656 = vld [vmem:[%s1654 + $0x4] sm:$0xf]
      %v1657 = vld [vmem:[%s1654 + $0x8] sm:$0xf]
      %v1658 = vld [vmem:[%s1654 + $0xc] sm:$0xf]
      %v1659 = vld [vmem:[%s1654 + $0x10] sm:$0xf]
      %v1660 = vld [vmem:[%s1654 + $0x14] sm:$0xf]
      %v1661 = vld [vmem:[%s1654 + $0x18] sm:$0xf]
      %v1662 = vld [vmem:[%s1654 + $0x1c] sm:$0xf]
      %v1663 = vld [vmem:[%s1654 + $0x20] sm:$0xf]
      %v1664 = vld [vmem:[%s1654 + $0x24] sm:$0xf]
      %v1665 = vld [vmem:[%s1654 + $0x28] sm:$0xf]
      %v1666 = vld [vmem:[%s1654 + $0x2c] sm:$0xf]
      %v1667 = vld [vmem:[%s1654 + $0x30] sm:$0xf]
      %v1668 = vld [vmem:[%s1654 + $0x34] sm:$0xf]
      %v1669 = vld [vmem:[%s1654 + $0x38] sm:$0xf]
      %v1670 = vld [vmem:[%s1654 + $0x3c] sm:$0xf]
      %v1675 = vunpack.c.l.b16 %v241
      %v1676 = vunpack.c.l.b16 %v242
      %v1677 = vunpack.c.l.b16 %v243
      %v1678 = vunpack.c.l.b16 %v244
      %v1679 = vpack.c.b16 %v1676, %v1675
      %v1680 = vpack.c.b16 %v1678, %v1677
      %v1699 = vunpack.c.l.b16 %v1655
      %v1700 = vunpack.c.l.b16 %v1656
      %v1701 = vunpack.c.l.b16 %v1657
      %v1702 = vunpack.c.l.b16 %v1658
      %v1703 = vunpack.c.l.b16 %v1659
      %v1704 = vunpack.c.l.b16 %v1660
      %v1705 = vunpack.c.l.b16 %v1661
      %v1706 = vunpack.c.l.b16 %v1662
      %v1707 = vunpack.c.l.b16 %v1663
      %v1708 = vunpack.c.l.b16 %v1664
      %v1709 = vunpack.c.l.b16 %v1665
      %v1710 = vunpack.c.l.b16 %v1666
      %v1711 = vunpack.c.l.b16 %v1667
      %v1712 = vunpack.c.l.b16 %v1668
      %v1713 = vunpack.c.l.b16 %v1669
      %v1714 = vunpack.c.l.b16 %v1670
      %v1715 = vpack.c.b16 %v1700, %v1699
      %v1716 = vpack.c.b16 %v1702, %v1701
      %v1717 = vpack.c.b16 %v1704, %v1703
      %v1718 = vpack.c.b16 %v1706, %v1705
      %v1719 = vpack.c.b16 %v1708, %v1707
      %v1720 = vpack.c.b16 %v1710, %v1709
      %v1721 = vpack.c.b16 %v1712, %v1711
      %v1722 = vpack.c.b16 %v1714, %v1713
      %1731 = vmatprep.subr.bf16.mxu0 0
      %1732 = vmatpush1.bf16.msra.mxu0 %v1722
      %1733 = vmatprep.subr.bf16.mxu0 0
      %1734 = vmatpush1.bf16.msra.mxu0 %v1721
      %1735 = vmatprep.subr.bf16.mxu0 0
      %1736 = vmatpush1.bf16.msra.mxu0 %v1720
      %1737 = vmatprep.subr.bf16.mxu0 0
      %1738 = vmatpush1.bf16.msra.mxu0 %v1719
      %1739 = vmatprep.subr.bf16.mxu0 0
      %1740 = vmatpush1.bf16.msra.mxu0 %v1718
      %1741 = vmatprep.subr.bf16.mxu0 0
      %1742 = vmatpush1.bf16.msra.mxu0 %v1717
      %1743 = vmatprep.subr.bf16.mxu0 0
      %1744 = vmatpush1.bf16.msra.mxu0 %v1716
      %1745 = vmatprep.subr.bf16.mxu0 0
      %1746 = vmatpush1.bf16.msra.mxu0 %v1715
      %1747 = vmatprep.subr.bf16.mxu0 0
      %1748 = vmatpush2.bf16.msra.mxu0 0
      %1749 = vmatprep.subr.bf16.mxu0 0
      %1750 = vmatpush2.bf16.msra.mxu0 0
      %1751 = vmatprep.subr.bf16.mxu0 0
      %1752 = vmatpush2.bf16.msra.mxu0 0
      %1753 = vmatprep.subr.bf16.mxu0 0
      %1754 = vmatpush2.bf16.msra.mxu0 0
      %1755 = vmatprep.subr.bf16.mxu0 0
      %1756 = vmatpush2.bf16.msra.mxu0 0
      %1757 = vmatprep.subr.bf16.mxu0 0
      %1758 = vmatpush2.bf16.msra.mxu0 0
      %1759 = vmatprep.subr.bf16.mxu0 0
      %1760 = vmatpush2.bf16.msra.mxu0 0
      %1761 = vmatprep.subr.bf16.mxu0 0
      %1762 = vmatpush2.bf16.msra.mxu0 0
      %1763 = vmatprep.mubr.bf16.mxu0 0
      %1764 = vmatmul.mubr.bf16.gmra.mxu0 %v978
      %v1765 = vpop.f32.mrf.mxu0
      %v1766 = vadd.f32 0.0, %v1765
      %v1767 = vpop.f32.mrf.mxu0
      %v1768 = vpop.f32.mrf.mxu0
      %v1769 = vadd.f32 0.0, %v1768
      %v1770 = vpop.f32.mrf.mxu0
      %1771 = vmatprep.mubr.bf16.mxu0 0
      %1772 = vmatmul.mubr.bf16.gmra.mxu0 %v979
      %v1773 = vpop.f32.mrf.mxu0
      %v1774 = vadd.f32 0.0, %v1773
      %v1775 = vpop.f32.mrf.mxu0
      %v1776 = vpop.f32.mrf.mxu0
      %v1777 = vadd.f32 0.0, %v1776
      %v1778 = vpop.f32.mrf.mxu0
      %1779 = vmatprep.mubr.bf16.mxu0 0
      %1780 = vmatmul.mubr.bf16.gmra.mxu0 %v980
      %v1781 = vpop.f32.mrf.mxu0
      %v1782 = vadd.f32 0.0, %v1781
      %v1783 = vpop.f32.mrf.mxu0
      %v1784 = vpop.f32.mrf.mxu0
      %v1785 = vadd.f32 0.0, %v1784
      %v1786 = vpop.f32.mrf.mxu0
      %1787 = vmatprep.mubr.bf16.mxu0 0
      %1788 = vmatmul.mubr.bf16.gmra.mxu0 %v981
      %v1789 = vpop.f32.mrf.mxu0
      %v1790 = vadd.f32 0.0, %v1789
      %v1791 = vpop.f32.mrf.mxu0
      %v1792 = vpop.f32.mrf.mxu0
      %v1793 = vadd.f32 0.0, %v1792
      %v1794 = vpop.f32.mrf.mxu0
      %1795 = vmatprep.mubr.bf16.mxu0 0
      %1796 = vmatmul.mubr.bf16.gmra.mxu0 %v982
      %v1797 = vpop.f32.mrf.mxu0
      %v1798 = vadd.f32 0.0, %v1797
      %v1799 = vpop.f32.mrf.mxu0
      %v1800 = vpop.f32.mrf.mxu0
      %v1801 = vadd.f32 0.0, %v1800
      %v1802 = vpop.f32.mrf.mxu0
      %1803 = vmatprep.mubr.bf16.mxu0 0
      %1804 = vmatmul.mubr.bf16.gmra.mxu0 %v983
      %v1805 = vpop.f32.mrf.mxu0
      %v1806 = vadd.f32 0.0, %v1805
      %v1807 = vpop.f32.mrf.mxu0
      %v1808 = vpop.f32.mrf.mxu0
      %v1809 = vadd.f32 0.0, %v1808
      %v1810 = vpop.f32.mrf.mxu0
      %1811 = vmatprep.mubr.bf16.mxu0 0
      %1812 = vmatmul.mubr.bf16.gmra.mxu0 %v984
      %v1813 = vpop.f32.mrf.mxu0
      %v1814 = vadd.f32 0.0, %v1813
      %v1815 = vpop.f32.mrf.mxu0
      %v1816 = vpop.f32.mrf.mxu0
      %v1817 = vadd.f32 0.0, %v1816
      %v1818 = vpop.f32.mrf.mxu0
      %1819 = vmatprep.mubr.bf16.mxu0 0
      %1820 = vmatmul.mubr.bf16.gmra.mxu0 %v985
      %v1821 = vpop.f32.mrf.mxu0
      %v1822 = vadd.f32 0.0, %v1821
      %v1823 = vpop.f32.mrf.mxu0
      %v1824 = vpop.f32.mrf.mxu0
      %v1825 = vadd.f32 0.0, %v1824
      %v1826 = vpop.f32.mrf.mxu0
      %1827 = vmatprep.mubr.bf16.mxu0 0
      %1828 = vmatmul.mubr.bf16.gmra.mxu0 %v986
      %v1829 = vpop.f32.mrf.mxu0
      %v1830 = vadd.f32 0.0, %v1829
      %v1831 = vpop.f32.mrf.mxu0
      %v1832 = vpop.f32.mrf.mxu0
      %v1833 = vadd.f32 0.0, %v1832
      %v1834 = vpop.f32.mrf.mxu0
      %1835 = vmatprep.mubr.bf16.mxu0 0
      %1836 = vmatmul.mubr.bf16.gmra.mxu0 %v987
      %v1837 = vpop.f32.mrf.mxu0
      %v1838 = vadd.f32 0.0, %v1837
      %v1839 = vpop.f32.mrf.mxu0
      %v1840 = vpop.f32.mrf.mxu0
      %v1841 = vadd.f32 0.0, %v1840
      %v1842 = vpop.f32.mrf.mxu0
      %1843 = vmatprep.mubr.bf16.mxu0 0
      %1844 = vmatmul.mubr.bf16.gmra.mxu0 %v988
      %v1845 = vpop.f32.mrf.mxu0
      %v1846 = vadd.f32 0.0, %v1845
      %v1847 = vpop.f32.mrf.mxu0
      %v1848 = vpop.f32.mrf.mxu0
      %v1849 = vadd.f32 0.0, %v1848
      %v1850 = vpop.f32.mrf.mxu0
      %1851 = vmatprep.mubr.bf16.mxu0 0
      %1852 = vmatmul.mubr.bf16.gmra.mxu0 %v989
      %v1853 = vpop.f32.mrf.mxu0
      %v1854 = vadd.f32 0.0, %v1853
      %v1855 = vpop.f32.mrf.mxu0
      %v1856 = vpop.f32.mrf.mxu0
      %v1857 = vadd.f32 0.0, %v1856
      %v1858 = vpop.f32.mrf.mxu0
      %1859 = vmatprep.mubr.bf16.mxu0 0
      %1860 = vmatmul.mubr.bf16.gmra.mxu0 %v990
      %v1861 = vpop.f32.mrf.mxu0
      %v1862 = vadd.f32 0.0, %v1861
      %v1863 = vpop.f32.mrf.mxu0
      %v1864 = vpop.f32.mrf.mxu0
      %v1865 = vadd.f32 0.0, %v1864
      %v1866 = vpop.f32.mrf.mxu0
      %1867 = vmatprep.mubr.bf16.mxu0 0
      %1868 = vmatmul.mubr.bf16.gmra.mxu0 %v991
      %v1869 = vpop.f32.mrf.mxu0
      %v1870 = vadd.f32 0.0, %v1869
      %v1871 = vpop.f32.mrf.mxu0
      %v1872 = vpop.f32.mrf.mxu0
      %v1873 = vadd.f32 0.0, %v1872
      %v1874 = vpop.f32.mrf.mxu0
      %1875 = vmatprep.mubr.bf16.mxu0 0
      %1876 = vmatmul.mubr.bf16.gmra.mxu0 %v1679
      %v1877 = vpop.f32.mrf.mxu0
      %v1878 = vadd.f32 0.0, %v1877
      %v1879 = vpop.f32.mrf.mxu0
      %v1880 = vpop.f32.mrf.mxu0
      %v1881 = vadd.f32 0.0, %v1880
      %v1882 = vpop.f32.mrf.mxu0
      %1883 = vmatprep.mubr.bf16.mxu0 0
      %1884 = vmatmul.mubr.bf16.gmra.mxu0 %v1680
      %v1885 = vpop.f32.mrf.mxu0
      %v1886 = vadd.f32 0.0, %v1885
      %v1887 = vpop.f32.mrf.mxu0
      %v1888 = vpop.f32.mrf.mxu0
      %v1889 = vadd.f32 0.0, %v1888
      %v1890 = vpop.f32.mrf.mxu0
      %1891 = vdwg.mxu0
      %v1892 = vadd.f32 %v1622, %v1766
      %v1893 = vadd.f32 %v1623, %v1769
      %v1894 = vadd.f32 %v1624, %v1774
      %v1895 = vadd.f32 %v1625, %v1777
      %v1896 = vadd.f32 %v1626, %v1782
      %v1897 = vadd.f32 %v1627, %v1785
      %v1898 = vadd.f32 %v1628, %v1790
      %v1899 = vadd.f32 %v1629, %v1793
      %v1900 = vadd.f32 %v1630, %v1798
      %v1901 = vadd.f32 %v1631, %v1801
      %v1902 = vadd.f32 %v1632, %v1806
      %v1903 = vadd.f32 %v1633, %v1809
      %v1904 = vadd.f32 %v1634, %v1814
      %v1905 = vadd.f32 %v1635, %v1817
      %v1906 = vadd.f32 %v1636, %v1822
      %v1907 = vadd.f32 %v1637, %v1825
      %v1908 = vadd.f32 %v1638, %v1830
      %v1909 = vadd.f32 %v1639, %v1833
      %v1910 = vadd.f32 %v1640, %v1838
      %v1911 = vadd.f32 %v1641, %v1841
      %v1912 = vadd.f32 %v1642, %v1846
      %v1913 = vadd.f32 %v1643, %v1849
      %v1914 = vadd.f32 %v1644, %v1854
      %v1915 = vadd.f32 %v1645, %v1857
      %v1916 = vadd.f32 %v1646, %v1862
      %v1917 = vadd.f32 %v1647, %v1865
      %v1918 = vadd.f32 %v1648, %v1870
      %v1919 = vadd.f32 %v1649, %v1873
      %v1920 = vadd.f32 %v1650, %v1878
      %v1921 = vadd.f32 %v1651, %v1881
      %v1922 = vadd.f32 %v1652, %v1886
      %v1923 = vadd.f32 %v1653, %v1889
      %v1925 = vshrl.u32 %v241, 16
      %v1927 = vrot.slane %v1925, 4
      %v1928 = vshll.u32 %v241, 16
      %v1930 = vrot.slane %v1928, 5
      %v1931 = vor.u32 %v1927, %v1930
      %v1932 = vrot.slane %v1931, 4
      %v1934 = vshll.u32 %v242, 16
      %v1936 = vrot.slane %v1934, 5
      %v1937 = vsel %vm269, %v1932, %v1936
      %v1938 = vshrl.u32 %v242, 16
      %v1940 = vrot.slane %v1938, 4
      %v1941 = vor.u32 %v1940, %v1936
      %v1942 = vrot.slane %v1941, 4
      %v1944 = vshll.u32 %v243, 16
      %v1946 = vrot.slane %v1944, 5
      %v1947 = vsel %vm269, %v1942, %v1946
      %v1948 = vshrl.u32 %v243, 16
      %v1950 = vrot.slane %v1948, 4
      %v1951 = vor.u32 %v1950, %v1946
      %v1952 = vrot.slane %v1951, 4
      %v1954 = vshll.u32 %v244, 16
      %v1956 = vrot.slane %v1954, 5
      %v1957 = vsel %vm269, %v1952, %v1956
      %v1958 = vshrl.u32 %v244, 16
      %v1960 = vrot.slane %v1958, 4
      %v1961 = vor.u32 %v1960, %v1956
      %v1962 = vrot.slane %v1961, 4
      %v1964 = vshll.u32 %v245, 16
      %v1966 = vrot.slane %v1964, 5
      %v1967 = vsel %vm269, %v1962, %v1966
      %s1968 = scalar_lea.vmem %s1, 256
      %v1969 = vld [vmem:[%s1968] sm:$0xf]
      %v1970 = vld [vmem:[%s1968 + $0x4] sm:$0xf]
      %v1971 = vld [vmem:[%s1968 + $0x8] sm:$0xf]
      %v1972 = vld [vmem:[%s1968 + $0xc] sm:$0xf]
      %v1973 = vld [vmem:[%s1968 + $0x10] sm:$0xf]
      %v1974 = vld [vmem:[%s1968 + $0x14] sm:$0xf]
      %v1975 = vld [vmem:[%s1968 + $0x18] sm:$0xf]
      %v1976 = vld [vmem:[%s1968 + $0x1c] sm:$0xf]
      %v1977 = vld [vmem:[%s1968 + $0x20] sm:$0xf]
      %v1978 = vld [vmem:[%s1968 + $0x24] sm:$0xf]
      %v1979 = vld [vmem:[%s1968 + $0x28] sm:$0xf]
      %v1980 = vld [vmem:[%s1968 + $0x2c] sm:$0xf]
      %v1981 = vld [vmem:[%s1968 + $0x30] sm:$0xf]
      %v1982 = vld [vmem:[%s1968 + $0x34] sm:$0xf]
      %v1983 = vld [vmem:[%s1968 + $0x38] sm:$0xf]
      %v1984 = vld [vmem:[%s1968 + $0x3c] sm:$0xf]
      %v1985 = vunpack.c.l.b16 %v1937
      %v1986 = vunpack.c.l.b16 %v1947
      %v1987 = vunpack.c.l.b16 %v1957
      %v1988 = vunpack.c.l.b16 %v1967
      %v1989 = vpack.c.b16 %v1986, %v1985
      %v1990 = vpack.c.b16 %v1988, %v1987
      %v2009 = vunpack.c.l.b16 %v1969
      %v2010 = vunpack.c.l.b16 %v1970
      %v2011 = vunpack.c.l.b16 %v1971
      %v2012 = vunpack.c.l.b16 %v1972
      %v2013 = vunpack.c.l.b16 %v1973
      %v2014 = vunpack.c.l.b16 %v1974
      %v2015 = vunpack.c.l.b16 %v1975
      %v2016 = vunpack.c.l.b16 %v1976
      %v2017 = vunpack.c.l.b16 %v1977
      %v2018 = vunpack.c.l.b16 %v1978
      %v2019 = vunpack.c.l.b16 %v1979
      %v2020 = vunpack.c.l.b16 %v1980
      %v2021 = vunpack.c.l.b16 %v1981
      %v2022 = vunpack.c.l.b16 %v1982
      %v2023 = vunpack.c.l.b16 %v1983
      %v2024 = vunpack.c.l.b16 %v1984
      %v2025 = vpack.c.b16 %v2010, %v2009
      %v2026 = vpack.c.b16 %v2012, %v2011
      %v2027 = vpack.c.b16 %v2014, %v2013
      %v2028 = vpack.c.b16 %v2016, %v2015
      %v2029 = vpack.c.b16 %v2018, %v2017
      %v2030 = vpack.c.b16 %v2020, %v2019
      %v2031 = vpack.c.b16 %v2022, %v2021
      %v2032 = vpack.c.b16 %v2024, %v2023
      %2041 = vmatprep.subr.bf16.mxu0 0
      %2042 = vmatpush1.bf16.msra.mxu0 %v2032
      %2043 = vmatprep.subr.bf16.mxu0 0
      %2044 = vmatpush1.bf16.msra.mxu0 %v2031
      %2045 = vmatprep.subr.bf16.mxu0 0
      %2046 = vmatpush1.bf16.msra.mxu0 %v2030
      %2047 = vmatprep.subr.bf16.mxu0 0
      %2048 = vmatpush1.bf16.msra.mxu0 %v2029
      %2049 = vmatprep.subr.bf16.mxu0 0
      %2050 = vmatpush1.bf16.msra.mxu0 %v2028
      %2051 = vmatprep.subr.bf16.mxu0 0
      %2052 = vmatpush1.bf16.msra.mxu0 %v2027
      %2053 = vmatprep.subr.bf16.mxu0 0
      %2054 = vmatpush1.bf16.msra.mxu0 %v2026
      %2055 = vmatprep.subr.bf16.mxu0 0
      %2056 = vmatpush1.bf16.msra.mxu0 %v2025
      %2057 = vmatprep.subr.bf16.mxu0 0
      %2058 = vmatpush2.bf16.msra.mxu0 0
      %2059 = vmatprep.subr.bf16.mxu0 0
      %2060 = vmatpush2.bf16.msra.mxu0 0
      %2061 = vmatprep.subr.bf16.mxu0 0
      %2062 = vmatpush2.bf16.msra.mxu0 0
      %2063 = vmatprep.subr.bf16.mxu0 0
      %2064 = vmatpush2.bf16.msra.mxu0 0
      %2065 = vmatprep.subr.bf16.mxu0 0
      %2066 = vmatpush2.bf16.msra.mxu0 0
      %2067 = vmatprep.subr.bf16.mxu0 0
      %2068 = vmatpush2.bf16.msra.mxu0 0
      %2069 = vmatprep.subr.bf16.mxu0 0
      %2070 = vmatpush2.bf16.msra.mxu0 0
      %2071 = vmatprep.subr.bf16.mxu0 0
      %2072 = vmatpush2.bf16.msra.mxu0 0
      %2073 = vmatprep.mubr.bf16.mxu0 0
      %2074 = vmatmul.mubr.bf16.gmra.mxu0 %v673
      %v2075 = vpop.f32.mrf.mxu0
      %v2076 = vadd.f32 0.0, %v2075
      %v2077 = vpop.f32.mrf.mxu0
      %v2078 = vpop.f32.mrf.mxu0
      %v2079 = vadd.f32 0.0, %v2078
      %v2080 = vpop.f32.mrf.mxu0
      %2081 = vmatprep.mubr.bf16.mxu0 0
      %2082 = vmatmul.mubr.bf16.gmra.mxu0 %v674
      %v2083 = vpop.f32.mrf.mxu0
      %v2084 = vadd.f32 0.0, %v2083
      %v2085 = vpop.f32.mrf.mxu0
      %v2086 = vpop.f32.mrf.mxu0
      %v2087 = vadd.f32 0.0, %v2086
      %v2088 = vpop.f32.mrf.mxu0
      %2089 = vmatprep.mubr.bf16.mxu0 0
      %2090 = vmatmul.mubr.bf16.gmra.mxu0 %v675
      %v2091 = vpop.f32.mrf.mxu0
      %v2092 = vadd.f32 0.0, %v2091
      %v2093 = vpop.f32.mrf.mxu0
      %v2094 = vpop.f32.mrf.mxu0
      %v2095 = vadd.f32 0.0, %v2094
      %v2096 = vpop.f32.mrf.mxu0
      %2097 = vmatprep.mubr.bf16.mxu0 0
      %2098 = vmatmul.mubr.bf16.gmra.mxu0 %v676
      %v2099 = vpop.f32.mrf.mxu0
      %v2100 = vadd.f32 0.0, %v2099
      %v2101 = vpop.f32.mrf.mxu0
      %v2102 = vpop.f32.mrf.mxu0
      %v2103 = vadd.f32 0.0, %v2102
      %v2104 = vpop.f32.mrf.mxu0
      %2105 = vmatprep.mubr.bf16.mxu0 0
      %2106 = vmatmul.mubr.bf16.gmra.mxu0 %v677
      %v2107 = vpop.f32.mrf.mxu0
      %v2108 = vadd.f32 0.0, %v2107
      %v2109 = vpop.f32.mrf.mxu0
      %v2110 = vpop.f32.mrf.mxu0
      %v2111 = vadd.f32 0.0, %v2110
      %v2112 = vpop.f32.mrf.mxu0
      %2113 = vmatprep.mubr.bf16.mxu0 0
      %2114 = vmatmul.mubr.bf16.gmra.mxu0 %v678
      %v2115 = vpop.f32.mrf.mxu0
      %v2116 = vadd.f32 0.0, %v2115
      %v2117 = vpop.f32.mrf.mxu0
      %v2118 = vpop.f32.mrf.mxu0
      %v2119 = vadd.f32 0.0, %v2118
      %v2120 = vpop.f32.mrf.mxu0
      %2121 = vmatprep.mubr.bf16.mxu0 0
      %2122 = vmatmul.mubr.bf16.gmra.mxu0 %v679
      %v2123 = vpop.f32.mrf.mxu0
      %v2124 = vadd.f32 0.0, %v2123
      %v2125 = vpop.f32.mrf.mxu0
      %v2126 = vpop.f32.mrf.mxu0
      %v2127 = vadd.f32 0.0, %v2126
      %v2128 = vpop.f32.mrf.mxu0
      %2129 = vmatprep.mubr.bf16.mxu0 0
      %2130 = vmatmul.mubr.bf16.gmra.mxu0 %v680
      %v2131 = vpop.f32.mrf.mxu0
      %v2132 = vadd.f32 0.0, %v2131
      %v2133 = vpop.f32.mrf.mxu0
      %v2134 = vpop.f32.mrf.mxu0
      %v2135 = vadd.f32 0.0, %v2134
      %v2136 = vpop.f32.mrf.mxu0
      %2137 = vmatprep.mubr.bf16.mxu0 0
      %2138 = vmatmul.mubr.bf16.gmra.mxu0 %v681
      %v2139 = vpop.f32.mrf.mxu0
      %v2140 = vadd.f32 0.0, %v2139
      %v2141 = vpop.f32.mrf.mxu0
      %v2142 = vpop.f32.mrf.mxu0
      %v2143 = vadd.f32 0.0, %v2142
      %v2144 = vpop.f32.mrf.mxu0
      %2145 = vmatprep.mubr.bf16.mxu0 0
      %2146 = vmatmul.mubr.bf16.gmra.mxu0 %v682
      %v2147 = vpop.f32.mrf.mxu0
      %v2148 = vadd.f32 0.0, %v2147
      %v2149 = vpop.f32.mrf.mxu0
      %v2150 = vpop.f32.mrf.mxu0
      %v2151 = vadd.f32 0.0, %v2150
      %v2152 = vpop.f32.mrf.mxu0
      %2153 = vmatprep.mubr.bf16.mxu0 0
      %2154 = vmatmul.mubr.bf16.gmra.mxu0 %v683
      %v2155 = vpop.f32.mrf.mxu0
      %v2156 = vadd.f32 0.0, %v2155
      %v2157 = vpop.f32.mrf.mxu0
      %v2158 = vpop.f32.mrf.mxu0
      %v2159 = vadd.f32 0.0, %v2158
      %v2160 = vpop.f32.mrf.mxu0
      %2161 = vmatprep.mubr.bf16.mxu0 0
      %2162 = vmatmul.mubr.bf16.gmra.mxu0 %v684
      %v2163 = vpop.f32.mrf.mxu0
      %v2164 = vadd.f32 0.0, %v2163
      %v2165 = vpop.f32.mrf.mxu0
      %v2166 = vpop.f32.mrf.mxu0
      %v2167 = vadd.f32 0.0, %v2166
      %v2168 = vpop.f32.mrf.mxu0
      %2169 = vmatprep.mubr.bf16.mxu0 0
      %2170 = vmatmul.mubr.bf16.gmra.mxu0 %v685
      %v2171 = vpop.f32.mrf.mxu0
      %v2172 = vadd.f32 0.0, %v2171
      %v2173 = vpop.f32.mrf.mxu0
      %v2174 = vpop.f32.mrf.mxu0
      %v2175 = vadd.f32 0.0, %v2174
      %v2176 = vpop.f32.mrf.mxu0
      %2177 = vmatprep.mubr.bf16.mxu0 0
      %2178 = vmatmul.mubr.bf16.gmra.mxu0 %v686
      %v2179 = vpop.f32.mrf.mxu0
      %v2180 = vadd.f32 0.0, %v2179
      %v2181 = vpop.f32.mrf.mxu0
      %v2182 = vpop.f32.mrf.mxu0
      %v2183 = vadd.f32 0.0, %v2182
      %v2184 = vpop.f32.mrf.mxu0
      %2185 = vmatprep.mubr.bf16.mxu0 0
      %2186 = vmatmul.mubr.bf16.gmra.mxu0 %v1989
      %v2187 = vpop.f32.mrf.mxu0
      %v2188 = vadd.f32 0.0, %v2187
      %v2189 = vpop.f32.mrf.mxu0
      %v2190 = vpop.f32.mrf.mxu0
      %v2191 = vadd.f32 0.0, %v2190
      %v2192 = vpop.f32.mrf.mxu0
      %2193 = vmatprep.mubr.bf16.mxu0 0
      %2194 = vmatmul.mubr.bf16.gmra.mxu0 %v1990
      %v2195 = vpop.f32.mrf.mxu0
      %v2196 = vadd.f32 0.0, %v2195
      %v2197 = vpop.f32.mrf.mxu0
      %v2198 = vpop.f32.mrf.mxu0
      %v2199 = vadd.f32 0.0, %v2198
      %v2200 = vpop.f32.mrf.mxu0
      %2201 = vdwg.mxu0
      %v2202 = vadd.f32 %v1892, %v2076
      %v2203 = vadd.f32 %v1893, %v2079
      %v2204 = vadd.f32 %v1894, %v2084
      %v2205 = vadd.f32 %v1895, %v2087
      %v2206 = vadd.f32 %v1896, %v2092
      %v2207 = vadd.f32 %v1897, %v2095
      %v2208 = vadd.f32 %v1898, %v2100
      %v2209 = vadd.f32 %v1899, %v2103
      %v2210 = vadd.f32 %v1900, %v2108
      %v2211 = vadd.f32 %v1901, %v2111
      %v2212 = vadd.f32 %v1902, %v2116
      %v2213 = vadd.f32 %v1903, %v2119
      %v2214 = vadd.f32 %v1904, %v2124
      %v2215 = vadd.f32 %v1905, %v2127
      %v2216 = vadd.f32 %v1906, %v2132
      %v2217 = vadd.f32 %v1907, %v2135
      %v2218 = vadd.f32 %v1908, %v2140
      %v2219 = vadd.f32 %v1909, %v2143
      %v2220 = vadd.f32 %v1910, %v2148
      %v2221 = vadd.f32 %v1911, %v2151
      %v2222 = vadd.f32 %v1912, %v2156
      %v2223 = vadd.f32 %v1913, %v2159
      %v2224 = vadd.f32 %v1914, %v2164
      %v2225 = vadd.f32 %v1915, %v2167
      %v2226 = vadd.f32 %v1916, %v2172
      %v2227 = vadd.f32 %v1917, %v2175
      %v2228 = vadd.f32 %v1918, %v2180
      %v2229 = vadd.f32 %v1919, %v2183
      %v2230 = vadd.f32 %v1920, %v2188
      %v2231 = vadd.f32 %v1921, %v2191
      %v2232 = vadd.f32 %v1922, %v2196
      %v2233 = vadd.f32 %v1923, %v2199
      %v2235 = vrot.slane %v241, 5
      %v2236 = vrot.slane %v2235, 4
      %v2237 = vrot.slane %v242, 5
      %v2238 = vsel %vm1227, %v2236, %v2237
      %v2239 = vrot.slane %v2237, 4
      %v2240 = vrot.slane %v243, 5
      %v2241 = vsel %vm1227, %v2239, %v2240
      %v2242 = vrot.slane %v2240, 4
      %v2243 = vrot.slane %v244, 5
      %v2244 = vsel %vm1227, %v2242, %v2243
      %v2245 = vrot.slane %v2243, 4
      %v2246 = vrot.slane %v245, 5
      %v2247 = vsel %vm1227, %v2245, %v2246
      %s2248 = scalar_lea.vmem %s1, 320
      %v2249 = vld [vmem:[%s2248] sm:$0xf]
      %v2250 = vld [vmem:[%s2248 + $0x4] sm:$0xf]
      %v2251 = vld [vmem:[%s2248 + $0x8] sm:$0xf]
      %v2252 = vld [vmem:[%s2248 + $0xc] sm:$0xf]
      %v2253 = vld [vmem:[%s2248 + $0x10] sm:$0xf]
      %v2254 = vld [vmem:[%s2248 + $0x14] sm:$0xf]
      %v2255 = vld [vmem:[%s2248 + $0x18] sm:$0xf]
      %v2256 = vld [vmem:[%s2248 + $0x1c] sm:$0xf]
      %v2257 = vld [vmem:[%s2248 + $0x20] sm:$0xf]
      %v2258 = vld [vmem:[%s2248 + $0x24] sm:$0xf]
      %v2259 = vld [vmem:[%s2248 + $0x28] sm:$0xf]
      %v2260 = vld [vmem:[%s2248 + $0x2c] sm:$0xf]
      %v2261 = vld [vmem:[%s2248 + $0x30] sm:$0xf]
      %v2262 = vld [vmem:[%s2248 + $0x34] sm:$0xf]
      %v2263 = vld [vmem:[%s2248 + $0x38] sm:$0xf]
      %v2264 = vld [vmem:[%s2248 + $0x3c] sm:$0xf]
      %v2265 = vunpack.c.l.b16 %v2238
      %v2266 = vunpack.c.l.b16 %v2241
      %v2267 = vunpack.c.l.b16 %v2244
      %v2268 = vunpack.c.l.b16 %v2247
      %v2269 = vpack.c.b16 %v2266, %v2265
      %v2270 = vpack.c.b16 %v2268, %v2267
      %v2289 = vunpack.c.l.b16 %v2249
      %v2290 = vunpack.c.l.b16 %v2250
      %v2291 = vunpack.c.l.b16 %v2251
      %v2292 = vunpack.c.l.b16 %v2252
      %v2293 = vunpack.c.l.b16 %v2253
      %v2294 = vunpack.c.l.b16 %v2254
      %v2295 = vunpack.c.l.b16 %v2255
      %v2296 = vunpack.c.l.b16 %v2256
      %v2297 = vunpack.c.l.b16 %v2257
      %v2298 = vunpack.c.l.b16 %v2258
      %v2299 = vunpack.c.l.b16 %v2259
      %v2300 = vunpack.c.l.b16 %v2260
      %v2301 = vunpack.c.l.b16 %v2261
      %v2302 = vunpack.c.l.b16 %v2262
      %v2303 = vunpack.c.l.b16 %v2263
      %v2304 = vunpack.c.l.b16 %v2264
      %v2305 = vpack.c.b16 %v2290, %v2289
      %v2306 = vpack.c.b16 %v2292, %v2291
      %v2307 = vpack.c.b16 %v2294, %v2293
      %v2308 = vpack.c.b16 %v2296, %v2295
      %v2309 = vpack.c.b16 %v2298, %v2297
      %v2310 = vpack.c.b16 %v2300, %v2299
      %v2311 = vpack.c.b16 %v2302, %v2301
      %v2312 = vpack.c.b16 %v2304, %v2303
      %2321 = vmatprep.subr.bf16.mxu0 0
      %2322 = vmatpush1.bf16.msra.mxu0 %v2312
      %2323 = vmatprep.subr.bf16.mxu0 0
      %2324 = vmatpush1.bf16.msra.mxu0 %v2311
      %2325 = vmatprep.subr.bf16.mxu0 0
      %2326 = vmatpush1.bf16.msra.mxu0 %v2310
      %2327 = vmatprep.subr.bf16.mxu0 0
      %2328 = vmatpush1.bf16.msra.mxu0 %v2309
      %2329 = vmatprep.subr.bf16.mxu0 0
      %2330 = vmatpush1.bf16.msra.mxu0 %v2308
      %2331 = vmatprep.subr.bf16.mxu0 0
      %2332 = vmatpush1.bf16.msra.mxu0 %v2307
      %2333 = vmatprep.subr.bf16.mxu0 0
      %2334 = vmatpush1.bf16.msra.mxu0 %v2306
      %2335 = vmatprep.subr.bf16.mxu0 0
      %2336 = vmatpush1.bf16.msra.mxu0 %v2305
      %2337 = vmatprep.subr.bf16.mxu0 0
      %2338 = vmatpush2.bf16.msra.mxu0 0
      %2339 = vmatprep.subr.bf16.mxu0 0
      %2340 = vmatpush2.bf16.msra.mxu0 0
      %2341 = vmatprep.subr.bf16.mxu0 0
      %2342 = vmatpush2.bf16.msra.mxu0 0
      %2343 = vmatprep.subr.bf16.mxu0 0
      %2344 = vmatpush2.bf16.msra.mxu0 0
      %2345 = vmatprep.subr.bf16.mxu0 0
      %2346 = vmatpush2.bf16.msra.mxu0 0
      %2347 = vmatprep.subr.bf16.mxu0 0
      %2348 = vmatpush2.bf16.msra.mxu0 0
      %2349 = vmatprep.subr.bf16.mxu0 0
      %2350 = vmatpush2.bf16.msra.mxu0 0
      %2351 = vmatprep.subr.bf16.mxu0 0
      %2352 = vmatpush2.bf16.msra.mxu0 0
      %2353 = vmatprep.mubr.bf16.mxu0 0
      %2354 = vmatmul.mubr.bf16.gmra.mxu0 %v1383
      %v2355 = vpop.f32.mrf.mxu0
      %v2356 = vadd.f32 0.0, %v2355
      %v2357 = vpop.f32.mrf.mxu0
      %v2358 = vpop.f32.mrf.mxu0
      %v2359 = vadd.f32 0.0, %v2358
      %v2360 = vpop.f32.mrf.mxu0
      %2361 = vmatprep.mubr.bf16.mxu0 0
      %2362 = vmatmul.mubr.bf16.gmra.mxu0 %v1384
      %v2363 = vpop.f32.mrf.mxu0
      %v2364 = vadd.f32 0.0, %v2363
      %v2365 = vpop.f32.mrf.mxu0
      %v2366 = vpop.f32.mrf.mxu0
      %v2367 = vadd.f32 0.0, %v2366
      %v2368 = vpop.f32.mrf.mxu0
      %2369 = vmatprep.mubr.bf16.mxu0 0
      %2370 = vmatmul.mubr.bf16.gmra.mxu0 %v1385
      %v2371 = vpop.f32.mrf.mxu0
      %v2372 = vadd.f32 0.0, %v2371
      %v2373 = vpop.f32.mrf.mxu0
      %v2374 = vpop.f32.mrf.mxu0
      %v2375 = vadd.f32 0.0, %v2374
      %v2376 = vpop.f32.mrf.mxu0
      %2377 = vmatprep.mubr.bf16.mxu0 0
      %2378 = vmatmul.mubr.bf16.gmra.mxu0 %v1386
      %v2379 = vpop.f32.mrf.mxu0
      %v2380 = vadd.f32 0.0, %v2379
      %v2381 = vpop.f32.mrf.mxu0
      %v2382 = vpop.f32.mrf.mxu0
      %v2383 = vadd.f32 0.0, %v2382
      %v2384 = vpop.f32.mrf.mxu0
      %2385 = vmatprep.mubr.bf16.mxu0 0
      %2386 = vmatmul.mubr.bf16.gmra.mxu0 %v1387
      %v2387 = vpop.f32.mrf.mxu0
      %v2388 = vadd.f32 0.0, %v2387
      %v2389 = vpop.f32.mrf.mxu0
      %v2390 = vpop.f32.mrf.mxu0
      %v2391 = vadd.f32 0.0, %v2390
      %v2392 = vpop.f32.mrf.mxu0
      %2393 = vmatprep.mubr.bf16.mxu0 0
      %2394 = vmatmul.mubr.bf16.gmra.mxu0 %v1388
      %v2395 = vpop.f32.mrf.mxu0
      %v2396 = vadd.f32 0.0, %v2395
      %v2397 = vpop.f32.mrf.mxu0
      %v2398 = vpop.f32.mrf.mxu0
      %v2399 = vadd.f32 0.0, %v2398
      %v2400 = vpop.f32.mrf.mxu0
      %2401 = vmatprep.mubr.bf16.mxu0 0
      %2402 = vmatmul.mubr.bf16.gmra.mxu0 %v1389
      %v2403 = vpop.f32.mrf.mxu0
      %v2404 = vadd.f32 0.0, %v2403
      %v2405 = vpop.f32.mrf.mxu0
      %v2406 = vpop.f32.mrf.mxu0
      %v2407 = vadd.f32 0.0, %v2406
      %v2408 = vpop.f32.mrf.mxu0
      %2409 = vmatprep.mubr.bf16.mxu0 0
      %2410 = vmatmul.mubr.bf16.gmra.mxu0 %v1390
      %v2411 = vpop.f32.mrf.mxu0
      %v2412 = vadd.f32 0.0, %v2411
      %v2413 = vpop.f32.mrf.mxu0
      %v2414 = vpop.f32.mrf.mxu0
      %v2415 = vadd.f32 0.0, %v2414
      %v2416 = vpop.f32.mrf.mxu0
      %2417 = vmatprep.mubr.bf16.mxu0 0
      %2418 = vmatmul.mubr.bf16.gmra.mxu0 %v1391
      %v2419 = vpop.f32.mrf.mxu0
      %v2420 = vadd.f32 0.0, %v2419
      %v2421 = vpop.f32.mrf.mxu0
      %v2422 = vpop.f32.mrf.mxu0
      %v2423 = vadd.f32 0.0, %v2422
      %v2424 = vpop.f32.mrf.mxu0
      %2425 = vmatprep.mubr.bf16.mxu0 0
      %2426 = vmatmul.mubr.bf16.gmra.mxu0 %v1392
      %v2427 = vpop.f32.mrf.mxu0
      %v2428 = vadd.f32 0.0, %v2427
      %v2429 = vpop.f32.mrf.mxu0
      %v2430 = vpop.f32.mrf.mxu0
      %v2431 = vadd.f32 0.0, %v2430
      %v2432 = vpop.f32.mrf.mxu0
      %2433 = vmatprep.mubr.bf16.mxu0 0
      %2434 = vmatmul.mubr.bf16.gmra.mxu0 %v1393
      %v2435 = vpop.f32.mrf.mxu0
      %v2436 = vadd.f32 0.0, %v2435
      %v2437 = vpop.f32.mrf.mxu0
      %v2438 = vpop.f32.mrf.mxu0
      %v2439 = vadd.f32 0.0, %v2438
      %v2440 = vpop.f32.mrf.mxu0
      %2441 = vmatprep.mubr.bf16.mxu0 0
      %2442 = vmatmul.mubr.bf16.gmra.mxu0 %v1394
      %v2443 = vpop.f32.mrf.mxu0
      %v2444 = vadd.f32 0.0, %v2443
      %v2445 = vpop.f32.mrf.mxu0
      %v2446 = vpop.f32.mrf.mxu0
      %v2447 = vadd.f32 0.0, %v2446
      %v2448 = vpop.f32.mrf.mxu0
      %2449 = vmatprep.mubr.bf16.mxu0 0
      %2450 = vmatmul.mubr.bf16.gmra.mxu0 %v1395
      %v2451 = vpop.f32.mrf.mxu0
      %v2452 = vadd.f32 0.0, %v2451
      %v2453 = vpop.f32.mrf.mxu0
      %v2454 = vpop.f32.mrf.mxu0
      %v2455 = vadd.f32 0.0, %v2454
      %v2456 = vpop.f32.mrf.mxu0
      %2457 = vmatprep.mubr.bf16.mxu0 0
      %2458 = vmatmul.mubr.bf16.gmra.mxu0 %v1396
      %v2459 = vpop.f32.mrf.mxu0
      %v2460 = vadd.f32 0.0, %v2459
      %v2461 = vpop.f32.mrf.mxu0
      %v2462 = vpop.f32.mrf.mxu0
      %v2463 = vadd.f32 0.0, %v2462
      %v2464 = vpop.f32.mrf.mxu0
      %2465 = vmatprep.mubr.bf16.mxu0 0
      %2466 = vmatmul.mubr.bf16.gmra.mxu0 %v2269
      %v2467 = vpop.f32.mrf.mxu0
      %v2468 = vadd.f32 0.0, %v2467
      %v2469 = vpop.f32.mrf.mxu0
      %v2470 = vpop.f32.mrf.mxu0
      %v2471 = vadd.f32 0.0, %v2470
      %v2472 = vpop.f32.mrf.mxu0
      %2473 = vmatprep.mubr.bf16.mxu0 0
      %2474 = vmatmul.mubr.bf16.gmra.mxu0 %v2270
      %v2475 = vpop.f32.mrf.mxu0
      %v2476 = vadd.f32 0.0, %v2475
      %v2477 = vpop.f32.mrf.mxu0
      %v2478 = vpop.f32.mrf.mxu0
      %v2479 = vadd.f32 0.0, %v2478
      %v2480 = vpop.f32.mrf.mxu0
      %2481 = vdwg.mxu0
      %v2482 = vadd.f32 %v2202, %v2356
      %v2483 = vadd.f32 %v2203, %v2359
      %v2484 = vadd.f32 %v2204, %v2364
      %v2485 = vadd.f32 %v2205, %v2367
      %v2486 = vadd.f32 %v2206, %v2372
      %v2487 = vadd.f32 %v2207, %v2375
      %v2488 = vadd.f32 %v2208, %v2380
      %v2489 = vadd.f32 %v2209, %v2383
      %v2490 = vadd.f32 %v2210, %v2388
      %v2491 = vadd.f32 %v2211, %v2391
      %v2492 = vadd.f32 %v2212, %v2396
      %v2493 = vadd.f32 %v2213, %v2399
      %v2494 = vadd.f32 %v2214, %v2404
      %v2495 = vadd.f32 %v2215, %v2407
      %v2496 = vadd.f32 %v2216, %v2412
      %v2497 = vadd.f32 %v2217, %v2415
      %v2498 = vadd.f32 %v2218, %v2420
      %v2499 = vadd.f32 %v2219, %v2423
      %v2500 = vadd.f32 %v2220, %v2428
      %v2501 = vadd.f32 %v2221, %v2431
      %v2502 = vadd.f32 %v2222, %v2436
      %v2503 = vadd.f32 %v2223, %v2439
      %v2504 = vadd.f32 %v2224, %v2444
      %v2505 = vadd.f32 %v2225, %v2447
      %v2506 = vadd.f32 %v2226, %v2452
      %v2507 = vadd.f32 %v2227, %v2455
      %v2508 = vadd.f32 %v2228, %v2460
      %v2509 = vadd.f32 %v2229, %v2463
      %v2510 = vadd.f32 %v2230, %v2468
      %v2511 = vadd.f32 %v2231, %v2471
      %v2512 = vadd.f32 %v2232, %v2476
      %v2513 = vadd.f32 %v2233, %v2479
      %s2514 = scalar_lea.vmem %s1, 384
      %v2515 = vld [vmem:[%s2514] sm:$0xf]
      %v2516 = vld [vmem:[%s2514 + $0x4] sm:$0xf]
      %v2517 = vld [vmem:[%s2514 + $0x8] sm:$0xf]
      %v2518 = vld [vmem:[%s2514 + $0xc] sm:$0xf]
      %v2519 = vld [vmem:[%s2514 + $0x10] sm:$0xf]
      %v2520 = vld [vmem:[%s2514 + $0x14] sm:$0xf]
      %v2521 = vld [vmem:[%s2514 + $0x18] sm:$0xf]
      %v2522 = vld [vmem:[%s2514 + $0x1c] sm:$0xf]
      %v2523 = vld [vmem:[%s2514 + $0x20] sm:$0xf]
      %v2524 = vld [vmem:[%s2514 + $0x24] sm:$0xf]
      %v2525 = vld [vmem:[%s2514 + $0x28] sm:$0xf]
      %v2526 = vld [vmem:[%s2514 + $0x2c] sm:$0xf]
      %v2527 = vld [vmem:[%s2514 + $0x30] sm:$0xf]
      %v2528 = vld [vmem:[%s2514 + $0x34] sm:$0xf]
      %v2529 = vld [vmem:[%s2514 + $0x38] sm:$0xf]
      %v2530 = vld [vmem:[%s2514 + $0x3c] sm:$0xf]
      %v2535 = vunpack.c.l.b16 %v246
      %v2536 = vunpack.c.l.b16 %v247
      %v2537 = vunpack.c.l.b16 %v248
      %v2538 = vunpack.c.l.b16 %v249
      %v2539 = vpack.c.b16 %v2536, %v2535
      %v2540 = vpack.c.b16 %v2538, %v2537
      %v2559 = vunpack.c.l.b16 %v2515
      %v2560 = vunpack.c.l.b16 %v2516
      %v2561 = vunpack.c.l.b16 %v2517
      %v2562 = vunpack.c.l.b16 %v2518
      %v2563 = vunpack.c.l.b16 %v2519
      %v2564 = vunpack.c.l.b16 %v2520
      %v2565 = vunpack.c.l.b16 %v2521
      %v2566 = vunpack.c.l.b16 %v2522
      %v2567 = vunpack.c.l.b16 %v2523
      %v2568 = vunpack.c.l.b16 %v2524
      %v2569 = vunpack.c.l.b16 %v2525
      %v2570 = vunpack.c.l.b16 %v2526
      %v2571 = vunpack.c.l.b16 %v2527
      %v2572 = vunpack.c.l.b16 %v2528
      %v2573 = vunpack.c.l.b16 %v2529
      %v2574 = vunpack.c.l.b16 %v2530
      %v2575 = vpack.c.b16 %v2560, %v2559
      %v2576 = vpack.c.b16 %v2562, %v2561
      %v2577 = vpack.c.b16 %v2564, %v2563
      %v2578 = vpack.c.b16 %v2566, %v2565
      %v2579 = vpack.c.b16 %v2568, %v2567
      %v2580 = vpack.c.b16 %v2570, %v2569
      %v2581 = vpack.c.b16 %v2572, %v2571
      %v2582 = vpack.c.b16 %v2574, %v2573
      %2591 = vmatprep.subr.bf16.mxu0 0
      %2592 = vmatpush1.bf16.msra.mxu0 %v2582
      %2593 = vmatprep.subr.bf16.mxu0 0
      %2594 = vmatpush1.bf16.msra.mxu0 %v2581
      %2595 = vmatprep.subr.bf16.mxu0 0
      %2596 = vmatpush1.bf16.msra.mxu0 %v2580
      %2597 = vmatprep.subr.bf16.mxu0 0
      %2598 = vmatpush1.bf16.msra.mxu0 %v2579
      %2599 = vmatprep.subr.bf16.mxu0 0
      %2600 = vmatpush1.bf16.msra.mxu0 %v2578
      %2601 = vmatprep.subr.bf16.mxu0 0
      %2602 = vmatpush1.bf16.msra.mxu0 %v2577
      %2603 = vmatprep.subr.bf16.mxu0 0
      %2604 = vmatpush1.bf16.msra.mxu0 %v2576
      %2605 = vmatprep.subr.bf16.mxu0 0
      %2606 = vmatpush1.bf16.msra.mxu0 %v2575
      %2607 = vmatprep.subr.bf16.mxu0 0
      %2608 = vmatpush2.bf16.msra.mxu0 0
      %2609 = vmatprep.subr.bf16.mxu0 0
      %2610 = vmatpush2.bf16.msra.mxu0 0
      %2611 = vmatprep.subr.bf16.mxu0 0
      %2612 = vmatpush2.bf16.msra.mxu0 0
      %2613 = vmatprep.subr.bf16.mxu0 0
      %2614 = vmatpush2.bf16.msra.mxu0 0
      %2615 = vmatprep.subr.bf16.mxu0 0
      %2616 = vmatpush2.bf16.msra.mxu0 0
      %2617 = vmatprep.subr.bf16.mxu0 0
      %2618 = vmatpush2.bf16.msra.mxu0 0
      %2619 = vmatprep.subr.bf16.mxu0 0
      %2620 = vmatpush2.bf16.msra.mxu0 0
      %2621 = vmatprep.subr.bf16.mxu0 0
      %2622 = vmatpush2.bf16.msra.mxu0 0
      %2623 = vmatprep.mubr.bf16.mxu0 0
      %2624 = vmatmul.mubr.bf16.gmra.mxu0 %v980
      %v2625 = vpop.f32.mrf.mxu0
      %v2626 = vadd.f32 0.0, %v2625
      %v2627 = vpop.f32.mrf.mxu0
      %v2628 = vpop.f32.mrf.mxu0
      %v2629 = vadd.f32 0.0, %v2628
      %v2630 = vpop.f32.mrf.mxu0
      %2631 = vmatprep.mubr.bf16.mxu0 0
      %2632 = vmatmul.mubr.bf16.gmra.mxu0 %v981
      %v2633 = vpop.f32.mrf.mxu0
      %v2634 = vadd.f32 0.0, %v2633
      %v2635 = vpop.f32.mrf.mxu0
      %v2636 = vpop.f32.mrf.mxu0
      %v2637 = vadd.f32 0.0, %v2636
      %v2638 = vpop.f32.mrf.mxu0
      %2639 = vmatprep.mubr.bf16.mxu0 0
      %2640 = vmatmul.mubr.bf16.gmra.mxu0 %v982
      %v2641 = vpop.f32.mrf.mxu0
      %v2642 = vadd.f32 0.0, %v2641
      %v2643 = vpop.f32.mrf.mxu0
      %v2644 = vpop.f32.mrf.mxu0
      %v2645 = vadd.f32 0.0, %v2644
      %v2646 = vpop.f32.mrf.mxu0
      %2647 = vmatprep.mubr.bf16.mxu0 0
      %2648 = vmatmul.mubr.bf16.gmra.mxu0 %v983
      %v2649 = vpop.f32.mrf.mxu0
      %v2650 = vadd.f32 0.0, %v2649
      %v2651 = vpop.f32.mrf.mxu0
      %v2652 = vpop.f32.mrf.mxu0
      %v2653 = vadd.f32 0.0, %v2652
      %v2654 = vpop.f32.mrf.mxu0
      %2655 = vmatprep.mubr.bf16.mxu0 0
      %2656 = vmatmul.mubr.bf16.gmra.mxu0 %v984
      %v2657 = vpop.f32.mrf.mxu0
      %v2658 = vadd.f32 0.0, %v2657
      %v2659 = vpop.f32.mrf.mxu0
      %v2660 = vpop.f32.mrf.mxu0
      %v2661 = vadd.f32 0.0, %v2660
      %v2662 = vpop.f32.mrf.mxu0
      %2663 = vmatprep.mubr.bf16.mxu0 0
      %2664 = vmatmul.mubr.bf16.gmra.mxu0 %v985
      %v2665 = vpop.f32.mrf.mxu0
      %v2666 = vadd.f32 0.0, %v2665
      %v2667 = vpop.f32.mrf.mxu0
      %v2668 = vpop.f32.mrf.mxu0
      %v2669 = vadd.f32 0.0, %v2668
      %v2670 = vpop.f32.mrf.mxu0
      %2671 = vmatprep.mubr.bf16.mxu0 0
      %2672 = vmatmul.mubr.bf16.gmra.mxu0 %v986
      %v2673 = vpop.f32.mrf.mxu0
      %v2674 = vadd.f32 0.0, %v2673
      %v2675 = vpop.f32.mrf.mxu0
      %v2676 = vpop.f32.mrf.mxu0
      %v2677 = vadd.f32 0.0, %v2676
      %v2678 = vpop.f32.mrf.mxu0
      %2679 = vmatprep.mubr.bf16.mxu0 0
      %2680 = vmatmul.mubr.bf16.gmra.mxu0 %v987
      %v2681 = vpop.f32.mrf.mxu0
      %v2682 = vadd.f32 0.0, %v2681
      %v2683 = vpop.f32.mrf.mxu0
      %v2684 = vpop.f32.mrf.mxu0
      %v2685 = vadd.f32 0.0, %v2684
      %v2686 = vpop.f32.mrf.mxu0
      %2687 = vmatprep.mubr.bf16.mxu0 0
      %2688 = vmatmul.mubr.bf16.gmra.mxu0 %v988
      %v2689 = vpop.f32.mrf.mxu0
      %v2690 = vadd.f32 0.0, %v2689
      %v2691 = vpop.f32.mrf.mxu0
      %v2692 = vpop.f32.mrf.mxu0
      %v2693 = vadd.f32 0.0, %v2692
      %v2694 = vpop.f32.mrf.mxu0
      %2695 = vmatprep.mubr.bf16.mxu0 0
      %2696 = vmatmul.mubr.bf16.gmra.mxu0 %v989
      %v2697 = vpop.f32.mrf.mxu0
      %v2698 = vadd.f32 0.0, %v2697
      %v2699 = vpop.f32.mrf.mxu0
      %v2700 = vpop.f32.mrf.mxu0
      %v2701 = vadd.f32 0.0, %v2700
      %v2702 = vpop.f32.mrf.mxu0
      %2703 = vmatprep.mubr.bf16.mxu0 0
      %2704 = vmatmul.mubr.bf16.gmra.mxu0 %v990
      %v2705 = vpop.f32.mrf.mxu0
      %v2706 = vadd.f32 0.0, %v2705
      %v2707 = vpop.f32.mrf.mxu0
      %v2708 = vpop.f32.mrf.mxu0
      %v2709 = vadd.f32 0.0, %v2708
      %v2710 = vpop.f32.mrf.mxu0
      %2711 = vmatprep.mubr.bf16.mxu0 0
      %2712 = vmatmul.mubr.bf16.gmra.mxu0 %v991
      %v2713 = vpop.f32.mrf.mxu0
      %v2714 = vadd.f32 0.0, %v2713
      %v2715 = vpop.f32.mrf.mxu0
      %v2716 = vpop.f32.mrf.mxu0
      %v2717 = vadd.f32 0.0, %v2716
      %v2718 = vpop.f32.mrf.mxu0
      %2719 = vmatprep.mubr.bf16.mxu0 0
      %2720 = vmatmul.mubr.bf16.gmra.mxu0 %v1679
      %v2721 = vpop.f32.mrf.mxu0
      %v2722 = vadd.f32 0.0, %v2721
      %v2723 = vpop.f32.mrf.mxu0
      %v2724 = vpop.f32.mrf.mxu0
      %v2725 = vadd.f32 0.0, %v2724
      %v2726 = vpop.f32.mrf.mxu0
      %2727 = vmatprep.mubr.bf16.mxu0 0
      %2728 = vmatmul.mubr.bf16.gmra.mxu0 %v1680
      %v2729 = vpop.f32.mrf.mxu0
      %v2730 = vadd.f32 0.0, %v2729
      %v2731 = vpop.f32.mrf.mxu0
      %v2732 = vpop.f32.mrf.mxu0
      %v2733 = vadd.f32 0.0, %v2732
      %v2734 = vpop.f32.mrf.mxu0
      %2735 = vmatprep.mubr.bf16.mxu0 0
      %2736 = vmatmul.mubr.bf16.gmra.mxu0 %v2539
      %v2737 = vpop.f32.mrf.mxu0
      %v2738 = vadd.f32 0.0, %v2737
      %v2739 = vpop.f32.mrf.mxu0
      %v2740 = vpop.f32.mrf.mxu0
      %v2741 = vadd.f32 0.0, %v2740
      %v2742 = vpop.f32.mrf.mxu0
      %2743 = vmatprep.mubr.bf16.mxu0 0
      %2744 = vmatmul.mubr.bf16.gmra.mxu0 %v2540
      %v2745 = vpop.f32.mrf.mxu0
      %v2746 = vadd.f32 0.0, %v2745
      %v2747 = vpop.f32.mrf.mxu0
      %v2748 = vpop.f32.mrf.mxu0
      %v2749 = vadd.f32 0.0, %v2748
      %v2750 = vpop.f32.mrf.mxu0
      %2751 = vdwg.mxu0
      %v2752 = vadd.f32 %v2482, %v2626
      %v2753 = vadd.f32 %v2483, %v2629
      %v2754 = vadd.f32 %v2484, %v2634
      %v2755 = vadd.f32 %v2485, %v2637
      %v2756 = vadd.f32 %v2486, %v2642
      %v2757 = vadd.f32 %v2487, %v2645
      %v2758 = vadd.f32 %v2488, %v2650
      %v2759 = vadd.f32 %v2489, %v2653
      %v2760 = vadd.f32 %v2490, %v2658
      %v2761 = vadd.f32 %v2491, %v2661
      %v2762 = vadd.f32 %v2492, %v2666
      %v2763 = vadd.f32 %v2493, %v2669
      %v2764 = vadd.f32 %v2494, %v2674
      %v2765 = vadd.f32 %v2495, %v2677
      %v2766 = vadd.f32 %v2496, %v2682
      %v2767 = vadd.f32 %v2497, %v2685
      %v2768 = vadd.f32 %v2498, %v2690
      %v2769 = vadd.f32 %v2499, %v2693
      %v2770 = vadd.f32 %v2500, %v2698
      %v2771 = vadd.f32 %v2501, %v2701
      %v2772 = vadd.f32 %v2502, %v2706
      %v2773 = vadd.f32 %v2503, %v2709
      %v2774 = vadd.f32 %v2504, %v2714
      %v2775 = vadd.f32 %v2505, %v2717
      %v2776 = vadd.f32 %v2506, %v2722
      %v2777 = vadd.f32 %v2507, %v2725
      %v2778 = vadd.f32 %v2508, %v2730
      %v2779 = vadd.f32 %v2509, %v2733
      %v2780 = vadd.f32 %v2510, %v2738
      %v2781 = vadd.f32 %v2511, %v2741
      %v2782 = vadd.f32 %v2512, %v2746
      %v2783 = vadd.f32 %v2513, %v2749
      %v2785 = vshrl.u32 %v246, 16
      %v2787 = vrot.slane %v2785, 4
      %v2788 = vshll.u32 %v246, 16
      %v2790 = vrot.slane %v2788, 5
      %v2791 = vor.u32 %v2787, %v2790
      %v2792 = vrot.slane %v2791, 4
      %v2794 = vshll.u32 %v247, 16
      %v2796 = vrot.slane %v2794, 5
      %v2797 = vsel %vm269, %v2792, %v2796
      %v2798 = vshrl.u32 %v247, 16
      %v2800 = vrot.slane %v2798, 4
      %v2801 = vor.u32 %v2800, %v2796
      %v2802 = vrot.slane %v2801, 4
      %v2804 = vshll.u32 %v248, 16
      %v2806 = vrot.slane %v2804, 5
      %v2807 = vsel %vm269, %v2802, %v2806
      %v2808 = vshrl.u32 %v248, 16
      %v2810 = vrot.slane %v2808, 4
      %v2811 = vor.u32 %v2810, %v2806
      %v2812 = vrot.slane %v2811, 4
      %v2814 = vshll.u32 %v249, 16
      %v2816 = vrot.slane %v2814, 5
      %v2817 = vsel %vm269, %v2812, %v2816
      %v2818 = vshrl.u32 %v249, 16
      %v2820 = vrot.slane %v2818, 4
      %v2821 = vor.u32 %v2820, %v2816
      %v2822 = vrot.slane %v2821, 4
      %v2824 = vshll.u32 %v250, 16
      %v2826 = vrot.slane %v2824, 5
      %v2827 = vsel %vm269, %v2822, %v2826
      %s2828 = scalar_lea.vmem %s1, 448
      %v2829 = vld [vmem:[%s2828] sm:$0xf]
      %v2830 = vld [vmem:[%s2828 + $0x4] sm:$0xf]
      %v2831 = vld [vmem:[%s2828 + $0x8] sm:$0xf]
      %v2832 = vld [vmem:[%s2828 + $0xc] sm:$0xf]
      %v2833 = vld [vmem:[%s2828 + $0x10] sm:$0xf]
      %v2834 = vld [vmem:[%s2828 + $0x14] sm:$0xf]
      %v2835 = vld [vmem:[%s2828 + $0x18] sm:$0xf]
      %v2836 = vld [vmem:[%s2828 + $0x1c] sm:$0xf]
      %v2837 = vld [vmem:[%s2828 + $0x20] sm:$0xf]
      %v2838 = vld [vmem:[%s2828 + $0x24] sm:$0xf]
      %v2839 = vld [vmem:[%s2828 + $0x28] sm:$0xf]
      %v2840 = vld [vmem:[%s2828 + $0x2c] sm:$0xf]
      %v2841 = vld [vmem:[%s2828 + $0x30] sm:$0xf]
      %v2842 = vld [vmem:[%s2828 + $0x34] sm:$0xf]
      %v2843 = vld [vmem:[%s2828 + $0x38] sm:$0xf]
      %v2844 = vld [vmem:[%s2828 + $0x3c] sm:$0xf]
      %v2845 = vunpack.c.l.b16 %v2797
      %v2846 = vunpack.c.l.b16 %v2807
      %v2847 = vunpack.c.l.b16 %v2817
      %v2848 = vunpack.c.l.b16 %v2827
      %v2849 = vpack.c.b16 %v2846, %v2845
      %v2850 = vpack.c.b16 %v2848, %v2847
      %v2869 = vunpack.c.l.b16 %v2829
      %v2870 = vunpack.c.l.b16 %v2830
      %v2871 = vunpack.c.l.b16 %v2831
      %v2872 = vunpack.c.l.b16 %v2832
      %v2873 = vunpack.c.l.b16 %v2833
      %v2874 = vunpack.c.l.b16 %v2834
      %v2875 = vunpack.c.l.b16 %v2835
      %v2876 = vunpack.c.l.b16 %v2836
      %v2877 = vunpack.c.l.b16 %v2837
      %v2878 = vunpack.c.l.b16 %v2838
      %v2879 = vunpack.c.l.b16 %v2839
      %v2880 = vunpack.c.l.b16 %v2840
      %v2881 = vunpack.c.l.b16 %v2841
      %v2882 = vunpack.c.l.b16 %v2842
      %v2883 = vunpack.c.l.b16 %v2843
      %v2884 = vunpack.c.l.b16 %v2844
      %v2885 = vpack.c.b16 %v2870, %v2869
      %v2886 = vpack.c.b16 %v2872, %v2871
      %v2887 = vpack.c.b16 %v2874, %v2873
      %v2888 = vpack.c.b16 %v2876, %v2875
      %v2889 = vpack.c.b16 %v2878, %v2877
      %v2890 = vpack.c.b16 %v2880, %v2879
      %v2891 = vpack.c.b16 %v2882, %v2881
      %v2892 = vpack.c.b16 %v2884, %v2883
      %2901 = vmatprep.subr.bf16.mxu0 0
      %2902 = vmatpush1.bf16.msra.mxu0 %v2892
      %2903 = vmatprep.subr.bf16.mxu0 0
      %2904 = vmatpush1.bf16.msra.mxu0 %v2891
      %2905 = vmatprep.subr.bf16.mxu0 0
      %2906 = vmatpush1.bf16.msra.mxu0 %v2890
      %2907 = vmatprep.subr.bf16.mxu0 0
      %2908 = vmatpush1.bf16.msra.mxu0 %v2889
      %2909 = vmatprep.subr.bf16.mxu0 0
      %2910 = vmatpush1.bf16.msra.mxu0 %v2888
      %2911 = vmatprep.subr.bf16.mxu0 0
      %2912 = vmatpush1.bf16.msra.mxu0 %v2887
      %2913 = vmatprep.subr.bf16.mxu0 0
      %2914 = vmatpush1.bf16.msra.mxu0 %v2886
      %2915 = vmatprep.subr.bf16.mxu0 0
      %2916 = vmatpush1.bf16.msra.mxu0 %v2885
      %2917 = vmatprep.subr.bf16.mxu0 0
      %2918 = vmatpush2.bf16.msra.mxu0 0
      %2919 = vmatprep.subr.bf16.mxu0 0
      %2920 = vmatpush2.bf16.msra.mxu0 0
      %2921 = vmatprep.subr.bf16.mxu0 0
      %2922 = vmatpush2.bf16.msra.mxu0 0
      %2923 = vmatprep.subr.bf16.mxu0 0
      %2924 = vmatpush2.bf16.msra.mxu0 0
      %2925 = vmatprep.subr.bf16.mxu0 0
      %2926 = vmatpush2.bf16.msra.mxu0 0
      %2927 = vmatprep.subr.bf16.mxu0 0
      %2928 = vmatpush2.bf16.msra.mxu0 0
      %2929 = vmatprep.subr.bf16.mxu0 0
      %2930 = vmatpush2.bf16.msra.mxu0 0
      %2931 = vmatprep.subr.bf16.mxu0 0
      %2932 = vmatpush2.bf16.msra.mxu0 0
      %2933 = vmatprep.mubr.bf16.mxu0 0
      %2934 = vmatmul.mubr.bf16.gmra.mxu0 %v675
      %v2935 = vpop.f32.mrf.mxu0
      %v2936 = vadd.f32 0.0, %v2935
      %v2937 = vpop.f32.mrf.mxu0
      %v2938 = vpop.f32.mrf.mxu0
      %v2939 = vadd.f32 0.0, %v2938
      %v2940 = vpop.f32.mrf.mxu0
      %2941 = vmatprep.mubr.bf16.mxu0 0
      %2942 = vmatmul.mubr.bf16.gmra.mxu0 %v676
      %v2943 = vpop.f32.mrf.mxu0
      %v2944 = vadd.f32 0.0, %v2943
      %v2945 = vpop.f32.mrf.mxu0
      %v2946 = vpop.f32.mrf.mxu0
      %v2947 = vadd.f32 0.0, %v2946
      %v2948 = vpop.f32.mrf.mxu0
      %2949 = vmatprep.mubr.bf16.mxu0 0
      %2950 = vmatmul.mubr.bf16.gmra.mxu0 %v677
      %v2951 = vpop.f32.mrf.mxu0
      %v2952 = vadd.f32 0.0, %v2951
      %v2953 = vpop.f32.mrf.mxu0
      %v2954 = vpop.f32.mrf.mxu0
      %v2955 = vadd.f32 0.0, %v2954
      %v2956 = vpop.f32.mrf.mxu0
      %2957 = vmatprep.mubr.bf16.mxu0 0
      %2958 = vmatmul.mubr.bf16.gmra.mxu0 %v678
      %v2959 = vpop.f32.mrf.mxu0
      %v2960 = vadd.f32 0.0, %v2959
      %v2961 = vpop.f32.mrf.mxu0
      %v2962 = vpop.f32.mrf.mxu0
      %v2963 = vadd.f32 0.0, %v2962
      %v2964 = vpop.f32.mrf.mxu0
      %2965 = vmatprep.mubr.bf16.mxu0 0
      %2966 = vmatmul.mubr.bf16.gmra.mxu0 %v679
      %v2967 = vpop.f32.mrf.mxu0
      %v2968 = vadd.f32 0.0, %v2967
      %v2969 = vpop.f32.mrf.mxu0
      %v2970 = vpop.f32.mrf.mxu0
      %v2971 = vadd.f32 0.0, %v2970
      %v2972 = vpop.f32.mrf.mxu0
      %2973 = vmatprep.mubr.bf16.mxu0 0
      %2974 = vmatmul.mubr.bf16.gmra.mxu0 %v680
      %v2975 = vpop.f32.mrf.mxu0
      %v2976 = vadd.f32 0.0, %v2975
      %v2977 = vpop.f32.mrf.mxu0
      %v2978 = vpop.f32.mrf.mxu0
      %v2979 = vadd.f32 0.0, %v2978
      %v2980 = vpop.f32.mrf.mxu0
      %2981 = vmatprep.mubr.bf16.mxu0 0
      %2982 = vmatmul.mubr.bf16.gmra.mxu0 %v681
      %v2983 = vpop.f32.mrf.mxu0
      %v2984 = vadd.f32 0.0, %v2983
      %v2985 = vpop.f32.mrf.mxu0
      %v2986 = vpop.f32.mrf.mxu0
      %v2987 = vadd.f32 0.0, %v2986
      %v2988 = vpop.f32.mrf.mxu0
      %2989 = vmatprep.mubr.bf16.mxu0 0
      %2990 = vmatmul.mubr.bf16.gmra.mxu0 %v682
      %v2991 = vpop.f32.mrf.mxu0
      %v2992 = vadd.f32 0.0, %v2991
      %v2993 = vpop.f32.mrf.mxu0
      %v2994 = vpop.f32.mrf.mxu0
      %v2995 = vadd.f32 0.0, %v2994
      %v2996 = vpop.f32.mrf.mxu0
      %2997 = vmatprep.mubr.bf16.mxu0 0
      %2998 = vmatmul.mubr.bf16.gmra.mxu0 %v683
      %v2999 = vpop.f32.mrf.mxu0
      %v3000 = vadd.f32 0.0, %v2999
      %v3001 = vpop.f32.mrf.mxu0
      %v3002 = vpop.f32.mrf.mxu0
      %v3003 = vadd.f32 0.0, %v3002
      %v3004 = vpop.f32.mrf.mxu0
      %3005 = vmatprep.mubr.bf16.mxu0 0
      %3006 = vmatmul.mubr.bf16.gmra.mxu0 %v684
      %v3007 = vpop.f32.mrf.mxu0
      %v3008 = vadd.f32 0.0, %v3007
      %v3009 = vpop.f32.mrf.mxu0
      %v3010 = vpop.f32.mrf.mxu0
      %v3011 = vadd.f32 0.0, %v3010
      %v3012 = vpop.f32.mrf.mxu0
      %3013 = vmatprep.mubr.bf16.mxu0 0
      %3014 = vmatmul.mubr.bf16.gmra.mxu0 %v685
      %v3015 = vpop.f32.mrf.mxu0
      %v3016 = vadd.f32 0.0, %v3015
      %v3017 = vpop.f32.mrf.mxu0
      %v3018 = vpop.f32.mrf.mxu0
      %v3019 = vadd.f32 0.0, %v3018
      %v3020 = vpop.f32.mrf.mxu0
      %3021 = vmatprep.mubr.bf16.mxu0 0
      %3022 = vmatmul.mubr.bf16.gmra.mxu0 %v686
      %v3023 = vpop.f32.mrf.mxu0
      %v3024 = vadd.f32 0.0, %v3023
      %v3025 = vpop.f32.mrf.mxu0
      %v3026 = vpop.f32.mrf.mxu0
      %v3027 = vadd.f32 0.0, %v3026
      %v3028 = vpop.f32.mrf.mxu0
      %3029 = vmatprep.mubr.bf16.mxu0 0
      %3030 = vmatmul.mubr.bf16.gmra.mxu0 %v1989
      %v3031 = vpop.f32.mrf.mxu0
      %v3032 = vadd.f32 0.0, %v3031
      %v3033 = vpop.f32.mrf.mxu0
      %v3034 = vpop.f32.mrf.mxu0
      %v3035 = vadd.f32 0.0, %v3034
      %v3036 = vpop.f32.mrf.mxu0
      %3037 = vmatprep.mubr.bf16.mxu0 0
      %3038 = vmatmul.mubr.bf16.gmra.mxu0 %v1990
      %v3039 = vpop.f32.mrf.mxu0
      %v3040 = vadd.f32 0.0, %v3039
      %v3041 = vpop.f32.mrf.mxu0
      %v3042 = vpop.f32.mrf.mxu0
      %v3043 = vadd.f32 0.0, %v3042
      %v3044 = vpop.f32.mrf.mxu0
      %3045 = vmatprep.mubr.bf16.mxu0 0
      %3046 = vmatmul.mubr.bf16.gmra.mxu0 %v2849
      %v3047 = vpop.f32.mrf.mxu0
      %v3048 = vadd.f32 0.0, %v3047
      %v3049 = vpop.f32.mrf.mxu0
      %v3050 = vpop.f32.mrf.mxu0
      %v3051 = vadd.f32 0.0, %v3050
      %v3052 = vpop.f32.mrf.mxu0
      %3053 = vmatprep.mubr.bf16.mxu0 0
      %3054 = vmatmul.mubr.bf16.gmra.mxu0 %v2850
      %v3055 = vpop.f32.mrf.mxu0
      %v3056 = vadd.f32 0.0, %v3055
      %v3057 = vpop.f32.mrf.mxu0
      %v3058 = vpop.f32.mrf.mxu0
      %v3059 = vadd.f32 0.0, %v3058
      %v3060 = vpop.f32.mrf.mxu0
      %3061 = vdwg.mxu0
      %v3062 = vadd.f32 %v2752, %v2936
      %v3063 = vadd.f32 %v2753, %v2939
      %v3064 = vadd.f32 %v2754, %v2944
      %v3065 = vadd.f32 %v2755, %v2947
      %v3066 = vadd.f32 %v2756, %v2952
      %v3067 = vadd.f32 %v2757, %v2955
      %v3068 = vadd.f32 %v2758, %v2960
      %v3069 = vadd.f32 %v2759, %v2963
      %v3070 = vadd.f32 %v2760, %v2968
      %v3071 = vadd.f32 %v2761, %v2971
      %v3072 = vadd.f32 %v2762, %v2976
      %v3073 = vadd.f32 %v2763, %v2979
      %v3074 = vadd.f32 %v2764, %v2984
      %v3075 = vadd.f32 %v2765, %v2987
      %v3076 = vadd.f32 %v2766, %v2992
      %v3077 = vadd.f32 %v2767, %v2995
      %v3078 = vadd.f32 %v2768, %v3000
      %v3079 = vadd.f32 %v2769, %v3003
      %v3080 = vadd.f32 %v2770, %v3008
      %v3081 = vadd.f32 %v2771, %v3011
      %v3082 = vadd.f32 %v2772, %v3016
      %v3083 = vadd.f32 %v2773, %v3019
      %v3084 = vadd.f32 %v2774, %v3024
      %v3085 = vadd.f32 %v2775, %v3027
      %v3086 = vadd.f32 %v2776, %v3032
      %v3087 = vadd.f32 %v2777, %v3035
      %v3088 = vadd.f32 %v2778, %v3040
      %v3089 = vadd.f32 %v2779, %v3043
      %v3090 = vadd.f32 %v2780, %v3048
      %v3091 = vadd.f32 %v2781, %v3051
      %v3092 = vadd.f32 %v2782, %v3056
      %v3093 = vadd.f32 %v2783, %v3059
      %v3095 = vrot.slane %v246, 5
      %v3096 = vrot.slane %v3095, 4
      %v3097 = vrot.slane %v247, 5
      %v3098 = vsel %vm1227, %v3096, %v3097
      %v3099 = vrot.slane %v3097, 4
      %v3100 = vrot.slane %v248, 5
      %v3101 = vsel %vm1227, %v3099, %v3100
      %v3102 = vrot.slane %v3100, 4
      %v3103 = vrot.slane %v249, 5
      %v3104 = vsel %vm1227, %v3102, %v3103
      %v3105 = vrot.slane %v3103, 4
      %v3106 = vrot.slane %v250, 5
      %v3107 = vsel %vm1227, %v3105, %v3106
      %s3108 = scalar_lea.vmem %s1, 512
      %v3109 = vld [vmem:[%s3108] sm:$0xf]
      %v3110 = vld [vmem:[%s3108 + $0x4] sm:$0xf]
      %v3111 = vld [vmem:[%s3108 + $0x8] sm:$0xf]
      %v3112 = vld [vmem:[%s3108 + $0xc] sm:$0xf]
      %v3113 = vld [vmem:[%s3108 + $0x10] sm:$0xf]
      %v3114 = vld [vmem:[%s3108 + $0x14] sm:$0xf]
      %v3115 = vld [vmem:[%s3108 + $0x18] sm:$0xf]
      %v3116 = vld [vmem:[%s3108 + $0x1c] sm:$0xf]
      %v3117 = vld [vmem:[%s3108 + $0x20] sm:$0xf]
      %v3118 = vld [vmem:[%s3108 + $0x24] sm:$0xf]
      %v3119 = vld [vmem:[%s3108 + $0x28] sm:$0xf]
      %v3120 = vld [vmem:[%s3108 + $0x2c] sm:$0xf]
      %v3121 = vld [vmem:[%s3108 + $0x30] sm:$0xf]
      %v3122 = vld [vmem:[%s3108 + $0x34] sm:$0xf]
      %v3123 = vld [vmem:[%s3108 + $0x38] sm:$0xf]
      %v3124 = vld [vmem:[%s3108 + $0x3c] sm:$0xf]
      %v3125 = vunpack.c.l.b16 %v3098
      %v3126 = vunpack.c.l.b16 %v3101
      %v3127 = vunpack.c.l.b16 %v3104
      %v3128 = vunpack.c.l.b16 %v3107
      %v3129 = vpack.c.b16 %v3126, %v3125
      %v3130 = vpack.c.b16 %v3128, %v3127
      %v3149 = vunpack.c.l.b16 %v3109
      %v3150 = vunpack.c.l.b16 %v3110
      %v3151 = vunpack.c.l.b16 %v3111
      %v3152 = vunpack.c.l.b16 %v3112
      %v3153 = vunpack.c.l.b16 %v3113
      %v3154 = vunpack.c.l.b16 %v3114
      %v3155 = vunpack.c.l.b16 %v3115
      %v3156 = vunpack.c.l.b16 %v3116
      %v3157 = vunpack.c.l.b16 %v3117
      %v3158 = vunpack.c.l.b16 %v3118
      %v3159 = vunpack.c.l.b16 %v3119
      %v3160 = vunpack.c.l.b16 %v3120
      %v3161 = vunpack.c.l.b16 %v3121
      %v3162 = vunpack.c.l.b16 %v3122
      %v3163 = vunpack.c.l.b16 %v3123
      %v3164 = vunpack.c.l.b16 %v3124
      %v3165 = vpack.c.b16 %v3150, %v3149
      %v3166 = vpack.c.b16 %v3152, %v3151
      %v3167 = vpack.c.b16 %v3154, %v3153
      %v3168 = vpack.c.b16 %v3156, %v3155
      %v3169 = vpack.c.b16 %v3158, %v3157
      %v3170 = vpack.c.b16 %v3160, %v3159
      %v3171 = vpack.c.b16 %v3162, %v3161
      %v3172 = vpack.c.b16 %v3164, %v3163
      %3181 = vmatprep.subr.bf16.mxu0 0
      %3182 = vmatpush1.bf16.msra.mxu0 %v3172
      %3183 = vmatprep.subr.bf16.mxu0 0
      %3184 = vmatpush1.bf16.msra.mxu0 %v3171
      %3185 = vmatprep.subr.bf16.mxu0 0
      %3186 = vmatpush1.bf16.msra.mxu0 %v3170
      %3187 = vmatprep.subr.bf16.mxu0 0
      %3188 = vmatpush1.bf16.msra.mxu0 %v3169
      %3189 = vmatprep.subr.bf16.mxu0 0
      %3190 = vmatpush1.bf16.msra.mxu0 %v3168
      %3191 = vmatprep.subr.bf16.mxu0 0
      %3192 = vmatpush1.bf16.msra.mxu0 %v3167
      %3193 = vmatprep.subr.bf16.mxu0 0
      %3194 = vmatpush1.bf16.msra.mxu0 %v3166
      %3195 = vmatprep.subr.bf16.mxu0 0
      %3196 = vmatpush1.bf16.msra.mxu0 %v3165
      %3197 = vmatprep.subr.bf16.mxu0 0
      %3198 = vmatpush2.bf16.msra.mxu0 0
      %3199 = vmatprep.subr.bf16.mxu0 0
      %3200 = vmatpush2.bf16.msra.mxu0 0
      %3201 = vmatprep.subr.bf16.mxu0 0
      %3202 = vmatpush2.bf16.msra.mxu0 0
      %3203 = vmatprep.subr.bf16.mxu0 0
      %3204 = vmatpush2.bf16.msra.mxu0 0
      %3205 = vmatprep.subr.bf16.mxu0 0
      %3206 = vmatpush2.bf16.msra.mxu0 0
      %3207 = vmatprep.subr.bf16.mxu0 0
      %3208 = vmatpush2.bf16.msra.mxu0 0
      %3209 = vmatprep.subr.bf16.mxu0 0
      %3210 = vmatpush2.bf16.msra.mxu0 0
      %3211 = vmatprep.subr.bf16.mxu0 0
      %3212 = vmatpush2.bf16.msra.mxu0 0
      %3213 = vmatprep.mubr.bf16.mxu0 0
      %3214 = vmatmul.mubr.bf16.gmra.mxu0 %v1385
      %v3215 = vpop.f32.mrf.mxu0
      %v3216 = vadd.f32 0.0, %v3215
      %v3217 = vpop.f32.mrf.mxu0
      %v3218 = vpop.f32.mrf.mxu0
      %v3219 = vadd.f32 0.0, %v3218
      %v3220 = vpop.f32.mrf.mxu0
      %3221 = vmatprep.mubr.bf16.mxu0 0
      %3222 = vmatmul.mubr.bf16.gmra.mxu0 %v1386
      %v3223 = vpop.f32.mrf.mxu0
      %v3224 = vadd.f32 0.0, %v3223
      %v3225 = vpop.f32.mrf.mxu0
      %v3226 = vpop.f32.mrf.mxu0
      %v3227 = vadd.f32 0.0, %v3226
      %v3228 = vpop.f32.mrf.mxu0
      %3229 = vmatprep.mubr.bf16.mxu0 0
      %3230 = vmatmul.mubr.bf16.gmra.mxu0 %v1387
      %v3231 = vpop.f32.mrf.mxu0
      %v3232 = vadd.f32 0.0, %v3231
      %v3233 = vpop.f32.mrf.mxu0
      %v3234 = vpop.f32.mrf.mxu0
      %v3235 = vadd.f32 0.0, %v3234
      %v3236 = vpop.f32.mrf.mxu0
      %3237 = vmatprep.mubr.bf16.mxu0 0
      %3238 = vmatmul.mubr.bf16.gmra.mxu0 %v1388
      %v3239 = vpop.f32.mrf.mxu0
      %v3240 = vadd.f32 0.0, %v3239
      %v3241 = vpop.f32.mrf.mxu0
      %v3242 = vpop.f32.mrf.mxu0
      %v3243 = vadd.f32 0.0, %v3242
      %v3244 = vpop.f32.mrf.mxu0
      %3245 = vmatprep.mubr.bf16.mxu0 0
      %3246 = vmatmul.mubr.bf16.gmra.mxu0 %v1389
      %v3247 = vpop.f32.mrf.mxu0
      %v3248 = vadd.f32 0.0, %v3247
      %v3249 = vpop.f32.mrf.mxu0
      %v3250 = vpop.f32.mrf.mxu0
      %v3251 = vadd.f32 0.0, %v3250
      %v3252 = vpop.f32.mrf.mxu0
      %3253 = vmatprep.mubr.bf16.mxu0 0
      %3254 = vmatmul.mubr.bf16.gmra.mxu0 %v1390
      %v3255 = vpop.f32.mrf.mxu0
      %v3256 = vadd.f32 0.0, %v3255
      %v3257 = vpop.f32.mrf.mxu0
      %v3258 = vpop.f32.mrf.mxu0
      %v3259 = vadd.f32 0.0, %v3258
      %v3260 = vpop.f32.mrf.mxu0
      %3261 = vmatprep.mubr.bf16.mxu0 0
      %3262 = vmatmul.mubr.bf16.gmra.mxu0 %v1391
      %v3263 = vpop.f32.mrf.mxu0
      %v3264 = vadd.f32 0.0, %v3263
      %v3265 = vpop.f32.mrf.mxu0
      %v3266 = vpop.f32.mrf.mxu0
      %v3267 = vadd.f32 0.0, %v3266
      %v3268 = vpop.f32.mrf.mxu0
      %3269 = vmatprep.mubr.bf16.mxu0 0
      %3270 = vmatmul.mubr.bf16.gmra.mxu0 %v1392
      %v3271 = vpop.f32.mrf.mxu0
      %v3272 = vadd.f32 0.0, %v3271
      %v3273 = vpop.f32.mrf.mxu0
      %v3274 = vpop.f32.mrf.mxu0
      %v3275 = vadd.f32 0.0, %v3274
      %v3276 = vpop.f32.mrf.mxu0
      %3277 = vmatprep.mubr.bf16.mxu0 0
      %3278 = vmatmul.mubr.bf16.gmra.mxu0 %v1393
      %v3279 = vpop.f32.mrf.mxu0
      %v3280 = vadd.f32 0.0, %v3279
      %v3281 = vpop.f32.mrf.mxu0
      %v3282 = vpop.f32.mrf.mxu0
      %v3283 = vadd.f32 0.0, %v3282
      %v3284 = vpop.f32.mrf.mxu0
      %3285 = vmatprep.mubr.bf16.mxu0 0
      %3286 = vmatmul.mubr.bf16.gmra.mxu0 %v1394
      %v3287 = vpop.f32.mrf.mxu0
      %v3288 = vadd.f32 0.0, %v3287
      %v3289 = vpop.f32.mrf.mxu0
      %v3290 = vpop.f32.mrf.mxu0
      %v3291 = vadd.f32 0.0, %v3290
      %v3292 = vpop.f32.mrf.mxu0
      %3293 = vmatprep.mubr.bf16.mxu0 0
      %3294 = vmatmul.mubr.bf16.gmra.mxu0 %v1395
      %v3295 = vpop.f32.mrf.mxu0
      %v3296 = vadd.f32 0.0, %v3295
      %v3297 = vpop.f32.mrf.mxu0
      %v3298 = vpop.f32.mrf.mxu0
      %v3299 = vadd.f32 0.0, %v3298
      %v3300 = vpop.f32.mrf.mxu0
      %3301 = vmatprep.mubr.bf16.mxu0 0
      %3302 = vmatmul.mubr.bf16.gmra.mxu0 %v1396
      %v3303 = vpop.f32.mrf.mxu0
      %v3304 = vadd.f32 0.0, %v3303
      %v3305 = vpop.f32.mrf.mxu0
      %v3306 = vpop.f32.mrf.mxu0
      %v3307 = vadd.f32 0.0, %v3306
      %v3308 = vpop.f32.mrf.mxu0
      %3309 = vmatprep.mubr.bf16.mxu0 0
      %3310 = vmatmul.mubr.bf16.gmra.mxu0 %v2269
      %v3311 = vpop.f32.mrf.mxu0
      %v3312 = vadd.f32 0.0, %v3311
      %v3313 = vpop.f32.mrf.mxu0
      %v3314 = vpop.f32.mrf.mxu0
      %v3315 = vadd.f32 0.0, %v3314
      %v3316 = vpop.f32.mrf.mxu0
      %3317 = vmatprep.mubr.bf16.mxu0 0
      %3318 = vmatmul.mubr.bf16.gmra.mxu0 %v2270
      %v3319 = vpop.f32.mrf.mxu0
      %v3320 = vadd.f32 0.0, %v3319
      %v3321 = vpop.f32.mrf.mxu0
      %v3322 = vpop.f32.mrf.mxu0
      %v3323 = vadd.f32 0.0, %v3322
      %v3324 = vpop.f32.mrf.mxu0
      %3325 = vmatprep.mubr.bf16.mxu0 0
      %3326 = vmatmul.mubr.bf16.gmra.mxu0 %v3129
      %v3327 = vpop.f32.mrf.mxu0
      %v3328 = vadd.f32 0.0, %v3327
      %v3329 = vpop.f32.mrf.mxu0
      %v3330 = vpop.f32.mrf.mxu0
      %v3331 = vadd.f32 0.0, %v3330
      %v3332 = vpop.f32.mrf.mxu0
      %3333 = vmatprep.mubr.bf16.mxu0 0
      %3334 = vmatmul.mubr.bf16.gmra.mxu0 %v3130
      %v3335 = vpop.f32.mrf.mxu0
      %v3336 = vadd.f32 0.0, %v3335
      %v3337 = vpop.f32.mrf.mxu0
      %v3338 = vpop.f32.mrf.mxu0
      %v3339 = vadd.f32 0.0, %v3338
      %v3340 = vpop.f32.mrf.mxu0
      %3341 = vdwg.mxu0
      %v3342 = vadd.f32 %v3062, %v3216
      %v3343 = vadd.f32 %v3063, %v3219
      %v3344 = vadd.f32 %v3064, %v3224
      %v3345 = vadd.f32 %v3065, %v3227
      %v3346 = vadd.f32 %v3066, %v3232
      %v3347 = vadd.f32 %v3067, %v3235
      %v3348 = vadd.f32 %v3068, %v3240
      %v3349 = vadd.f32 %v3069, %v3243
      %v3350 = vadd.f32 %v3070, %v3248
      %v3351 = vadd.f32 %v3071, %v3251
      %v3352 = vadd.f32 %v3072, %v3256
      %v3353 = vadd.f32 %v3073, %v3259
      %v3354 = vadd.f32 %v3074, %v3264
      %v3355 = vadd.f32 %v3075, %v3267
      %v3356 = vadd.f32 %v3076, %v3272
      %v3357 = vadd.f32 %v3077, %v3275
      %v3358 = vadd.f32 %v3078, %v3280
      %v3359 = vadd.f32 %v3079, %v3283
      %v3360 = vadd.f32 %v3080, %v3288
      %v3361 = vadd.f32 %v3081, %v3291
      %v3362 = vadd.f32 %v3082, %v3296
      %v3363 = vadd.f32 %v3083, %v3299
      %v3364 = vadd.f32 %v3084, %v3304
      %v3365 = vadd.f32 %v3085, %v3307
      %v3366 = vadd.f32 %v3086, %v3312
      %v3367 = vadd.f32 %v3087, %v3315
      %v3368 = vadd.f32 %v3088, %v3320
      %v3369 = vadd.f32 %v3089, %v3323
      %v3370 = vadd.f32 %v3090, %v3328
      %v3371 = vadd.f32 %v3091, %v3331
      %v3372 = vadd.f32 %v3092, %v3336
      %v3373 = vadd.f32 %v3093, %v3339
      %v3374 = vld [vmem:[%s2] sm:$0x1]
      %v3376 = vlaneseq
      %v3377 = vshrl.u32 %v3376, 7
      %v3378 = vsub.s32 0, %v3377
      %v3379 = vrot.slane %v3374, %v3378
      %v3381 = vadd.f32 %v3342, %v3379
      %v3382 = vadd.f32 %v3343, %v3379
      %v3383 = vadd.f32 %v3344, %v3379
      %v3384 = vadd.f32 %v3345, %v3379
      %v3385 = vadd.f32 %v3346, %v3379
      %v3386 = vadd.f32 %v3347, %v3379
      %v3387 = vadd.f32 %v3348, %v3379
      %v3388 = vadd.f32 %v3349, %v3379
      %v3389 = vadd.f32 %v3350, %v3379
      %v3390 = vadd.f32 %v3351, %v3379
      %v3391 = vadd.f32 %v3352, %v3379
      %v3392 = vadd.f32 %v3353, %v3379
      %v3393 = vadd.f32 %v3354, %v3379
      %v3394 = vadd.f32 %v3355, %v3379
      %v3395 = vadd.f32 %v3356, %v3379
      %v3396 = vadd.f32 %v3357, %v3379
      %v3397 = vadd.f32 %v3358, %v3379
      %v3398 = vadd.f32 %v3359, %v3379
      %v3399 = vadd.f32 %v3360, %v3379
      %v3400 = vadd.f32 %v3361, %v3379
      %v3401 = vadd.f32 %v3362, %v3379
      %v3402 = vadd.f32 %v3363, %v3379
      %v3403 = vadd.f32 %v3364, %v3379
      %v3404 = vadd.f32 %v3365, %v3379
      %v3405 = vadd.f32 %v3366, %v3379
      %v3406 = vadd.f32 %v3367, %v3379
      %v3407 = vadd.f32 %v3368, %v3379
      %v3408 = vadd.f32 %v3369, %v3379
      %v3409 = vadd.f32 %v3370, %v3379
      %v3410 = vadd.f32 %v3371, %v3379
      %v3411 = vadd.f32 %v3372, %v3379
      %v3412 = vadd.f32 %v3373, %v3379
      %v3413 = vmax.f32 %v3381, 0.0
      %v3414 = vmax.f32 %v3382, 0.0
      %v3415 = vmax.f32 %v3383, 0.0
      %v3416 = vmax.f32 %v3384, 0.0
      %v3417 = vmax.f32 %v3385, 0.0
      %v3418 = vmax.f32 %v3386, 0.0
      %v3419 = vmax.f32 %v3387, 0.0
      %v3420 = vmax.f32 %v3388, 0.0
      %v3421 = vmax.f32 %v3389, 0.0
      %v3422 = vmax.f32 %v3390, 0.0
      %v3423 = vmax.f32 %v3391, 0.0
      %v3424 = vmax.f32 %v3392, 0.0
      %v3425 = vmax.f32 %v3393, 0.0
      %v3426 = vmax.f32 %v3394, 0.0
      %v3427 = vmax.f32 %v3395, 0.0
      %v3428 = vmax.f32 %v3396, 0.0
      %v3429 = vmax.f32 %v3397, 0.0
      %v3430 = vmax.f32 %v3398, 0.0
      %v3431 = vmax.f32 %v3399, 0.0
      %v3432 = vmax.f32 %v3400, 0.0
      %v3433 = vmax.f32 %v3401, 0.0
      %v3434 = vmax.f32 %v3402, 0.0
      %v3435 = vmax.f32 %v3403, 0.0
      %v3436 = vmax.f32 %v3404, 0.0
      %v3437 = vmax.f32 %v3405, 0.0
      %v3438 = vmax.f32 %v3406, 0.0
      %v3439 = vmax.f32 %v3407, 0.0
      %v3440 = vmax.f32 %v3408, 0.0
      %v3441 = vmax.f32 %v3409, 0.0
      %v3442 = vmax.f32 %v3410, 0.0
      %v3443 = vmax.f32 %v3411, 0.0
      %v3444 = vmax.f32 %v3412, 0.0
      %v3445 = vpack.c.bf16 %v3414, %v3413
      %v3446 = vpack.c.bf16 %v3416, %v3415
      %v3447 = vpack.c.bf16 %v3418, %v3417
      %v3448 = vpack.c.bf16 %v3420, %v3419
      %v3449 = vpack.c.bf16 %v3422, %v3421
      %v3450 = vpack.c.bf16 %v3424, %v3423
      %v3451 = vpack.c.bf16 %v3426, %v3425
      %v3452 = vpack.c.bf16 %v3428, %v3427
      %v3453 = vpack.c.bf16 %v3430, %v3429
      %v3454 = vpack.c.bf16 %v3432, %v3431
      %v3455 = vpack.c.bf16 %v3434, %v3433
      %v3456 = vpack.c.bf16 %v3436, %v3435
      %v3457 = vpack.c.bf16 %v3438, %v3437
      %v3458 = vpack.c.bf16 %v3440, %v3439
      %v3459 = vpack.c.bf16 %v3442, %v3441
      %v3460 = vpack.c.bf16 %v3444, %v3443
      %v3477 = vunpack.c.l.b16 %v3445
      %v3478 = vunpack.c.h.b16 %v3445
      %v3479 = vunpack.c.l.b16 %v3446
      %v3480 = vunpack.c.h.b16 %v3446
      %v3481 = vunpack.c.l.b16 %v3447
      %v3482 = vunpack.c.h.b16 %v3447
      %v3483 = vunpack.c.l.b16 %v3448
      %v3484 = vunpack.c.h.b16 %v3448
      %v3485 = vunpack.c.l.b16 %v3449
      %v3486 = vunpack.c.h.b16 %v3449
      %v3487 = vunpack.c.l.b16 %v3450
      %v3488 = vunpack.c.h.b16 %v3450
      %v3489 = vunpack.c.l.b16 %v3451
      %v3490 = vunpack.c.h.b16 %v3451
      %v3491 = vunpack.c.l.b16 %v3452
      %v3492 = vunpack.c.h.b16 %v3452
      %v3493 = vunpack.c.l.b16 %v3453
      %v3494 = vunpack.c.h.b16 %v3453
      %v3495 = vunpack.c.l.b16 %v3454
      %v3496 = vunpack.c.h.b16 %v3454
      %v3497 = vunpack.c.l.b16 %v3455
      %v3498 = vunpack.c.h.b16 %v3455
      %v3499 = vunpack.c.l.b16 %v3456
      %v3500 = vunpack.c.h.b16 %v3456
      %v3501 = vunpack.c.l.b16 %v3457
      %v3502 = vunpack.c.h.b16 %v3457
      %v3503 = vunpack.c.l.b16 %v3458
      %v3504 = vunpack.c.h.b16 %v3458
      %v3505 = vunpack.c.l.b16 %v3459
      %v3506 = vunpack.c.h.b16 %v3459
      %v3507 = vunpack.c.l.b16 %v3460
      %v3508 = vunpack.c.h.b16 %v3460
      %v3509 = vpack.c.b16 %v3477, %v3477
      %v3510 = vpack.c.b16 %v3478, %v3478
      %v3511 = vpack.c.b16 %v3479, %v3479
      %v3512 = vpack.c.b16 %v3480, %v3480
      %v3513 = vpack.c.b16 %v3481, %v3481
      %v3514 = vpack.c.b16 %v3482, %v3482
      %v3515 = vpack.c.b16 %v3483, %v3483
      %v3516 = vpack.c.b16 %v3484, %v3484
      %v3517 = vpack.c.b16 %v3485, %v3485
      %v3518 = vpack.c.b16 %v3486, %v3486
      %v3519 = vpack.c.b16 %v3487, %v3487
      %v3520 = vpack.c.b16 %v3488, %v3488
      %v3521 = vpack.c.b16 %v3489, %v3489
      %v3522 = vpack.c.b16 %v3490, %v3490
      %v3523 = vpack.c.b16 %v3491, %v3491
      %v3524 = vpack.c.b16 %v3492, %v3492
      %v3525 = vpack.c.b16 %v3493, %v3493
      %v3526 = vpack.c.b16 %v3494, %v3494
      %v3527 = vpack.c.b16 %v3495, %v3495
      %v3528 = vpack.c.b16 %v3496, %v3496
      %v3529 = vpack.c.b16 %v3497, %v3497
      %v3530 = vpack.c.b16 %v3498, %v3498
      %v3531 = vpack.c.b16 %v3499, %v3499
      %v3532 = vpack.c.b16 %v3500, %v3500
      %v3533 = vpack.c.b16 %v3501, %v3501
      %v3534 = vpack.c.b16 %v3502, %v3502
      %v3535 = vpack.c.b16 %v3503, %v3503
      %v3536 = vpack.c.b16 %v3504, %v3504
      %v3537 = vpack.c.b16 %v3505, %v3505
      %v3538 = vpack.c.b16 %v3506, %v3506
      %v3539 = vpack.c.b16 %v3507, %v3507
      %v3540 = vpack.c.b16 %v3508, %v3508
      %3573 = vst [vmem:[%s194] sm:$0xf] %v3509
      %3574 = vst [vmem:[%s194 + $0x4] sm:$0xf] %v3510
      %3575 = vst [vmem:[%s194 + $0x8] sm:$0xf] %v3511
      %3576 = vst [vmem:[%s194 + $0xc] sm:$0xf] %v3512
      %3577 = vst [vmem:[%s194 + $0x10] sm:$0xf] %v3513
      %3578 = vst [vmem:[%s194 + $0x14] sm:$0xf] %v3514
      %3579 = vst [vmem:[%s194 + $0x18] sm:$0xf] %v3515
      %3580 = vst [vmem:[%s194 + $0x1c] sm:$0xf] %v3516
      %3581 = vst [vmem:[%s194 + $0x20] sm:$0xf] %v3517
      %3582 = vst [vmem:[%s194 + $0x24] sm:$0xf] %v3518
      %3583 = vst [vmem:[%s194 + $0x28] sm:$0xf] %v3519
      %3584 = vst [vmem:[%s194 + $0x2c] sm:$0xf] %v3520
      %3585 = vst [vmem:[%s194 + $0x30] sm:$0xf] %v3521
      %3586 = vst [vmem:[%s194 + $0x34] sm:$0xf] %v3522
      %3587 = vst [vmem:[%s194 + $0x38] sm:$0xf] %v3523
      %3588 = vst [vmem:[%s194 + $0x3c] sm:$0xf] %v3524
      %3589 = vst [vmem:[%s194 + $0x40] sm:$0xf] %v3525
      %3590 = vst [vmem:[%s194 + $0x44] sm:$0xf] %v3526
      %3591 = vst [vmem:[%s194 + $0x48] sm:$0xf] %v3527
      %3592 = vst [vmem:[%s194 + $0x4c] sm:$0xf] %v3528
      %3593 = vst [vmem:[%s194 + $0x50] sm:$0xf] %v3529
      %3594 = vst [vmem:[%s194 + $0x54] sm:$0xf] %v3530
      %3595 = vst [vmem:[%s194 + $0x58] sm:$0xf] %v3531
      %3596 = vst [vmem:[%s194 + $0x5c] sm:$0xf] %v3532
      %3597 = vst [vmem:[%s194 + $0x60] sm:$0xf] %v3533
      %3598 = vst [vmem:[%s194 + $0x64] sm:$0xf] %v3534
      %3599 = vst [vmem:[%s194 + $0x68] sm:$0xf] %v3535
      %3600 = vst [vmem:[%s194 + $0x6c] sm:$0xf] %v3536
      %3601 = vst [vmem:[%s194 + $0x70] sm:$0xf] %v3537
      %3602 = vst [vmem:[%s194 + $0x74] sm:$0xf] %v3538
      %3603 = vst [vmem:[%s194 + $0x78] sm:$0xf] %v3539
      %3604 = vst [vmem:[%s194 + $0x7c] sm:$0xf] %v3540
      %s3605 = smul.u32 8, %s19
      %p3606 = scmp.lt.s32.totalorder %s18, 1
      %s3607 = scalar_select %p3606, %s18, 1
      %p3608 = scmp.lt.s32.totalorder %s3605, 31
      %s3609 = scalar_select %p3608, %s3605, 31
      %s3610 = smul.addr %s3609, 4
      %s3611 = smul.addr %s3607, 128
      %s3612 = sadd.s32 %s3610, %s3611
      %s3613 = smul.addr %s3612, 4
      %s3614 = scalar_lea.vmem %s3, %s3613
      // Predicated region
      $region33: #{pose_forward_pallas.5} parent=31 // pred_check
        %p3615 = pneg %p114
      $region34: #{pose_forward_pallas.5} parent=31 // pred_check_branch
        %3617 = sbr.rel (%p3615) target = $region36
      $region35: #{pose_forward_pallas.5} parent=31 // pred_region
        %s3618 = smul.u32 8, %s19
      $region36: #{pose_forward_pallas.5} parent=31 // pred_fallthru
        _
    $region32: #{pose_forward_pallas.5} parent=5 // pred_fallthru
      _
    %p3619 = scmp.le.s32.totalorder 2, %s9
    // Predicated region
    $region37: #{pose_forward_pallas.5} parent=5 // pred_check
      %p3620 = pneg %p3619
    $region38: #{pose_forward_pallas.5} parent=5 // pred_check_branch
      %3622 = sbr.rel (%p3620) target = $region40
    $region39: #{pose_forward_pallas.5} parent=5 // pred_region
      %s3623 = ssub.s32 %s9, 2
      // Predicated region
      $region41: #{pose_forward_pallas.5} parent=39 // pred_check
        %p3624 = pneg %p120
      $region42: #{pose_forward_pallas.5} parent=39 // pred_check_branch
        %3626 = sbr.rel (%p3624) target = $region44
      $region43: #{pose_forward_pallas.5} parent=39 // pred_region
        %s3627 = smul.u32 8, %s21
        %p3628 = scmp.lt.s32.totalorder %s20, 1
        %s3629 = scalar_select %p3628, %s20, 1
        %p3630 = scmp.lt.s32.totalorder %s3627, 31
        %s3631 = scalar_select %p3630, %s3627, 31
        %s3632 = smul.addr %s3631, 4
        %s3633 = smul.addr %s3629, 128
        %s3634 = sadd.s32 %s3632, %s3633
        %s3635 = smul.addr %s3634, 4
        %s3636 = scalar_lea.vmem %s3, %s3635
      $region44: #{pose_forward_pallas.5} parent=39 // pred_fallthru
        _
    $region40: #{pose_forward_pallas.5} parent=5 // pred_fallthru
      _
  $region6: #{pose_forward_pallas.5} parent=0 // loop_footer
    %s13 = sadd.s32 1, %s9
  $region7: #{pose_forward_pallas.5} parent=0 // loop_footer_branch
    %8 = sbr.rel target = $region3
  $region8: #{pose_forward_pallas.5} parent=0 // loop_exit
    _

// kernel: pose_forward_pallas.7
$region0: #{pose_forward_pallas.7}
  #allocation0 [shape = 'u32[]', space=smem, size = 0x4, offset = 0x4, fixed_abs, tag = 'smem constant byte address 0x4 - core index']
  #allocation1 [shape = 'u32[144,128]{1,0:T(1,128)}', space=vmem, size = 0x12000, scoped, tag = 'internal scratch']
  %s0 = inlined_call_operand.vmem [shape: bf16[2048,128], index: 0, kind: input, shape index: {}]
  %s1 = inlined_call_operand.vmem [shape: f32[1,128], index: 1, kind: input, shape index: {}]
  %s2 = inlined_call_operand.vmem [shape: f32[1,128], index: 2, kind: input, shape index: {}]
  %s3 = inlined_call_operand.vmem [shape: bf16[128,128], index: 3, kind: input, shape index: {}]
  %s4 = inlined_call_operand.vmem [shape: f32[1,128], index: 4, kind: input, shape index: {}]
  %s5 = inlined_call_operand.vmem [shape: f32[2048,128], index: 5, kind: output, shape index: {}]
  %s6 = sld [smem:[#allocation0]]
  $region53: #{pose_forward_pallas.7} parent=0
    _
  %s8 = ssub.s32 1, %s6
  %s9 = scalar_select 0, %s8, %s6
  loop: start=0, step=1, limit=10
  $region2: #{pose_forward_pallas.7} parent=0 // loop_pre_header
    _
  $region3: #{pose_forward_pallas.7} parent=0 // loop_header
    %s11 = sphi 0, %s15
    %p12 = scmp.ge.s32.totalorder %s11, 10
    %s21 = sphi 0, %s23
    %s24 = sphi 0, %s21
    %s25 = sphi 0, %s24
    %s41 = sphi 0, %s25
    %s45 = sphi 0, %s45
    %s47 = sphi 0, %s45
    %s48 = sphi 0, %s47
    %s62 = sphi 0, %s48
    %s66 = sphi 0, %s66
    %s68 = sphi 0, %s66
    %s69 = sphi 0, %s68
    %s83 = sphi 0, %s69
    %s87 = sphi 0, %s87
    %s89 = sphi 0, %s87
    %s90 = sphi 0, %s89
    %s104 = sphi 0, %s90
    %s108 = sphi 0, %s108
    %s110 = sphi 0, %s108
    %s111 = sphi 0, %s110
    %s125 = sphi 0, %s111
    %s131 = sphi 0, %s133
    %s134 = sphi 0, %s131
    %s135 = sphi 0, %s134
    %s151 = sphi 0, %s135
  $region4: #{pose_forward_pallas.7} parent=0 // loop_header_branch
    %14 = sbr.rel (%p12) target = $region8
  $region5: #{pose_forward_pallas.7} parent=0 // loop_body
    %s16 = ssub.s32 %s11, 1
    %s17 = ssub.s32 %s11, 2
    %s18 = sadd.s32 %s11, 1
    %s19 = ssub.s32 %s11, %s18
    %p20 = scmp.eq.s32.totalorder %s19, 0
    %s22 = sadd.s32 %s21, 1
    %s23 = scalar_select %p20, %s21, %s22
    %p26 = pneg %p20
    %p27 = scmp.eq.s32.totalorder %s11, 7
    %p28 = por %p26, %p27
    %p29 = scmp.ne.s32.totalorder %s21, %s24
    %p30 = scmp.eq.s32.totalorder %s11, 0
    %p31 = por %p29, %p30
    %p32 = scmp.ne.s32.totalorder %s21, %s24
    %p33 = scmp.eq.s32.totalorder %s16, 7
    %p34 = por %p32, %p33
    %p35 = scmp.ne.s32.totalorder %s24, %s25
    %p36 = scmp.eq.s32.totalorder %s16, 0
    %p37 = por %p35, %p36
    %p38 = scmp.ne.s32.totalorder %s24, %s25
    %p39 = scmp.eq.s32.totalorder %s17, 7
    %p40 = por %p38, %p39
    %p42 = scmp.ne.s32.totalorder %s25, %s41
    %p43 = scmp.eq.s32.totalorder %s17, 0
    %p44 = por %p42, %p43
    %s46 = sadd.s32 %s45, 1
    %p49 = scmp.eq.s32.totalorder %s11, 7
    %p50 = scmp.ne.s32.totalorder %s45, %s47
    %p51 = scmp.eq.s32.totalorder %s11, 0
    %p52 = por %p50, %p51
    %p53 = scmp.ne.s32.totalorder %s45, %s47
    %p54 = scmp.eq.s32.totalorder %s16, 7
    %p55 = por %p53, %p54
    %p56 = scmp.ne.s32.totalorder %s47, %s48
    %p57 = scmp.eq.s32.totalorder %s16, 0
    %p58 = por %p56, %p57
    %p59 = scmp.ne.s32.totalorder %s47, %s48
    %p60 = scmp.eq.s32.totalorder %s17, 7
    %p61 = por %p59, %p60
    %p63 = scmp.ne.s32.totalorder %s48, %s62
    %p64 = scmp.eq.s32.totalorder %s17, 0
    %p65 = por %p63, %p64
    %s67 = sadd.s32 %s66, 1
    %p70 = scmp.eq.s32.totalorder %s11, 7
    %p71 = scmp.ne.s32.totalorder %s66, %s68
    %p72 = scmp.eq.s32.totalorder %s11, 0
    %p73 = por %p71, %p72
    %p74 = scmp.ne.s32.totalorder %s66, %s68
    %p75 = scmp.eq.s32.totalorder %s16, 7
    %p76 = por %p74, %p75
    %p77 = scmp.ne.s32.totalorder %s68, %s69
    %p78 = scmp.eq.s32.totalorder %s16, 0
    %p79 = por %p77, %p78
    %p80 = scmp.ne.s32.totalorder %s68, %s69
    %p81 = scmp.eq.s32.totalorder %s17, 7
    %p82 = por %p80, %p81
    %p84 = scmp.ne.s32.totalorder %s69, %s83
    %p85 = scmp.eq.s32.totalorder %s17, 0
    %p86 = por %p84, %p85
    %s88 = sadd.s32 %s87, 1
    %p91 = scmp.eq.s32.totalorder %s11, 7
    %p92 = scmp.ne.s32.totalorder %s87, %s89
    %p93 = scmp.eq.s32.totalorder %s11, 0
    %p94 = por %p92, %p93
    %p95 = scmp.ne.s32.totalorder %s87, %s89
    %p96 = scmp.eq.s32.totalorder %s16, 7
    %p97 = por %p95, %p96
    %p98 = scmp.ne.s32.totalorder %s89, %s90
    %p99 = scmp.eq.s32.totalorder %s16, 0
    %p100 = por %p98, %p99
    %p101 = scmp.ne.s32.totalorder %s89, %s90
    %p102 = scmp.eq.s32.totalorder %s17, 7
    %p103 = por %p101, %p102
    %p105 = scmp.ne.s32.totalorder %s90, %s104
    %p106 = scmp.eq.s32.totalorder %s17, 0
    %p107 = por %p105, %p106
    %s109 = sadd.s32 %s108, 1
    %p112 = scmp.eq.s32.totalorder %s11, 7
    %p113 = scmp.ne.s32.totalorder %s108, %s110
    %p114 = scmp.eq.s32.totalorder %s11, 0
    %p115 = por %p113, %p114
    %p116 = scmp.ne.s32.totalorder %s108, %s110
    %p117 = scmp.eq.s32.totalorder %s16, 7
    %p118 = por %p116, %p117
    %p119 = scmp.ne.s32.totalorder %s110, %s111
    %p120 = scmp.eq.s32.totalorder %s16, 0
    %p121 = por %p119, %p120
    %p122 = scmp.ne.s32.totalorder %s110, %s111
    %p123 = scmp.eq.s32.totalorder %s17, 7
    %p124 = por %p122, %p123
    %p126 = scmp.ne.s32.totalorder %s111, %s125
    %p127 = scmp.eq.s32.totalorder %s17, 0
    %p128 = por %p126, %p127
    %s129 = ssub.s32 %s11, %s18
    %p130 = scmp.eq.s32.totalorder %s129, 0
    %s132 = sadd.s32 %s131, 1
    %s133 = scalar_select %p130, %s131, %s132
    %p136 = pneg %p130
    %p137 = scmp.eq.s32.totalorder %s11, 7
    %p138 = por %p136, %p137
    %p139 = scmp.ne.s32.totalorder %s131, %s134
    %p140 = scmp.eq.s32.totalorder %s11, 0
    %p141 = por %p139, %p140
    %p142 = scmp.ne.s32.totalorder %s131, %s134
    %p143 = scmp.eq.s32.totalorder %s16, 7
    %p144 = por %p142, %p143
    %p145 = scmp.ne.s32.totalorder %s134, %s135
    %p146 = scmp.eq.s32.totalorder %s16, 0
    %p147 = por %p145, %p146
    %p148 = scmp.ne.s32.totalorder %s134, %s135
    %p149 = scmp.eq.s32.totalorder %s17, 7
    %p150 = por %p148, %p149
    %p152 = scmp.ne.s32.totalorder %s135, %s151
    %p153 = scmp.eq.s32.totalorder %s17, 0
    %p154 = por %p152, %p153
    %p155 = scmp.le.s32.totalorder 1, %s11
    %p156 = scmp.lt.s32.totalorder %s11, 9
    %p157 = pnand %p155, %p156
    %p158 = pneg %p157
    // Predicated region
    $region9: #{pose_forward_pallas.7} parent=5 // pred_check
      _
    $region10: #{pose_forward_pallas.7} parent=5 // pred_check_branch
      %160 = sbr.rel (%p157) target = $region12
    $region11: #{pose_forward_pallas.7} parent=5 // pred_region
      %s161 = ssub.s32 %s11, 1
      // Predicated region
      $region13: #{pose_forward_pallas.7} parent=11 // pred_check
        %p162 = pneg %p58
      $region14: #{pose_forward_pallas.7} parent=11 // pred_check_branch
        %164 = sbr.rel (%p162) target = $region16
      $region15: #{pose_forward_pallas.7} parent=11 // pred_region
        _
      $region16: #{pose_forward_pallas.7} parent=11 // pred_fallthru
        _
      // Predicated region
      $region17: #{pose_forward_pallas.7} parent=11 // pred_check
        %p165 = pneg %p79
      $region18: #{pose_forward_pallas.7} parent=11 // pred_check_branch
        %167 = sbr.rel (%p165) target = $region20
      $region19: #{pose_forward_pallas.7} parent=11 // pred_region
        _
      $region20: #{pose_forward_pallas.7} parent=11 // pred_fallthru
        _
      // Predicated region
      $region21: #{pose_forward_pallas.7} parent=11 // pred_check
        %p168 = pneg %p100
      $region22: #{pose_forward_pallas.7} parent=11 // pred_check_branch
        %170 = sbr.rel (%p168) target = $region24
      $region23: #{pose_forward_pallas.7} parent=11 // pred_region
        _
      $region24: #{pose_forward_pallas.7} parent=11 // pred_fallthru
        _
      // Predicated region
      $region25: #{pose_forward_pallas.7} parent=11 // pred_check
        %p171 = pneg %p121
      $region26: #{pose_forward_pallas.7} parent=11 // pred_check_branch
        %173 = sbr.rel (%p171) target = $region28
      $region27: #{pose_forward_pallas.7} parent=11 // pred_region
        _
      $region28: #{pose_forward_pallas.7} parent=11 // pred_fallthru
        _
    $region12: #{pose_forward_pallas.7} parent=5 // pred_fallthru
      _
    %p174 = scmp.lt.s32.totalorder %s11, 8
    // Predicated region
    $region29: #{pose_forward_pallas.7} parent=5 // pred_check
      %p175 = pneg %p174
    $region30: #{pose_forward_pallas.7} parent=5 // pred_check_branch
      %177 = sbr.rel (%p175) target = $region32
    $region31: #{pose_forward_pallas.7} parent=5 // pred_region
      // Predicated region
      $region33: #{pose_forward_pallas.7} parent=31 // pred_check
        %p178 = pneg %p31
      $region34: #{pose_forward_pallas.7} parent=31 // pred_check_branch
        %180 = sbr.rel (%p178) target = $region36
      $region35: #{pose_forward_pallas.7} parent=31 // pred_region
        %s181 = smul.u32 32, %s11
        %p182 = scmp.lt.s32.totalorder %s181, 255
        %s183 = scalar_select %p182, %s181, 255
        %s184 = smul.addr %s183, 4
        %s185 = scalar_lea.vmem %s0, %s184
        %s186 = smul.u32 32, %s11
      $region36: #{pose_forward_pallas.7} parent=31 // pred_fallthru
        _
    $region32: #{pose_forward_pallas.7} parent=5 // pred_fallthru
      _
    %p187 = scmp.le.s32.totalorder 1, %s11
    %p188 = scmp.lt.s32.totalorder %s11, 9
    %p189 = pnand %p187, %p188
    %p190 = pneg %p189
    // Predicated region
    $region37: #{pose_forward_pallas.7} parent=5 // pred_check
      _
    $region38: #{pose_forward_pallas.7} parent=5 // pred_check_branch
      %192 = sbr.rel (%p189) target = $region40
    $region39: #{pose_forward_pallas.7} parent=5 // pred_region
      %s193 = ssub.s32 %s11, 1
      %s194 = smul.u32 32, %s16
      %p195 = scmp.lt.s32.totalorder %s194, 255
      %s196 = scalar_select %p195, %s194, 255
      %s197 = smul.addr %s196, 4
      %s198 = scalar_lea.vmem %s0, %s197
      %p199 = pneg %p37
      %p200 = pneg %p34
      %p201 = pneg %p58
      %p202 = pneg %p55
      %p203 = pneg %p79
      %p204 = pneg %p76
      %p205 = pneg %p100
      %p206 = pneg %p97
      %p207 = pneg %p121
      %p208 = pneg %p118
      %p209 = pneg %p147
      %p210 = pneg %p144
      %s211 = smul.u32 32, %s16
      %p212 = scmp.lt.s32.totalorder %s211, 255
      %s213 = scalar_select %p212, %s211, 255
      %s214 = smul.addr %s213, 8
      %s215 = scalar_lea.vmem %s5, %s214
      %s216 = smul.u32 32, %s16
      %p217 = scmp.lt.s32.totalorder %s216, 255
      %s218 = scalar_select %p217, %s216, 255
      %s219 = smul.addr %s218, 4
      %s220 = scalar_lea.vmem %s0, %s219
      %s221 = smul.u32 32, %s16
      %s222 = smul.u32 32, %s16
      %p223 = scmp.lt.s32.totalorder %s222, 255
      %s224 = scalar_select %p223, %s222, 255
      %s225 = smul.addr %s224, 8
      %s226 = scalar_lea.vmem %s5, %s225
      %s227 = smul.u32 32, %s16
      %v229 = vld [vmem:[%s220] sm:$0xf]
      %v230 = vld [vmem:[%s220 + $0x4] sm:$0xf]
      %v231 = vld [vmem:[%s220 + $0x8] sm:$0xf]
      %v232 = vld [vmem:[%s220 + $0xc] sm:$0xf]
      %v233 = vld [vmem:[%s220 + $0x10] sm:$0xf]
      %v234 = vld [vmem:[%s220 + $0x14] sm:$0xf]
      %v235 = vld [vmem:[%s220 + $0x18] sm:$0xf]
      %v236 = vld [vmem:[%s220 + $0x1c] sm:$0xf]
      %v237 = vld [vmem:[%s220 + $0x20] sm:$0xf]
      %v238 = vld [vmem:[%s220 + $0x24] sm:$0xf]
      %v239 = vld [vmem:[%s220 + $0x28] sm:$0xf]
      %v240 = vld [vmem:[%s220 + $0x2c] sm:$0xf]
      %v241 = vld [vmem:[%s220 + $0x30] sm:$0xf]
      %v242 = vld [vmem:[%s220 + $0x34] sm:$0xf]
      %v243 = vld [vmem:[%s220 + $0x38] sm:$0xf]
      %v244 = vld [vmem:[%s220 + $0x3c] sm:$0xf]
      %v245 = vld [vmem:[%s220 + $0x40] sm:$0xf]
      %v246 = vld [vmem:[%s220 + $0x44] sm:$0xf]
      %v247 = vld [vmem:[%s220 + $0x48] sm:$0xf]
      %v248 = vld [vmem:[%s220 + $0x4c] sm:$0xf]
      %v249 = vld [vmem:[%s220 + $0x50] sm:$0xf]
      %v250 = vld [vmem:[%s220 + $0x54] sm:$0xf]
      %v251 = vld [vmem:[%s220 + $0x58] sm:$0xf]
      %v252 = vld [vmem:[%s220 + $0x5c] sm:$0xf]
      %v253 = vld [vmem:[%s220 + $0x60] sm:$0xf]
      %v254 = vld [vmem:[%s220 + $0x64] sm:$0xf]
      %v255 = vld [vmem:[%s220 + $0x68] sm:$0xf]
      %v256 = vld [vmem:[%s220 + $0x6c] sm:$0xf]
      %v257 = vld [vmem:[%s220 + $0x70] sm:$0xf]
      %v258 = vld [vmem:[%s220 + $0x74] sm:$0xf]
      %v259 = vld [vmem:[%s220 + $0x78] sm:$0xf]
      %v260 = vld [vmem:[%s220 + $0x7c] sm:$0xf]
      %v261 = vunpack.c.l.bf16 %v229
      %v262 = vunpack.c.l.bf16 %v230
      %v263 = vunpack.c.l.bf16 %v231
      %v264 = vunpack.c.l.bf16 %v232
      %v265 = vunpack.c.l.bf16 %v233
      %v266 = vunpack.c.l.bf16 %v234
      %v267 = vunpack.c.l.bf16 %v235
      %v268 = vunpack.c.l.bf16 %v236
      %v269 = vunpack.c.l.bf16 %v237
      %v270 = vunpack.c.l.bf16 %v238
      %v271 = vunpack.c.l.bf16 %v239
      %v272 = vunpack.c.l.bf16 %v240
      %v273 = vunpack.c.l.bf16 %v241
      %v274 = vunpack.c.l.bf16 %v242
      %v275 = vunpack.c.l.bf16 %v243
      %v276 = vunpack.c.l.bf16 %v244
      %v277 = vunpack.c.l.bf16 %v245
      %v278 = vunpack.c.l.bf16 %v246
      %v279 = vunpack.c.l.bf16 %v247
      %v280 = vunpack.c.l.bf16 %v248
      %v281 = vunpack.c.l.bf16 %v249
      %v282 = vunpack.c.l.bf16 %v250
      %v283 = vunpack.c.l.bf16 %v251
      %v284 = vunpack.c.l.bf16 %v252
      %v285 = vunpack.c.l.bf16 %v253
      %v286 = vunpack.c.l.bf16 %v254
      %v287 = vunpack.c.l.bf16 %v255
      %v288 = vunpack.c.l.bf16 %v256
      %v289 = vunpack.c.l.bf16 %v257
      %v290 = vunpack.c.l.bf16 %v258
      %v291 = vunpack.c.l.bf16 %v259
      %v292 = vunpack.c.l.bf16 %v260
      %v293 = vld [vmem:[%s1] sm:$0x1]
      %v295 = vlaneseq
      %v296 = vshrl.u32 %v295, 7
      %v297 = vsub.s32 0, %v296
      %v298 = vrot.slane %v293, %v297
      %v300 = vmul.f32 %v261, %v298
      %v301 = vmul.f32 %v262, %v298
      %v302 = vmul.f32 %v263, %v298
      %v303 = vmul.f32 %v264, %v298
      %v304 = vmul.f32 %v265, %v298
      %v305 = vmul.f32 %v266, %v298
      %v306 = vmul.f32 %v267, %v298
      %v307 = vmul.f32 %v268, %v298
      %v308 = vmul.f32 %v269, %v298
      %v309 = vmul.f32 %v270, %v298
      %v310 = vmul.f32 %v271, %v298
      %v311 = vmul.f32 %v272, %v298
      %v312 = vmul.f32 %v273, %v298
      %v313 = vmul.f32 %v274, %v298
      %v314 = vmul.f32 %v275, %v298
      %v315 = vmul.f32 %v276, %v298
      %v316 = vmul.f32 %v277, %v298
      %v317 = vmul.f32 %v278, %v298
      %v318 = vmul.f32 %v279, %v298
      %v319 = vmul.f32 %v280, %v298
      %v320 = vmul.f32 %v281, %v298
      %v321 = vmul.f32 %v282, %v298
      %v322 = vmul.f32 %v283, %v298
      %v323 = vmul.f32 %v284, %v298
      %v324 = vmul.f32 %v285, %v298
      %v325 = vmul.f32 %v286, %v298
      %v326 = vmul.f32 %v287, %v298
      %v327 = vmul.f32 %v288, %v298
      %v328 = vmul.f32 %v289, %v298
      %v329 = vmul.f32 %v290, %v298
      %v330 = vmul.f32 %v291, %v298
      %v331 = vmul.f32 %v292, %v298
      %v332 = vld [vmem:[%s2] sm:$0x1]
      %v334 = vlaneseq
      %v335 = vshrl.u32 %v334, 7
      %v336 = vsub.s32 0, %v335
      %v337 = vrot.slane %v332, %v336
      %v339 = vadd.f32 %v300, %v337
      %v340 = vadd.f32 %v301, %v337
      %v341 = vadd.f32 %v302, %v337
      %v342 = vadd.f32 %v303, %v337
      %v343 = vadd.f32 %v304, %v337
      %v344 = vadd.f32 %v305, %v337
      %v345 = vadd.f32 %v306, %v337
      %v346 = vadd.f32 %v307, %v337
      %v347 = vadd.f32 %v308, %v337
      %v348 = vadd.f32 %v309, %v337
      %v349 = vadd.f32 %v310, %v337
      %v350 = vadd.f32 %v311, %v337
      %v351 = vadd.f32 %v312, %v337
      %v352 = vadd.f32 %v313, %v337
      %v353 = vadd.f32 %v314, %v337
      %v354 = vadd.f32 %v315, %v337
      %v355 = vadd.f32 %v316, %v337
      %v356 = vadd.f32 %v317, %v337
      %v357 = vadd.f32 %v318, %v337
      %v358 = vadd.f32 %v319, %v337
      %v359 = vadd.f32 %v320, %v337
      %v360 = vadd.f32 %v321, %v337
      %v361 = vadd.f32 %v322, %v337
      %v362 = vadd.f32 %v323, %v337
      %v363 = vadd.f32 %v324, %v337
      %v364 = vadd.f32 %v325, %v337
      %v365 = vadd.f32 %v326, %v337
      %v366 = vadd.f32 %v327, %v337
      %v367 = vadd.f32 %v328, %v337
      %v368 = vadd.f32 %v329, %v337
      %v369 = vadd.f32 %v330, %v337
      %v370 = vadd.f32 %v331, %v337
      %v371 = vmax.f32 %v339, 0.0
      %v372 = vmax.f32 %v340, 0.0
      %v373 = vmax.f32 %v341, 0.0
      %v374 = vmax.f32 %v342, 0.0
      %v375 = vmax.f32 %v343, 0.0
      %v376 = vmax.f32 %v344, 0.0
      %v377 = vmax.f32 %v345, 0.0
      %v378 = vmax.f32 %v346, 0.0
      %v379 = vmax.f32 %v347, 0.0
      %v380 = vmax.f32 %v348, 0.0
      %v381 = vmax.f32 %v349, 0.0
      %v382 = vmax.f32 %v350, 0.0
      %v383 = vmax.f32 %v351, 0.0
      %v384 = vmax.f32 %v352, 0.0
      %v385 = vmax.f32 %v353, 0.0
      %v386 = vmax.f32 %v354, 0.0
      %v387 = vmax.f32 %v355, 0.0
      %v388 = vmax.f32 %v356, 0.0
      %v389 = vmax.f32 %v357, 0.0
      %v390 = vmax.f32 %v358, 0.0
      %v391 = vmax.f32 %v359, 0.0
      %v392 = vmax.f32 %v360, 0.0
      %v393 = vmax.f32 %v361, 0.0
      %v394 = vmax.f32 %v362, 0.0
      %v395 = vmax.f32 %v363, 0.0
      %v396 = vmax.f32 %v364, 0.0
      %v397 = vmax.f32 %v365, 0.0
      %v398 = vmax.f32 %v366, 0.0
      %v399 = vmax.f32 %v367, 0.0
      %v400 = vmax.f32 %v368, 0.0
      %v401 = vmax.f32 %v369, 0.0
      %v402 = vmax.f32 %v370, 0.0
      %v403 = vpack.c.bf16 %v372, %v371
      %v404 = vpack.c.bf16 %v374, %v373
      %v405 = vpack.c.bf16 %v376, %v375
      %v406 = vpack.c.bf16 %v378, %v377
      %v407 = vpack.c.bf16 %v380, %v379
      %v408 = vpack.c.bf16 %v382, %v381
      %v409 = vpack.c.bf16 %v384, %v383
      %v410 = vpack.c.bf16 %v386, %v385
      %v411 = vpack.c.bf16 %v388, %v387
      %v412 = vpack.c.bf16 %v390, %v389
      %v413 = vpack.c.bf16 %v392, %v391
      %v414 = vpack.c.bf16 %v394, %v393
      %v415 = vpack.c.bf16 %v396, %v395
      %v416 = vpack.c.bf16 %v398, %v397
      %v417 = vpack.c.bf16 %v400, %v399
      %v418 = vpack.c.bf16 %v402, %v401
      %v419 = vld [vmem:[%s3] sm:$0xf]
      %v420 = vld [vmem:[%s3 + $0x4] sm:$0xf]
      %v421 = vld [vmem:[%s3 + $0x8] sm:$0xf]
      %v422 = vld [vmem:[%s3 + $0xc] sm:$0xf]
      %v423 = vld [vmem:[%s3 + $0x10] sm:$0xf]
      %v424 = vld [vmem:[%s3 + $0x14] sm:$0xf]
      %v425 = vld [vmem:[%s3 + $0x18] sm:$0xf]
      %v426 = vld [vmem:[%s3 + $0x1c] sm:$0xf]
      %v427 = vld [vmem:[%s3 + $0x20] sm:$0xf]
      %v428 = vld [vmem:[%s3 + $0x24] sm:$0xf]
      %v429 = vld [vmem:[%s3 + $0x28] sm:$0xf]
      %v430 = vld [vmem:[%s3 + $0x2c] sm:$0xf]
      %v431 = vld [vmem:[%s3 + $0x30] sm:$0xf]
      %v432 = vld [vmem:[%s3 + $0x34] sm:$0xf]
      %v433 = vld [vmem:[%s3 + $0x38] sm:$0xf]
      %v434 = vld [vmem:[%s3 + $0x3c] sm:$0xf]
      %v435 = vld [vmem:[%s4] sm:$0x1]
      %v437 = vlaneseq
      %v438 = vshrl.u32 %v437, 7
      %v439 = vsub.s32 0, %v438
      %v440 = vrot.slane %v435, %v439
      %v458 = vunpack.c.l.b16 %v419
      %v459 = vunpack.c.l.b16 %v420
      %v460 = vunpack.c.l.b16 %v421
      %v461 = vunpack.c.l.b16 %v422
      %v462 = vunpack.c.l.b16 %v423
      %v463 = vunpack.c.l.b16 %v424
      %v464 = vunpack.c.l.b16 %v425
      %v465 = vunpack.c.l.b16 %v426
      %v466 = vunpack.c.l.b16 %v427
      %v467 = vunpack.c.l.b16 %v428
      %v468 = vunpack.c.l.b16 %v429
      %v469 = vunpack.c.l.b16 %v430
      %v470 = vunpack.c.l.b16 %v431
      %v471 = vunpack.c.l.b16 %v432
      %v472 = vunpack.c.l.b16 %v433
      %v473 = vunpack.c.l.b16 %v434
      %v474 = vpack.c.b16 %v459, %v458
      %v475 = vpack.c.b16 %v461, %v460
      %v476 = vpack.c.b16 %v463, %v462
      %v477 = vpack.c.b16 %v465, %v464
      %v478 = vpack.c.b16 %v467, %v466
      %v479 = vpack.c.b16 %v469, %v468
      %v480 = vpack.c.b16 %v471, %v470
      %v481 = vpack.c.b16 %v473, %v472
      %490 = vmatprep.subr.bf16.mxu0 0
      %491 = vmatpush1.bf16.msra.mxu0 %v481
      %492 = vmatprep.subr.bf16.mxu0 0
      %493 = vmatpush1.bf16.msra.mxu0 %v480
      %494 = vmatprep.subr.bf16.mxu0 0
      %495 = vmatpush1.bf16.msra.mxu0 %v479
      %496 = vmatprep.subr.bf16.mxu0 0
      %497 = vmatpush1.bf16.msra.mxu0 %v478
      %498 = vmatprep.subr.bf16.mxu0 0
      %499 = vmatpush1.bf16.msra.mxu0 %v477
      %500 = vmatprep.subr.bf16.mxu0 0
      %501 = vmatpush1.bf16.msra.mxu0 %v476
      %502 = vmatprep.subr.bf16.mxu0 0
      %503 = vmatpush1.bf16.msra.mxu0 %v475
      %504 = vmatprep.subr.bf16.mxu0 0
      %505 = vmatpush1.bf16.msra.mxu0 %v474
      %506 = vmatprep.subr.bf16.mxu0 0
      %507 = vmatpush2.bf16.msra.mxu0 0
      %508 = vmatprep.subr.bf16.mxu0 0
      %509 = vmatpush2.bf16.msra.mxu0 0
      %510 = vmatprep.subr.bf16.mxu0 0
      %511 = vmatpush2.bf16.msra.mxu0 0
      %512 = vmatprep.subr.bf16.mxu0 0
      %513 = vmatpush2.bf16.msra.mxu0 0
      %514 = vmatprep.subr.bf16.mxu0 0
      %515 = vmatpush2.bf16.msra.mxu0 0
      %516 = vmatprep.subr.bf16.mxu0 0
      %517 = vmatpush2.bf16.msra.mxu0 0
      %518 = vmatprep.subr.bf16.mxu0 0
      %519 = vmatpush2.bf16.msra.mxu0 0
      %520 = vmatprep.subr.bf16.mxu0 0
      %521 = vmatpush2.bf16.msra.mxu0 0
      %522 = vmatprep.mubr.bf16.mxu0 0
      %523 = vmatmul.mubr.bf16.gmra.mxu0 %v403
      %v524 = vpop.f32.mrf.mxu0
      %v525 = vadd.f32 %v440, %v524
      %v526 = vpop.f32.mrf.mxu0
      %v527 = vpop.f32.mrf.mxu0
      %v528 = vadd.f32 %v440, %v527
      %v529 = vpop.f32.mrf.mxu0
      %530 = vmatprep.mubr.bf16.mxu0 0
      %531 = vmatmul.mubr.bf16.gmra.mxu0 %v404
      %v532 = vpop.f32.mrf.mxu0
      %v533 = vadd.f32 %v440, %v532
      %v534 = vpop.f32.mrf.mxu0
      %v535 = vpop.f32.mrf.mxu0
      %v536 = vadd.f32 %v440, %v535
      %v537 = vpop.f32.mrf.mxu0
      %538 = vmatprep.mubr.bf16.mxu0 0
      %539 = vmatmul.mubr.bf16.gmra.mxu0 %v405
      %v540 = vpop.f32.mrf.mxu0
      %v541 = vadd.f32 %v440, %v540
      %v542 = vpop.f32.mrf.mxu0
      %v543 = vpop.f32.mrf.mxu0
      %v544 = vadd.f32 %v440, %v543
      %v545 = vpop.f32.mrf.mxu0
      %546 = vmatprep.mubr.bf16.mxu0 0
      %547 = vmatmul.mubr.bf16.gmra.mxu0 %v406
      %v548 = vpop.f32.mrf.mxu0
      %v549 = vadd.f32 %v440, %v548
      %v550 = vpop.f32.mrf.mxu0
      %v551 = vpop.f32.mrf.mxu0
      %v552 = vadd.f32 %v440, %v551
      %v553 = vpop.f32.mrf.mxu0
      %554 = vmatprep.mubr.bf16.mxu0 0
      %555 = vmatmul.mubr.bf16.gmra.mxu0 %v407
      %v556 = vpop.f32.mrf.mxu0
      %v557 = vadd.f32 %v440, %v556
      %v558 = vpop.f32.mrf.mxu0
      %v559 = vpop.f32.mrf.mxu0
      %v560 = vadd.f32 %v440, %v559
      %v561 = vpop.f32.mrf.mxu0
      %562 = vmatprep.mubr.bf16.mxu0 0
      %563 = vmatmul.mubr.bf16.gmra.mxu0 %v408
      %v564 = vpop.f32.mrf.mxu0
      %v565 = vadd.f32 %v440, %v564
      %v566 = vpop.f32.mrf.mxu0
      %v567 = vpop.f32.mrf.mxu0
      %v568 = vadd.f32 %v440, %v567
      %v569 = vpop.f32.mrf.mxu0
      %570 = vmatprep.mubr.bf16.mxu0 0
      %571 = vmatmul.mubr.bf16.gmra.mxu0 %v409
      %v572 = vpop.f32.mrf.mxu0
      %v573 = vadd.f32 %v440, %v572
      %v574 = vpop.f32.mrf.mxu0
      %v575 = vpop.f32.mrf.mxu0
      %v576 = vadd.f32 %v440, %v575
      %v577 = vpop.f32.mrf.mxu0
      %578 = vmatprep.mubr.bf16.mxu0 0
      %579 = vmatmul.mubr.bf16.gmra.mxu0 %v410
      %v580 = vpop.f32.mrf.mxu0
      %v581 = vadd.f32 %v440, %v580
      %v582 = vpop.f32.mrf.mxu0
      %v583 = vpop.f32.mrf.mxu0
      %v584 = vadd.f32 %v440, %v583
      %v585 = vpop.f32.mrf.mxu0
      %586 = vmatprep.mubr.bf16.mxu0 0
      %587 = vmatmul.mubr.bf16.gmra.mxu0 %v411
      %v588 = vpop.f32.mrf.mxu0
      %v589 = vadd.f32 %v440, %v588
      %v590 = vpop.f32.mrf.mxu0
      %v591 = vpop.f32.mrf.mxu0
      %v592 = vadd.f32 %v440, %v591
      %v593 = vpop.f32.mrf.mxu0
      %594 = vmatprep.mubr.bf16.mxu0 0
      %595 = vmatmul.mubr.bf16.gmra.mxu0 %v412
      %v596 = vpop.f32.mrf.mxu0
      %v597 = vadd.f32 %v440, %v596
      %v598 = vpop.f32.mrf.mxu0
      %v599 = vpop.f32.mrf.mxu0
      %v600 = vadd.f32 %v440, %v599
      %v601 = vpop.f32.mrf.mxu0
      %602 = vmatprep.mubr.bf16.mxu0 0
      %603 = vmatmul.mubr.bf16.gmra.mxu0 %v413
      %v604 = vpop.f32.mrf.mxu0
      %v605 = vadd.f32 %v440, %v604
      %v606 = vpop.f32.mrf.mxu0
      %v607 = vpop.f32.mrf.mxu0
      %v608 = vadd.f32 %v440, %v607
      %v609 = vpop.f32.mrf.mxu0
      %610 = vmatprep.mubr.bf16.mxu0 0
      %611 = vmatmul.mubr.bf16.gmra.mxu0 %v414
      %v612 = vpop.f32.mrf.mxu0
      %v613 = vadd.f32 %v440, %v612
      %v614 = vpop.f32.mrf.mxu0
      %v615 = vpop.f32.mrf.mxu0
      %v616 = vadd.f32 %v440, %v615
      %v617 = vpop.f32.mrf.mxu0
      %618 = vmatprep.mubr.bf16.mxu0 0
      %619 = vmatmul.mubr.bf16.gmra.mxu0 %v415
      %v620 = vpop.f32.mrf.mxu0
      %v621 = vadd.f32 %v440, %v620
      %v622 = vpop.f32.mrf.mxu0
      %v623 = vpop.f32.mrf.mxu0
      %v624 = vadd.f32 %v440, %v623
      %v625 = vpop.f32.mrf.mxu0
      %626 = vmatprep.mubr.bf16.mxu0 0
      %627 = vmatmul.mubr.bf16.gmra.mxu0 %v416
      %v628 = vpop.f32.mrf.mxu0
      %v629 = vadd.f32 %v440, %v628
      %v630 = vpop.f32.mrf.mxu0
      %v631 = vpop.f32.mrf.mxu0
      %v632 = vadd.f32 %v440, %v631
      %v633 = vpop.f32.mrf.mxu0
      %634 = vmatprep.mubr.bf16.mxu0 0
      %635 = vmatmul.mubr.bf16.gmra.mxu0 %v417
      %v636 = vpop.f32.mrf.mxu0
      %v637 = vadd.f32 %v440, %v636
      %v638 = vpop.f32.mrf.mxu0
      %v639 = vpop.f32.mrf.mxu0
      %v640 = vadd.f32 %v440, %v639
      %v641 = vpop.f32.mrf.mxu0
      %642 = vmatprep.mubr.bf16.mxu0 0
      %643 = vmatmul.mubr.bf16.gmra.mxu0 %v418
      %v644 = vpop.f32.mrf.mxu0
      %v645 = vadd.f32 %v440, %v644
      %v646 = vpop.f32.mrf.mxu0
      %v647 = vpop.f32.mrf.mxu0
      %v648 = vadd.f32 %v440, %v647
      %v649 = vpop.f32.mrf.mxu0
      %650 = vdwg.mxu0
      %651 = vst [vmem:[%s226] sm:$0xff] %v525
      %652 = vst [vmem:[%s226 + $0x8] sm:$0xff] %v528
      %653 = vst [vmem:[%s226 + $0x10] sm:$0xff] %v533
      %654 = vst [vmem:[%s226 + $0x18] sm:$0xff] %v536
      %655 = vst [vmem:[%s226 + $0x20] sm:$0xff] %v541
      %656 = vst [vmem:[%s226 + $0x28] sm:$0xff] %v544
      %657 = vst [vmem:[%s226 + $0x30] sm:$0xff] %v549
      %658 = vst [vmem:[%s226 + $0x38] sm:$0xff] %v552
      %659 = vst [vmem:[%s226 + $0x40] sm:$0xff] %v557
      %660 = vst [vmem:[%s226 + $0x48] sm:$0xff] %v560
      %661 = vst [vmem:[%s226 + $0x50] sm:$0xff] %v565
      %662 = vst [vmem:[%s226 + $0x58] sm:$0xff] %v568
      %663 = vst [vmem:[%s226 + $0x60] sm:$0xff] %v573
      %664 = vst [vmem:[%s226 + $0x68] sm:$0xff] %v576
      %665 = vst [vmem:[%s226 + $0x70] sm:$0xff] %v581
      %666 = vst [vmem:[%s226 + $0x78] sm:$0xff] %v584
      %667 = vst [vmem:[%s226 + $0x80] sm:$0xff] %v589
      %668 = vst [vmem:[%s226 + $0x88] sm:$0xff] %v592
      %669 = vst [vmem:[%s226 + $0x90] sm:$0xff] %v597
      %670 = vst [vmem:[%s226 + $0x98] sm:$0xff] %v600
      %671 = vst [vmem:[%s226 + $0xa0] sm:$0xff] %v605
      %672 = vst [vmem:[%s226 + $0xa8] sm:$0xff] %v608
      %673 = vst [vmem:[%s226 + $0xb0] sm:$0xff] %v613
      %674 = vst [vmem:[%s226 + $0xb8] sm:$0xff] %v616
      %675 = vst [vmem:[%s226 + $0xc0] sm:$0xff] %v621
      %676 = vst [vmem:[%s226 + $0xc8] sm:$0xff] %v624
      %677 = vst [vmem:[%s226 + $0xd0] sm:$0xff] %v629
      %678 = vst [vmem:[%s226 + $0xd8] sm:$0xff] %v632
      %679 = vst [vmem:[%s226 + $0xe0] sm:$0xff] %v637
      %680 = vst [vmem:[%s226 + $0xe8] sm:$0xff] %v640
      %681 = vst [vmem:[%s226 + $0xf0] sm:$0xff] %v645
      %682 = vst [vmem:[%s226 + $0xf8] sm:$0xff] %v648
      %s683 = smul.u32 32, %s16
      %p684 = scmp.lt.s32.totalorder %s683, 255
      %s685 = scalar_select %p684, %s683, 255
      %s686 = smul.addr %s685, 8
      %s687 = scalar_lea.vmem %s5, %s686
      // Predicated region
      $region41: #{pose_forward_pallas.7} parent=39 // pred_check
        %p688 = pneg %p144
      $region42: #{pose_forward_pallas.7} parent=39 // pred_check_branch
        %690 = sbr.rel (%p688) target = $region44
      $region43: #{pose_forward_pallas.7} parent=39 // pred_region
        %s691 = smul.u32 32, %s16
      $region44: #{pose_forward_pallas.7} parent=39 // pred_fallthru
        _
    $region40: #{pose_forward_pallas.7} parent=5 // pred_fallthru
      _
    %p692 = scmp.le.s32.totalorder 2, %s11
    // Predicated region
    $region45: #{pose_forward_pallas.7} parent=5 // pred_check
      %p693 = pneg %p692
    $region46: #{pose_forward_pallas.7} parent=5 // pred_check_branch
      %695 = sbr.rel (%p693) target = $region48
    $region47: #{pose_forward_pallas.7} parent=5 // pred_region
      %s696 = ssub.s32 %s11, 2
      // Predicated region
      $region49: #{pose_forward_pallas.7} parent=47 // pred_check
        %p697 = pneg %p150
      $region50: #{pose_forward_pallas.7} parent=47 // pred_check_branch
        %699 = sbr.rel (%p697) target = $region52
      $region51: #{pose_forward_pallas.7} parent=47 // pred_region
        %s700 = smul.u32 32, %s17
        %p701 = scmp.lt.s32.totalorder %s700, 255
        %s702 = scalar_select %p701, %s700, 255
        %s703 = smul.addr %s702, 8
        %s704 = scalar_lea.vmem %s5, %s703
      $region52: #{pose_forward_pallas.7} parent=47 // pred_fallthru
        _
    $region48: #{pose_forward_pallas.7} parent=5 // pred_fallthru
      _
  $region6: #{pose_forward_pallas.7} parent=0 // loop_footer
    %s15 = sadd.s32 1, %s11
  $region7: #{pose_forward_pallas.7} parent=0 // loop_footer_branch
    %10 = sbr.rel target = $region3
  $region8: #{pose_forward_pallas.7} parent=0 // loop_exit
    _

// kernel: pose_forward_pallas.6
$region0: #{pose_forward_pallas.6}
  #allocation0 [shape = 'u32[]', space=smem, size = 0x4, offset = 0x4, fixed_abs, tag = 'smem constant byte address 0x4 - core index']
  #allocation1 [shape = 'u32[144,128]{1,0:T(1,128)}', space=vmem, size = 0x12000, scoped, tag = 'internal scratch']
  %s0 = inlined_call_operand.vmem [shape: bf16[2,34,34,128], index: 0, kind: input, shape index: {}]
  %s1 = inlined_call_operand.vmem [shape: bf16[9,128,128], index: 1, kind: input, shape index: {}]
  %s2 = inlined_call_operand.vmem [shape: f32[1,128], index: 2, kind: input, shape index: {}]
  %s3 = inlined_call_operand.vmem [shape: bf16[2,32,32,128], index: 3, kind: output, shape index: {0}]
  %s4 = inlined_call_operand.vmem [shape: f32[8,8,128], index: 4, kind: output, shape index: {1}]
  %5 = xla_tuple %s3, %s4
  %s6 = sld [smem:[#allocation0]]
  $region53: #{pose_forward_pallas.6} parent=0
    _
  %s8 = ssub.s32 1, %s6
  %s9 = scalar_select 0, %s8, %s6
  loop: start=0, step=1, limit=10
  $region2: #{pose_forward_pallas.6} parent=0 // loop_pre_header
    _
  $region3: #{pose_forward_pallas.6} parent=0 // loop_header
    %s11 = sphi 0, %s15
    %p12 = scmp.ge.s32.totalorder %s11, 10
    %s18 = sphi 0, %s30
    %s19 = sphi 0, %s26
    %s20 = sphi 0, %s18
    %s21 = sphi 0, %s19
    %s22 = sphi 0, %s20
    %s23 = sphi 0, %s21
    %s33 = sphi 0, %s35
    %s36 = sphi 0, %s33
    %s37 = sphi 0, %s36
    %s53 = sphi 0, %s37
    %s57 = sphi 0, %s57
    %s59 = sphi 0, %s57
    %s60 = sphi 0, %s59
    %s74 = sphi 0, %s60
    %s78 = sphi 0, %s78
    %s80 = sphi 0, %s78
    %s81 = sphi 0, %s80
    %s95 = sphi 0, %s81
    %s103 = sphi 0, %s105
    %s106 = sphi 0, %s103
    %s107 = sphi 0, %s106
    %s123 = sphi 0, %s107
    %s133 = sphi 0, %s135
    %s136 = sphi 0, %s133
    %s137 = sphi 0, %s136
    %s153 = sphi 0, %s137
  $region4: #{pose_forward_pallas.6} parent=0 // loop_header_branch
    %14 = sbr.rel (%p12) target = $region8
  $region5: #{pose_forward_pallas.6} parent=0 // loop_body
    %s16 = ssub.s32 %s11, 1
    %s17 = ssub.s32 %s11, 2
    %s24 = sadd.s32 1, %s19
    %p25 = scmp.ge.s32.totalorder %s24, 4
    %s26 = scalar_select %p25, 0, %s24
    %s27 = sadd.s32 1, %s18
    %s28 = scalar_select %p25, %s27, %s18
    %p29 = scmp.ge.s32.totalorder %s28, 2
    %s30 = scalar_select %p29, 0, %s28
    %s31 = ssub.s32 %s18, %s30
    %p32 = scmp.eq.s32.totalorder %s31, 0
    %s34 = sadd.s32 %s33, 1
    %s35 = scalar_select %p32, %s33, %s34
    %p38 = pneg %p32
    %p39 = scmp.eq.s32.totalorder %s11, 7
    %p40 = por %p38, %p39
    %p41 = scmp.ne.s32.totalorder %s33, %s36
    %p42 = scmp.eq.s32.totalorder %s11, 0
    %p43 = por %p41, %p42
    %p44 = scmp.ne.s32.totalorder %s33, %s36
    %p45 = scmp.eq.s32.totalorder %s16, 7
    %p46 = por %p44, %p45
    %p47 = scmp.ne.s32.totalorder %s36, %s37
    %p48 = scmp.eq.s32.totalorder %s16, 0
    %p49 = por %p47, %p48
    %p50 = scmp.ne.s32.totalorder %s36, %s37
    %p51 = scmp.eq.s32.totalorder %s17, 7
    %p52 = por %p50, %p51
    %p54 = scmp.ne.s32.totalorder %s37, %s53
    %p55 = scmp.eq.s32.totalorder %s17, 0
    %p56 = por %p54, %p55
    %s58 = sadd.s32 %s57, 1
    %p61 = scmp.eq.s32.totalorder %s11, 7
    %p62 = scmp.ne.s32.totalorder %s57, %s59
    %p63 = scmp.eq.s32.totalorder %s11, 0
    %p64 = por %p62, %p63
    %p65 = scmp.ne.s32.totalorder %s57, %s59
    %p66 = scmp.eq.s32.totalorder %s16, 7
    %p67 = por %p65, %p66
    %p68 = scmp.ne.s32.totalorder %s59, %s60
    %p69 = scmp.eq.s32.totalorder %s16, 0
    %p70 = por %p68, %p69
    %p71 = scmp.ne.s32.totalorder %s59, %s60
    %p72 = scmp.eq.s32.totalorder %s17, 7
    %p73 = por %p71, %p72
    %p75 = scmp.ne.s32.totalorder %s60, %s74
    %p76 = scmp.eq.s32.totalorder %s17, 0
    %p77 = por %p75, %p76
    %s79 = sadd.s32 %s78, 1
    %p82 = scmp.eq.s32.totalorder %s11, 7
    %p83 = scmp.ne.s32.totalorder %s78, %s80
    %p84 = scmp.eq.s32.totalorder %s11, 0
    %p85 = por %p83, %p84
    %p86 = scmp.ne.s32.totalorder %s78, %s80
    %p87 = scmp.eq.s32.totalorder %s16, 7
    %p88 = por %p86, %p87
    %p89 = scmp.ne.s32.totalorder %s80, %s81
    %p90 = scmp.eq.s32.totalorder %s16, 0
    %p91 = por %p89, %p90
    %p92 = scmp.ne.s32.totalorder %s80, %s81
    %p93 = scmp.eq.s32.totalorder %s17, 7
    %p94 = por %p92, %p93
    %p96 = scmp.ne.s32.totalorder %s81, %s95
    %p97 = scmp.eq.s32.totalorder %s17, 0
    %p98 = por %p96, %p97
    %s99 = ssub.s32 %s18, %s30
    %s100 = ssub.s32 %s19, %s26
    %s101 = sor.u32 %s99, %s100
    %p102 = scmp.eq.s32.totalorder %s101, 0
    %s104 = sadd.s32 %s103, 1
    %s105 = scalar_select %p102, %s103, %s104
    %p108 = pneg %p102
    %p109 = scmp.eq.s32.totalorder %s11, 7
    %p110 = por %p108, %p109
    %p111 = scmp.ne.s32.totalorder %s103, %s106
    %p112 = scmp.eq.s32.totalorder %s11, 0
    %p113 = por %p111, %p112
    %p114 = scmp.ne.s32.totalorder %s103, %s106
    %p115 = scmp.eq.s32.totalorder %s16, 7
    %p116 = por %p114, %p115
    %p117 = scmp.ne.s32.totalorder %s106, %s107
    %p118 = scmp.eq.s32.totalorder %s16, 0
    %p119 = por %p117, %p118
    %p120 = scmp.ne.s32.totalorder %s106, %s107
    %p121 = scmp.eq.s32.totalorder %s17, 7
    %p122 = por %p120, %p121
    %p124 = scmp.ne.s32.totalorder %s107, %s123
    %p125 = scmp.eq.s32.totalorder %s17, 0
    %p126 = por %p124, %p125
    %s127 = smul.u32 %s18, 4
    %s128 = sadd.s32 %s127, %s19
    %s129 = smul.u32 %s30, 4
    %s130 = sadd.s32 %s129, %s26
    %s131 = ssub.s32 %s128, %s130
    %p132 = scmp.eq.s32.totalorder %s131, 0
    %s134 = sadd.s32 %s133, 1
    %s135 = scalar_select %p132, %s133, %s134
    %p138 = pneg %p132
    %p139 = scmp.eq.s32.totalorder %s11, 7
    %p140 = por %p138, %p139
    %p141 = scmp.ne.s32.totalorder %s133, %s136
    %p142 = scmp.eq.s32.totalorder %s11, 0
    %p143 = por %p141, %p142
    %p144 = scmp.ne.s32.totalorder %s133, %s136
    %p145 = scmp.eq.s32.totalorder %s16, 7
    %p146 = por %p144, %p145
    %p147 = scmp.ne.s32.totalorder %s136, %s137
    %p148 = scmp.eq.s32.totalorder %s16, 0
    %p149 = por %p147, %p148
    %p150 = scmp.ne.s32.totalorder %s136, %s137
    %p151 = scmp.eq.s32.totalorder %s17, 7
    %p152 = por %p150, %p151
    %p154 = scmp.ne.s32.totalorder %s137, %s153
    %p155 = scmp.eq.s32.totalorder %s17, 0
    %p156 = por %p154, %p155
    %p157 = scmp.le.s32.totalorder 1, %s11
    %p158 = scmp.lt.s32.totalorder %s11, 9
    %p159 = pnand %p157, %p158
    %p160 = pneg %p159
    // Predicated region
    $region9: #{pose_forward_pallas.6} parent=5 // pred_check
      _
    $region10: #{pose_forward_pallas.6} parent=5 // pred_check_branch
      %162 = sbr.rel (%p159) target = $region12
    $region11: #{pose_forward_pallas.6} parent=5 // pred_region
      %s163 = ssub.s32 %s11, 1
      // Predicated region
      $region13: #{pose_forward_pallas.6} parent=11 // pred_check
        %p164 = pneg %p70
      $region14: #{pose_forward_pallas.6} parent=11 // pred_check_branch
        %166 = sbr.rel (%p164) target = $region16
      $region15: #{pose_forward_pallas.6} parent=11 // pred_region
        _
      $region16: #{pose_forward_pallas.6} parent=11 // pred_fallthru
        _
      // Predicated region
      $region17: #{pose_forward_pallas.6} parent=11 // pred_check
        %p167 = pneg %p91
      $region18: #{pose_forward_pallas.6} parent=11 // pred_check_branch
        %169 = sbr.rel (%p167) target = $region20
      $region19: #{pose_forward_pallas.6} parent=11 // pred_region
        _
      $region20: #{pose_forward_pallas.6} parent=11 // pred_fallthru
        _
    $region12: #{pose_forward_pallas.6} parent=5 // pred_fallthru
      _
    %p170 = scmp.lt.s32.totalorder %s11, 8
    // Predicated region
    $region21: #{pose_forward_pallas.6} parent=5 // pred_check
      %p171 = pneg %p170
    $region22: #{pose_forward_pallas.6} parent=5 // pred_check_branch
      %173 = sbr.rel (%p171) target = $region24
    $region23: #{pose_forward_pallas.6} parent=5 // pred_region
      // Predicated region
      $region25: #{pose_forward_pallas.6} parent=23 // pred_check
        %p174 = pneg %p43
      $region26: #{pose_forward_pallas.6} parent=23 // pred_check_branch
        %176 = sbr.rel (%p174) target = $region28
      $region27: #{pose_forward_pallas.6} parent=23 // pred_region
        %p177 = scmp.lt.s32.totalorder %s18, 1
        %s178 = scalar_select %p177, %s18, 1
        %s179 = smul.addr %s178, 170
        %s180 = smul.addr %s179, 4
        %s181 = scalar_lea.vmem %s0, %s180
      $region28: #{pose_forward_pallas.6} parent=23 // pred_fallthru
        _
    $region24: #{pose_forward_pallas.6} parent=5 // pred_fallthru
      _
    %p182 = scmp.le.s32.totalorder 1, %s11
    %p183 = scmp.lt.s32.totalorder %s11, 9
    %p184 = pnand %p182, %p183
    %p185 = pneg %p184
    // Predicated region
    $region29: #{pose_forward_pallas.6} parent=5 // pred_check
      _
    $region30: #{pose_forward_pallas.6} parent=5 // pred_check_branch
      %187 = sbr.rel (%p184) target = $region32
    $region31: #{pose_forward_pallas.6} parent=5 // pred_region
      %s188 = ssub.s32 %s11, 1
      %p189 = scmp.lt.s32.totalorder %s20, 1
      %s190 = scalar_select %p189, %s20, 1
      %s191 = smul.addr %s190, 170
      %s192 = smul.addr %s191, 4
      %s193 = scalar_lea.vmem %s0, %s192
      %p194 = pneg %p49
      %p195 = pneg %p46
      %p196 = pneg %p70
      %p197 = pneg %p67
      %p198 = pneg %p91
      %p199 = pneg %p88
      %p200 = pneg %p119
      %p201 = pneg %p116
      %s202 = smul.u32 8, %s21
      %p203 = scmp.lt.s32.totalorder %s20, 1
      %s204 = scalar_select %p203, %s20, 1
      %p205 = scmp.lt.s32.totalorder %s202, 31
      %s206 = scalar_select %p205, %s202, 31
      %s207 = smul.addr %s206, 4
      %s208 = smul.addr %s204, 128
      %s209 = sadd.s32 %s207, %s208
      %s210 = smul.addr %s209, 4
      %s211 = scalar_lea.vmem %s3, %s210
      %p212 = pneg %p149
      %p213 = pneg %p146
      %s214 = smul.u32 %s20, 4
      %s215 = sadd.s32 %s214, %s21
      %p216 = scmp.lt.s32.totalorder %s215, 7
      %s217 = scalar_select %p216, %s215, 7
      %s218 = smul.addr %s217, 8
      %s219 = scalar_lea.vmem %s4, %s218
      %p220 = scmp.lt.s32.totalorder %s20, 1
      %s221 = scalar_select %p220, %s20, 1
      %s222 = smul.addr %s221, 170
      %s223 = smul.addr %s222, 4
      %s224 = scalar_lea.vmem %s0, %s223
      %s225 = smul.u32 8, %s21
      %p226 = scmp.lt.s32.totalorder %s20, 1
      %s227 = scalar_select %p226, %s20, 1
      %p228 = scmp.lt.s32.totalorder %s225, 31
      %s229 = scalar_select %p228, %s225, 31
      %s230 = smul.addr %s229, 4
      %s231 = smul.addr %s227, 128
      %s232 = sadd.s32 %s230, %s231
      %s233 = smul.addr %s232, 4
      %s234 = scalar_lea.vmem %s3, %s233
      %s235 = smul.u32 8, %s21
      %s236 = smul.u32 %s20, 4
      %s237 = sadd.s32 %s236, %s21
      %p238 = scmp.lt.s32.totalorder %s237, 7
      %s239 = scalar_select %p238, %s237, 7
      %s240 = smul.addr %s239, 8
      %s241 = scalar_lea.vmem %s4, %s240
      %s242 = smul.u32 %s20, 4
      %s243 = sadd.s32 %s242, %s21
      %s245 = smul.u32 %s21, 8
      %s246 = smul.u32 %s245, 5
      %s247 = smul.addr %s246, 4
      %s248 = scalar_lea.vmem %s224, %s247
      %v249 = vld [vmem:[%s248] sm:$0xf]
      %v250 = vld [vmem:[%s248 + $0x4] sm:$0xf]
      %v251 = vld [vmem:[%s248 + $0x8] sm:$0xf]
      %v252 = vld [vmem:[%s248 + $0xc] sm:$0xf]
      %v253 = vld [vmem:[%s248 + $0x10] sm:$0x1]
      %v254 = vld [vmem:[%s248 + $0x14] sm:$0xf]
      %v255 = vld [vmem:[%s248 + $0x18] sm:$0xf]
      %v256 = vld [vmem:[%s248 + $0x1c] sm:$0xf]
      %v257 = vld [vmem:[%s248 + $0x20] sm:$0xf]
      %v258 = vld [vmem:[%s248 + $0x24] sm:$0x1]
      %v259 = vld [vmem:[%s248 + $0x28] sm:$0xf]
      %v260 = vld [vmem:[%s248 + $0x2c] sm:$0xf]
      %v261 = vld [vmem:[%s248 + $0x30] sm:$0xf]
      %v262 = vld [vmem:[%s248 + $0x34] sm:$0xf]
      %v263 = vld [vmem:[%s248 + $0x38] sm:$0x1]
      %v264 = vld [vmem:[%s248 + $0x3c] sm:$0xf]
      %v265 = vld [vmem:[%s248 + $0x40] sm:$0xf]
      %v266 = vld [vmem:[%s248 + $0x44] sm:$0xf]
      %v267 = vld [vmem:[%s248 + $0x48] sm:$0xf]
      %v268 = vld [vmem:[%s248 + $0x4c] sm:$0x1]
      %v269 = vld [vmem:[%s248 + $0x50] sm:$0xf]
      %v270 = vld [vmem:[%s248 + $0x54] sm:$0xf]
      %v271 = vld [vmem:[%s248 + $0x58] sm:$0xf]
      %v272 = vld [vmem:[%s248 + $0x5c] sm:$0xf]
      %v273 = vld [vmem:[%s248 + $0x60] sm:$0x1]
      %v274 = vld [vmem:[%s248 + $0x64] sm:$0xf]
      %v275 = vld [vmem:[%s248 + $0x68] sm:$0xf]
      %v276 = vld [vmem:[%s248 + $0x6c] sm:$0xf]
      %v277 = vld [vmem:[%s248 + $0x70] sm:$0xf]
      %v278 = vld [vmem:[%s248 + $0x74] sm:$0x1]
      %v279 = vld [vmem:[%s248 + $0x78] sm:$0xf]
      %v280 = vld [vmem:[%s248 + $0x7c] sm:$0xf]
      %v281 = vld [vmem:[%s248 + $0x80] sm:$0xf]
      %v282 = vld [vmem:[%s248 + $0x84] sm:$0xf]
      %v283 = vld [vmem:[%s248 + $0x88] sm:$0x1]
      %v284 = vld [vmem:[%s248 + $0x8c] sm:$0xf]
      %v285 = vld [vmem:[%s248 + $0x90] sm:$0xf]
      %v286 = vld [vmem:[%s248 + $0x94] sm:$0xf]
      %v287 = vld [vmem:[%s248 + $0x98] sm:$0xf]
      %v288 = vld [vmem:[%s248 + $0x9c] sm:$0x1]
      %v289 = vld [vmem:[%s248 + $0xa0] sm:$0xf]
      %v290 = vld [vmem:[%s248 + $0xa4] sm:$0xf]
      %v291 = vld [vmem:[%s248 + $0xa8] sm:$0xf]
      %v292 = vld [vmem:[%s248 + $0xac] sm:$0xf]
      %v293 = vld [vmem:[%s248 + $0xb0] sm:$0x1]
      %v294 = vld [vmem:[%s248 + $0xb4] sm:$0xf]
      %v295 = vld [vmem:[%s248 + $0xb8] sm:$0xf]
      %v296 = vld [vmem:[%s248 + $0xbc] sm:$0xf]
      %v297 = vld [vmem:[%s248 + $0xc0] sm:$0xf]
      %v298 = vld [vmem:[%s248 + $0xc4] sm:$0x1]
      %v299 = vld [vmem:[%s1] sm:$0xf]
      %v300 = vld [vmem:[%s1 + $0x4] sm:$0xf]
      %v301 = vld [vmem:[%s1 + $0x8] sm:$0xf]
      %v302 = vld [vmem:[%s1 + $0xc] sm:$0xf]
      %v303 = vld [vmem:[%s1 + $0x10] sm:$0xf]
      %v304 = vld [vmem:[%s1 + $0x14] sm:$0xf]
      %v305 = vld [vmem:[%s1 + $0x18] sm:$0xf]
      %v306 = vld [vmem:[%s1 + $0x1c] sm:$0xf]
      %v307 = vld [vmem:[%s1 + $0x20] sm:$0xf]
      %v308 = vld [vmem:[%s1 + $0x24] sm:$0xf]
      %v309 = vld [vmem:[%s1 + $0x28] sm:$0xf]
      %v310 = vld [vmem:[%s1 + $0x2c] sm:$0xf]
      %v311 = vld [vmem:[%s1 + $0x30] sm:$0xf]
      %v312 = vld [vmem:[%s1 + $0x34] sm:$0xf]
      %v313 = vld [vmem:[%s1 + $0x38] sm:$0xf]
      %v314 = vld [vmem:[%s1 + $0x3c] sm:$0xf]
      %vm315 = vsmask.f32 3328
      %vm316 = vsmask.f32 7440
      %vm317 = vmor %vm315, %vm316
      %v319 = vshrl.u32 %v249, 16
      %v321 = vrot.slane %v319, 4
      %v322 = vshll.u32 %v249, 16
      %v324 = vrot.slane %v322, 5
      %v325 = vor.u32 %v321, %v324
      %v326 = vrot.slane %v325, 4
      %v328 = vshll.u32 %v250, 16
      %v330 = vrot.slane %v328, 5
      %v331 = vsel %vm317, %v326, %v330
      %v332 = vshrl.u32 %v250, 16
      %v334 = vrot.slane %v332, 4
      %v335 = vor.u32 %v334, %v330
      %v336 = vrot.slane %v335, 4
      %v338 = vshll.u32 %v251, 16
      %v340 = vrot.slane %v338, 5
      %v341 = vsel %vm317, %v336, %v340
      %v342 = vshrl.u32 %v251, 16
      %v344 = vrot.slane %v342, 4
      %v345 = vor.u32 %v344, %v340
      %v346 = vrot.slane %v345, 4
      %v348 = vshll.u32 %v252, 16
      %v350 = vrot.slane %v348, 5
      %v351 = vsel %vm317, %v346, %v350
      %v352 = vshrl.u32 %v252, 16
      %v354 = vrot.slane %v352, 4
      %v355 = vor.u32 %v354, %v350
      %v356 = vrot.slane %v355, 4
      %v358 = vshll.u32 %v253, 16
      %v360 = vrot.slane %v358, 5
      %v361 = vsel %vm317, %v356, %v360
      %v363 = vshrl.u32 %v254, 16
      %v365 = vrot.slane %v363, 4
      %v366 = vshll.u32 %v254, 16
      %v368 = vrot.slane %v366, 5
      %v369 = vor.u32 %v365, %v368
      %v370 = vrot.slane %v369, 4
      %v372 = vshll.u32 %v255, 16
      %v374 = vrot.slane %v372, 5
      %v375 = vsel %vm317, %v370, %v374
      %v376 = vshrl.u32 %v255, 16
      %v378 = vrot.slane %v376, 4
      %v379 = vor.u32 %v378, %v374
      %v380 = vrot.slane %v379, 4
      %v382 = vshll.u32 %v256, 16
      %v384 = vrot.slane %v382, 5
      %v385 = vsel %vm317, %v380, %v384
      %v386 = vshrl.u32 %v256, 16
      %v388 = vrot.slane %v386, 4
      %v389 = vor.u32 %v388, %v384
      %v390 = vrot.slane %v389, 4
      %v392 = vshll.u32 %v257, 16
      %v394 = vrot.slane %v392, 5
      %v395 = vsel %vm317, %v390, %v394
      %v396 = vshrl.u32 %v257, 16
      %v398 = vrot.slane %v396, 4
      %v399 = vor.u32 %v398, %v394
      %v400 = vrot.slane %v399, 4
      %v402 = vshll.u32 %v258, 16
      %v404 = vrot.slane %v402, 5
      %v405 = vsel %vm317, %v400, %v404
      %v407 = vshrl.u32 %v259, 16
      %v409 = vrot.slane %v407, 4
      %v410 = vshll.u32 %v259, 16
      %v412 = vrot.slane %v410, 5
      %v413 = vor.u32 %v409, %v412
      %v414 = vrot.slane %v413, 4
      %v416 = vshll.u32 %v260, 16
      %v418 = vrot.slane %v416, 5
      %v419 = vsel %vm317, %v414, %v418
      %v420 = vshrl.u32 %v260, 16
      %v422 = vrot.slane %v420, 4
      %v423 = vor.u32 %v422, %v418
      %v424 = vrot.slane %v423, 4
      %v426 = vshll.u32 %v261, 16
      %v428 = vrot.slane %v426, 5
      %v429 = vsel %vm317, %v424, %v428
      %v430 = vshrl.u32 %v261, 16
      %v432 = vrot.slane %v430, 4
      %v433 = vor.u32 %v432, %v428
      %v434 = vrot.slane %v433, 4
      %v436 = vshll.u32 %v262, 16
      %v438 = vrot.slane %v436, 5
      %v439 = vsel %vm317, %v434, %v438
      %v440 = vshrl.u32 %v262, 16
      %v442 = vrot.slane %v440, 4
      %v443 = vor.u32 %v442, %v438
      %v444 = vrot.slane %v443, 4
      %v446 = vshll.u32 %v263, 16
      %v448 = vrot.slane %v446, 5
      %v449 = vsel %vm317, %v444, %v448
      %v451 = vshrl.u32 %v264, 16
      %v453 = vrot.slane %v451, 4
      %v454 = vshll.u32 %v264, 16
      %v456 = vrot.slane %v454, 5
      %v457 = vor.u32 %v453, %v456
      %v458 = vrot.slane %v457, 4
      %v460 = vshll.u32 %v265, 16
      %v462 = vrot.slane %v460, 5
      %v463 = vsel %vm317, %v458, %v462
      %v464 = vshrl.u32 %v265, 16
      %v466 = vrot.slane %v464, 4
      %v467 = vor.u32 %v466, %v462
      %v468 = vrot.slane %v467, 4
      %v470 = vshll.u32 %v266, 16
      %v472 = vrot.slane %v470, 5
      %v473 = vsel %vm317, %v468, %v472
      %v474 = vshrl.u32 %v266, 16
      %v476 = vrot.slane %v474, 4
      %v477 = vor.u32 %v476, %v472
      %v478 = vrot.slane %v477, 4
      %v480 = vshll.u32 %v267, 16
      %v482 = vrot.slane %v480, 5
      %v483 = vsel %vm317, %v478, %v482
      %v484 = vshrl.u32 %v267, 16
      %v486 = vrot.slane %v484, 4
      %v487 = vor.u32 %v486, %v482
      %v488 = vrot.slane %v487, 4
      %v490 = vshll.u32 %v268, 16
      %v492 = vrot.slane %v490, 5
      %v493 = vsel %vm317, %v488, %v492
      %v495 = vshrl.u32 %v269, 16
      %v497 = vrot.slane %v495, 4
      %v498 = vshll.u32 %v269, 16
      %v500 = vrot.slane %v498, 5
      %v501 = vor.u32 %v497, %v500
      %v502 = vrot.slane %v501, 4
      %v504 = vshll.u32 %v270, 16
      %v506 = vrot.slane %v504, 5
      %v507 = vsel %vm317, %v502, %v506
      %v508 = vshrl.u32 %v270, 16
      %v510 = vrot.slane %v508, 4
      %v511 = vor.u32 %v510, %v506
      %v512 = vrot.slane %v511, 4
      %v514 = vshll.u32 %v271, 16
      %v516 = vrot.slane %v514, 5
      %v517 = vsel %vm317, %v512, %v516
      %v518 = vshrl.u32 %v271, 16
      %v520 = vrot.slane %v518, 4
      %v521 = vor.u32 %v520, %v516
      %v522 = vrot.slane %v521, 4
      %v524 = vshll.u32 %v272, 16
      %v526 = vrot.slane %v524, 5
      %v527 = vsel %vm317, %v522, %v526
      %v528 = vshrl.u32 %v272, 16
      %v530 = vrot.slane %v528, 4
      %v531 = vor.u32 %v530, %v526
      %v532 = vrot.slane %v531, 4
      %v534 = vshll.u32 %v273, 16
      %v536 = vrot.slane %v534, 5
      %v537 = vsel %vm317, %v532, %v536
      %v539 = vshrl.u32 %v274, 16
      %v541 = vrot.slane %v539, 4
      %v542 = vshll.u32 %v274, 16
      %v544 = vrot.slane %v542, 5
      %v545 = vor.u32 %v541, %v544
      %v546 = vrot.slane %v545, 4
      %v548 = vshll.u32 %v275, 16
      %v550 = vrot.slane %v548, 5
      %v551 = vsel %vm317, %v546, %v550
      %v552 = vshrl.u32 %v275, 16
      %v554 = vrot.slane %v552, 4
      %v555 = vor.u32 %v554, %v550
      %v556 = vrot.slane %v555, 4
      %v558 = vshll.u32 %v276, 16
      %v560 = vrot.slane %v558, 5
      %v561 = vsel %vm317, %v556, %v560
      %v562 = vshrl.u32 %v276, 16
      %v564 = vrot.slane %v562, 4
      %v565 = vor.u32 %v564, %v560
      %v566 = vrot.slane %v565, 4
      %v568 = vshll.u32 %v277, 16
      %v570 = vrot.slane %v568, 5
      %v571 = vsel %vm317, %v566, %v570
      %v572 = vshrl.u32 %v277, 16
      %v574 = vrot.slane %v572, 4
      %v575 = vor.u32 %v574, %v570
      %v576 = vrot.slane %v575, 4
      %v578 = vshll.u32 %v278, 16
      %v580 = vrot.slane %v578, 5
      %v581 = vsel %vm317, %v576, %v580
      %v583 = vshrl.u32 %v279, 16
      %v585 = vrot.slane %v583, 4
      %v586 = vshll.u32 %v279, 16
      %v588 = vrot.slane %v586, 5
      %v589 = vor.u32 %v585, %v588
      %v590 = vrot.slane %v589, 4
      %v592 = vshll.u32 %v280, 16
      %v594 = vrot.slane %v592, 5
      %v595 = vsel %vm317, %v590, %v594
      %v596 = vshrl.u32 %v280, 16
      %v598 = vrot.slane %v596, 4
      %v599 = vor.u32 %v598, %v594
      %v600 = vrot.slane %v599, 4
      %v602 = vshll.u32 %v281, 16
      %v604 = vrot.slane %v602, 5
      %v605 = vsel %vm317, %v600, %v604
      %v606 = vshrl.u32 %v281, 16
      %v608 = vrot.slane %v606, 4
      %v609 = vor.u32 %v608, %v604
      %v610 = vrot.slane %v609, 4
      %v612 = vshll.u32 %v282, 16
      %v614 = vrot.slane %v612, 5
      %v615 = vsel %vm317, %v610, %v614
      %v616 = vshrl.u32 %v282, 16
      %v618 = vrot.slane %v616, 4
      %v619 = vor.u32 %v618, %v614
      %v620 = vrot.slane %v619, 4
      %v622 = vshll.u32 %v283, 16
      %v624 = vrot.slane %v622, 5
      %v625 = vsel %vm317, %v620, %v624
      %v627 = vshrl.u32 %v284, 16
      %v629 = vrot.slane %v627, 4
      %v630 = vshll.u32 %v284, 16
      %v632 = vrot.slane %v630, 5
      %v633 = vor.u32 %v629, %v632
      %v634 = vrot.slane %v633, 4
      %v636 = vshll.u32 %v285, 16
      %v638 = vrot.slane %v636, 5
      %v639 = vsel %vm317, %v634, %v638
      %v640 = vshrl.u32 %v285, 16
      %v642 = vrot.slane %v640, 4
      %v643 = vor.u32 %v642, %v638
      %v644 = vrot.slane %v643, 4
      %v646 = vshll.u32 %v286, 16
      %v648 = vrot.slane %v646, 5
      %v649 = vsel %vm317, %v644, %v648
      %v650 = vshrl.u32 %v286, 16
      %v652 = vrot.slane %v650, 4
      %v653 = vor.u32 %v652, %v648
      %v654 = vrot.slane %v653, 4
      %v656 = vshll.u32 %v287, 16
      %v658 = vrot.slane %v656, 5
      %v659 = vsel %vm317, %v654, %v658
      %v660 = vshrl.u32 %v287, 16
      %v662 = vrot.slane %v660, 4
      %v663 = vor.u32 %v662, %v658
      %v664 = vrot.slane %v663, 4
      %v666 = vshll.u32 %v288, 16
      %v668 = vrot.slane %v666, 5
      %v669 = vsel %vm317, %v664, %v668
      %s670 = scalar_lea.vmem %s1, 64
      %v671 = vld [vmem:[%s670] sm:$0xf]
      %v672 = vld [vmem:[%s670 + $0x4] sm:$0xf]
      %v673 = vld [vmem:[%s670 + $0x8] sm:$0xf]
      %v674 = vld [vmem:[%s670 + $0xc] sm:$0xf]
      %v675 = vld [vmem:[%s670 + $0x10] sm:$0xf]
      %v676 = vld [vmem:[%s670 + $0x14] sm:$0xf]
      %v677 = vld [vmem:[%s670 + $0x18] sm:$0xf]
      %v678 = vld [vmem:[%s670 + $0x1c] sm:$0xf]
      %v679 = vld [vmem:[%s670 + $0x20] sm:$0xf]
      %v680 = vld [vmem:[%s670 + $0x24] sm:$0xf]
      %v681 = vld [vmem:[%s670 + $0x28] sm:$0xf]
      %v682 = vld [vmem:[%s670 + $0x2c] sm:$0xf]
      %v683 = vld [vmem:[%s670 + $0x30] sm:$0xf]
      %v684 = vld [vmem:[%s670 + $0x34] sm:$0xf]
      %v685 = vld [vmem:[%s670 + $0x38] sm:$0xf]
      %v686 = vld [vmem:[%s670 + $0x3c] sm:$0xf]
      %v687 = vunpack.c.l.b16 %v331
      %v688 = vunpack.c.l.b16 %v341
      %v689 = vunpack.c.l.b16 %v351
      %v690 = vunpack.c.l.b16 %v361
      %v691 = vunpack.c.l.b16 %v375
      %v692 = vunpack.c.l.b16 %v385
      %v693 = vunpack.c.l.b16 %v395
      %v694 = vunpack.c.l.b16 %v405
      %v695 = vunpack.c.l.b16 %v419
      %v696 = vunpack.c.l.b16 %v429
      %v697 = vunpack.c.l.b16 %v439
      %v698 = vunpack.c.l.b16 %v449
      %v699 = vunpack.c.l.b16 %v463
      %v700 = vunpack.c.l.b16 %v473
      %v701 = vunpack.c.l.b16 %v483
      %v702 = vunpack.c.l.b16 %v493
      %v703 = vunpack.c.l.b16 %v507
      %v704 = vunpack.c.l.b16 %v517
      %v705 = vunpack.c.l.b16 %v527
      %v706 = vunpack.c.l.b16 %v537
      %v707 = vunpack.c.l.b16 %v551
      %v708 = vunpack.c.l.b16 %v561
      %v709 = vunpack.c.l.b16 %v571
      %v710 = vunpack.c.l.b16 %v581
      %v711 = vunpack.c.l.b16 %v595
      %v712 = vunpack.c.l.b16 %v605
      %v713 = vunpack.c.l.b16 %v615
      %v714 = vunpack.c.l.b16 %v625
      %v715 = vunpack.c.l.b16 %v639
      %v716 = vunpack.c.l.b16 %v649
      %v717 = vunpack.c.l.b16 %v659
      %v718 = vunpack.c.l.b16 %v669
      %v719 = vpack.c.b16 %v688, %v687
      %v720 = vpack.c.b16 %v690, %v689
      %v721 = vpack.c.b16 %v692, %v691
      %v722 = vpack.c.b16 %v694, %v693
      %v723 = vpack.c.b16 %v696, %v695
      %v724 = vpack.c.b16 %v698, %v697
      %v725 = vpack.c.b16 %v700, %v699
      %v726 = vpack.c.b16 %v702, %v701
      %v727 = vpack.c.b16 %v704, %v703
      %v728 = vpack.c.b16 %v706, %v705
      %v729 = vpack.c.b16 %v708, %v707
      %v730 = vpack.c.b16 %v710, %v709
      %v731 = vpack.c.b16 %v712, %v711
      %v732 = vpack.c.b16 %v714, %v713
      %v733 = vpack.c.b16 %v716, %v715
      %v734 = vpack.c.b16 %v718, %v717
      %v767 = vunpack.c.l.b16 %v671
      %v768 = vunpack.c.l.b16 %v672
      %v769 = vunpack.c.l.b16 %v673
      %v770 = vunpack.c.l.b16 %v674
      %v771 = vunpack.c.l.b16 %v675
      %v772 = vunpack.c.l.b16 %v676
      %v773 = vunpack.c.l.b16 %v677
      %v774 = vunpack.c.l.b16 %v678
      %v775 = vunpack.c.l.b16 %v679
      %v776 = vunpack.c.l.b16 %v680
      %v777 = vunpack.c.l.b16 %v681
      %v778 = vunpack.c.l.b16 %v682
      %v779 = vunpack.c.l.b16 %v683
      %v780 = vunpack.c.l.b16 %v684
      %v781 = vunpack.c.l.b16 %v685
      %v782 = vunpack.c.l.b16 %v686
      %v783 = vpack.c.b16 %v768, %v767
      %v784 = vpack.c.b16 %v770, %v769
      %v785 = vpack.c.b16 %v772, %v771
      %v786 = vpack.c.b16 %v774, %v773
      %v787 = vpack.c.b16 %v776, %v775
      %v788 = vpack.c.b16 %v778, %v777
      %v789 = vpack.c.b16 %v780, %v779
      %v790 = vpack.c.b16 %v782, %v781
      %799 = vmatprep.subr.bf16.mxu0 0
      %800 = vmatpush1.bf16.msra.mxu0 %v790
      %801 = vmatprep.subr.bf16.mxu0 0
      %802 = vmatpush1.bf16.msra.mxu0 %v789
      %803 = vmatprep.subr.bf16.mxu0 0
      %804 = vmatpush1.bf16.msra.mxu0 %v788
      %805 = vmatprep.subr.bf16.mxu0 0
      %806 = vmatpush1.bf16.msra.mxu0 %v787
      %807 = vmatprep.subr.bf16.mxu0 0
      %808 = vmatpush1.bf16.msra.mxu0 %v786
      %809 = vmatprep.subr.bf16.mxu0 0
      %810 = vmatpush1.bf16.msra.mxu0 %v785
      %811 = vmatprep.subr.bf16.mxu0 0
      %812 = vmatpush1.bf16.msra.mxu0 %v784
      %813 = vmatprep.subr.bf16.mxu0 0
      %814 = vmatpush1.bf16.msra.mxu0 %v783
      %815 = vmatprep.subr.bf16.mxu0 0
      %816 = vmatpush2.bf16.msra.mxu0 0
      %817 = vmatprep.subr.bf16.mxu0 0
      %818 = vmatpush2.bf16.msra.mxu0 0
      %819 = vmatprep.subr.bf16.mxu0 0
      %820 = vmatpush2.bf16.msra.mxu0 0
      %821 = vmatprep.subr.bf16.mxu0 0
      %822 = vmatpush2.bf16.msra.mxu0 0
      %823 = vmatprep.subr.bf16.mxu0 0
      %824 = vmatpush2.bf16.msra.mxu0 0
      %825 = vmatprep.subr.bf16.mxu0 0
      %826 = vmatpush2.bf16.msra.mxu0 0
      %827 = vmatprep.subr.bf16.mxu0 0
      %828 = vmatpush2.bf16.msra.mxu0 0
      %829 = vmatprep.subr.bf16.mxu0 0
      %830 = vmatpush2.bf16.msra.mxu0 0
      %831 = vmatprep.mubr.bf16.mxu0 0
      %832 = vmatmul.mubr.bf16.gmra.mxu0 %v719
      %v833 = vpop.f32.mrf.mxu0
      %v834 = vadd.f32 0.0, %v833
      %v835 = vpop.f32.mrf.mxu0
      %v836 = vpop.f32.mrf.mxu0
      %v837 = vadd.f32 0.0, %v836
      %v838 = vpop.f32.mrf.mxu0
      %839 = vmatprep.mubr.bf16.mxu0 0
      %840 = vmatmul.mubr.bf16.gmra.mxu0 %v720
      %v841 = vpop.f32.mrf.mxu0
      %v842 = vadd.f32 0.0, %v841
      %v843 = vpop.f32.mrf.mxu0
      %v844 = vpop.f32.mrf.mxu0
      %v845 = vadd.f32 0.0, %v844
      %v846 = vpop.f32.mrf.mxu0
      %847 = vmatprep.mubr.bf16.mxu0 0
      %848 = vmatmul.mubr.bf16.gmra.mxu0 %v721
      %v849 = vpop.f32.mrf.mxu0
      %v850 = vadd.f32 0.0, %v849
      %v851 = vpop.f32.mrf.mxu0
      %v852 = vpop.f32.mrf.mxu0
      %v853 = vadd.f32 0.0, %v852
      %v854 = vpop.f32.mrf.mxu0
      %855 = vmatprep.mubr.bf16.mxu0 0
      %856 = vmatmul.mubr.bf16.gmra.mxu0 %v722
      %v857 = vpop.f32.mrf.mxu0
      %v858 = vadd.f32 0.0, %v857
      %v859 = vpop.f32.mrf.mxu0
      %v860 = vpop.f32.mrf.mxu0
      %v861 = vadd.f32 0.0, %v860
      %v862 = vpop.f32.mrf.mxu0
      %863 = vmatprep.mubr.bf16.mxu0 0
      %864 = vmatmul.mubr.bf16.gmra.mxu0 %v723
      %v865 = vpop.f32.mrf.mxu0
      %v866 = vadd.f32 0.0, %v865
      %v867 = vpop.f32.mrf.mxu0
      %v868 = vpop.f32.mrf.mxu0
      %v869 = vadd.f32 0.0, %v868
      %v870 = vpop.f32.mrf.mxu0
      %871 = vmatprep.mubr.bf16.mxu0 0
      %872 = vmatmul.mubr.bf16.gmra.mxu0 %v724
      %v873 = vpop.f32.mrf.mxu0
      %v874 = vadd.f32 0.0, %v873
      %v875 = vpop.f32.mrf.mxu0
      %v876 = vpop.f32.mrf.mxu0
      %v877 = vadd.f32 0.0, %v876
      %v878 = vpop.f32.mrf.mxu0
      %879 = vmatprep.mubr.bf16.mxu0 0
      %880 = vmatmul.mubr.bf16.gmra.mxu0 %v725
      %v881 = vpop.f32.mrf.mxu0
      %v882 = vadd.f32 0.0, %v881
      %v883 = vpop.f32.mrf.mxu0
      %v884 = vpop.f32.mrf.mxu0
      %v885 = vadd.f32 0.0, %v884
      %v886 = vpop.f32.mrf.mxu0
      %887 = vmatprep.mubr.bf16.mxu0 0
      %888 = vmatmul.mubr.bf16.gmra.mxu0 %v726
      %v889 = vpop.f32.mrf.mxu0
      %v890 = vadd.f32 0.0, %v889
      %v891 = vpop.f32.mrf.mxu0
      %v892 = vpop.f32.mrf.mxu0
      %v893 = vadd.f32 0.0, %v892
      %v894 = vpop.f32.mrf.mxu0
      %895 = vmatprep.mubr.bf16.mxu0 0
      %896 = vmatmul.mubr.bf16.gmra.mxu0 %v727
      %v897 = vpop.f32.mrf.mxu0
      %v898 = vadd.f32 0.0, %v897
      %v899 = vpop.f32.mrf.mxu0
      %v900 = vpop.f32.mrf.mxu0
      %v901 = vadd.f32 0.0, %v900
      %v902 = vpop.f32.mrf.mxu0
      %903 = vmatprep.mubr.bf16.mxu0 0
      %904 = vmatmul.mubr.bf16.gmra.mxu0 %v728
      %v905 = vpop.f32.mrf.mxu0
      %v906 = vadd.f32 0.0, %v905
      %v907 = vpop.f32.mrf.mxu0
      %v908 = vpop.f32.mrf.mxu0
      %v909 = vadd.f32 0.0, %v908
      %v910 = vpop.f32.mrf.mxu0
      %911 = vmatprep.mubr.bf16.mxu0 0
      %912 = vmatmul.mubr.bf16.gmra.mxu0 %v729
      %v913 = vpop.f32.mrf.mxu0
      %v914 = vadd.f32 0.0, %v913
      %v915 = vpop.f32.mrf.mxu0
      %v916 = vpop.f32.mrf.mxu0
      %v917 = vadd.f32 0.0, %v916
      %v918 = vpop.f32.mrf.mxu0
      %919 = vmatprep.mubr.bf16.mxu0 0
      %920 = vmatmul.mubr.bf16.gmra.mxu0 %v730
      %v921 = vpop.f32.mrf.mxu0
      %v922 = vadd.f32 0.0, %v921
      %v923 = vpop.f32.mrf.mxu0
      %v924 = vpop.f32.mrf.mxu0
      %v925 = vadd.f32 0.0, %v924
      %v926 = vpop.f32.mrf.mxu0
      %927 = vmatprep.mubr.bf16.mxu0 0
      %928 = vmatmul.mubr.bf16.gmra.mxu0 %v731
      %v929 = vpop.f32.mrf.mxu0
      %v930 = vadd.f32 0.0, %v929
      %v931 = vpop.f32.mrf.mxu0
      %v932 = vpop.f32.mrf.mxu0
      %v933 = vadd.f32 0.0, %v932
      %v934 = vpop.f32.mrf.mxu0
      %935 = vmatprep.mubr.bf16.mxu0 0
      %936 = vmatmul.mubr.bf16.gmra.mxu0 %v732
      %v937 = vpop.f32.mrf.mxu0
      %v938 = vadd.f32 0.0, %v937
      %v939 = vpop.f32.mrf.mxu0
      %v940 = vpop.f32.mrf.mxu0
      %v941 = vadd.f32 0.0, %v940
      %v942 = vpop.f32.mrf.mxu0
      %943 = vmatprep.mubr.bf16.mxu0 0
      %944 = vmatmul.mubr.bf16.gmra.mxu0 %v733
      %v945 = vpop.f32.mrf.mxu0
      %v946 = vadd.f32 0.0, %v945
      %v947 = vpop.f32.mrf.mxu0
      %v948 = vpop.f32.mrf.mxu0
      %v949 = vadd.f32 0.0, %v948
      %v950 = vpop.f32.mrf.mxu0
      %951 = vmatprep.mubr.bf16.mxu0 0
      %952 = vmatmul.mubr.bf16.gmra.mxu0 %v734
      %v953 = vpop.f32.mrf.mxu0
      %v954 = vadd.f32 0.0, %v953
      %v955 = vpop.f32.mrf.mxu0
      %v956 = vpop.f32.mrf.mxu0
      %v957 = vadd.f32 0.0, %v956
      %v958 = vpop.f32.mrf.mxu0
      %959 = vdwg.mxu0
      %v992 = vunpack.c.l.b16 %v249
      %v993 = vunpack.c.l.b16 %v250
      %v994 = vunpack.c.l.b16 %v251
      %v995 = vunpack.c.l.b16 %v252
      %v996 = vunpack.c.l.b16 %v254
      %v997 = vunpack.c.l.b16 %v255
      %v998 = vunpack.c.l.b16 %v256
      %v999 = vunpack.c.l.b16 %v257
      %v1000 = vunpack.c.l.b16 %v259
      %v1001 = vunpack.c.l.b16 %v260
      %v1002 = vunpack.c.l.b16 %v261
      %v1003 = vunpack.c.l.b16 %v262
      %v1004 = vunpack.c.l.b16 %v264
      %v1005 = vunpack.c.l.b16 %v265
      %v1006 = vunpack.c.l.b16 %v266
      %v1007 = vunpack.c.l.b16 %v267
      %v1008 = vunpack.c.l.b16 %v269
      %v1009 = vunpack.c.l.b16 %v270
      %v1010 = vunpack.c.l.b16 %v271
      %v1011 = vunpack.c.l.b16 %v272
      %v1012 = vunpack.c.l.b16 %v274
      %v1013 = vunpack.c.l.b16 %v275
      %v1014 = vunpack.c.l.b16 %v276
      %v1015 = vunpack.c.l.b16 %v277
      %v1016 = vunpack.c.l.b16 %v279
      %v1017 = vunpack.c.l.b16 %v280
      %v1018 = vunpack.c.l.b16 %v281
      %v1019 = vunpack.c.l.b16 %v282
      %v1020 = vunpack.c.l.b16 %v284
      %v1021 = vunpack.c.l.b16 %v285
      %v1022 = vunpack.c.l.b16 %v286
      %v1023 = vunpack.c.l.b16 %v287
      %v1024 = vpack.c.b16 %v993, %v992
      %v1025 = vpack.c.b16 %v995, %v994
      %v1026 = vpack.c.b16 %v997, %v996
      %v1027 = vpack.c.b16 %v999, %v998
      %v1028 = vpack.c.b16 %v1001, %v1000
      %v1029 = vpack.c.b16 %v1003, %v1002
      %v1030 = vpack.c.b16 %v1005, %v1004
      %v1031 = vpack.c.b16 %v1007, %v1006
      %v1032 = vpack.c.b16 %v1009, %v1008
      %v1033 = vpack.c.b16 %v1011, %v1010
      %v1034 = vpack.c.b16 %v1013, %v1012
      %v1035 = vpack.c.b16 %v1015, %v1014
      %v1036 = vpack.c.b16 %v1017, %v1016
      %v1037 = vpack.c.b16 %v1019, %v1018
      %v1038 = vpack.c.b16 %v1021, %v1020
      %v1039 = vpack.c.b16 %v1023, %v1022
      %v1072 = vunpack.c.l.b16 %v299
      %v1073 = vunpack.c.l.b16 %v300
      %v1074 = vunpack.c.l.b16 %v301
      %v1075 = vunpack.c.l.b16 %v302
      %v1076 = vunpack.c.l.b16 %v303
      %v1077 = vunpack.c.l.b16 %v304
      %v1078 = vunpack.c.l.b16 %v305
      %v1079 = vunpack.c.l.b16 %v306
      %v1080 = vunpack.c.l.b16 %v307
      %v1081 = vunpack.c.l.b16 %v308
      %v1082 = vunpack.c.l.b16 %v309
      %v1083 = vunpack.c.l.b16 %v310
      %v1084 = vunpack.c.l.b16 %v311
      %v1085 = vunpack.c.l.b16 %v312
      %v1086 = vunpack.c.l.b16 %v313
      %v1087 = vunpack.c.l.b16 %v314
      %v1088 = vpack.c.b16 %v1073, %v1072
      %v1089 = vpack.c.b16 %v1075, %v1074
      %v1090 = vpack.c.b16 %v1077, %v1076
      %v1091 = vpack.c.b16 %v1079, %v1078
      %v1092 = vpack.c.b16 %v1081, %v1080
      %v1093 = vpack.c.b16 %v1083, %v1082
      %v1094 = vpack.c.b16 %v1085, %v1084
      %v1095 = vpack.c.b16 %v1087, %v1086
      %1104 = vmatprep.subr.bf16.mxu0 0
      %1105 = vmatpush1.bf16.msra.mxu0 %v1095
      %1106 = vmatprep.subr.bf16.mxu0 0
      %1107 = vmatpush1.bf16.msra.mxu0 %v1094
      %1108 = vmatprep.subr.bf16.mxu0 0
      %1109 = vmatpush1.bf16.msra.mxu0 %v1093
      %1110 = vmatprep.subr.bf16.mxu0 0
      %1111 = vmatpush1.bf16.msra.mxu0 %v1092
      %1112 = vmatprep.subr.bf16.mxu0 0
      %1113 = vmatpush1.bf16.msra.mxu0 %v1091
      %1114 = vmatprep.subr.bf16.mxu0 0
      %1115 = vmatpush1.bf16.msra.mxu0 %v1090
      %1116 = vmatprep.subr.bf16.mxu0 0
      %1117 = vmatpush1.bf16.msra.mxu0 %v1089
      %1118 = vmatprep.subr.bf16.mxu0 0
      %1119 = vmatpush1.bf16.msra.mxu0 %v1088
      %1120 = vmatprep.subr.bf16.mxu0 0
      %1121 = vmatpush2.bf16.msra.mxu0 0
      %1122 = vmatprep.subr.bf16.mxu0 0
      %1123 = vmatpush2.bf16.msra.mxu0 0
      %1124 = vmatprep.subr.bf16.mxu0 0
      %1125 = vmatpush2.bf16.msra.mxu0 0
      %1126 = vmatprep.subr.bf16.mxu0 0
      %1127 = vmatpush2.bf16.msra.mxu0 0
      %1128 = vmatprep.subr.bf16.mxu0 0
      %1129 = vmatpush2.bf16.msra.mxu0 0
      %1130 = vmatprep.subr.bf16.mxu0 0
      %1131 = vmatpush2.bf16.msra.mxu0 0
      %1132 = vmatprep.subr.bf16.mxu0 0
      %1133 = vmatpush2.bf16.msra.mxu0 0
      %1134 = vmatprep.subr.bf16.mxu0 0
      %1135 = vmatpush2.bf16.msra.mxu0 0
      %1136 = vmatprep.mubr.bf16.mxu0 0
      %1137 = vmatmul.mubr.bf16.gmra.mxu0 %v1024
      %v1138 = vpop.f32.mrf.mxu0
      %v1139 = vadd.f32 %v834, %v1138
      %v1140 = vpop.f32.mrf.mxu0
      %v1141 = vpop.f32.mrf.mxu0
      %v1142 = vadd.f32 %v837, %v1141
      %v1143 = vpop.f32.mrf.mxu0
      %1144 = vmatprep.mubr.bf16.mxu0 0
      %1145 = vmatmul.mubr.bf16.gmra.mxu0 %v1025
      %v1146 = vpop.f32.mrf.mxu0
      %v1147 = vadd.f32 %v842, %v1146
      %v1148 = vpop.f32.mrf.mxu0
      %v1149 = vpop.f32.mrf.mxu0
      %v1150 = vadd.f32 %v845, %v1149
      %v1151 = vpop.f32.mrf.mxu0
      %1152 = vmatprep.mubr.bf16.mxu0 0
      %1153 = vmatmul.mubr.bf16.gmra.mxu0 %v1026
      %v1154 = vpop.f32.mrf.mxu0
      %v1155 = vadd.f32 %v850, %v1154
      %v1156 = vpop.f32.mrf.mxu0
      %v1157 = vpop.f32.mrf.mxu0
      %v1158 = vadd.f32 %v853, %v1157
      %v1159 = vpop.f32.mrf.mxu0
      %1160 = vmatprep.mubr.bf16.mxu0 0
      %1161 = vmatmul.mubr.bf16.gmra.mxu0 %v1027
      %v1162 = vpop.f32.mrf.mxu0
      %v1163 = vadd.f32 %v858, %v1162
      %v1164 = vpop.f32.mrf.mxu0
      %v1165 = vpop.f32.mrf.mxu0
      %v1166 = vadd.f32 %v861, %v1165
      %v1167 = vpop.f32.mrf.mxu0
      %1168 = vmatprep.mubr.bf16.mxu0 0
      %1169 = vmatmul.mubr.bf16.gmra.mxu0 %v1028
      %v1170 = vpop.f32.mrf.mxu0
      %v1171 = vadd.f32 %v866, %v1170
      %v1172 = vpop.f32.mrf.mxu0
      %v1173 = vpop.f32.mrf.mxu0
      %v1174 = vadd.f32 %v869, %v1173
      %v1175 = vpop.f32.mrf.mxu0
      %1176 = vmatprep.mubr.bf16.mxu0 0
      %1177 = vmatmul.mubr.bf16.gmra.mxu0 %v1029
      %v1178 = vpop.f32.mrf.mxu0
      %v1179 = vadd.f32 %v874, %v1178
      %v1180 = vpop.f32.mrf.mxu0
      %v1181 = vpop.f32.mrf.mxu0
      %v1182 = vadd.f32 %v877, %v1181
      %v1183 = vpop.f32.mrf.mxu0
      %1184 = vmatprep.mubr.bf16.mxu0 0
      %1185 = vmatmul.mubr.bf16.gmra.mxu0 %v1030
      %v1186 = vpop.f32.mrf.mxu0
      %v1187 = vadd.f32 %v882, %v1186
      %v1188 = vpop.f32.mrf.mxu0
      %v1189 = vpop.f32.mrf.mxu0
      %v1190 = vadd.f32 %v885, %v1189
      %v1191 = vpop.f32.mrf.mxu0
      %1192 = vmatprep.mubr.bf16.mxu0 0
      %1193 = vmatmul.mubr.bf16.gmra.mxu0 %v1031
      %v1194 = vpop.f32.mrf.mxu0
      %v1195 = vadd.f32 %v890, %v1194
      %v1196 = vpop.f32.mrf.mxu0
      %v1197 = vpop.f32.mrf.mxu0
      %v1198 = vadd.f32 %v893, %v1197
      %v1199 = vpop.f32.mrf.mxu0
      %1200 = vmatprep.mubr.bf16.mxu0 0
      %1201 = vmatmul.mubr.bf16.gmra.mxu0 %v1032
      %v1202 = vpop.f32.mrf.mxu0
      %v1203 = vadd.f32 %v898, %v1202
      %v1204 = vpop.f32.mrf.mxu0
      %v1205 = vpop.f32.mrf.mxu0
      %v1206 = vadd.f32 %v901, %v1205
      %v1207 = vpop.f32.mrf.mxu0
      %1208 = vmatprep.mubr.bf16.mxu0 0
      %1209 = vmatmul.mubr.bf16.gmra.mxu0 %v1033
      %v1210 = vpop.f32.mrf.mxu0
      %v1211 = vadd.f32 %v906, %v1210
      %v1212 = vpop.f32.mrf.mxu0
      %v1213 = vpop.f32.mrf.mxu0
      %v1214 = vadd.f32 %v909, %v1213
      %v1215 = vpop.f32.mrf.mxu0
      %1216 = vmatprep.mubr.bf16.mxu0 0
      %1217 = vmatmul.mubr.bf16.gmra.mxu0 %v1034
      %v1218 = vpop.f32.mrf.mxu0
      %v1219 = vadd.f32 %v914, %v1218
      %v1220 = vpop.f32.mrf.mxu0
      %v1221 = vpop.f32.mrf.mxu0
      %v1222 = vadd.f32 %v917, %v1221
      %v1223 = vpop.f32.mrf.mxu0
      %1224 = vmatprep.mubr.bf16.mxu0 0
      %1225 = vmatmul.mubr.bf16.gmra.mxu0 %v1035
      %v1226 = vpop.f32.mrf.mxu0
      %v1227 = vadd.f32 %v922, %v1226
      %v1228 = vpop.f32.mrf.mxu0
      %v1229 = vpop.f32.mrf.mxu0
      %v1230 = vadd.f32 %v925, %v1229
      %v1231 = vpop.f32.mrf.mxu0
      %1232 = vmatprep.mubr.bf16.mxu0 0
      %1233 = vmatmul.mubr.bf16.gmra.mxu0 %v1036
      %v1234 = vpop.f32.mrf.mxu0
      %v1235 = vadd.f32 %v930, %v1234
      %v1236 = vpop.f32.mrf.mxu0
      %v1237 = vpop.f32.mrf.mxu0
      %v1238 = vadd.f32 %v933, %v1237
      %v1239 = vpop.f32.mrf.mxu0
      %1240 = vmatprep.mubr.bf16.mxu0 0
      %1241 = vmatmul.mubr.bf16.gmra.mxu0 %v1037
      %v1242 = vpop.f32.mrf.mxu0
      %v1243 = vadd.f32 %v938, %v1242
      %v1244 = vpop.f32.mrf.mxu0
      %v1245 = vpop.f32.mrf.mxu0
      %v1246 = vadd.f32 %v941, %v1245
      %v1247 = vpop.f32.mrf.mxu0
      %1248 = vmatprep.mubr.bf16.mxu0 0
      %1249 = vmatmul.mubr.bf16.gmra.mxu0 %v1038
      %v1250 = vpop.f32.mrf.mxu0
      %v1251 = vadd.f32 %v946, %v1250
      %v1252 = vpop.f32.mrf.mxu0
      %v1253 = vpop.f32.mrf.mxu0
      %v1254 = vadd.f32 %v949, %v1253
      %v1255 = vpop.f32.mrf.mxu0
      %1256 = vmatprep.mubr.bf16.mxu0 0
      %1257 = vmatmul.mubr.bf16.gmra.mxu0 %v1039
      %v1258 = vpop.f32.mrf.mxu0
      %v1259 = vadd.f32 %v954, %v1258
      %v1260 = vpop.f32.mrf.mxu0
      %v1261 = vpop.f32.mrf.mxu0
      %v1262 = vadd.f32 %v957, %v1261
      %v1263 = vpop.f32.mrf.mxu0
      %1264 = vdwg.mxu0
      %vm1273 = vcmask 1042432
      %vm1274 = vcmask 1046532
      %vm1275 = vmor %vm1273, %vm1274
      %v1276 = vrot.slane %v249, 5
      %v1277 = vrot.slane %v1276, 4
      %v1278 = vrot.slane %v250, 5
      %v1279 = vsel %vm1275, %v1277, %v1278
      %v1280 = vrot.slane %v1278, 4
      %v1281 = vrot.slane %v251, 5
      %v1282 = vsel %vm1275, %v1280, %v1281
      %v1283 = vrot.slane %v1281, 4
      %v1284 = vrot.slane %v252, 5
      %v1285 = vsel %vm1275, %v1283, %v1284
      %v1286 = vrot.slane %v1284, 4
      %v1287 = vrot.slane %v253, 5
      %v1288 = vsel %vm1275, %v1286, %v1287
      %v1289 = vrot.slane %v254, 5
      %v1290 = vrot.slane %v1289, 4
      %v1291 = vrot.slane %v255, 5
      %v1292 = vsel %vm1275, %v1290, %v1291
      %v1293 = vrot.slane %v1291, 4
      %v1294 = vrot.slane %v256, 5
      %v1295 = vsel %vm1275, %v1293, %v1294
      %v1296 = vrot.slane %v1294, 4
      %v1297 = vrot.slane %v257, 5
      %v1298 = vsel %vm1275, %v1296, %v1297
      %v1299 = vrot.slane %v1297, 4
      %v1300 = vrot.slane %v258, 5
      %v1301 = vsel %vm1275, %v1299, %v1300
      %v1302 = vrot.slane %v259, 5
      %v1303 = vrot.slane %v1302, 4
      %v1304 = vrot.slane %v260, 5
      %v1305 = vsel %vm1275, %v1303, %v1304
      %v1306 = vrot.slane %v1304, 4
      %v1307 = vrot.slane %v261, 5
      %v1308 = vsel %vm1275, %v1306, %v1307
      %v1309 = vrot.slane %v1307, 4
      %v1310 = vrot.slane %v262, 5
      %v1311 = vsel %vm1275, %v1309, %v1310
      %v1312 = vrot.slane %v1310, 4
      %v1313 = vrot.slane %v263, 5
      %v1314 = vsel %vm1275, %v1312, %v1313
      %v1315 = vrot.slane %v264, 5
      %v1316 = vrot.slane %v1315, 4
      %v1317 = vrot.slane %v265, 5
      %v1318 = vsel %vm1275, %v1316, %v1317
      %v1319 = vrot.slane %v1317, 4
      %v1320 = vrot.slane %v266, 5
      %v1321 = vsel %vm1275, %v1319, %v1320
      %v1322 = vrot.slane %v1320, 4
      %v1323 = vrot.slane %v267, 5
      %v1324 = vsel %vm1275, %v1322, %v1323
      %v1325 = vrot.slane %v1323, 4
      %v1326 = vrot.slane %v268, 5
      %v1327 = vsel %vm1275, %v1325, %v1326
      %v1328 = vrot.slane %v269, 5
      %v1329 = vrot.slane %v1328, 4
      %v1330 = vrot.slane %v270, 5
      %v1331 = vsel %vm1275, %v1329, %v1330
      %v1332 = vrot.slane %v1330, 4
      %v1333 = vrot.slane %v271, 5
      %v1334 = vsel %vm1275, %v1332, %v1333
      %v1335 = vrot.slane %v1333, 4
      %v1336 = vrot.slane %v272, 5
      %v1337 = vsel %vm1275, %v1335, %v1336
      %v1338 = vrot.slane %v1336, 4
      %v1339 = vrot.slane %v273, 5
      %v1340 = vsel %vm1275, %v1338, %v1339
      %v1341 = vrot.slane %v274, 5
      %v1342 = vrot.slane %v1341, 4
      %v1343 = vrot.slane %v275, 5
      %v1344 = vsel %vm1275, %v1342, %v1343
      %v1345 = vrot.slane %v1343, 4
      %v1346 = vrot.slane %v276, 5
      %v1347 = vsel %vm1275, %v1345, %v1346
      %v1348 = vrot.slane %v1346, 4
      %v1349 = vrot.slane %v277, 5
      %v1350 = vsel %vm1275, %v1348, %v1349
      %v1351 = vrot.slane %v1349, 4
      %v1352 = vrot.slane %v278, 5
      %v1353 = vsel %vm1275, %v1351, %v1352
      %v1354 = vrot.slane %v279, 5
      %v1355 = vrot.slane %v1354, 4
      %v1356 = vrot.slane %v280, 5
      %v1357 = vsel %vm1275, %v1355, %v1356
      %v1358 = vrot.slane %v1356, 4
      %v1359 = vrot.slane %v281, 5
      %v1360 = vsel %vm1275, %v1358, %v1359
      %v1361 = vrot.slane %v1359, 4
      %v1362 = vrot.slane %v282, 5
      %v1363 = vsel %vm1275, %v1361, %v1362
      %v1364 = vrot.slane %v1362, 4
      %v1365 = vrot.slane %v283, 5
      %v1366 = vsel %vm1275, %v1364, %v1365
      %v1367 = vrot.slane %v284, 5
      %v1368 = vrot.slane %v1367, 4
      %v1369 = vrot.slane %v285, 5
      %v1370 = vsel %vm1275, %v1368, %v1369
      %v1371 = vrot.slane %v1369, 4
      %v1372 = vrot.slane %v286, 5
      %v1373 = vsel %vm1275, %v1371, %v1372
      %v1374 = vrot.slane %v1372, 4
      %v1375 = vrot.slane %v287, 5
      %v1376 = vsel %vm1275, %v1374, %v1375
      %v1377 = vrot.slane %v1375, 4
      %v1378 = vrot.slane %v288, 5
      %v1379 = vsel %vm1275, %v1377, %v1378
      %s1380 = scalar_lea.vmem %s1, 128
      %v1381 = vld [vmem:[%s1380] sm:$0xf]
      %v1382 = vld [vmem:[%s1380 + $0x4] sm:$0xf]
      %v1383 = vld [vmem:[%s1380 + $0x8] sm:$0xf]
      %v1384 = vld [vmem:[%s1380 + $0xc] sm:$0xf]
      %v1385 = vld [vmem:[%s1380 + $0x10] sm:$0xf]
      %v1386 = vld [vmem:[%s1380 + $0x14] sm:$0xf]
      %v1387 = vld [vmem:[%s1380 + $0x18] sm:$0xf]
      %v1388 = vld [vmem:[%s1380 + $0x1c] sm:$0xf]
      %v1389 = vld [vmem:[%s1380 + $0x20] sm:$0xf]
      %v1390 = vld [vmem:[%s1380 + $0x24] sm:$0xf]
      %v1391 = vld [vmem:[%s1380 + $0x28] sm:$0xf]
      %v1392 = vld [vmem:[%s1380 + $0x2c] sm:$0xf]
      %v1393 = vld [vmem:[%s1380 + $0x30] sm:$0xf]
      %v1394 = vld [vmem:[%s1380 + $0x34] sm:$0xf]
      %v1395 = vld [vmem:[%s1380 + $0x38] sm:$0xf]
      %v1396 = vld [vmem:[%s1380 + $0x3c] sm:$0xf]
      %v1397 = vunpack.c.l.b16 %v1279
      %v1398 = vunpack.c.l.b16 %v1282
      %v1399 = vunpack.c.l.b16 %v1285
      %v1400 = vunpack.c.l.b16 %v1288
      %v1401 = vunpack.c.l.b16 %v1292
      %v1402 = vunpack.c.l.b16 %v1295
      %v1403 = vunpack.c.l.b16 %v1298
      %v1404 = vunpack.c.l.b16 %v1301
      %v1405 = vunpack.c.l.b16 %v1305
      %v1406 = vunpack.c.l.b16 %v1308
      %v1407 = vunpack.c.l.b16 %v1311
      %v1408 = vunpack.c.l.b16 %v1314
      %v1409 = vunpack.c.l.b16 %v1318
      %v1410 = vunpack.c.l.b16 %v1321
      %v1411 = vunpack.c.l.b16 %v1324
      %v1412 = vunpack.c.l.b16 %v1327
      %v1413 = vunpack.c.l.b16 %v1331
      %v1414 = vunpack.c.l.b16 %v1334
      %v1415 = vunpack.c.l.b16 %v1337
      %v1416 = vunpack.c.l.b16 %v1340
      %v1417 = vunpack.c.l.b16 %v1344
      %v1418 = vunpack.c.l.b16 %v1347
      %v1419 = vunpack.c.l.b16 %v1350
      %v1420 = vunpack.c.l.b16 %v1353
      %v1421 = vunpack.c.l.b16 %v1357
      %v1422 = vunpack.c.l.b16 %v1360
      %v1423 = vunpack.c.l.b16 %v1363
      %v1424 = vunpack.c.l.b16 %v1366
      %v1425 = vunpack.c.l.b16 %v1370
      %v1426 = vunpack.c.l.b16 %v1373
      %v1427 = vunpack.c.l.b16 %v1376
      %v1428 = vunpack.c.l.b16 %v1379
      %v1429 = vpack.c.b16 %v1398, %v1397
      %v1430 = vpack.c.b16 %v1400, %v1399
      %v1431 = vpack.c.b16 %v1402, %v1401
      %v1432 = vpack.c.b16 %v1404, %v1403
      %v1433 = vpack.c.b16 %v1406, %v1405
      %v1434 = vpack.c.b16 %v1408, %v1407
      %v1435 = vpack.c.b16 %v1410, %v1409
      %v1436 = vpack.c.b16 %v1412, %v1411
      %v1437 = vpack.c.b16 %v1414, %v1413
      %v1438 = vpack.c.b16 %v1416, %v1415
      %v1439 = vpack.c.b16 %v1418, %v1417
      %v1440 = vpack.c.b16 %v1420, %v1419
      %v1441 = vpack.c.b16 %v1422, %v1421
      %v1442 = vpack.c.b16 %v1424, %v1423
      %v1443 = vpack.c.b16 %v1426, %v1425
      %v1444 = vpack.c.b16 %v1428, %v1427
      %v1477 = vunpack.c.l.b16 %v1381
      %v1478 = vunpack.c.l.b16 %v1382
      %v1479 = vunpack.c.l.b16 %v1383
      %v1480 = vunpack.c.l.b16 %v1384
      %v1481 = vunpack.c.l.b16 %v1385
      %v1482 = vunpack.c.l.b16 %v1386
      %v1483 = vunpack.c.l.b16 %v1387
      %v1484 = vunpack.c.l.b16 %v1388
      %v1485 = vunpack.c.l.b16 %v1389
      %v1486 = vunpack.c.l.b16 %v1390
      %v1487 = vunpack.c.l.b16 %v1391
      %v1488 = vunpack.c.l.b16 %v1392
      %v1489 = vunpack.c.l.b16 %v1393
      %v1490 = vunpack.c.l.b16 %v1394
      %v1491 = vunpack.c.l.b16 %v1395
      %v1492 = vunpack.c.l.b16 %v1396
      %v1493 = vpack.c.b16 %v1478, %v1477
      %v1494 = vpack.c.b16 %v1480, %v1479
      %v1495 = vpack.c.b16 %v1482, %v1481
      %v1496 = vpack.c.b16 %v1484, %v1483
      %v1497 = vpack.c.b16 %v1486, %v1485
      %v1498 = vpack.c.b16 %v1488, %v1487
      %v1499 = vpack.c.b16 %v1490, %v1489
      %v1500 = vpack.c.b16 %v1492, %v1491
      %1509 = vmatprep.subr.bf16.mxu0 0
      %1510 = vmatpush1.bf16.msra.mxu0 %v1500
      %1511 = vmatprep.subr.bf16.mxu0 0
      %1512 = vmatpush1.bf16.msra.mxu0 %v1499
      %1513 = vmatprep.subr.bf16.mxu0 0
      %1514 = vmatpush1.bf16.msra.mxu0 %v1498
      %1515 = vmatprep.subr.bf16.mxu0 0
      %1516 = vmatpush1.bf16.msra.mxu0 %v1497
      %1517 = vmatprep.subr.bf16.mxu0 0
      %1518 = vmatpush1.bf16.msra.mxu0 %v1496
      %1519 = vmatprep.subr.bf16.mxu0 0
      %1520 = vmatpush1.bf16.msra.mxu0 %v1495
      %1521 = vmatprep.subr.bf16.mxu0 0
      %1522 = vmatpush1.bf16.msra.mxu0 %v1494
      %1523 = vmatprep.subr.bf16.mxu0 0
      %1524 = vmatpush1.bf16.msra.mxu0 %v1493
      %1525 = vmatprep.subr.bf16.mxu0 0
      %1526 = vmatpush2.bf16.msra.mxu0 0
      %1527 = vmatprep.subr.bf16.mxu0 0
      %1528 = vmatpush2.bf16.msra.mxu0 0
      %1529 = vmatprep.subr.bf16.mxu0 0
      %1530 = vmatpush2.bf16.msra.mxu0 0
      %1531 = vmatprep.subr.bf16.mxu0 0
      %1532 = vmatpush2.bf16.msra.mxu0 0
      %1533 = vmatprep.subr.bf16.mxu0 0
      %1534 = vmatpush2.bf16.msra.mxu0 0
      %1535 = vmatprep.subr.bf16.mxu0 0
      %1536 = vmatpush2.bf16.msra.mxu0 0
      %1537 = vmatprep.subr.bf16.mxu0 0
      %1538 = vmatpush2.bf16.msra.mxu0 0
      %1539 = vmatprep.subr.bf16.mxu0 0
      %1540 = vmatpush2.bf16.msra.mxu0 0
      %1541 = vmatprep.mubr.bf16.mxu0 0
      %1542 = vmatmul.mubr.bf16.gmra.mxu0 %v1429
      %v1543 = vpop.f32.mrf.mxu0
      %v1544 = vadd.f32 0.0, %v1543
      %v1545 = vpop.f32.mrf.mxu0
      %v1546 = vpop.f32.mrf.mxu0
      %v1547 = vadd.f32 0.0, %v1546
      %v1548 = vpop.f32.mrf.mxu0
      %1549 = vmatprep.mubr.bf16.mxu0 0
      %1550 = vmatmul.mubr.bf16.gmra.mxu0 %v1430
      %v1551 = vpop.f32.mrf.mxu0
      %v1552 = vadd.f32 0.0, %v1551
      %v1553 = vpop.f32.mrf.mxu0
      %v1554 = vpop.f32.mrf.mxu0
      %v1555 = vadd.f32 0.0, %v1554
      %v1556 = vpop.f32.mrf.mxu0
      %1557 = vmatprep.mubr.bf16.mxu0 0
      %1558 = vmatmul.mubr.bf16.gmra.mxu0 %v1431
      %v1559 = vpop.f32.mrf.mxu0
      %v1560 = vadd.f32 0.0, %v1559
      %v1561 = vpop.f32.mrf.mxu0
      %v1562 = vpop.f32.mrf.mxu0
      %v1563 = vadd.f32 0.0, %v1562
      %v1564 = vpop.f32.mrf.mxu0
      %1565 = vmatprep.mubr.bf16.mxu0 0
      %1566 = vmatmul.mubr.bf16.gmra.mxu0 %v1432
      %v1567 = vpop.f32.mrf.mxu0
      %v1568 = vadd.f32 0.0, %v1567
      %v1569 = vpop.f32.mrf.mxu0
      %v1570 = vpop.f32.mrf.mxu0
      %v1571 = vadd.f32 0.0, %v1570
      %v1572 = vpop.f32.mrf.mxu0
      %1573 = vmatprep.mubr.bf16.mxu0 0
      %1574 = vmatmul.mubr.bf16.gmra.mxu0 %v1433
      %v1575 = vpop.f32.mrf.mxu0
      %v1576 = vadd.f32 0.0, %v1575
      %v1577 = vpop.f32.mrf.mxu0
      %v1578 = vpop.f32.mrf.mxu0
      %v1579 = vadd.f32 0.0, %v1578
      %v1580 = vpop.f32.mrf.mxu0
      %1581 = vmatprep.mubr.bf16.mxu0 0
      %1582 = vmatmul.mubr.bf16.gmra.mxu0 %v1434
      %v1583 = vpop.f32.mrf.mxu0
      %v1584 = vadd.f32 0.0, %v1583
      %v1585 = vpop.f32.mrf.mxu0
      %v1586 = vpop.f32.mrf.mxu0
      %v1587 = vadd.f32 0.0, %v1586
      %v1588 = vpop.f32.mrf.mxu0
      %1589 = vmatprep.mubr.bf16.mxu0 0
      %1590 = vmatmul.mubr.bf16.gmra.mxu0 %v1435
      %v1591 = vpop.f32.mrf.mxu0
      %v1592 = vadd.f32 0.0, %v1591
      %v1593 = vpop.f32.mrf.mxu0
      %v1594 = vpop.f32.mrf.mxu0
      %v1595 = vadd.f32 0.0, %v1594
      %v1596 = vpop.f32.mrf.mxu0
      %1597 = vmatprep.mubr.bf16.mxu0 0
      %1598 = vmatmul.mubr.bf16.gmra.mxu0 %v1436
      %v1599 = vpop.f32.mrf.mxu0
      %v1600 = vadd.f32 0.0, %v1599
      %v1601 = vpop.f32.mrf.mxu0
      %v1602 = vpop.f32.mrf.mxu0
      %v1603 = vadd.f32 0.0, %v1602
      %v1604 = vpop.f32.mrf.mxu0
      %1605 = vmatprep.mubr.bf16.mxu0 0
      %1606 = vmatmul.mubr.bf16.gmra.mxu0 %v1437
      %v1607 = vpop.f32.mrf.mxu0
      %v1608 = vadd.f32 0.0, %v1607
      %v1609 = vpop.f32.mrf.mxu0
      %v1610 = vpop.f32.mrf.mxu0
      %v1611 = vadd.f32 0.0, %v1610
      %v1612 = vpop.f32.mrf.mxu0
      %1613 = vmatprep.mubr.bf16.mxu0 0
      %1614 = vmatmul.mubr.bf16.gmra.mxu0 %v1438
      %v1615 = vpop.f32.mrf.mxu0
      %v1616 = vadd.f32 0.0, %v1615
      %v1617 = vpop.f32.mrf.mxu0
      %v1618 = vpop.f32.mrf.mxu0
      %v1619 = vadd.f32 0.0, %v1618
      %v1620 = vpop.f32.mrf.mxu0
      %1621 = vmatprep.mubr.bf16.mxu0 0
      %1622 = vmatmul.mubr.bf16.gmra.mxu0 %v1439
      %v1623 = vpop.f32.mrf.mxu0
      %v1624 = vadd.f32 0.0, %v1623
      %v1625 = vpop.f32.mrf.mxu0
      %v1626 = vpop.f32.mrf.mxu0
      %v1627 = vadd.f32 0.0, %v1626
      %v1628 = vpop.f32.mrf.mxu0
      %1629 = vmatprep.mubr.bf16.mxu0 0
      %1630 = vmatmul.mubr.bf16.gmra.mxu0 %v1440
      %v1631 = vpop.f32.mrf.mxu0
      %v1632 = vadd.f32 0.0, %v1631
      %v1633 = vpop.f32.mrf.mxu0
      %v1634 = vpop.f32.mrf.mxu0
      %v1635 = vadd.f32 0.0, %v1634
      %v1636 = vpop.f32.mrf.mxu0
      %1637 = vmatprep.mubr.bf16.mxu0 0
      %1638 = vmatmul.mubr.bf16.gmra.mxu0 %v1441
      %v1639 = vpop.f32.mrf.mxu0
      %v1640 = vadd.f32 0.0, %v1639
      %v1641 = vpop.f32.mrf.mxu0
      %v1642 = vpop.f32.mrf.mxu0
      %v1643 = vadd.f32 0.0, %v1642
      %v1644 = vpop.f32.mrf.mxu0
      %1645 = vmatprep.mubr.bf16.mxu0 0
      %1646 = vmatmul.mubr.bf16.gmra.mxu0 %v1442
      %v1647 = vpop.f32.mrf.mxu0
      %v1648 = vadd.f32 0.0, %v1647
      %v1649 = vpop.f32.mrf.mxu0
      %v1650 = vpop.f32.mrf.mxu0
      %v1651 = vadd.f32 0.0, %v1650
      %v1652 = vpop.f32.mrf.mxu0
      %1653 = vmatprep.mubr.bf16.mxu0 0
      %1654 = vmatmul.mubr.bf16.gmra.mxu0 %v1443
      %v1655 = vpop.f32.mrf.mxu0
      %v1656 = vadd.f32 0.0, %v1655
      %v1657 = vpop.f32.mrf.mxu0
      %v1658 = vpop.f32.mrf.mxu0
      %v1659 = vadd.f32 0.0, %v1658
      %v1660 = vpop.f32.mrf.mxu0
      %1661 = vmatprep.mubr.bf16.mxu0 0
      %1662 = vmatmul.mubr.bf16.gmra.mxu0 %v1444
      %v1663 = vpop.f32.mrf.mxu0
      %v1664 = vadd.f32 0.0, %v1663
      %v1665 = vpop.f32.mrf.mxu0
      %v1666 = vpop.f32.mrf.mxu0
      %v1667 = vadd.f32 0.0, %v1666
      %v1668 = vpop.f32.mrf.mxu0
      %1669 = vdwg.mxu0
      %v1670 = vadd.f32 %v1139, %v1544
      %v1671 = vadd.f32 %v1142, %v1547
      %v1672 = vadd.f32 %v1147, %v1552
      %v1673 = vadd.f32 %v1150, %v1555
      %v1674 = vadd.f32 %v1155, %v1560
      %v1675 = vadd.f32 %v1158, %v1563
      %v1676 = vadd.f32 %v1163, %v1568
      %v1677 = vadd.f32 %v1166, %v1571
      %v1678 = vadd.f32 %v1171, %v1576
      %v1679 = vadd.f32 %v1174, %v1579
      %v1680 = vadd.f32 %v1179, %v1584
      %v1681 = vadd.f32 %v1182, %v1587
      %v1682 = vadd.f32 %v1187, %v1592
      %v1683 = vadd.f32 %v1190, %v1595
      %v1684 = vadd.f32 %v1195, %v1600
      %v1685 = vadd.f32 %v1198, %v1603
      %v1686 = vadd.f32 %v1203, %v1608
      %v1687 = vadd.f32 %v1206, %v1611
      %v1688 = vadd.f32 %v1211, %v1616
      %v1689 = vadd.f32 %v1214, %v1619
      %v1690 = vadd.f32 %v1219, %v1624
      %v1691 = vadd.f32 %v1222, %v1627
      %v1692 = vadd.f32 %v1227, %v1632
      %v1693 = vadd.f32 %v1230, %v1635
      %v1694 = vadd.f32 %v1235, %v1640
      %v1695 = vadd.f32 %v1238, %v1643
      %v1696 = vadd.f32 %v1243, %v1648
      %v1697 = vadd.f32 %v1246, %v1651
      %v1698 = vadd.f32 %v1251, %v1656
      %v1699 = vadd.f32 %v1254, %v1659
      %v1700 = vadd.f32 %v1259, %v1664
      %v1701 = vadd.f32 %v1262, %v1667
      %s1702 = scalar_lea.vmem %s1, 192
      %v1703 = vld [vmem:[%s1702] sm:$0xf]
      %v1704 = vld [vmem:[%s1702 + $0x4] sm:$0xf]
      %v1705 = vld [vmem:[%s1702 + $0x8] sm:$0xf]
      %v1706 = vld [vmem:[%s1702 + $0xc] sm:$0xf]
      %v1707 = vld [vmem:[%s1702 + $0x10] sm:$0xf]
      %v1708 = vld [vmem:[%s1702 + $0x14] sm:$0xf]
      %v1709 = vld [vmem:[%s1702 + $0x18] sm:$0xf]
      %v1710 = vld [vmem:[%s1702 + $0x1c] sm:$0xf]
      %v1711 = vld [vmem:[%s1702 + $0x20] sm:$0xf]
      %v1712 = vld [vmem:[%s1702 + $0x24] sm:$0xf]
      %v1713 = vld [vmem:[%s1702 + $0x28] sm:$0xf]
      %v1714 = vld [vmem:[%s1702 + $0x2c] sm:$0xf]
      %v1715 = vld [vmem:[%s1702 + $0x30] sm:$0xf]
      %v1716 = vld [vmem:[%s1702 + $0x34] sm:$0xf]
      %v1717 = vld [vmem:[%s1702 + $0x38] sm:$0xf]
      %v1718 = vld [vmem:[%s1702 + $0x3c] sm:$0xf]
      %v1723 = vunpack.c.l.b16 %v289
      %v1724 = vunpack.c.l.b16 %v290
      %v1725 = vunpack.c.l.b16 %v291
      %v1726 = vunpack.c.l.b16 %v292
      %v1727 = vpack.c.b16 %v1724, %v1723
      %v1728 = vpack.c.b16 %v1726, %v1725
      %v1747 = vunpack.c.l.b16 %v1703
      %v1748 = vunpack.c.l.b16 %v1704
      %v1749 = vunpack.c.l.b16 %v1705
      %v1750 = vunpack.c.l.b16 %v1706
      %v1751 = vunpack.c.l.b16 %v1707
      %v1752 = vunpack.c.l.b16 %v1708
      %v1753 = vunpack.c.l.b16 %v1709
      %v1754 = vunpack.c.l.b16 %v1710
      %v1755 = vunpack.c.l.b16 %v1711
      %v1756 = vunpack.c.l.b16 %v1712
      %v1757 = vunpack.c.l.b16 %v1713
      %v1758 = vunpack.c.l.b16 %v1714
      %v1759 = vunpack.c.l.b16 %v1715
      %v1760 = vunpack.c.l.b16 %v1716
      %v1761 = vunpack.c.l.b16 %v1717
      %v1762 = vunpack.c.l.b16 %v1718
      %v1763 = vpack.c.b16 %v1748, %v1747
      %v1764 = vpack.c.b16 %v1750, %v1749
      %v1765 = vpack.c.b16 %v1752, %v1751
      %v1766 = vpack.c.b16 %v1754, %v1753
      %v1767 = vpack.c.b16 %v1756, %v1755
      %v1768 = vpack.c.b16 %v1758, %v1757
      %v1769 = vpack.c.b16 %v1760, %v1759
      %v1770 = vpack.c.b16 %v1762, %v1761
      %1779 = vmatprep.subr.bf16.mxu0 0
      %1780 = vmatpush1.bf16.msra.mxu0 %v1770
      %1781 = vmatprep.subr.bf16.mxu0 0
      %1782 = vmatpush1.bf16.msra.mxu0 %v1769
      %1783 = vmatprep.subr.bf16.mxu0 0
      %1784 = vmatpush1.bf16.msra.mxu0 %v1768
      %1785 = vmatprep.subr.bf16.mxu0 0
      %1786 = vmatpush1.bf16.msra.mxu0 %v1767
      %1787 = vmatprep.subr.bf16.mxu0 0
      %1788 = vmatpush1.bf16.msra.mxu0 %v1766
      %1789 = vmatprep.subr.bf16.mxu0 0
      %1790 = vmatpush1.bf16.msra.mxu0 %v1765
      %1791 = vmatprep.subr.bf16.mxu0 0
      %1792 = vmatpush1.bf16.msra.mxu0 %v1764
      %1793 = vmatprep.subr.bf16.mxu0 0
      %1794 = vmatpush1.bf16.msra.mxu0 %v1763
      %1795 = vmatprep.subr.bf16.mxu0 0
      %1796 = vmatpush2.bf16.msra.mxu0 0
      %1797 = vmatprep.subr.bf16.mxu0 0
      %1798 = vmatpush2.bf16.msra.mxu0 0
      %1799 = vmatprep.subr.bf16.mxu0 0
      %1800 = vmatpush2.bf16.msra.mxu0 0
      %1801 = vmatprep.subr.bf16.mxu0 0
      %1802 = vmatpush2.bf16.msra.mxu0 0
      %1803 = vmatprep.subr.bf16.mxu0 0
      %1804 = vmatpush2.bf16.msra.mxu0 0
      %1805 = vmatprep.subr.bf16.mxu0 0
      %1806 = vmatpush2.bf16.msra.mxu0 0
      %1807 = vmatprep.subr.bf16.mxu0 0
      %1808 = vmatpush2.bf16.msra.mxu0 0
      %1809 = vmatprep.subr.bf16.mxu0 0
      %1810 = vmatpush2.bf16.msra.mxu0 0
      %1811 = vmatprep.mubr.bf16.mxu0 0
      %1812 = vmatmul.mubr.bf16.gmra.mxu0 %v1026
      %v1813 = vpop.f32.mrf.mxu0
      %v1814 = vadd.f32 0.0, %v1813
      %v1815 = vpop.f32.mrf.mxu0
      %v1816 = vpop.f32.mrf.mxu0
      %v1817 = vadd.f32 0.0, %v1816
      %v1818 = vpop.f32.mrf.mxu0
      %1819 = vmatprep.mubr.bf16.mxu0 0
      %1820 = vmatmul.mubr.bf16.gmra.mxu0 %v1027
      %v1821 = vpop.f32.mrf.mxu0
      %v1822 = vadd.f32 0.0, %v1821
      %v1823 = vpop.f32.mrf.mxu0
      %v1824 = vpop.f32.mrf.mxu0
      %v1825 = vadd.f32 0.0, %v1824
      %v1826 = vpop.f32.mrf.mxu0
      %1827 = vmatprep.mubr.bf16.mxu0 0
      %1828 = vmatmul.mubr.bf16.gmra.mxu0 %v1028
      %v1829 = vpop.f32.mrf.mxu0
      %v1830 = vadd.f32 0.0, %v1829
      %v1831 = vpop.f32.mrf.mxu0
      %v1832 = vpop.f32.mrf.mxu0
      %v1833 = vadd.f32 0.0, %v1832
      %v1834 = vpop.f32.mrf.mxu0
      %1835 = vmatprep.mubr.bf16.mxu0 0
      %1836 = vmatmul.mubr.bf16.gmra.mxu0 %v1029
      %v1837 = vpop.f32.mrf.mxu0
      %v1838 = vadd.f32 0.0, %v1837
      %v1839 = vpop.f32.mrf.mxu0
      %v1840 = vpop.f32.mrf.mxu0
      %v1841 = vadd.f32 0.0, %v1840
      %v1842 = vpop.f32.mrf.mxu0
      %1843 = vmatprep.mubr.bf16.mxu0 0
      %1844 = vmatmul.mubr.bf16.gmra.mxu0 %v1030
      %v1845 = vpop.f32.mrf.mxu0
      %v1846 = vadd.f32 0.0, %v1845
      %v1847 = vpop.f32.mrf.mxu0
      %v1848 = vpop.f32.mrf.mxu0
      %v1849 = vadd.f32 0.0, %v1848
      %v1850 = vpop.f32.mrf.mxu0
      %1851 = vmatprep.mubr.bf16.mxu0 0
      %1852 = vmatmul.mubr.bf16.gmra.mxu0 %v1031
      %v1853 = vpop.f32.mrf.mxu0
      %v1854 = vadd.f32 0.0, %v1853
      %v1855 = vpop.f32.mrf.mxu0
      %v1856 = vpop.f32.mrf.mxu0
      %v1857 = vadd.f32 0.0, %v1856
      %v1858 = vpop.f32.mrf.mxu0
      %1859 = vmatprep.mubr.bf16.mxu0 0
      %1860 = vmatmul.mubr.bf16.gmra.mxu0 %v1032
      %v1861 = vpop.f32.mrf.mxu0
      %v1862 = vadd.f32 0.0, %v1861
      %v1863 = vpop.f32.mrf.mxu0
      %v1864 = vpop.f32.mrf.mxu0
      %v1865 = vadd.f32 0.0, %v1864
      %v1866 = vpop.f32.mrf.mxu0
      %1867 = vmatprep.mubr.bf16.mxu0 0
      %1868 = vmatmul.mubr.bf16.gmra.mxu0 %v1033
      %v1869 = vpop.f32.mrf.mxu0
      %v1870 = vadd.f32 0.0, %v1869
      %v1871 = vpop.f32.mrf.mxu0
      %v1872 = vpop.f32.mrf.mxu0
      %v1873 = vadd.f32 0.0, %v1872
      %v1874 = vpop.f32.mrf.mxu0
      %1875 = vmatprep.mubr.bf16.mxu0 0
      %1876 = vmatmul.mubr.bf16.gmra.mxu0 %v1034
      %v1877 = vpop.f32.mrf.mxu0
      %v1878 = vadd.f32 0.0, %v1877
      %v1879 = vpop.f32.mrf.mxu0
      %v1880 = vpop.f32.mrf.mxu0
      %v1881 = vadd.f32 0.0, %v1880
      %v1882 = vpop.f32.mrf.mxu0
      %1883 = vmatprep.mubr.bf16.mxu0 0
      %1884 = vmatmul.mubr.bf16.gmra.mxu0 %v1035
      %v1885 = vpop.f32.mrf.mxu0
      %v1886 = vadd.f32 0.0, %v1885
      %v1887 = vpop.f32.mrf.mxu0
      %v1888 = vpop.f32.mrf.mxu0
      %v1889 = vadd.f32 0.0, %v1888
      %v1890 = vpop.f32.mrf.mxu0
      %1891 = vmatprep.mubr.bf16.mxu0 0
      %1892 = vmatmul.mubr.bf16.gmra.mxu0 %v1036
      %v1893 = vpop.f32.mrf.mxu0
      %v1894 = vadd.f32 0.0, %v1893
      %v1895 = vpop.f32.mrf.mxu0
      %v1896 = vpop.f32.mrf.mxu0
      %v1897 = vadd.f32 0.0, %v1896
      %v1898 = vpop.f32.mrf.mxu0
      %1899 = vmatprep.mubr.bf16.mxu0 0
      %1900 = vmatmul.mubr.bf16.gmra.mxu0 %v1037
      %v1901 = vpop.f32.mrf.mxu0
      %v1902 = vadd.f32 0.0, %v1901
      %v1903 = vpop.f32.mrf.mxu0
      %v1904 = vpop.f32.mrf.mxu0
      %v1905 = vadd.f32 0.0, %v1904
      %v1906 = vpop.f32.mrf.mxu0
      %1907 = vmatprep.mubr.bf16.mxu0 0
      %1908 = vmatmul.mubr.bf16.gmra.mxu0 %v1038
      %v1909 = vpop.f32.mrf.mxu0
      %v1910 = vadd.f32 0.0, %v1909
      %v1911 = vpop.f32.mrf.mxu0
      %v1912 = vpop.f32.mrf.mxu0
      %v1913 = vadd.f32 0.0, %v1912
      %v1914 = vpop.f32.mrf.mxu0
      %1915 = vmatprep.mubr.bf16.mxu0 0
      %1916 = vmatmul.mubr.bf16.gmra.mxu0 %v1039
      %v1917 = vpop.f32.mrf.mxu0
      %v1918 = vadd.f32 0.0, %v1917
      %v1919 = vpop.f32.mrf.mxu0
      %v1920 = vpop.f32.mrf.mxu0
      %v1921 = vadd.f32 0.0, %v1920
      %v1922 = vpop.f32.mrf.mxu0
      %1923 = vmatprep.mubr.bf16.mxu0 0
      %1924 = vmatmul.mubr.bf16.gmra.mxu0 %v1727
      %v1925 = vpop.f32.mrf.mxu0
      %v1926 = vadd.f32 0.0, %v1925
      %v1927 = vpop.f32.mrf.mxu0
      %v1928 = vpop.f32.mrf.mxu0
      %v1929 = vadd.f32 0.0, %v1928
      %v1930 = vpop.f32.mrf.mxu0
      %1931 = vmatprep.mubr.bf16.mxu0 0
      %1932 = vmatmul.mubr.bf16.gmra.mxu0 %v1728
      %v1933 = vpop.f32.mrf.mxu0
      %v1934 = vadd.f32 0.0, %v1933
      %v1935 = vpop.f32.mrf.mxu0
      %v1936 = vpop.f32.mrf.mxu0
      %v1937 = vadd.f32 0.0, %v1936
      %v1938 = vpop.f32.mrf.mxu0
      %1939 = vdwg.mxu0
      %v1940 = vadd.f32 %v1670, %v1814
      %v1941 = vadd.f32 %v1671, %v1817
      %v1942 = vadd.f32 %v1672, %v1822
      %v1943 = vadd.f32 %v1673, %v1825
      %v1944 = vadd.f32 %v1674, %v1830
      %v1945 = vadd.f32 %v1675, %v1833
      %v1946 = vadd.f32 %v1676, %v1838
      %v1947 = vadd.f32 %v1677, %v1841
      %v1948 = vadd.f32 %v1678, %v1846
      %v1949 = vadd.f32 %v1679, %v1849
      %v1950 = vadd.f32 %v1680, %v1854
      %v1951 = vadd.f32 %v1681, %v1857
      %v1952 = vadd.f32 %v1682, %v1862
      %v1953 = vadd.f32 %v1683, %v1865
      %v1954 = vadd.f32 %v1684, %v1870
      %v1955 = vadd.f32 %v1685, %v1873
      %v1956 = vadd.f32 %v1686, %v1878
      %v1957 = vadd.f32 %v1687, %v1881
      %v1958 = vadd.f32 %v1688, %v1886
      %v1959 = vadd.f32 %v1689, %v1889
      %v1960 = vadd.f32 %v1690, %v1894
      %v1961 = vadd.f32 %v1691, %v1897
      %v1962 = vadd.f32 %v1692, %v1902
      %v1963 = vadd.f32 %v1693, %v1905
      %v1964 = vadd.f32 %v1694, %v1910
      %v1965 = vadd.f32 %v1695, %v1913
      %v1966 = vadd.f32 %v1696, %v1918
      %v1967 = vadd.f32 %v1697, %v1921
      %v1968 = vadd.f32 %v1698, %v1926
      %v1969 = vadd.f32 %v1699, %v1929
      %v1970 = vadd.f32 %v1700, %v1934
      %v1971 = vadd.f32 %v1701, %v1937
      %v1973 = vshrl.u32 %v289, 16
      %v1975 = vrot.slane %v1973, 4
      %v1976 = vshll.u32 %v289, 16
      %v1978 = vrot.slane %v1976, 5
      %v1979 = vor.u32 %v1975, %v1978
      %v1980 = vrot.slane %v1979, 4
      %v1982 = vshll.u32 %v290, 16
      %v1984 = vrot.slane %v1982, 5
      %v1985 = vsel %vm317, %v1980, %v1984
      %v1986 = vshrl.u32 %v290, 16
      %v1988 = vrot.slane %v1986, 4
      %v1989 = vor.u32 %v1988, %v1984
      %v1990 = vrot.slane %v1989, 4
      %v1992 = vshll.u32 %v291, 16
      %v1994 = vrot.slane %v1992, 5
      %v1995 = vsel %vm317, %v1990, %v1994
      %v1996 = vshrl.u32 %v291, 16
      %v1998 = vrot.slane %v1996, 4
      %v1999 = vor.u32 %v1998, %v1994
      %v2000 = vrot.slane %v1999, 4
      %v2002 = vshll.u32 %v292, 16
      %v2004 = vrot.slane %v2002, 5
      %v2005 = vsel %vm317, %v2000, %v2004
      %v2006 = vshrl.u32 %v292, 16
      %v2008 = vrot.slane %v2006, 4
      %v2009 = vor.u32 %v2008, %v2004
      %v2010 = vrot.slane %v2009, 4
      %v2012 = vshll.u32 %v293, 16
      %v2014 = vrot.slane %v2012, 5
      %v2015 = vsel %vm317, %v2010, %v2014
      %s2016 = scalar_lea.vmem %s1, 256
      %v2017 = vld [vmem:[%s2016] sm:$0xf]
      %v2018 = vld [vmem:[%s2016 + $0x4] sm:$0xf]
      %v2019 = vld [vmem:[%s2016 + $0x8] sm:$0xf]
      %v2020 = vld [vmem:[%s2016 + $0xc] sm:$0xf]
      %v2021 = vld [vmem:[%s2016 + $0x10] sm:$0xf]
      %v2022 = vld [vmem:[%s2016 + $0x14] sm:$0xf]
      %v2023 = vld [vmem:[%s2016 + $0x18] sm:$0xf]
      %v2024 = vld [vmem:[%s2016 + $0x1c] sm:$0xf]
      %v2025 = vld [vmem:[%s2016 + $0x20] sm:$0xf]
      %v2026 = vld [vmem:[%s2016 + $0x24] sm:$0xf]
      %v2027 = vld [vmem:[%s2016 + $0x28] sm:$0xf]
      %v2028 = vld [vmem:[%s2016 + $0x2c] sm:$0xf]
      %v2029 = vld [vmem:[%s2016 + $0x30] sm:$0xf]
      %v2030 = vld [vmem:[%s2016 + $0x34] sm:$0xf]
      %v2031 = vld [vmem:[%s2016 + $0x38] sm:$0xf]
      %v2032 = vld [vmem:[%s2016 + $0x3c] sm:$0xf]
      %v2033 = vunpack.c.l.b16 %v1985
      %v2034 = vunpack.c.l.b16 %v1995
      %v2035 = vunpack.c.l.b16 %v2005
      %v2036 = vunpack.c.l.b16 %v2015
      %v2037 = vpack.c.b16 %v2034, %v2033
      %v2038 = vpack.c.b16 %v2036, %v2035
      %v2057 = vunpack.c.l.b16 %v2017
      %v2058 = vunpack.c.l.b16 %v2018
      %v2059 = vunpack.c.l.b16 %v2019
      %v2060 = vunpack.c.l.b16 %v2020
      %v2061 = vunpack.c.l.b16 %v2021
      %v2062 = vunpack.c.l.b16 %v2022
      %v2063 = vunpack.c.l.b16 %v2023
      %v2064 = vunpack.c.l.b16 %v2024
      %v2065 = vunpack.c.l.b16 %v2025
      %v2066 = vunpack.c.l.b16 %v2026
      %v2067 = vunpack.c.l.b16 %v2027
      %v2068 = vunpack.c.l.b16 %v2028
      %v2069 = vunpack.c.l.b16 %v2029
      %v2070 = vunpack.c.l.b16 %v2030
      %v2071 = vunpack.c.l.b16 %v2031
      %v2072 = vunpack.c.l.b16 %v2032
      %v2073 = vpack.c.b16 %v2058, %v2057
      %v2074 = vpack.c.b16 %v2060, %v2059
      %v2075 = vpack.c.b16 %v2062, %v2061
      %v2076 = vpack.c.b16 %v2064, %v2063
      %v2077 = vpack.c.b16 %v2066, %v2065
      %v2078 = vpack.c.b16 %v2068, %v2067
      %v2079 = vpack.c.b16 %v2070, %v2069
      %v2080 = vpack.c.b16 %v2072, %v2071
      %2089 = vmatprep.subr.bf16.mxu0 0
      %2090 = vmatpush1.bf16.msra.mxu0 %v2080
      %2091 = vmatprep.subr.bf16.mxu0 0
      %2092 = vmatpush1.bf16.msra.mxu0 %v2079
      %2093 = vmatprep.subr.bf16.mxu0 0
      %2094 = vmatpush1.bf16.msra.mxu0 %v2078
      %2095 = vmatprep.subr.bf16.mxu0 0
      %2096 = vmatpush1.bf16.msra.mxu0 %v2077
      %2097 = vmatprep.subr.bf16.mxu0 0
      %2098 = vmatpush1.bf16.msra.mxu0 %v2076
      %2099 = vmatprep.subr.bf16.mxu0 0
      %2100 = vmatpush1.bf16.msra.mxu0 %v2075
      %2101 = vmatprep.subr.bf16.mxu0 0
      %2102 = vmatpush1.bf16.msra.mxu0 %v2074
      %2103 = vmatprep.subr.bf16.mxu0 0
      %2104 = vmatpush1.bf16.msra.mxu0 %v2073
      %2105 = vmatprep.subr.bf16.mxu0 0
      %2106 = vmatpush2.bf16.msra.mxu0 0
      %2107 = vmatprep.subr.bf16.mxu0 0
      %2108 = vmatpush2.bf16.msra.mxu0 0
      %2109 = vmatprep.subr.bf16.mxu0 0
      %2110 = vmatpush2.bf16.msra.mxu0 0
      %2111 = vmatprep.subr.bf16.mxu0 0
      %2112 = vmatpush2.bf16.msra.mxu0 0
      %2113 = vmatprep.subr.bf16.mxu0 0
      %2114 = vmatpush2.bf16.msra.mxu0 0
      %2115 = vmatprep.subr.bf16.mxu0 0
      %2116 = vmatpush2.bf16.msra.mxu0 0
      %2117 = vmatprep.subr.bf16.mxu0 0
      %2118 = vmatpush2.bf16.msra.mxu0 0
      %2119 = vmatprep.subr.bf16.mxu0 0
      %2120 = vmatpush2.bf16.msra.mxu0 0
      %2121 = vmatprep.mubr.bf16.mxu0 0
      %2122 = vmatmul.mubr.bf16.gmra.mxu0 %v721
      %v2123 = vpop.f32.mrf.mxu0
      %v2124 = vadd.f32 0.0, %v2123
      %v2125 = vpop.f32.mrf.mxu0
      %v2126 = vpop.f32.mrf.mxu0
      %v2127 = vadd.f32 0.0, %v2126
      %v2128 = vpop.f32.mrf.mxu0
      %2129 = vmatprep.mubr.bf16.mxu0 0
      %2130 = vmatmul.mubr.bf16.gmra.mxu0 %v722
      %v2131 = vpop.f32.mrf.mxu0
      %v2132 = vadd.f32 0.0, %v2131
      %v2133 = vpop.f32.mrf.mxu0
      %v2134 = vpop.f32.mrf.mxu0
      %v2135 = vadd.f32 0.0, %v2134
      %v2136 = vpop.f32.mrf.mxu0
      %2137 = vmatprep.mubr.bf16.mxu0 0
      %2138 = vmatmul.mubr.bf16.gmra.mxu0 %v723
      %v2139 = vpop.f32.mrf.mxu0
      %v2140 = vadd.f32 0.0, %v2139
      %v2141 = vpop.f32.mrf.mxu0
      %v2142 = vpop.f32.mrf.mxu0
      %v2143 = vadd.f32 0.0, %v2142
      %v2144 = vpop.f32.mrf.mxu0
      %2145 = vmatprep.mubr.bf16.mxu0 0
      %2146 = vmatmul.mubr.bf16.gmra.mxu0 %v724
      %v2147 = vpop.f32.mrf.mxu0
      %v2148 = vadd.f32 0.0, %v2147
      %v2149 = vpop.f32.mrf.mxu0
      %v2150 = vpop.f32.mrf.mxu0
      %v2151 = vadd.f32 0.0, %v2150
      %v2152 = vpop.f32.mrf.mxu0
      %2153 = vmatprep.mubr.bf16.mxu0 0
      %2154 = vmatmul.mubr.bf16.gmra.mxu0 %v725
      %v2155 = vpop.f32.mrf.mxu0
      %v2156 = vadd.f32 0.0, %v2155
      %v2157 = vpop.f32.mrf.mxu0
      %v2158 = vpop.f32.mrf.mxu0
      %v2159 = vadd.f32 0.0, %v2158
      %v2160 = vpop.f32.mrf.mxu0
      %2161 = vmatprep.mubr.bf16.mxu0 0
      %2162 = vmatmul.mubr.bf16.gmra.mxu0 %v726
      %v2163 = vpop.f32.mrf.mxu0
      %v2164 = vadd.f32 0.0, %v2163
      %v2165 = vpop.f32.mrf.mxu0
      %v2166 = vpop.f32.mrf.mxu0
      %v2167 = vadd.f32 0.0, %v2166
      %v2168 = vpop.f32.mrf.mxu0
      %2169 = vmatprep.mubr.bf16.mxu0 0
      %2170 = vmatmul.mubr.bf16.gmra.mxu0 %v727
      %v2171 = vpop.f32.mrf.mxu0
      %v2172 = vadd.f32 0.0, %v2171
      %v2173 = vpop.f32.mrf.mxu0
      %v2174 = vpop.f32.mrf.mxu0
      %v2175 = vadd.f32 0.0, %v2174
      %v2176 = vpop.f32.mrf.mxu0
      %2177 = vmatprep.mubr.bf16.mxu0 0
      %2178 = vmatmul.mubr.bf16.gmra.mxu0 %v728
      %v2179 = vpop.f32.mrf.mxu0
      %v2180 = vadd.f32 0.0, %v2179
      %v2181 = vpop.f32.mrf.mxu0
      %v2182 = vpop.f32.mrf.mxu0
      %v2183 = vadd.f32 0.0, %v2182
      %v2184 = vpop.f32.mrf.mxu0
      %2185 = vmatprep.mubr.bf16.mxu0 0
      %2186 = vmatmul.mubr.bf16.gmra.mxu0 %v729
      %v2187 = vpop.f32.mrf.mxu0
      %v2188 = vadd.f32 0.0, %v2187
      %v2189 = vpop.f32.mrf.mxu0
      %v2190 = vpop.f32.mrf.mxu0
      %v2191 = vadd.f32 0.0, %v2190
      %v2192 = vpop.f32.mrf.mxu0
      %2193 = vmatprep.mubr.bf16.mxu0 0
      %2194 = vmatmul.mubr.bf16.gmra.mxu0 %v730
      %v2195 = vpop.f32.mrf.mxu0
      %v2196 = vadd.f32 0.0, %v2195
      %v2197 = vpop.f32.mrf.mxu0
      %v2198 = vpop.f32.mrf.mxu0
      %v2199 = vadd.f32 0.0, %v2198
      %v2200 = vpop.f32.mrf.mxu0
      %2201 = vmatprep.mubr.bf16.mxu0 0
      %2202 = vmatmul.mubr.bf16.gmra.mxu0 %v731
      %v2203 = vpop.f32.mrf.mxu0
      %v2204 = vadd.f32 0.0, %v2203
      %v2205 = vpop.f32.mrf.mxu0
      %v2206 = vpop.f32.mrf.mxu0
      %v2207 = vadd.f32 0.0, %v2206
      %v2208 = vpop.f32.mrf.mxu0
      %2209 = vmatprep.mubr.bf16.mxu0 0
      %2210 = vmatmul.mubr.bf16.gmra.mxu0 %v732
      %v2211 = vpop.f32.mrf.mxu0
      %v2212 = vadd.f32 0.0, %v2211
      %v2213 = vpop.f32.mrf.mxu0
      %v2214 = vpop.f32.mrf.mxu0
      %v2215 = vadd.f32 0.0, %v2214
      %v2216 = vpop.f32.mrf.mxu0
      %2217 = vmatprep.mubr.bf16.mxu0 0
      %2218 = vmatmul.mubr.bf16.gmra.mxu0 %v733
      %v2219 = vpop.f32.mrf.mxu0
      %v2220 = vadd.f32 0.0, %v2219
      %v2221 = vpop.f32.mrf.mxu0
      %v2222 = vpop.f32.mrf.mxu0
      %v2223 = vadd.f32 0.0, %v2222
      %v2224 = vpop.f32.mrf.mxu0
      %2225 = vmatprep.mubr.bf16.mxu0 0
      %2226 = vmatmul.mubr.bf16.gmra.mxu0 %v734
      %v2227 = vpop.f32.mrf.mxu0
      %v2228 = vadd.f32 0.0, %v2227
      %v2229 = vpop.f32.mrf.mxu0
      %v2230 = vpop.f32.mrf.mxu0
      %v2231 = vadd.f32 0.0, %v2230
      %v2232 = vpop.f32.mrf.mxu0
      %2233 = vmatprep.mubr.bf16.mxu0 0
      %2234 = vmatmul.mubr.bf16.gmra.mxu0 %v2037
      %v2235 = vpop.f32.mrf.mxu0
      %v2236 = vadd.f32 0.0, %v2235
      %v2237 = vpop.f32.mrf.mxu0
      %v2238 = vpop.f32.mrf.mxu0
      %v2239 = vadd.f32 0.0, %v2238
      %v2240 = vpop.f32.mrf.mxu0
      %2241 = vmatprep.mubr.bf16.mxu0 0
      %2242 = vmatmul.mubr.bf16.gmra.mxu0 %v2038
      %v2243 = vpop.f32.mrf.mxu0
      %v2244 = vadd.f32 0.0, %v2243
      %v2245 = vpop.f32.mrf.mxu0
      %v2246 = vpop.f32.mrf.mxu0
      %v2247 = vadd.f32 0.0, %v2246
      %v2248 = vpop.f32.mrf.mxu0
      %2249 = vdwg.mxu0
      %v2250 = vadd.f32 %v1940, %v2124
      %v2251 = vadd.f32 %v1941, %v2127
      %v2252 = vadd.f32 %v1942, %v2132
      %v2253 = vadd.f32 %v1943, %v2135
      %v2254 = vadd.f32 %v1944, %v2140
      %v2255 = vadd.f32 %v1945, %v2143
      %v2256 = vadd.f32 %v1946, %v2148
      %v2257 = vadd.f32 %v1947, %v2151
      %v2258 = vadd.f32 %v1948, %v2156
      %v2259 = vadd.f32 %v1949, %v2159
      %v2260 = vadd.f32 %v1950, %v2164
      %v2261 = vadd.f32 %v1951, %v2167
      %v2262 = vadd.f32 %v1952, %v2172
      %v2263 = vadd.f32 %v1953, %v2175
      %v2264 = vadd.f32 %v1954, %v2180
      %v2265 = vadd.f32 %v1955, %v2183
      %v2266 = vadd.f32 %v1956, %v2188
      %v2267 = vadd.f32 %v1957, %v2191
      %v2268 = vadd.f32 %v1958, %v2196
      %v2269 = vadd.f32 %v1959, %v2199
      %v2270 = vadd.f32 %v1960, %v2204
      %v2271 = vadd.f32 %v1961, %v2207
      %v2272 = vadd.f32 %v1962, %v2212
      %v2273 = vadd.f32 %v1963, %v2215
      %v2274 = vadd.f32 %v1964, %v2220
      %v2275 = vadd.f32 %v1965, %v2223
      %v2276 = vadd.f32 %v1966, %v2228
      %v2277 = vadd.f32 %v1967, %v2231
      %v2278 = vadd.f32 %v1968, %v2236
      %v2279 = vadd.f32 %v1969, %v2239
      %v2280 = vadd.f32 %v1970, %v2244
      %v2281 = vadd.f32 %v1971, %v2247
      %v2283 = vrot.slane %v289, 5
      %v2284 = vrot.slane %v2283, 4
      %v2285 = vrot.slane %v290, 5
      %v2286 = vsel %vm1275, %v2284, %v2285
      %v2287 = vrot.slane %v2285, 4
      %v2288 = vrot.slane %v291, 5
      %v2289 = vsel %vm1275, %v2287, %v2288
      %v2290 = vrot.slane %v2288, 4
      %v2291 = vrot.slane %v292, 5
      %v2292 = vsel %vm1275, %v2290, %v2291
      %v2293 = vrot.slane %v2291, 4
      %v2294 = vrot.slane %v293, 5
      %v2295 = vsel %vm1275, %v2293, %v2294
      %s2296 = scalar_lea.vmem %s1, 320
      %v2297 = vld [vmem:[%s2296] sm:$0xf]
      %v2298 = vld [vmem:[%s2296 + $0x4] sm:$0xf]
      %v2299 = vld [vmem:[%s2296 + $0x8] sm:$0xf]
      %v2300 = vld [vmem:[%s2296 + $0xc] sm:$0xf]
      %v2301 = vld [vmem:[%s2296 + $0x10] sm:$0xf]
      %v2302 = vld [vmem:[%s2296 + $0x14] sm:$0xf]
      %v2303 = vld [vmem:[%s2296 + $0x18] sm:$0xf]
      %v2304 = vld [vmem:[%s2296 + $0x1c] sm:$0xf]
      %v2305 = vld [vmem:[%s2296 + $0x20] sm:$0xf]
      %v2306 = vld [vmem:[%s2296 + $0x24] sm:$0xf]
      %v2307 = vld [vmem:[%s2296 + $0x28] sm:$0xf]
      %v2308 = vld [vmem:[%s2296 + $0x2c] sm:$0xf]
      %v2309 = vld [vmem:[%s2296 + $0x30] sm:$0xf]
      %v2310 = vld [vmem:[%s2296 + $0x34] sm:$0xf]
      %v2311 = vld [vmem:[%s2296 + $0x38] sm:$0xf]
      %v2312 = vld [vmem:[%s2296 + $0x3c] sm:$0xf]
      %v2313 = vunpack.c.l.b16 %v2286
      %v2314 = vunpack.c.l.b16 %v2289
      %v2315 = vunpack.c.l.b16 %v2292
      %v2316 = vunpack.c.l.b16 %v2295
      %v2317 = vpack.c.b16 %v2314, %v2313
      %v2318 = vpack.c.b16 %v2316, %v2315
      %v2337 = vunpack.c.l.b16 %v2297
      %v2338 = vunpack.c.l.b16 %v2298
      %v2339 = vunpack.c.l.b16 %v2299
      %v2340 = vunpack.c.l.b16 %v2300
      %v2341 = vunpack.c.l.b16 %v2301
      %v2342 = vunpack.c.l.b16 %v2302
      %v2343 = vunpack.c.l.b16 %v2303
      %v2344 = vunpack.c.l.b16 %v2304
      %v2345 = vunpack.c.l.b16 %v2305
      %v2346 = vunpack.c.l.b16 %v2306
      %v2347 = vunpack.c.l.b16 %v2307
      %v2348 = vunpack.c.l.b16 %v2308
      %v2349 = vunpack.c.l.b16 %v2309
      %v2350 = vunpack.c.l.b16 %v2310
      %v2351 = vunpack.c.l.b16 %v2311
      %v2352 = vunpack.c.l.b16 %v2312
      %v2353 = vpack.c.b16 %v2338, %v2337
      %v2354 = vpack.c.b16 %v2340, %v2339
      %v2355 = vpack.c.b16 %v2342, %v2341
      %v2356 = vpack.c.b16 %v2344, %v2343
      %v2357 = vpack.c.b16 %v2346, %v2345
      %v2358 = vpack.c.b16 %v2348, %v2347
      %v2359 = vpack.c.b16 %v2350, %v2349
      %v2360 = vpack.c.b16 %v2352, %v2351
      %2369 = vmatprep.subr.bf16.mxu0 0
      %2370 = vmatpush1.bf16.msra.mxu0 %v2360
      %2371 = vmatprep.subr.bf16.mxu0 0
      %2372 = vmatpush1.bf16.msra.mxu0 %v2359
      %2373 = vmatprep.subr.bf16.mxu0 0
      %2374 = vmatpush1.bf16.msra.mxu0 %v2358
      %2375 = vmatprep.subr.bf16.mxu0 0
      %2376 = vmatpush1.bf16.msra.mxu0 %v2357
      %2377 = vmatprep.subr.bf16.mxu0 0
      %2378 = vmatpush1.bf16.msra.mxu0 %v2356
      %2379 = vmatprep.subr.bf16.mxu0 0
      %2380 = vmatpush1.bf16.msra.mxu0 %v2355
      %2381 = vmatprep.subr.bf16.mxu0 0
      %2382 = vmatpush1.bf16.msra.mxu0 %v2354
      %2383 = vmatprep.subr.bf16.mxu0 0
      %2384 = vmatpush1.bf16.msra.mxu0 %v2353
      %2385 = vmatprep.subr.bf16.mxu0 0
      %2386 = vmatpush2.bf16.msra.mxu0 0
      %2387 = vmatprep.subr.bf16.mxu0 0
      %2388 = vmatpush2.bf16.msra.mxu0 0
      %2389 = vmatprep.subr.bf16.mxu0 0
      %2390 = vmatpush2.bf16.msra.mxu0 0
      %2391 = vmatprep.subr.bf16.mxu0 0
      %2392 = vmatpush2.bf16.msra.mxu0 0
      %2393 = vmatprep.subr.bf16.mxu0 0
      %2394 = vmatpush2.bf16.msra.mxu0 0
      %2395 = vmatprep.subr.bf16.mxu0 0
      %2396 = vmatpush2.bf16.msra.mxu0 0
      %2397 = vmatprep.subr.bf16.mxu0 0
      %2398 = vmatpush2.bf16.msra.mxu0 0
      %2399 = vmatprep.subr.bf16.mxu0 0
      %2400 = vmatpush2.bf16.msra.mxu0 0
      %2401 = vmatprep.mubr.bf16.mxu0 0
      %2402 = vmatmul.mubr.bf16.gmra.mxu0 %v1431
      %v2403 = vpop.f32.mrf.mxu0
      %v2404 = vadd.f32 0.0, %v2403
      %v2405 = vpop.f32.mrf.mxu0
      %v2406 = vpop.f32.mrf.mxu0
      %v2407 = vadd.f32 0.0, %v2406
      %v2408 = vpop.f32.mrf.mxu0
      %2409 = vmatprep.mubr.bf16.mxu0 0
      %2410 = vmatmul.mubr.bf16.gmra.mxu0 %v1432
      %v2411 = vpop.f32.mrf.mxu0
      %v2412 = vadd.f32 0.0, %v2411
      %v2413 = vpop.f32.mrf.mxu0
      %v2414 = vpop.f32.mrf.mxu0
      %v2415 = vadd.f32 0.0, %v2414
      %v2416 = vpop.f32.mrf.mxu0
      %2417 = vmatprep.mubr.bf16.mxu0 0
      %2418 = vmatmul.mubr.bf16.gmra.mxu0 %v1433
      %v2419 = vpop.f32.mrf.mxu0
      %v2420 = vadd.f32 0.0, %v2419
      %v2421 = vpop.f32.mrf.mxu0
      %v2422 = vpop.f32.mrf.mxu0
      %v2423 = vadd.f32 0.0, %v2422
      %v2424 = vpop.f32.mrf.mxu0
      %2425 = vmatprep.mubr.bf16.mxu0 0
      %2426 = vmatmul.mubr.bf16.gmra.mxu0 %v1434
      %v2427 = vpop.f32.mrf.mxu0
      %v2428 = vadd.f32 0.0, %v2427
      %v2429 = vpop.f32.mrf.mxu0
      %v2430 = vpop.f32.mrf.mxu0
      %v2431 = vadd.f32 0.0, %v2430
      %v2432 = vpop.f32.mrf.mxu0
      %2433 = vmatprep.mubr.bf16.mxu0 0
      %2434 = vmatmul.mubr.bf16.gmra.mxu0 %v1435
      %v2435 = vpop.f32.mrf.mxu0
      %v2436 = vadd.f32 0.0, %v2435
      %v2437 = vpop.f32.mrf.mxu0
      %v2438 = vpop.f32.mrf.mxu0
      %v2439 = vadd.f32 0.0, %v2438
      %v2440 = vpop.f32.mrf.mxu0
      %2441 = vmatprep.mubr.bf16.mxu0 0
      %2442 = vmatmul.mubr.bf16.gmra.mxu0 %v1436
      %v2443 = vpop.f32.mrf.mxu0
      %v2444 = vadd.f32 0.0, %v2443
      %v2445 = vpop.f32.mrf.mxu0
      %v2446 = vpop.f32.mrf.mxu0
      %v2447 = vadd.f32 0.0, %v2446
      %v2448 = vpop.f32.mrf.mxu0
      %2449 = vmatprep.mubr.bf16.mxu0 0
      %2450 = vmatmul.mubr.bf16.gmra.mxu0 %v1437
      %v2451 = vpop.f32.mrf.mxu0
      %v2452 = vadd.f32 0.0, %v2451
      %v2453 = vpop.f32.mrf.mxu0
      %v2454 = vpop.f32.mrf.mxu0
      %v2455 = vadd.f32 0.0, %v2454
      %v2456 = vpop.f32.mrf.mxu0
      %2457 = vmatprep.mubr.bf16.mxu0 0
      %2458 = vmatmul.mubr.bf16.gmra.mxu0 %v1438
      %v2459 = vpop.f32.mrf.mxu0
      %v2460 = vadd.f32 0.0, %v2459
      %v2461 = vpop.f32.mrf.mxu0
      %v2462 = vpop.f32.mrf.mxu0
      %v2463 = vadd.f32 0.0, %v2462
      %v2464 = vpop.f32.mrf.mxu0
      %2465 = vmatprep.mubr.bf16.mxu0 0
      %2466 = vmatmul.mubr.bf16.gmra.mxu0 %v1439
      %v2467 = vpop.f32.mrf.mxu0
      %v2468 = vadd.f32 0.0, %v2467
      %v2469 = vpop.f32.mrf.mxu0
      %v2470 = vpop.f32.mrf.mxu0
      %v2471 = vadd.f32 0.0, %v2470
      %v2472 = vpop.f32.mrf.mxu0
      %2473 = vmatprep.mubr.bf16.mxu0 0
      %2474 = vmatmul.mubr.bf16.gmra.mxu0 %v1440
      %v2475 = vpop.f32.mrf.mxu0
      %v2476 = vadd.f32 0.0, %v2475
      %v2477 = vpop.f32.mrf.mxu0
      %v2478 = vpop.f32.mrf.mxu0
      %v2479 = vadd.f32 0.0, %v2478
      %v2480 = vpop.f32.mrf.mxu0
      %2481 = vmatprep.mubr.bf16.mxu0 0
      %2482 = vmatmul.mubr.bf16.gmra.mxu0 %v1441
      %v2483 = vpop.f32.mrf.mxu0
      %v2484 = vadd.f32 0.0, %v2483
      %v2485 = vpop.f32.mrf.mxu0
      %v2486 = vpop.f32.mrf.mxu0
      %v2487 = vadd.f32 0.0, %v2486
      %v2488 = vpop.f32.mrf.mxu0
      %2489 = vmatprep.mubr.bf16.mxu0 0
      %2490 = vmatmul.mubr.bf16.gmra.mxu0 %v1442
      %v2491 = vpop.f32.mrf.mxu0
      %v2492 = vadd.f32 0.0, %v2491
      %v2493 = vpop.f32.mrf.mxu0
      %v2494 = vpop.f32.mrf.mxu0
      %v2495 = vadd.f32 0.0, %v2494
      %v2496 = vpop.f32.mrf.mxu0
      %2497 = vmatprep.mubr.bf16.mxu0 0
      %2498 = vmatmul.mubr.bf16.gmra.mxu0 %v1443
      %v2499 = vpop.f32.mrf.mxu0
      %v2500 = vadd.f32 0.0, %v2499
      %v2501 = vpop.f32.mrf.mxu0
      %v2502 = vpop.f32.mrf.mxu0
      %v2503 = vadd.f32 0.0, %v2502
      %v2504 = vpop.f32.mrf.mxu0
      %2505 = vmatprep.mubr.bf16.mxu0 0
      %2506 = vmatmul.mubr.bf16.gmra.mxu0 %v1444
      %v2507 = vpop.f32.mrf.mxu0
      %v2508 = vadd.f32 0.0, %v2507
      %v2509 = vpop.f32.mrf.mxu0
      %v2510 = vpop.f32.mrf.mxu0
      %v2511 = vadd.f32 0.0, %v2510
      %v2512 = vpop.f32.mrf.mxu0
      %2513 = vmatprep.mubr.bf16.mxu0 0
      %2514 = vmatmul.mubr.bf16.gmra.mxu0 %v2317
      %v2515 = vpop.f32.mrf.mxu0
      %v2516 = vadd.f32 0.0, %v2515
      %v2517 = vpop.f32.mrf.mxu0
      %v2518 = vpop.f32.mrf.mxu0
      %v2519 = vadd.f32 0.0, %v2518
      %v2520 = vpop.f32.mrf.mxu0
      %2521 = vmatprep.mubr.bf16.mxu0 0
      %2522 = vmatmul.mubr.bf16.gmra.mxu0 %v2318
      %v2523 = vpop.f32.mrf.mxu0
      %v2524 = vadd.f32 0.0, %v2523
      %v2525 = vpop.f32.mrf.mxu0
      %v2526 = vpop.f32.mrf.mxu0
      %v2527 = vadd.f32 0.0, %v2526
      %v2528 = vpop.f32.mrf.mxu0
      %2529 = vdwg.mxu0
      %v2530 = vadd.f32 %v2250, %v2404
      %v2531 = vadd.f32 %v2251, %v2407
      %v2532 = vadd.f32 %v2252, %v2412
      %v2533 = vadd.f32 %v2253, %v2415
      %v2534 = vadd.f32 %v2254, %v2420
      %v2535 = vadd.f32 %v2255, %v2423
      %v2536 = vadd.f32 %v2256, %v2428
      %v2537 = vadd.f32 %v2257, %v2431
      %v2538 = vadd.f32 %v2258, %v2436
      %v2539 = vadd.f32 %v2259, %v2439
      %v2540 = vadd.f32 %v2260, %v2444
      %v2541 = vadd.f32 %v2261, %v2447
      %v2542 = vadd.f32 %v2262, %v2452
      %v2543 = vadd.f32 %v2263, %v2455
      %v2544 = vadd.f32 %v2264, %v2460
      %v2545 = vadd.f32 %v2265, %v2463
      %v2546 = vadd.f32 %v2266, %v2468
      %v2547 = vadd.f32 %v2267, %v2471
      %v2548 = vadd.f32 %v2268, %v2476
      %v2549 = vadd.f32 %v2269, %v2479
      %v2550 = vadd.f32 %v2270, %v2484
      %v2551 = vadd.f32 %v2271, %v2487
      %v2552 = vadd.f32 %v2272, %v2492
      %v2553 = vadd.f32 %v2273, %v2495
      %v2554 = vadd.f32 %v2274, %v2500
      %v2555 = vadd.f32 %v2275, %v2503
      %v2556 = vadd.f32 %v2276, %v2508
      %v2557 = vadd.f32 %v2277, %v2511
      %v2558 = vadd.f32 %v2278, %v2516
      %v2559 = vadd.f32 %v2279, %v2519
      %v2560 = vadd.f32 %v2280, %v2524
      %v2561 = vadd.f32 %v2281, %v2527
      %s2562 = scalar_lea.vmem %s1, 384
      %v2563 = vld [vmem:[%s2562] sm:$0xf]
      %v2564 = vld [vmem:[%s2562 + $0x4] sm:$0xf]
      %v2565 = vld [vmem:[%s2562 + $0x8] sm:$0xf]
      %v2566 = vld [vmem:[%s2562 + $0xc] sm:$0xf]
      %v2567 = vld [vmem:[%s2562 + $0x10] sm:$0xf]
      %v2568 = vld [vmem:[%s2562 + $0x14] sm:$0xf]
      %v2569 = vld [vmem:[%s2562 + $0x18] sm:$0xf]
      %v2570 = vld [vmem:[%s2562 + $0x1c] sm:$0xf]
      %v2571 = vld [vmem:[%s2562 + $0x20] sm:$0xf]
      %v2572 = vld [vmem:[%s2562 + $0x24] sm:$0xf]
      %v2573 = vld [vmem:[%s2562 + $0x28] sm:$0xf]
      %v2574 = vld [vmem:[%s2562 + $0x2c] sm:$0xf]
      %v2575 = vld [vmem:[%s2562 + $0x30] sm:$0xf]
      %v2576 = vld [vmem:[%s2562 + $0x34] sm:$0xf]
      %v2577 = vld [vmem:[%s2562 + $0x38] sm:$0xf]
      %v2578 = vld [vmem:[%s2562 + $0x3c] sm:$0xf]
      %v2583 = vunpack.c.l.b16 %v294
      %v2584 = vunpack.c.l.b16 %v295
      %v2585 = vunpack.c.l.b16 %v296
      %v2586 = vunpack.c.l.b16 %v297
      %v2587 = vpack.c.b16 %v2584, %v2583
      %v2588 = vpack.c.b16 %v2586, %v2585
      %v2607 = vunpack.c.l.b16 %v2563
      %v2608 = vunpack.c.l.b16 %v2564
      %v2609 = vunpack.c.l.b16 %v2565
      %v2610 = vunpack.c.l.b16 %v2566
      %v2611 = vunpack.c.l.b16 %v2567
      %v2612 = vunpack.c.l.b16 %v2568
      %v2613 = vunpack.c.l.b16 %v2569
      %v2614 = vunpack.c.l.b16 %v2570
      %v2615 = vunpack.c.l.b16 %v2571
      %v2616 = vunpack.c.l.b16 %v2572
      %v2617 = vunpack.c.l.b16 %v2573
      %v2618 = vunpack.c.l.b16 %v2574
      %v2619 = vunpack.c.l.b16 %v2575
      %v2620 = vunpack.c.l.b16 %v2576
      %v2621 = vunpack.c.l.b16 %v2577
      %v2622 = vunpack.c.l.b16 %v2578
      %v2623 = vpack.c.b16 %v2608, %v2607
      %v2624 = vpack.c.b16 %v2610, %v2609
      %v2625 = vpack.c.b16 %v2612, %v2611
      %v2626 = vpack.c.b16 %v2614, %v2613
      %v2627 = vpack.c.b16 %v2616, %v2615
      %v2628 = vpack.c.b16 %v2618, %v2617
      %v2629 = vpack.c.b16 %v2620, %v2619
      %v2630 = vpack.c.b16 %v2622, %v2621
      %2639 = vmatprep.subr.bf16.mxu0 0
      %2640 = vmatpush1.bf16.msra.mxu0 %v2630
      %2641 = vmatprep.subr.bf16.mxu0 0
      %2642 = vmatpush1.bf16.msra.mxu0 %v2629
      %2643 = vmatprep.subr.bf16.mxu0 0
      %2644 = vmatpush1.bf16.msra.mxu0 %v2628
      %2645 = vmatprep.subr.bf16.mxu0 0
      %2646 = vmatpush1.bf16.msra.mxu0 %v2627
      %2647 = vmatprep.subr.bf16.mxu0 0
      %2648 = vmatpush1.bf16.msra.mxu0 %v2626
      %2649 = vmatprep.subr.bf16.mxu0 0
      %2650 = vmatpush1.bf16.msra.mxu0 %v2625
      %2651 = vmatprep.subr.bf16.mxu0 0
      %2652 = vmatpush1.bf16.msra.mxu0 %v2624
      %2653 = vmatprep.subr.bf16.mxu0 0
      %2654 = vmatpush1.bf16.msra.mxu0 %v2623
      %2655 = vmatprep.subr.bf16.mxu0 0
      %2656 = vmatpush2.bf16.msra.mxu0 0
      %2657 = vmatprep.subr.bf16.mxu0 0
      %2658 = vmatpush2.bf16.msra.mxu0 0
      %2659 = vmatprep.subr.bf16.mxu0 0
      %2660 = vmatpush2.bf16.msra.mxu0 0
      %2661 = vmatprep.subr.bf16.mxu0 0
      %2662 = vmatpush2.bf16.msra.mxu0 0
      %2663 = vmatprep.subr.bf16.mxu0 0
      %2664 = vmatpush2.bf16.msra.mxu0 0
      %2665 = vmatprep.subr.bf16.mxu0 0
      %2666 = vmatpush2.bf16.msra.mxu0 0
      %2667 = vmatprep.subr.bf16.mxu0 0
      %2668 = vmatpush2.bf16.msra.mxu0 0
      %2669 = vmatprep.subr.bf16.mxu0 0
      %2670 = vmatpush2.bf16.msra.mxu0 0
      %2671 = vmatprep.mubr.bf16.mxu0 0
      %2672 = vmatmul.mubr.bf16.gmra.mxu0 %v1028
      %v2673 = vpop.f32.mrf.mxu0
      %v2674 = vadd.f32 0.0, %v2673
      %v2675 = vpop.f32.mrf.mxu0
      %v2676 = vpop.f32.mrf.mxu0
      %v2677 = vadd.f32 0.0, %v2676
      %v2678 = vpop.f32.mrf.mxu0
      %2679 = vmatprep.mubr.bf16.mxu0 0
      %2680 = vmatmul.mubr.bf16.gmra.mxu0 %v1029
      %v2681 = vpop.f32.mrf.mxu0
      %v2682 = vadd.f32 0.0, %v2681
      %v2683 = vpop.f32.mrf.mxu0
      %v2684 = vpop.f32.mrf.mxu0
      %v2685 = vadd.f32 0.0, %v2684
      %v2686 = vpop.f32.mrf.mxu0
      %2687 = vmatprep.mubr.bf16.mxu0 0
      %2688 = vmatmul.mubr.bf16.gmra.mxu0 %v1030
      %v2689 = vpop.f32.mrf.mxu0
      %v2690 = vadd.f32 0.0, %v2689
      %v2691 = vpop.f32.mrf.mxu0
      %v2692 = vpop.f32.mrf.mxu0
      %v2693 = vadd.f32 0.0, %v2692
      %v2694 = vpop.f32.mrf.mxu0
      %2695 = vmatprep.mubr.bf16.mxu0 0
      %2696 = vmatmul.mubr.bf16.gmra.mxu0 %v1031
      %v2697 = vpop.f32.mrf.mxu0
      %v2698 = vadd.f32 0.0, %v2697
      %v2699 = vpop.f32.mrf.mxu0
      %v2700 = vpop.f32.mrf.mxu0
      %v2701 = vadd.f32 0.0, %v2700
      %v2702 = vpop.f32.mrf.mxu0
      %2703 = vmatprep.mubr.bf16.mxu0 0
      %2704 = vmatmul.mubr.bf16.gmra.mxu0 %v1032
      %v2705 = vpop.f32.mrf.mxu0
      %v2706 = vadd.f32 0.0, %v2705
      %v2707 = vpop.f32.mrf.mxu0
      %v2708 = vpop.f32.mrf.mxu0
      %v2709 = vadd.f32 0.0, %v2708
      %v2710 = vpop.f32.mrf.mxu0
      %2711 = vmatprep.mubr.bf16.mxu0 0
      %2712 = vmatmul.mubr.bf16.gmra.mxu0 %v1033
      %v2713 = vpop.f32.mrf.mxu0
      %v2714 = vadd.f32 0.0, %v2713
      %v2715 = vpop.f32.mrf.mxu0
      %v2716 = vpop.f32.mrf.mxu0
      %v2717 = vadd.f32 0.0, %v2716
      %v2718 = vpop.f32.mrf.mxu0
      %2719 = vmatprep.mubr.bf16.mxu0 0
      %2720 = vmatmul.mubr.bf16.gmra.mxu0 %v1034
      %v2721 = vpop.f32.mrf.mxu0
      %v2722 = vadd.f32 0.0, %v2721
      %v2723 = vpop.f32.mrf.mxu0
      %v2724 = vpop.f32.mrf.mxu0
      %v2725 = vadd.f32 0.0, %v2724
      %v2726 = vpop.f32.mrf.mxu0
      %2727 = vmatprep.mubr.bf16.mxu0 0
      %2728 = vmatmul.mubr.bf16.gmra.mxu0 %v1035
      %v2729 = vpop.f32.mrf.mxu0
      %v2730 = vadd.f32 0.0, %v2729
      %v2731 = vpop.f32.mrf.mxu0
      %v2732 = vpop.f32.mrf.mxu0
      %v2733 = vadd.f32 0.0, %v2732
      %v2734 = vpop.f32.mrf.mxu0
      %2735 = vmatprep.mubr.bf16.mxu0 0
      %2736 = vmatmul.mubr.bf16.gmra.mxu0 %v1036
      %v2737 = vpop.f32.mrf.mxu0
      %v2738 = vadd.f32 0.0, %v2737
      %v2739 = vpop.f32.mrf.mxu0
      %v2740 = vpop.f32.mrf.mxu0
      %v2741 = vadd.f32 0.0, %v2740
      %v2742 = vpop.f32.mrf.mxu0
      %2743 = vmatprep.mubr.bf16.mxu0 0
      %2744 = vmatmul.mubr.bf16.gmra.mxu0 %v1037
      %v2745 = vpop.f32.mrf.mxu0
      %v2746 = vadd.f32 0.0, %v2745
      %v2747 = vpop.f32.mrf.mxu0
      %v2748 = vpop.f32.mrf.mxu0
      %v2749 = vadd.f32 0.0, %v2748
      %v2750 = vpop.f32.mrf.mxu0
      %2751 = vmatprep.mubr.bf16.mxu0 0
      %2752 = vmatmul.mubr.bf16.gmra.mxu0 %v1038
      %v2753 = vpop.f32.mrf.mxu0
      %v2754 = vadd.f32 0.0, %v2753
      %v2755 = vpop.f32.mrf.mxu0
      %v2756 = vpop.f32.mrf.mxu0
      %v2757 = vadd.f32 0.0, %v2756
      %v2758 = vpop.f32.mrf.mxu0
      %2759 = vmatprep.mubr.bf16.mxu0 0
      %2760 = vmatmul.mubr.bf16.gmra.mxu0 %v1039
      %v2761 = vpop.f32.mrf.mxu0
      %v2762 = vadd.f32 0.0, %v2761
      %v2763 = vpop.f32.mrf.mxu0
      %v2764 = vpop.f32.mrf.mxu0
      %v2765 = vadd.f32 0.0, %v2764
      %v2766 = vpop.f32.mrf.mxu0
      %2767 = vmatprep.mubr.bf16.mxu0 0
      %2768 = vmatmul.mubr.bf16.gmra.mxu0 %v1727
      %v2769 = vpop.f32.mrf.mxu0
      %v2770 = vadd.f32 0.0, %v2769
      %v2771 = vpop.f32.mrf.mxu0
      %v2772 = vpop.f32.mrf.mxu0
      %v2773 = vadd.f32 0.0, %v2772
      %v2774 = vpop.f32.mrf.mxu0
      %2775 = vmatprep.mubr.bf16.mxu0 0
      %2776 = vmatmul.mubr.bf16.gmra.mxu0 %v1728
      %v2777 = vpop.f32.mrf.mxu0
      %v2778 = vadd.f32 0.0, %v2777
      %v2779 = vpop.f32.mrf.mxu0
      %v2780 = vpop.f32.mrf.mxu0
      %v2781 = vadd.f32 0.0, %v2780
      %v2782 = vpop.f32.mrf.mxu0
      %2783 = vmatprep.mubr.bf16.mxu0 0
      %2784 = vmatmul.mubr.bf16.gmra.mxu0 %v2587
      %v2785 = vpop.f32.mrf.mxu0
      %v2786 = vadd.f32 0.0, %v2785
      %v2787 = vpop.f32.mrf.mxu0
      %v2788 = vpop.f32.mrf.mxu0
      %v2789 = vadd.f32 0.0, %v2788
      %v2790 = vpop.f32.mrf.mxu0
      %2791 = vmatprep.mubr.bf16.mxu0 0
      %2792 = vmatmul.mubr.bf16.gmra.mxu0 %v2588
      %v2793 = vpop.f32.mrf.mxu0
      %v2794 = vadd.f32 0.0, %v2793
      %v2795 = vpop.f32.mrf.mxu0
      %v2796 = vpop.f32.mrf.mxu0
      %v2797 = vadd.f32 0.0, %v2796
      %v2798 = vpop.f32.mrf.mxu0
      %2799 = vdwg.mxu0
      %v2800 = vadd.f32 %v2530, %v2674
      %v2801 = vadd.f32 %v2531, %v2677
      %v2802 = vadd.f32 %v2532, %v2682
      %v2803 = vadd.f32 %v2533, %v2685
      %v2804 = vadd.f32 %v2534, %v2690
      %v2805 = vadd.f32 %v2535, %v2693
      %v2806 = vadd.f32 %v2536, %v2698
      %v2807 = vadd.f32 %v2537, %v2701
      %v2808 = vadd.f32 %v2538, %v2706
      %v2809 = vadd.f32 %v2539, %v2709
      %v2810 = vadd.f32 %v2540, %v2714
      %v2811 = vadd.f32 %v2541, %v2717
      %v2812 = vadd.f32 %v2542, %v2722
      %v2813 = vadd.f32 %v2543, %v2725
      %v2814 = vadd.f32 %v2544, %v2730
      %v2815 = vadd.f32 %v2545, %v2733
      %v2816 = vadd.f32 %v2546, %v2738
      %v2817 = vadd.f32 %v2547, %v2741
      %v2818 = vadd.f32 %v2548, %v2746
      %v2819 = vadd.f32 %v2549, %v2749
      %v2820 = vadd.f32 %v2550, %v2754
      %v2821 = vadd.f32 %v2551, %v2757
      %v2822 = vadd.f32 %v2552, %v2762
      %v2823 = vadd.f32 %v2553, %v2765
      %v2824 = vadd.f32 %v2554, %v2770
      %v2825 = vadd.f32 %v2555, %v2773
      %v2826 = vadd.f32 %v2556, %v2778
      %v2827 = vadd.f32 %v2557, %v2781
      %v2828 = vadd.f32 %v2558, %v2786
      %v2829 = vadd.f32 %v2559, %v2789
      %v2830 = vadd.f32 %v2560, %v2794
      %v2831 = vadd.f32 %v2561, %v2797
      %v2833 = vshrl.u32 %v294, 16
      %v2835 = vrot.slane %v2833, 4
      %v2836 = vshll.u32 %v294, 16
      %v2838 = vrot.slane %v2836, 5
      %v2839 = vor.u32 %v2835, %v2838
      %v2840 = vrot.slane %v2839, 4
      %v2842 = vshll.u32 %v295, 16
      %v2844 = vrot.slane %v2842, 5
      %v2845 = vsel %vm317, %v2840, %v2844
      %v2846 = vshrl.u32 %v295, 16
      %v2848 = vrot.slane %v2846, 4
      %v2849 = vor.u32 %v2848, %v2844
      %v2850 = vrot.slane %v2849, 4
      %v2852 = vshll.u32 %v296, 16
      %v2854 = vrot.slane %v2852, 5
      %v2855 = vsel %vm317, %v2850, %v2854
      %v2856 = vshrl.u32 %v296, 16
      %v2858 = vrot.slane %v2856, 4
      %v2859 = vor.u32 %v2858, %v2854
      %v2860 = vrot.slane %v2859, 4
      %v2862 = vshll.u32 %v297, 16
      %v2864 = vrot.slane %v2862, 5
      %v2865 = vsel %vm317, %v2860, %v2864
      %v2866 = vshrl.u32 %v297, 16
      %v2868 = vrot.slane %v2866, 4
      %v2869 = vor.u32 %v2868, %v2864
      %v2870 = vrot.slane %v2869, 4
      %v2872 = vshll.u32 %v298, 16
      %v2874 = vrot.slane %v2872, 5
      %v2875 = vsel %vm317, %v2870, %v2874
      %s2876 = scalar_lea.vmem %s1, 448
      %v2877 = vld [vmem:[%s2876] sm:$0xf]
      %v2878 = vld [vmem:[%s2876 + $0x4] sm:$0xf]
      %v2879 = vld [vmem:[%s2876 + $0x8] sm:$0xf]
      %v2880 = vld [vmem:[%s2876 + $0xc] sm:$0xf]
      %v2881 = vld [vmem:[%s2876 + $0x10] sm:$0xf]
      %v2882 = vld [vmem:[%s2876 + $0x14] sm:$0xf]
      %v2883 = vld [vmem:[%s2876 + $0x18] sm:$0xf]
      %v2884 = vld [vmem:[%s2876 + $0x1c] sm:$0xf]
      %v2885 = vld [vmem:[%s2876 + $0x20] sm:$0xf]
      %v2886 = vld [vmem:[%s2876 + $0x24] sm:$0xf]
      %v2887 = vld [vmem:[%s2876 + $0x28] sm:$0xf]
      %v2888 = vld [vmem:[%s2876 + $0x2c] sm:$0xf]
      %v2889 = vld [vmem:[%s2876 + $0x30] sm:$0xf]
      %v2890 = vld [vmem:[%s2876 + $0x34] sm:$0xf]
      %v2891 = vld [vmem:[%s2876 + $0x38] sm:$0xf]
      %v2892 = vld [vmem:[%s2876 + $0x3c] sm:$0xf]
      %v2893 = vunpack.c.l.b16 %v2845
      %v2894 = vunpack.c.l.b16 %v2855
      %v2895 = vunpack.c.l.b16 %v2865
      %v2896 = vunpack.c.l.b16 %v2875
      %v2897 = vpack.c.b16 %v2894, %v2893
      %v2898 = vpack.c.b16 %v2896, %v2895
      %v2917 = vunpack.c.l.b16 %v2877
      %v2918 = vunpack.c.l.b16 %v2878
      %v2919 = vunpack.c.l.b16 %v2879
      %v2920 = vunpack.c.l.b16 %v2880
      %v2921 = vunpack.c.l.b16 %v2881
      %v2922 = vunpack.c.l.b16 %v2882
      %v2923 = vunpack.c.l.b16 %v2883
      %v2924 = vunpack.c.l.b16 %v2884
      %v2925 = vunpack.c.l.b16 %v2885
      %v2926 = vunpack.c.l.b16 %v2886
      %v2927 = vunpack.c.l.b16 %v2887
      %v2928 = vunpack.c.l.b16 %v2888
      %v2929 = vunpack.c.l.b16 %v2889
      %v2930 = vunpack.c.l.b16 %v2890
      %v2931 = vunpack.c.l.b16 %v2891
      %v2932 = vunpack.c.l.b16 %v2892
      %v2933 = vpack.c.b16 %v2918, %v2917
      %v2934 = vpack.c.b16 %v2920, %v2919
      %v2935 = vpack.c.b16 %v2922, %v2921
      %v2936 = vpack.c.b16 %v2924, %v2923
      %v2937 = vpack.c.b16 %v2926, %v2925
      %v2938 = vpack.c.b16 %v2928, %v2927
      %v2939 = vpack.c.b16 %v2930, %v2929
      %v2940 = vpack.c.b16 %v2932, %v2931
      %2949 = vmatprep.subr.bf16.mxu0 0
      %2950 = vmatpush1.bf16.msra.mxu0 %v2940
      %2951 = vmatprep.subr.bf16.mxu0 0
      %2952 = vmatpush1.bf16.msra.mxu0 %v2939
      %2953 = vmatprep.subr.bf16.mxu0 0
      %2954 = vmatpush1.bf16.msra.mxu0 %v2938
      %2955 = vmatprep.subr.bf16.mxu0 0
      %2956 = vmatpush1.bf16.msra.mxu0 %v2937
      %2957 = vmatprep.subr.bf16.mxu0 0
      %2958 = vmatpush1.bf16.msra.mxu0 %v2936
      %2959 = vmatprep.subr.bf16.mxu0 0
      %2960 = vmatpush1.bf16.msra.mxu0 %v2935
      %2961 = vmatprep.subr.bf16.mxu0 0
      %2962 = vmatpush1.bf16.msra.mxu0 %v2934
      %2963 = vmatprep.subr.bf16.mxu0 0
      %2964 = vmatpush1.bf16.msra.mxu0 %v2933
      %2965 = vmatprep.subr.bf16.mxu0 0
      %2966 = vmatpush2.bf16.msra.mxu0 0
      %2967 = vmatprep.subr.bf16.mxu0 0
      %2968 = vmatpush2.bf16.msra.mxu0 0
      %2969 = vmatprep.subr.bf16.mxu0 0
      %2970 = vmatpush2.bf16.msra.mxu0 0
      %2971 = vmatprep.subr.bf16.mxu0 0
      %2972 = vmatpush2.bf16.msra.mxu0 0
      %2973 = vmatprep.subr.bf16.mxu0 0
      %2974 = vmatpush2.bf16.msra.mxu0 0
      %2975 = vmatprep.subr.bf16.mxu0 0
      %2976 = vmatpush2.bf16.msra.mxu0 0
      %2977 = vmatprep.subr.bf16.mxu0 0
      %2978 = vmatpush2.bf16.msra.mxu0 0
      %2979 = vmatprep.subr.bf16.mxu0 0
      %2980 = vmatpush2.bf16.msra.mxu0 0
      %2981 = vmatprep.mubr.bf16.mxu0 0
      %2982 = vmatmul.mubr.bf16.gmra.mxu0 %v723
      %v2983 = vpop.f32.mrf.mxu0
      %v2984 = vadd.f32 0.0, %v2983
      %v2985 = vpop.f32.mrf.mxu0
      %v2986 = vpop.f32.mrf.mxu0
      %v2987 = vadd.f32 0.0, %v2986
      %v2988 = vpop.f32.mrf.mxu0
      %2989 = vmatprep.mubr.bf16.mxu0 0
      %2990 = vmatmul.mubr.bf16.gmra.mxu0 %v724
      %v2991 = vpop.f32.mrf.mxu0
      %v2992 = vadd.f32 0.0, %v2991
      %v2993 = vpop.f32.mrf.mxu0
      %v2994 = vpop.f32.mrf.mxu0
      %v2995 = vadd.f32 0.0, %v2994
      %v2996 = vpop.f32.mrf.mxu0
      %2997 = vmatprep.mubr.bf16.mxu0 0
      %2998 = vmatmul.mubr.bf16.gmra.mxu0 %v725
      %v2999 = vpop.f32.mrf.mxu0
      %v3000 = vadd.f32 0.0, %v2999
      %v3001 = vpop.f32.mrf.mxu0
      %v3002 = vpop.f32.mrf.mxu0
      %v3003 = vadd.f32 0.0, %v3002
      %v3004 = vpop.f32.mrf.mxu0
      %3005 = vmatprep.mubr.bf16.mxu0 0
      %3006 = vmatmul.mubr.bf16.gmra.mxu0 %v726
      %v3007 = vpop.f32.mrf.mxu0
      %v3008 = vadd.f32 0.0, %v3007
      %v3009 = vpop.f32.mrf.mxu0
      %v3010 = vpop.f32.mrf.mxu0
      %v3011 = vadd.f32 0.0, %v3010
      %v3012 = vpop.f32.mrf.mxu0
      %3013 = vmatprep.mubr.bf16.mxu0 0
      %3014 = vmatmul.mubr.bf16.gmra.mxu0 %v727
      %v3015 = vpop.f32.mrf.mxu0
      %v3016 = vadd.f32 0.0, %v3015
      %v3017 = vpop.f32.mrf.mxu0
      %v3018 = vpop.f32.mrf.mxu0
      %v3019 = vadd.f32 0.0, %v3018
      %v3020 = vpop.f32.mrf.mxu0
      %3021 = vmatprep.mubr.bf16.mxu0 0
      %3022 = vmatmul.mubr.bf16.gmra.mxu0 %v728
      %v3023 = vpop.f32.mrf.mxu0
      %v3024 = vadd.f32 0.0, %v3023
      %v3025 = vpop.f32.mrf.mxu0
      %v3026 = vpop.f32.mrf.mxu0
      %v3027 = vadd.f32 0.0, %v3026
      %v3028 = vpop.f32.mrf.mxu0
      %3029 = vmatprep.mubr.bf16.mxu0 0
      %3030 = vmatmul.mubr.bf16.gmra.mxu0 %v729
      %v3031 = vpop.f32.mrf.mxu0
      %v3032 = vadd.f32 0.0, %v3031
      %v3033 = vpop.f32.mrf.mxu0
      %v3034 = vpop.f32.mrf.mxu0
      %v3035 = vadd.f32 0.0, %v3034
      %v3036 = vpop.f32.mrf.mxu0
      %3037 = vmatprep.mubr.bf16.mxu0 0
      %3038 = vmatmul.mubr.bf16.gmra.mxu0 %v730
      %v3039 = vpop.f32.mrf.mxu0
      %v3040 = vadd.f32 0.0, %v3039
      %v3041 = vpop.f32.mrf.mxu0
      %v3042 = vpop.f32.mrf.mxu0
      %v3043 = vadd.f32 0.0, %v3042
      %v3044 = vpop.f32.mrf.mxu0
      %3045 = vmatprep.mubr.bf16.mxu0 0
      %3046 = vmatmul.mubr.bf16.gmra.mxu0 %v731
      %v3047 = vpop.f32.mrf.mxu0
      %v3048 = vadd.f32 0.0, %v3047
      %v3049 = vpop.f32.mrf.mxu0
      %v3050 = vpop.f32.mrf.mxu0
      %v3051 = vadd.f32 0.0, %v3050
      %v3052 = vpop.f32.mrf.mxu0
      %3053 = vmatprep.mubr.bf16.mxu0 0
      %3054 = vmatmul.mubr.bf16.gmra.mxu0 %v732
      %v3055 = vpop.f32.mrf.mxu0
      %v3056 = vadd.f32 0.0, %v3055
      %v3057 = vpop.f32.mrf.mxu0
      %v3058 = vpop.f32.mrf.mxu0
      %v3059 = vadd.f32 0.0, %v3058
      %v3060 = vpop.f32.mrf.mxu0
      %3061 = vmatprep.mubr.bf16.mxu0 0
      %3062 = vmatmul.mubr.bf16.gmra.mxu0 %v733
      %v3063 = vpop.f32.mrf.mxu0
      %v3064 = vadd.f32 0.0, %v3063
      %v3065 = vpop.f32.mrf.mxu0
      %v3066 = vpop.f32.mrf.mxu0
      %v3067 = vadd.f32 0.0, %v3066
      %v3068 = vpop.f32.mrf.mxu0
      %3069 = vmatprep.mubr.bf16.mxu0 0
      %3070 = vmatmul.mubr.bf16.gmra.mxu0 %v734
      %v3071 = vpop.f32.mrf.mxu0
      %v3072 = vadd.f32 0.0, %v3071
      %v3073 = vpop.f32.mrf.mxu0
      %v3074 = vpop.f32.mrf.mxu0
      %v3075 = vadd.f32 0.0, %v3074
      %v3076 = vpop.f32.mrf.mxu0
      %3077 = vmatprep.mubr.bf16.mxu0 0
      %3078 = vmatmul.mubr.bf16.gmra.mxu0 %v2037
      %v3079 = vpop.f32.mrf.mxu0
      %v3080 = vadd.f32 0.0, %v3079
      %v3081 = vpop.f32.mrf.mxu0
      %v3082 = vpop.f32.mrf.mxu0
      %v3083 = vadd.f32 0.0, %v3082
      %v3084 = vpop.f32.mrf.mxu0
      %3085 = vmatprep.mubr.bf16.mxu0 0
      %3086 = vmatmul.mubr.bf16.gmra.mxu0 %v2038
      %v3087 = vpop.f32.mrf.mxu0
      %v3088 = vadd.f32 0.0, %v3087
      %v3089 = vpop.f32.mrf.mxu0
      %v3090 = vpop.f32.mrf.mxu0
      %v3091 = vadd.f32 0.0, %v3090
      %v3092 = vpop.f32.mrf.mxu0
      %3093 = vmatprep.mubr.bf16.mxu0 0
      %3094 = vmatmul.mubr.bf16.gmra.mxu0 %v2897
      %v3095 = vpop.f32.mrf.mxu0
      %v3096 = vadd.f32 0.0, %v3095
      %v3097 = vpop.f32.mrf.mxu0
      %v3098 = vpop.f32.mrf.mxu0
      %v3099 = vadd.f32 0.0, %v3098
      %v3100 = vpop.f32.mrf.mxu0
      %3101 = vmatprep.mubr.bf16.mxu0 0
      %3102 = vmatmul.mubr.bf16.gmra.mxu0 %v2898
      %v3103 = vpop.f32.mrf.mxu0
      %v3104 = vadd.f32 0.0, %v3103
      %v3105 = vpop.f32.mrf.mxu0
      %v3106 = vpop.f32.mrf.mxu0
      %v3107 = vadd.f32 0.0, %v3106
      %v3108 = vpop.f32.mrf.mxu0
      %3109 = vdwg.mxu0
      %v3110 = vadd.f32 %v2800, %v2984
      %v3111 = vadd.f32 %v2801, %v2987
      %v3112 = vadd.f32 %v2802, %v2992
      %v3113 = vadd.f32 %v2803, %v2995
      %v3114 = vadd.f32 %v2804, %v3000
      %v3115 = vadd.f32 %v2805, %v3003
      %v3116 = vadd.f32 %v2806, %v3008
      %v3117 = vadd.f32 %v2807, %v3011
      %v3118 = vadd.f32 %v2808, %v3016
      %v3119 = vadd.f32 %v2809, %v3019
      %v3120 = vadd.f32 %v2810, %v3024
      %v3121 = vadd.f32 %v2811, %v3027
      %v3122 = vadd.f32 %v2812, %v3032
      %v3123 = vadd.f32 %v2813, %v3035
      %v3124 = vadd.f32 %v2814, %v3040
      %v3125 = vadd.f32 %v2815, %v3043
      %v3126 = vadd.f32 %v2816, %v3048
      %v3127 = vadd.f32 %v2817, %v3051
      %v3128 = vadd.f32 %v2818, %v3056
      %v3129 = vadd.f32 %v2819, %v3059
      %v3130 = vadd.f32 %v2820, %v3064
      %v3131 = vadd.f32 %v2821, %v3067
      %v3132 = vadd.f32 %v2822, %v3072
      %v3133 = vadd.f32 %v2823, %v3075
      %v3134 = vadd.f32 %v2824, %v3080
      %v3135 = vadd.f32 %v2825, %v3083
      %v3136 = vadd.f32 %v2826, %v3088
      %v3137 = vadd.f32 %v2827, %v3091
      %v3138 = vadd.f32 %v2828, %v3096
      %v3139 = vadd.f32 %v2829, %v3099
      %v3140 = vadd.f32 %v2830, %v3104
      %v3141 = vadd.f32 %v2831, %v3107
      %v3143 = vrot.slane %v294, 5
      %v3144 = vrot.slane %v3143, 4
      %v3145 = vrot.slane %v295, 5
      %v3146 = vsel %vm1275, %v3144, %v3145
      %v3147 = vrot.slane %v3145, 4
      %v3148 = vrot.slane %v296, 5
      %v3149 = vsel %vm1275, %v3147, %v3148
      %v3150 = vrot.slane %v3148, 4
      %v3151 = vrot.slane %v297, 5
      %v3152 = vsel %vm1275, %v3150, %v3151
      %v3153 = vrot.slane %v3151, 4
      %v3154 = vrot.slane %v298, 5
      %v3155 = vsel %vm1275, %v3153, %v3154
      %s3156 = scalar_lea.vmem %s1, 512
      %v3157 = vld [vmem:[%s3156] sm:$0xf]
      %v3158 = vld [vmem:[%s3156 + $0x4] sm:$0xf]
      %v3159 = vld [vmem:[%s3156 + $0x8] sm:$0xf]
      %v3160 = vld [vmem:[%s3156 + $0xc] sm:$0xf]
      %v3161 = vld [vmem:[%s3156 + $0x10] sm:$0xf]
      %v3162 = vld [vmem:[%s3156 + $0x14] sm:$0xf]
      %v3163 = vld [vmem:[%s3156 + $0x18] sm:$0xf]
      %v3164 = vld [vmem:[%s3156 + $0x1c] sm:$0xf]
      %v3165 = vld [vmem:[%s3156 + $0x20] sm:$0xf]
      %v3166 = vld [vmem:[%s3156 + $0x24] sm:$0xf]
      %v3167 = vld [vmem:[%s3156 + $0x28] sm:$0xf]
      %v3168 = vld [vmem:[%s3156 + $0x2c] sm:$0xf]
      %v3169 = vld [vmem:[%s3156 + $0x30] sm:$0xf]
      %v3170 = vld [vmem:[%s3156 + $0x34] sm:$0xf]
      %v3171 = vld [vmem:[%s3156 + $0x38] sm:$0xf]
      %v3172 = vld [vmem:[%s3156 + $0x3c] sm:$0xf]
      %v3173 = vunpack.c.l.b16 %v3146
      %v3174 = vunpack.c.l.b16 %v3149
      %v3175 = vunpack.c.l.b16 %v3152
      %v3176 = vunpack.c.l.b16 %v3155
      %v3177 = vpack.c.b16 %v3174, %v3173
      %v3178 = vpack.c.b16 %v3176, %v3175
      %v3197 = vunpack.c.l.b16 %v3157
      %v3198 = vunpack.c.l.b16 %v3158
      %v3199 = vunpack.c.l.b16 %v3159
      %v3200 = vunpack.c.l.b16 %v3160
      %v3201 = vunpack.c.l.b16 %v3161
      %v3202 = vunpack.c.l.b16 %v3162
      %v3203 = vunpack.c.l.b16 %v3163
      %v3204 = vunpack.c.l.b16 %v3164
      %v3205 = vunpack.c.l.b16 %v3165
      %v3206 = vunpack.c.l.b16 %v3166
      %v3207 = vunpack.c.l.b16 %v3167
      %v3208 = vunpack.c.l.b16 %v3168
      %v3209 = vunpack.c.l.b16 %v3169
      %v3210 = vunpack.c.l.b16 %v3170
      %v3211 = vunpack.c.l.b16 %v3171
      %v3212 = vunpack.c.l.b16 %v3172
      %v3213 = vpack.c.b16 %v3198, %v3197
      %v3214 = vpack.c.b16 %v3200, %v3199
      %v3215 = vpack.c.b16 %v3202, %v3201
      %v3216 = vpack.c.b16 %v3204, %v3203
      %v3217 = vpack.c.b16 %v3206, %v3205
      %v3218 = vpack.c.b16 %v3208, %v3207
      %v3219 = vpack.c.b16 %v3210, %v3209
      %v3220 = vpack.c.b16 %v3212, %v3211
      %3229 = vmatprep.subr.bf16.mxu0 0
      %3230 = vmatpush1.bf16.msra.mxu0 %v3220
      %3231 = vmatprep.subr.bf16.mxu0 0
      %3232 = vmatpush1.bf16.msra.mxu0 %v3219
      %3233 = vmatprep.subr.bf16.mxu0 0
      %3234 = vmatpush1.bf16.msra.mxu0 %v3218
      %3235 = vmatprep.subr.bf16.mxu0 0
      %3236 = vmatpush1.bf16.msra.mxu0 %v3217
      %3237 = vmatprep.subr.bf16.mxu0 0
      %3238 = vmatpush1.bf16.msra.mxu0 %v3216
      %3239 = vmatprep.subr.bf16.mxu0 0
      %3240 = vmatpush1.bf16.msra.mxu0 %v3215
      %3241 = vmatprep.subr.bf16.mxu0 0
      %3242 = vmatpush1.bf16.msra.mxu0 %v3214
      %3243 = vmatprep.subr.bf16.mxu0 0
      %3244 = vmatpush1.bf16.msra.mxu0 %v3213
      %3245 = vmatprep.subr.bf16.mxu0 0
      %3246 = vmatpush2.bf16.msra.mxu0 0
      %3247 = vmatprep.subr.bf16.mxu0 0
      %3248 = vmatpush2.bf16.msra.mxu0 0
      %3249 = vmatprep.subr.bf16.mxu0 0
      %3250 = vmatpush2.bf16.msra.mxu0 0
      %3251 = vmatprep.subr.bf16.mxu0 0
      %3252 = vmatpush2.bf16.msra.mxu0 0
      %3253 = vmatprep.subr.bf16.mxu0 0
      %3254 = vmatpush2.bf16.msra.mxu0 0
      %3255 = vmatprep.subr.bf16.mxu0 0
      %3256 = vmatpush2.bf16.msra.mxu0 0
      %3257 = vmatprep.subr.bf16.mxu0 0
      %3258 = vmatpush2.bf16.msra.mxu0 0
      %3259 = vmatprep.subr.bf16.mxu0 0
      %3260 = vmatpush2.bf16.msra.mxu0 0
      %3261 = vmatprep.mubr.bf16.mxu0 0
      %3262 = vmatmul.mubr.bf16.gmra.mxu0 %v1433
      %v3263 = vpop.f32.mrf.mxu0
      %v3264 = vadd.f32 0.0, %v3263
      %v3265 = vpop.f32.mrf.mxu0
      %v3266 = vpop.f32.mrf.mxu0
      %v3267 = vadd.f32 0.0, %v3266
      %v3268 = vpop.f32.mrf.mxu0
      %3269 = vmatprep.mubr.bf16.mxu0 0
      %3270 = vmatmul.mubr.bf16.gmra.mxu0 %v1434
      %v3271 = vpop.f32.mrf.mxu0
      %v3272 = vadd.f32 0.0, %v3271
      %v3273 = vpop.f32.mrf.mxu0
      %v3274 = vpop.f32.mrf.mxu0
      %v3275 = vadd.f32 0.0, %v3274
      %v3276 = vpop.f32.mrf.mxu0
      %3277 = vmatprep.mubr.bf16.mxu0 0
      %3278 = vmatmul.mubr.bf16.gmra.mxu0 %v1435
      %v3279 = vpop.f32.mrf.mxu0
      %v3280 = vadd.f32 0.0, %v3279
      %v3281 = vpop.f32.mrf.mxu0
      %v3282 = vpop.f32.mrf.mxu0
      %v3283 = vadd.f32 0.0, %v3282
      %v3284 = vpop.f32.mrf.mxu0
      %3285 = vmatprep.mubr.bf16.mxu0 0
      %3286 = vmatmul.mubr.bf16.gmra.mxu0 %v1436
      %v3287 = vpop.f32.mrf.mxu0
      %v3288 = vadd.f32 0.0, %v3287
      %v3289 = vpop.f32.mrf.mxu0
      %v3290 = vpop.f32.mrf.mxu0
      %v3291 = vadd.f32 0.0, %v3290
      %v3292 = vpop.f32.mrf.mxu0
      %3293 = vmatprep.mubr.bf16.mxu0 0
      %3294 = vmatmul.mubr.bf16.gmra.mxu0 %v1437
      %v3295 = vpop.f32.mrf.mxu0
      %v3296 = vadd.f32 0.0, %v3295
      %v3297 = vpop.f32.mrf.mxu0
      %v3298 = vpop.f32.mrf.mxu0
      %v3299 = vadd.f32 0.0, %v3298
      %v3300 = vpop.f32.mrf.mxu0
      %3301 = vmatprep.mubr.bf16.mxu0 0
      %3302 = vmatmul.mubr.bf16.gmra.mxu0 %v1438
      %v3303 = vpop.f32.mrf.mxu0
      %v3304 = vadd.f32 0.0, %v3303
      %v3305 = vpop.f32.mrf.mxu0
      %v3306 = vpop.f32.mrf.mxu0
      %v3307 = vadd.f32 0.0, %v3306
      %v3308 = vpop.f32.mrf.mxu0
      %3309 = vmatprep.mubr.bf16.mxu0 0
      %3310 = vmatmul.mubr.bf16.gmra.mxu0 %v1439
      %v3311 = vpop.f32.mrf.mxu0
      %v3312 = vadd.f32 0.0, %v3311
      %v3313 = vpop.f32.mrf.mxu0
      %v3314 = vpop.f32.mrf.mxu0
      %v3315 = vadd.f32 0.0, %v3314
      %v3316 = vpop.f32.mrf.mxu0
      %3317 = vmatprep.mubr.bf16.mxu0 0
      %3318 = vmatmul.mubr.bf16.gmra.mxu0 %v1440
      %v3319 = vpop.f32.mrf.mxu0
      %v3320 = vadd.f32 0.0, %v3319
      %v3321 = vpop.f32.mrf.mxu0
      %v3322 = vpop.f32.mrf.mxu0
      %v3323 = vadd.f32 0.0, %v3322
      %v3324 = vpop.f32.mrf.mxu0
      %3325 = vmatprep.mubr.bf16.mxu0 0
      %3326 = vmatmul.mubr.bf16.gmra.mxu0 %v1441
      %v3327 = vpop.f32.mrf.mxu0
      %v3328 = vadd.f32 0.0, %v3327
      %v3329 = vpop.f32.mrf.mxu0
      %v3330 = vpop.f32.mrf.mxu0
      %v3331 = vadd.f32 0.0, %v3330
      %v3332 = vpop.f32.mrf.mxu0
      %3333 = vmatprep.mubr.bf16.mxu0 0
      %3334 = vmatmul.mubr.bf16.gmra.mxu0 %v1442
      %v3335 = vpop.f32.mrf.mxu0
      %v3336 = vadd.f32 0.0, %v3335
      %v3337 = vpop.f32.mrf.mxu0
      %v3338 = vpop.f32.mrf.mxu0
      %v3339 = vadd.f32 0.0, %v3338
      %v3340 = vpop.f32.mrf.mxu0
      %3341 = vmatprep.mubr.bf16.mxu0 0
      %3342 = vmatmul.mubr.bf16.gmra.mxu0 %v1443
      %v3343 = vpop.f32.mrf.mxu0
      %v3344 = vadd.f32 0.0, %v3343
      %v3345 = vpop.f32.mrf.mxu0
      %v3346 = vpop.f32.mrf.mxu0
      %v3347 = vadd.f32 0.0, %v3346
      %v3348 = vpop.f32.mrf.mxu0
      %3349 = vmatprep.mubr.bf16.mxu0 0
      %3350 = vmatmul.mubr.bf16.gmra.mxu0 %v1444
      %v3351 = vpop.f32.mrf.mxu0
      %v3352 = vadd.f32 0.0, %v3351
      %v3353 = vpop.f32.mrf.mxu0
      %v3354 = vpop.f32.mrf.mxu0
      %v3355 = vadd.f32 0.0, %v3354
      %v3356 = vpop.f32.mrf.mxu0
      %3357 = vmatprep.mubr.bf16.mxu0 0
      %3358 = vmatmul.mubr.bf16.gmra.mxu0 %v2317
      %v3359 = vpop.f32.mrf.mxu0
      %v3360 = vadd.f32 0.0, %v3359
      %v3361 = vpop.f32.mrf.mxu0
      %v3362 = vpop.f32.mrf.mxu0
      %v3363 = vadd.f32 0.0, %v3362
      %v3364 = vpop.f32.mrf.mxu0
      %3365 = vmatprep.mubr.bf16.mxu0 0
      %3366 = vmatmul.mubr.bf16.gmra.mxu0 %v2318
      %v3367 = vpop.f32.mrf.mxu0
      %v3368 = vadd.f32 0.0, %v3367
      %v3369 = vpop.f32.mrf.mxu0
      %v3370 = vpop.f32.mrf.mxu0
      %v3371 = vadd.f32 0.0, %v3370
      %v3372 = vpop.f32.mrf.mxu0
      %3373 = vmatprep.mubr.bf16.mxu0 0
      %3374 = vmatmul.mubr.bf16.gmra.mxu0 %v3177
      %v3375 = vpop.f32.mrf.mxu0
      %v3376 = vadd.f32 0.0, %v3375
      %v3377 = vpop.f32.mrf.mxu0
      %v3378 = vpop.f32.mrf.mxu0
      %v3379 = vadd.f32 0.0, %v3378
      %v3380 = vpop.f32.mrf.mxu0
      %3381 = vmatprep.mubr.bf16.mxu0 0
      %3382 = vmatmul.mubr.bf16.gmra.mxu0 %v3178
      %v3383 = vpop.f32.mrf.mxu0
      %v3384 = vadd.f32 0.0, %v3383
      %v3385 = vpop.f32.mrf.mxu0
      %v3386 = vpop.f32.mrf.mxu0
      %v3387 = vadd.f32 0.0, %v3386
      %v3388 = vpop.f32.mrf.mxu0
      %3389 = vdwg.mxu0
      %v3390 = vadd.f32 %v3110, %v3264
      %v3391 = vadd.f32 %v3111, %v3267
      %v3392 = vadd.f32 %v3112, %v3272
      %v3393 = vadd.f32 %v3113, %v3275
      %v3394 = vadd.f32 %v3114, %v3280
      %v3395 = vadd.f32 %v3115, %v3283
      %v3396 = vadd.f32 %v3116, %v3288
      %v3397 = vadd.f32 %v3117, %v3291
      %v3398 = vadd.f32 %v3118, %v3296
      %v3399 = vadd.f32 %v3119, %v3299
      %v3400 = vadd.f32 %v3120, %v3304
      %v3401 = vadd.f32 %v3121, %v3307
      %v3402 = vadd.f32 %v3122, %v3312
      %v3403 = vadd.f32 %v3123, %v3315
      %v3404 = vadd.f32 %v3124, %v3320
      %v3405 = vadd.f32 %v3125, %v3323
      %v3406 = vadd.f32 %v3126, %v3328
      %v3407 = vadd.f32 %v3127, %v3331
      %v3408 = vadd.f32 %v3128, %v3336
      %v3409 = vadd.f32 %v3129, %v3339
      %v3410 = vadd.f32 %v3130, %v3344
      %v3411 = vadd.f32 %v3131, %v3347
      %v3412 = vadd.f32 %v3132, %v3352
      %v3413 = vadd.f32 %v3133, %v3355
      %v3414 = vadd.f32 %v3134, %v3360
      %v3415 = vadd.f32 %v3135, %v3363
      %v3416 = vadd.f32 %v3136, %v3368
      %v3417 = vadd.f32 %v3137, %v3371
      %v3418 = vadd.f32 %v3138, %v3376
      %v3419 = vadd.f32 %v3139, %v3379
      %v3420 = vadd.f32 %v3140, %v3384
      %v3421 = vadd.f32 %v3141, %v3387
      %v3422 = vld [vmem:[%s2] sm:$0x1]
      %v3424 = vlaneseq
      %v3425 = vshrl.u32 %v3424, 7
      %v3426 = vsub.s32 0, %v3425
      %v3427 = vrot.slane %v3422, %v3426
      %v3429 = vadd.f32 %v3390, %v3427
      %v3430 = vadd.f32 %v3391, %v3427
      %v3431 = vadd.f32 %v3392, %v3427
      %v3432 = vadd.f32 %v3393, %v3427
      %v3433 = vadd.f32 %v3394, %v3427
      %v3434 = vadd.f32 %v3395, %v3427
      %v3435 = vadd.f32 %v3396, %v3427
      %v3436 = vadd.f32 %v3397, %v3427
      %v3437 = vadd.f32 %v3398, %v3427
      %v3438 = vadd.f32 %v3399, %v3427
      %v3439 = vadd.f32 %v3400, %v3427
      %v3440 = vadd.f32 %v3401, %v3427
      %v3441 = vadd.f32 %v3402, %v3427
      %v3442 = vadd.f32 %v3403, %v3427
      %v3443 = vadd.f32 %v3404, %v3427
      %v3444 = vadd.f32 %v3405, %v3427
      %v3445 = vadd.f32 %v3406, %v3427
      %v3446 = vadd.f32 %v3407, %v3427
      %v3447 = vadd.f32 %v3408, %v3427
      %v3448 = vadd.f32 %v3409, %v3427
      %v3449 = vadd.f32 %v3410, %v3427
      %v3450 = vadd.f32 %v3411, %v3427
      %v3451 = vadd.f32 %v3412, %v3427
      %v3452 = vadd.f32 %v3413, %v3427
      %v3453 = vadd.f32 %v3414, %v3427
      %v3454 = vadd.f32 %v3415, %v3427
      %v3455 = vadd.f32 %v3416, %v3427
      %v3456 = vadd.f32 %v3417, %v3427
      %v3457 = vadd.f32 %v3418, %v3427
      %v3458 = vadd.f32 %v3419, %v3427
      %v3459 = vadd.f32 %v3420, %v3427
      %v3460 = vadd.f32 %v3421, %v3427
      %v3461 = vpack.c.bf16 %v3430, %v3429
      %v3462 = vpack.c.bf16 %v3432, %v3431
      %v3463 = vpack.c.bf16 %v3434, %v3433
      %v3464 = vpack.c.bf16 %v3436, %v3435
      %v3465 = vpack.c.bf16 %v3438, %v3437
      %v3466 = vpack.c.bf16 %v3440, %v3439
      %v3467 = vpack.c.bf16 %v3442, %v3441
      %v3468 = vpack.c.bf16 %v3444, %v3443
      %v3469 = vpack.c.bf16 %v3446, %v3445
      %v3470 = vpack.c.bf16 %v3448, %v3447
      %v3471 = vpack.c.bf16 %v3450, %v3449
      %v3472 = vpack.c.bf16 %v3452, %v3451
      %v3473 = vpack.c.bf16 %v3454, %v3453
      %v3474 = vpack.c.bf16 %v3456, %v3455
      %v3475 = vpack.c.bf16 %v3458, %v3457
      %v3476 = vpack.c.bf16 %v3460, %v3459
      %v3493 = vunpack.c.l.b16 %v3461
      %v3494 = vunpack.c.h.b16 %v3461
      %v3495 = vunpack.c.l.b16 %v3462
      %v3496 = vunpack.c.h.b16 %v3462
      %v3497 = vunpack.c.l.b16 %v3463
      %v3498 = vunpack.c.h.b16 %v3463
      %v3499 = vunpack.c.l.b16 %v3464
      %v3500 = vunpack.c.h.b16 %v3464
      %v3501 = vunpack.c.l.b16 %v3465
      %v3502 = vunpack.c.h.b16 %v3465
      %v3503 = vunpack.c.l.b16 %v3466
      %v3504 = vunpack.c.h.b16 %v3466
      %v3505 = vunpack.c.l.b16 %v3467
      %v3506 = vunpack.c.h.b16 %v3467
      %v3507 = vunpack.c.l.b16 %v3468
      %v3508 = vunpack.c.h.b16 %v3468
      %v3509 = vunpack.c.l.b16 %v3469
      %v3510 = vunpack.c.h.b16 %v3469
      %v3511 = vunpack.c.l.b16 %v3470
      %v3512 = vunpack.c.h.b16 %v3470
      %v3513 = vunpack.c.l.b16 %v3471
      %v3514 = vunpack.c.h.b16 %v3471
      %v3515 = vunpack.c.l.b16 %v3472
      %v3516 = vunpack.c.h.b16 %v3472
      %v3517 = vunpack.c.l.b16 %v3473
      %v3518 = vunpack.c.h.b16 %v3473
      %v3519 = vunpack.c.l.b16 %v3474
      %v3520 = vunpack.c.h.b16 %v3474
      %v3521 = vunpack.c.l.b16 %v3475
      %v3522 = vunpack.c.h.b16 %v3475
      %v3523 = vunpack.c.l.b16 %v3476
      %v3524 = vunpack.c.h.b16 %v3476
      %v3525 = vpack.c.b16 %v3493, %v3493
      %v3526 = vpack.c.b16 %v3494, %v3494
      %v3527 = vpack.c.b16 %v3495, %v3495
      %v3528 = vpack.c.b16 %v3496, %v3496
      %v3529 = vpack.c.b16 %v3497, %v3497
      %v3530 = vpack.c.b16 %v3498, %v3498
      %v3531 = vpack.c.b16 %v3499, %v3499
      %v3532 = vpack.c.b16 %v3500, %v3500
      %v3533 = vpack.c.b16 %v3501, %v3501
      %v3534 = vpack.c.b16 %v3502, %v3502
      %v3535 = vpack.c.b16 %v3503, %v3503
      %v3536 = vpack.c.b16 %v3504, %v3504
      %v3537 = vpack.c.b16 %v3505, %v3505
      %v3538 = vpack.c.b16 %v3506, %v3506
      %v3539 = vpack.c.b16 %v3507, %v3507
      %v3540 = vpack.c.b16 %v3508, %v3508
      %v3541 = vpack.c.b16 %v3509, %v3509
      %v3542 = vpack.c.b16 %v3510, %v3510
      %v3543 = vpack.c.b16 %v3511, %v3511
      %v3544 = vpack.c.b16 %v3512, %v3512
      %v3545 = vpack.c.b16 %v3513, %v3513
      %v3546 = vpack.c.b16 %v3514, %v3514
      %v3547 = vpack.c.b16 %v3515, %v3515
      %v3548 = vpack.c.b16 %v3516, %v3516
      %v3549 = vpack.c.b16 %v3517, %v3517
      %v3550 = vpack.c.b16 %v3518, %v3518
      %v3551 = vpack.c.b16 %v3519, %v3519
      %v3552 = vpack.c.b16 %v3520, %v3520
      %v3553 = vpack.c.b16 %v3521, %v3521
      %v3554 = vpack.c.b16 %v3522, %v3522
      %v3555 = vpack.c.b16 %v3523, %v3523
      %v3556 = vpack.c.b16 %v3524, %v3524
      %3589 = vst [vmem:[%s234] sm:$0xf] %v3525
      %3590 = vst [vmem:[%s234 + $0x4] sm:$0xf] %v3526
      %3591 = vst [vmem:[%s234 + $0x8] sm:$0xf] %v3527
      %3592 = vst [vmem:[%s234 + $0xc] sm:$0xf] %v3528
      %3593 = vst [vmem:[%s234 + $0x10] sm:$0xf] %v3529
      %3594 = vst [vmem:[%s234 + $0x14] sm:$0xf] %v3530
      %3595 = vst [vmem:[%s234 + $0x18] sm:$0xf] %v3531
      %3596 = vst [vmem:[%s234 + $0x1c] sm:$0xf] %v3532
      %3597 = vst [vmem:[%s234 + $0x20] sm:$0xf] %v3533
      %3598 = vst [vmem:[%s234 + $0x24] sm:$0xf] %v3534
      %3599 = vst [vmem:[%s234 + $0x28] sm:$0xf] %v3535
      %3600 = vst [vmem:[%s234 + $0x2c] sm:$0xf] %v3536
      %3601 = vst [vmem:[%s234 + $0x30] sm:$0xf] %v3537
      %3602 = vst [vmem:[%s234 + $0x34] sm:$0xf] %v3538
      %3603 = vst [vmem:[%s234 + $0x38] sm:$0xf] %v3539
      %3604 = vst [vmem:[%s234 + $0x3c] sm:$0xf] %v3540
      %3605 = vst [vmem:[%s234 + $0x40] sm:$0xf] %v3541
      %3606 = vst [vmem:[%s234 + $0x44] sm:$0xf] %v3542
      %3607 = vst [vmem:[%s234 + $0x48] sm:$0xf] %v3543
      %3608 = vst [vmem:[%s234 + $0x4c] sm:$0xf] %v3544
      %3609 = vst [vmem:[%s234 + $0x50] sm:$0xf] %v3545
      %3610 = vst [vmem:[%s234 + $0x54] sm:$0xf] %v3546
      %3611 = vst [vmem:[%s234 + $0x58] sm:$0xf] %v3547
      %3612 = vst [vmem:[%s234 + $0x5c] sm:$0xf] %v3548
      %3613 = vst [vmem:[%s234 + $0x60] sm:$0xf] %v3549
      %3614 = vst [vmem:[%s234 + $0x64] sm:$0xf] %v3550
      %3615 = vst [vmem:[%s234 + $0x68] sm:$0xf] %v3551
      %3616 = vst [vmem:[%s234 + $0x6c] sm:$0xf] %v3552
      %3617 = vst [vmem:[%s234 + $0x70] sm:$0xf] %v3553
      %3618 = vst [vmem:[%s234 + $0x74] sm:$0xf] %v3554
      %3619 = vst [vmem:[%s234 + $0x78] sm:$0xf] %v3555
      %3620 = vst [vmem:[%s234 + $0x7c] sm:$0xf] %v3556
      %v3621 = vadd.f32 %v3429, %v3430
      %v3622 = vadd.f32 %v3621, %v3431
      %v3623 = vadd.f32 %v3622, %v3432
      %v3624 = vadd.f32 %v3623, %v3433
      %v3625 = vadd.f32 %v3624, %v3434
      %v3626 = vadd.f32 %v3625, %v3435
      %v3627 = vadd.f32 %v3626, %v3436
      %v3628 = vadd.f32 %v3627, %v3437
      %v3629 = vadd.f32 %v3628, %v3438
      %v3630 = vadd.f32 %v3629, %v3439
      %v3631 = vadd.f32 %v3630, %v3440
      %v3632 = vadd.f32 %v3631, %v3441
      %v3633 = vadd.f32 %v3632, %v3442
      %v3634 = vadd.f32 %v3633, %v3443
      %v3635 = vadd.f32 %v3634, %v3444
      %v3636 = vadd.f32 %v3635, %v3445
      %v3637 = vadd.f32 %v3636, %v3446
      %v3638 = vadd.f32 %v3637, %v3447
      %v3639 = vadd.f32 %v3638, %v3448
      %v3640 = vadd.f32 %v3639, %v3449
      %v3641 = vadd.f32 %v3640, %v3450
      %v3642 = vadd.f32 %v3641, %v3451
      %v3643 = vadd.f32 %v3642, %v3452
      %v3644 = vadd.f32 %v3643, %v3453
      %v3645 = vadd.f32 %v3644, %v3454
      %v3646 = vadd.f32 %v3645, %v3455
      %v3647 = vadd.f32 %v3646, %v3456
      %v3648 = vadd.f32 %v3647, %v3457
      %v3649 = vadd.f32 %v3648, %v3458
      %v3650 = vadd.f32 %v3649, %v3459
      %v3651 = vadd.f32 %v3650, %v3460
      %v3652 = vrot.slane %v3651, 4
      %v3653 = vadd.f32 %v3651, %v3652
      %v3654 = vrot.slane %v3653, 2
      %v3655 = vadd.f32 %v3653, %v3654
      %v3656 = vrot.slane %v3655, 1
      %v3657 = vadd.f32 %v3655, %v3656
      %3658 = vst [vmem:[%s241] sm:$0x1] %v3657
      %v3659 = vmul.f32 %v3429, %v3429
      %v3660 = vmul.f32 %v3430, %v3430
      %v3661 = vmul.f32 %v3431, %v3431
      %v3662 = vmul.f32 %v3432, %v3432
      %v3663 = vmul.f32 %v3433, %v3433
      %v3664 = vmul.f32 %v3434, %v3434
      %v3665 = vmul.f32 %v3435, %v3435
      %v3666 = vmul.f32 %v3436, %v3436
      %v3667 = vmul.f32 %v3437, %v3437
      %v3668 = vmul.f32 %v3438, %v3438
      %v3669 = vmul.f32 %v3439, %v3439
      %v3670 = vmul.f32 %v3440, %v3440
      %v3671 = vmul.f32 %v3441, %v3441
      %v3672 = vmul.f32 %v3442, %v3442
      %v3673 = vmul.f32 %v3443, %v3443
      %v3674 = vmul.f32 %v3444, %v3444
      %v3675 = vmul.f32 %v3445, %v3445
      %v3676 = vmul.f32 %v3446, %v3446
      %v3677 = vmul.f32 %v3447, %v3447
      %v3678 = vmul.f32 %v3448, %v3448
      %v3679 = vmul.f32 %v3449, %v3449
      %v3680 = vmul.f32 %v3450, %v3450
      %v3681 = vmul.f32 %v3451, %v3451
      %v3682 = vmul.f32 %v3452, %v3452
      %v3683 = vmul.f32 %v3453, %v3453
      %v3684 = vmul.f32 %v3454, %v3454
      %v3685 = vmul.f32 %v3455, %v3455
      %v3686 = vmul.f32 %v3456, %v3456
      %v3687 = vmul.f32 %v3457, %v3457
      %v3688 = vmul.f32 %v3458, %v3458
      %v3689 = vmul.f32 %v3459, %v3459
      %v3690 = vmul.f32 %v3460, %v3460
      %v3691 = vadd.f32 %v3659, %v3660
      %v3692 = vadd.f32 %v3691, %v3661
      %v3693 = vadd.f32 %v3692, %v3662
      %v3694 = vadd.f32 %v3693, %v3663
      %v3695 = vadd.f32 %v3694, %v3664
      %v3696 = vadd.f32 %v3695, %v3665
      %v3697 = vadd.f32 %v3696, %v3666
      %v3698 = vadd.f32 %v3697, %v3667
      %v3699 = vadd.f32 %v3698, %v3668
      %v3700 = vadd.f32 %v3699, %v3669
      %v3701 = vadd.f32 %v3700, %v3670
      %v3702 = vadd.f32 %v3701, %v3671
      %v3703 = vadd.f32 %v3702, %v3672
      %v3704 = vadd.f32 %v3703, %v3673
      %v3705 = vadd.f32 %v3704, %v3674
      %v3706 = vadd.f32 %v3705, %v3675
      %v3707 = vadd.f32 %v3706, %v3676
      %v3708 = vadd.f32 %v3707, %v3677
      %v3709 = vadd.f32 %v3708, %v3678
      %v3710 = vadd.f32 %v3709, %v3679
      %v3711 = vadd.f32 %v3710, %v3680
      %v3712 = vadd.f32 %v3711, %v3681
      %v3713 = vadd.f32 %v3712, %v3682
      %v3714 = vadd.f32 %v3713, %v3683
      %v3715 = vadd.f32 %v3714, %v3684
      %v3716 = vadd.f32 %v3715, %v3685
      %v3717 = vadd.f32 %v3716, %v3686
      %v3718 = vadd.f32 %v3717, %v3687
      %v3719 = vadd.f32 %v3718, %v3688
      %v3720 = vadd.f32 %v3719, %v3689
      %v3721 = vadd.f32 %v3720, %v3690
      %v3722 = vrot.slane %v3721, 4
      %v3723 = vadd.f32 %v3721, %v3722
      %v3724 = vrot.slane %v3723, 2
      %v3725 = vadd.f32 %v3723, %v3724
      %v3726 = vrot.slane %v3725, 1
      %v3727 = vadd.f32 %v3725, %v3726
      %3728 = vst [vmem:[%s241 + $0x1] sm:$0x1] %v3727
      %3729 = vst [vmem:[%s241 + $0x2] sm:$0x3f] 0.0
      %s3730 = smul.u32 8, %s21
      %p3731 = scmp.lt.s32.totalorder %s20, 1
      %s3732 = scalar_select %p3731, %s20, 1
      %p3733 = scmp.lt.s32.totalorder %s3730, 31
      %s3734 = scalar_select %p3733, %s3730, 31
      %s3735 = smul.addr %s3734, 4
      %s3736 = smul.addr %s3732, 128
      %s3737 = sadd.s32 %s3735, %s3736
      %s3738 = smul.addr %s3737, 4
      %s3739 = scalar_lea.vmem %s3, %s3738
      %s3740 = smul.u32 %s20, 4
      %s3741 = sadd.s32 %s3740, %s21
      %p3742 = scmp.lt.s32.totalorder %s3741, 7
      %s3743 = scalar_select %p3742, %s3741, 7
      %s3744 = smul.addr %s3743, 8
      %s3745 = scalar_lea.vmem %s4, %s3744
      // Predicated region
      $region33: #{pose_forward_pallas.6} parent=31 // pred_check
        %p3746 = pneg %p116
      $region34: #{pose_forward_pallas.6} parent=31 // pred_check_branch
        %3748 = sbr.rel (%p3746) target = $region36
      $region35: #{pose_forward_pallas.6} parent=31 // pred_region
        %s3749 = smul.u32 8, %s21
      $region36: #{pose_forward_pallas.6} parent=31 // pred_fallthru
        _
      // Predicated region
      $region37: #{pose_forward_pallas.6} parent=31 // pred_check
        %p3750 = pneg %p146
      $region38: #{pose_forward_pallas.6} parent=31 // pred_check_branch
        %3752 = sbr.rel (%p3750) target = $region40
      $region39: #{pose_forward_pallas.6} parent=31 // pred_region
        %s3753 = smul.u32 %s20, 4
        %s3754 = sadd.s32 %s3753, %s21
      $region40: #{pose_forward_pallas.6} parent=31 // pred_fallthru
        _
    $region32: #{pose_forward_pallas.6} parent=5 // pred_fallthru
      _
    %p3755 = scmp.le.s32.totalorder 2, %s11
    // Predicated region
    $region41: #{pose_forward_pallas.6} parent=5 // pred_check
      %p3756 = pneg %p3755
    $region42: #{pose_forward_pallas.6} parent=5 // pred_check_branch
      %3758 = sbr.rel (%p3756) target = $region44
    $region43: #{pose_forward_pallas.6} parent=5 // pred_region
      %s3759 = ssub.s32 %s11, 2
      // Predicated region
      $region45: #{pose_forward_pallas.6} parent=43 // pred_check
        %p3760 = pneg %p122
      $region46: #{pose_forward_pallas.6} parent=43 // pred_check_branch
        %3762 = sbr.rel (%p3760) target = $region48
      $region47: #{pose_forward_pallas.6} parent=43 // pred_region
        %s3763 = smul.u32 8, %s23
        %p3764 = scmp.lt.s32.totalorder %s22, 1
        %s3765 = scalar_select %p3764, %s22, 1
        %p3766 = scmp.lt.s32.totalorder %s3763, 31
        %s3767 = scalar_select %p3766, %s3763, 31
        %s3768 = smul.addr %s3767, 4
        %s3769 = smul.addr %s3765, 128
        %s3770 = sadd.s32 %s3768, %s3769
        %s3771 = smul.addr %s3770, 4
        %s3772 = scalar_lea.vmem %s3, %s3771
      $region48: #{pose_forward_pallas.6} parent=43 // pred_fallthru
        _
      // Predicated region
      $region49: #{pose_forward_pallas.6} parent=43 // pred_check
        %p3773 = pneg %p152
      $region50: #{pose_forward_pallas.6} parent=43 // pred_check_branch
        %3775 = sbr.rel (%p3773) target = $region52
      $region51: #{pose_forward_pallas.6} parent=43 // pred_region
        %s3776 = smul.u32 %s22, 4
        %s3777 = sadd.s32 %s3776, %s23
        %p3778 = scmp.lt.s32.totalorder %s3777, 7
        %s3779 = scalar_select %p3778, %s3777, 7
        %s3780 = smul.addr %s3779, 8
        %s3781 = scalar_lea.vmem %s4, %s3780
      $region52: #{pose_forward_pallas.6} parent=43 // pred_fallthru
        _
    $region44: #{pose_forward_pallas.6} parent=5 // pred_fallthru
      _
  $region6: #{pose_forward_pallas.6} parent=0 // loop_footer
    %s15 = sadd.s32 1, %s11
  $region7: #{pose_forward_pallas.6} parent=0 // loop_footer_branch
    %10 = sbr.rel target = $region3
  $region8: #{pose_forward_pallas.6} parent=0 // loop_exit
    _

</llo_original>
